<compile_context>
chip_gen: v5e
topology: v5e:2x2
jax: 0.10.0
libtpu: 0.0.40
codegen_flags: <defaults>
</compile_context>

<pallas_src>
import jax
import jax.numpy as jnp
from jax.experimental import pallas as pl
from jax.experimental.pallas import tpu as pltpu

# ----------------------- synthetic model config (small) -----------------------
B        = 2               # batch
NUM_ROI  = 2
ROI_RANK = (0, 1)          # params.roi_rank
T        = 16              # samples per ROI
KSIZE    = 3               # Conv1d kernel size, 'same' padding
ENC_CH   = (1, 8, 16, 16, 16)   # conv_block1..4; out_f = 16 = LSTM input_size
H        = 16              # params.LSTM.hidden_size (bidirectional)
DEC_HID  = 32              # Hybrid_Decoder hidden width
N_OUT    = 2               # Hybrid_Decoder output dim

PAD   = KSIZE // 2
TP    = T + 2 * PAD        # padded time per (roi, batch) segment
WC    = B * TP             # conv working width: all batch segments side by side
WG    = WC + 2 * PAD       # + guard columns at the global ends
S     = NUM_ROI * T        # LSTM sequence length after time-concat of the ROIs
D     = ENC_CH[-1]
C_MAX = max(ENC_CH)

# lhs-transposed matmul (y.T @ w) expressed as dot_general dimension numbers,
# avoiding an explicit transpose op inside the kernel.
_TN_DIMS = (((0,), (0,)), ((), ()))


# ------------------------------ fused Pallas kernel -----------------------------
def _fused_forward_kernel(
    xin_ref,                      # (NUM_ROI, 1, WG)  guard/'same'-padded input signals
    cmask_ref,                    # (1, WC)  1.0 on valid time columns
    gmask_ref,                    # (1, 8H)  1.0 on forward-direction gate columns
    w1_ref, s1_ref, b1_ref,       # conv layer i: (K, C_out, C_in), (C_out, 1), (C_out, 1)
    w2_ref, s2_ref, b2_ref,
    w3_ref, s3_ref, b3_ref,
    w4_ref, s4_ref, b4_ref,
    wih_ref, whh_ref, bl_ref,     # (D, 8H), (2H, 8H), (1, 8H) gate-interleaved LSTM params
    wd1_ref, bd1_ref, wd2_ref, bd2_ref,   # decoder MLP
    o_ref,                        # (B, N_OUT)
    act_ref,                      # VMEM scratch (C_MAX, WG): conv activations, guard layout
    zx_ref,                       # VMEM scratch (S, B, 8H): hoisted LSTM input projections
):
    f32 = jnp.float32
    conv = ((w1_ref, s1_ref, b1_ref), (w2_ref, s2_ref, b2_ref),
            (w3_ref, s3_ref, b3_ref), (w4_ref, s4_ref, b4_ref))

    cmask = cmask_ref[...]                     # (1, WC)   hoisted
    wih = wih_ref[...]                         # (D, 8H)   hoisted
    bl = bl_ref[...]                           # (1, 8H)   hoisted

    # Guard columns of the activation scratch must be zero; 'same'-padding
    # columns are re-zeroed every layer via cmask.
    act_ref[...] = jnp.zeros(act_ref.shape, f32)

    # ------------------------- shared SCCNN_bn encoder -------------------------
    for roi in range(NUM_ROI):
        y = None
        for li, (w_ref, sc_ref, bi_ref) in enumerate(conv):
            c_in = w_ref.shape[2]
            c_out = w_ref.shape[1]
            if li == 0:
                a = xin_ref[roi]               # (1, WG)  host-prepadded signal
            else:
                a = act_ref[0:c_in, :]         # (C_in, WG)  previous layer, guard layout
            acc = jnp.zeros((c_out, WC), f32)
            for kk in range(KSIZE):            # K taps -> K small MXU matmuls, whole batch
                acc = acc + jnp.dot(w_ref[kk], a[:, kk:kk + WC],
                                    preferred_element_type=f32)
            y = acc * sc_ref[...] + bi_ref[...]          # folded BatchNorm affine
            y = jnp.maximum(y, 0.0) * cmask              # ReLU; keep pad columns at 0
            if li < len(conv) - 1:
                act_ref[0:c_out, PAD:PAD + WC] = y       # back to guard layout

        # --- hoisted LSTM input projection (both directions + bias), per batch ---
        for b in range(B):
            col0 = b * TP + PAD
            y_b = y[:, col0:col0 + T]                    # (D, T)
            proj = jax.lax.dot_general(                  # y_b.T @ wih  ->  (T, 8H)
                y_b, wih, _TN_DIMS, preferred_element_type=f32) + bl
            zx_ref[roi * T:(roi + 1) * T, b, :] = proj

    # ----------------------------- bidirectional LSTM ----------------------------
    gm_f = gmask_ref[...]                      # (1, 8H) forward-gate column mask
    gm_b = 1.0 - gm_f
    whh = whh_ref[...]                         # (2H, 8H) block-diagonal fwd/bwd recurrence
    h = jnp.zeros((B, 2 * H), f32)             # [h_fwd | h_bwd]
    c = jnp.zeros((B, 2 * H), f32)
    for t in range(S):                         # fully unrolled serial recurrence
        # forward direction consumes time t, backward consumes time S-1-t
        zx_t = zx_ref[t] * gm_f + zx_ref[S - 1 - t] * gm_b          # (B, 8H)
        z = zx_t + jnp.dot(h, whh, preferred_element_type=f32)      # one matmul / step
        i = jax.nn.sigmoid(z[:, 0:2 * H])      # gate-interleaved: [i_f i_b|f_f f_b|g|o]
        f = jax.nn.sigmoid(z[:, 2 * H:4 * H])
        g = jnp.tanh(z[:, 4 * H:6 * H])
        o = jax.nn.sigmoid(z[:, 6 * H:8 * H])
        c = f * c + i * g
        h = o * jnp.tanh(c)
    # h == torch.concat([out[:, -1, :H], out[:, 0, H:]], axis=1)  (already flattened)

    # -------------------------------- Hybrid_Decoder -----------------------------
    hid = jnp.maximum(
        jnp.dot(h, wd1_ref[...], preferred_element_type=f32) + bd1_ref[...], 0.0)
    o_ref[...] = jnp.dot(hid, wd2_ref[...], preferred_element_type=f32) + bd2_ref[...]


# ------------------------------- pallas_call wrapper ----------------------------
def sccnn_lstm_hybrid_forward(x, enc_params, lstm_params, dec_params):
    # x: (B, NUM_ROI, T) -- mirrors the PyTorch x[:, roi, :] slicing.
    # The only host-side glue is this tiny (few-KB) layout prep of the raw input.
    x_sel = x[:, list(ROI_RANK), :]                                   # roi_rank selection
    x_pad = jnp.pad(x_sel, ((0, 0), (0, 0), (PAD, PAD)))              # 'same' padding
    xin = jnp.transpose(x_pad, (1, 0, 2)).reshape(NUM_ROI, 1, WC)     # segmented time axis
    xin = jnp.pad(xin, ((0, 0), (0, 0), (PAD, PAD)))                  # guards -> (NUM_ROI,1,WG)

    pos = jnp.arange(WC) % TP
    cmask = ((pos >= PAD) & (pos < PAD + T)).astype(jnp.float32)[None, :]   # (1, WC)
    gidx = (jnp.arange(8 * H) // H) % 2
    gmask = (gidx == 0).astype(jnp.float32)[None, :]                        # (1, 8H)

    args = [xin, cmask, gmask]
    for (w, scale, bias) in enc_params:
        args += [w, scale, bias]
    args += [lstm_params["wih"], lstm_params["whh"], lstm_params["b"]]
    args += [dec_params["w1"], dec_params["b1"], dec_params["w2"], dec_params["b2"]]

    return pl.pallas_call(
        _fused_forward_kernel,
        out_shape=jax.ShapeDtypeStruct((B, N_OUT), jnp.float32),
        # No grid / no BlockSpecs: every operand is tiny, so the default
        # whole-array-in-VMEM block is used for all inputs and the output.
        scratch_shapes=[
            pltpu.VMEM((C_MAX, WG), jnp.float32),       # conv activations (guard layout)
            pltpu.VMEM((S, B, 8 * H), jnp.float32),     # hoisted LSTM input projections
        ],
    )(*args)


# ------------------------------- deterministic params ---------------------------
def _interleave_gates(a_f, a_b):
    # [..., 4H] per direction -> [..., 8H] with column blocks
    # [i_f i_b f_f f_b g_f g_b o_f o_b] (PyTorch gate order i, f, g, o).
    lead = a_f.shape[:-1]
    a_f = a_f.reshape(lead + (4, H))
    a_b = a_b.reshape(lead + (4, H))
    return jnp.stack([a_f, a_b], axis=-2).reshape(lead + (8 * H,))


def _init_params(key):
    keys = iter(jax.random.split(key, 64))

    def nrm(shape, scale=0.1):
        return scale * jax.random.normal(next(keys), shape, jnp.float32)

    enc = []
    for c_in, c_out in zip(ENC_CH[:-1], ENC_CH[1:]):
        w = nrm((KSIZE, c_out, c_in), 0.3)              # Conv1d weight as (K, C_out, C_in)
        scale = 1.0 + nrm((c_out, 1), 0.05)             # folded BN scale
        bias = nrm((c_out, 1), 0.05)                    # folded BN bias (incl. conv bias)
        enc.append((w, scale, bias))

    lim = 1.0 / (H ** 0.5)

    def lstm_dir():
        wih = jax.random.uniform(next(keys), (D, 4 * H), jnp.float32, -lim, lim)
        whh = jax.random.uniform(next(keys), (H, 4 * H), jnp.float32, -lim, lim)
        bias = (jax.random.uniform(next(keys), (4 * H,), jnp.float32, -lim, lim)
                + jax.random.uniform(next(keys), (4 * H,), jnp.float32, -lim, lim))
        return wih, whh, bias

    wih_f, whh_f, b_f = lstm_dir()
    wih_b, whh_b, b_b = lstm_dir()
    zeros_hh = jnp.zeros_like(whh_f)
    lstm = dict(
        wih=_interleave_gates(wih_f, wih_b),                          # (D, 8H)
        whh=jnp.concatenate(
            [_interleave_gates(whh_f, zeros_hh),                      # h_fwd -> fwd gates only
             _interleave_gates(zeros_hh, whh_b)], axis=0),            # h_bwd -> bwd gates only
        b=_interleave_gates(b_f, b_b)[None, :],                       # (1, 8H)
    )

    dec = dict(w1=nrm((2 * H, DEC_HID), 0.2), b1=nrm((1, DEC_HID), 0.05),
               w2=nrm((DEC_HID, N_OUT), 0.2), b2=nrm((1, N_OUT), 0.05))
    return enc, lstm, dec


# ----------------------------------- main ---------------------------------------
if __name__ == "__main__":
    key = jax.random.PRNGKey(0)
    k_param, k_x = jax.random.split(key)
    enc_p, lstm_p, dec_p = _init_params(k_param)

    x = jax.random.normal(k_x, (B, NUM_ROI, T), jnp.float32)

    fwd = jax.jit(lambda xx: sccnn_lstm_hybrid_forward(xx, enc_p, lstm_p, dec_p))
    y = fwd(x)
    jax.block_until_ready(y)
    assert y.shape == (B, N_OUT), y.shape
    assert bool(jnp.all(jnp.isfinite(y))), "non-finite output"
    print("KERNEL_OK")
</pallas_src>

<mosaic_0001>
module attributes {stable_mosaic.version = 11 : i64} {
  func.func @_fused_forward_kernel(%arg0: memref<2x1x38xf32, #tpu.memory_space<vmem>>, %arg1: memref<1x36xf32, #tpu.memory_space<vmem>>, %arg2: memref<1x128xf32, #tpu.memory_space<vmem>>, %arg3: memref<3x8x1xf32, #tpu.memory_space<vmem>>, %arg4: memref<8x1xf32, #tpu.memory_space<vmem>>, %arg5: memref<8x1xf32, #tpu.memory_space<vmem>>, %arg6: memref<3x16x8xf32, #tpu.memory_space<vmem>>, %arg7: memref<16x1xf32, #tpu.memory_space<vmem>>, %arg8: memref<16x1xf32, #tpu.memory_space<vmem>>, %arg9: memref<3x16x16xf32, #tpu.memory_space<vmem>>, %arg10: memref<16x1xf32, #tpu.memory_space<vmem>>, %arg11: memref<16x1xf32, #tpu.memory_space<vmem>>, %arg12: memref<3x16x16xf32, #tpu.memory_space<vmem>>, %arg13: memref<16x1xf32, #tpu.memory_space<vmem>>, %arg14: memref<16x1xf32, #tpu.memory_space<vmem>>, %arg15: memref<16x128xf32, #tpu.memory_space<vmem>>, %arg16: memref<32x128xf32, #tpu.memory_space<vmem>>, %arg17: memref<1x128xf32, #tpu.memory_space<vmem>>, %arg18: memref<32x32xf32, #tpu.memory_space<vmem>>, %arg19: memref<1x32xf32, #tpu.memory_space<vmem>>, %arg20: memref<32x2xf32, #tpu.memory_space<vmem>>, %arg21: memref<1x2xf32, #tpu.memory_space<vmem>>, %arg22: memref<2x2xf32, #tpu.memory_space<vmem>>, %arg23: memref<16x38xf32, #tpu.memory_space<vmem>>, %arg24: memref<32x2x128xf32, #tpu.memory_space<vmem>>) attributes {dimension_semantics = [], scalar_prefetch = 0 : i64, scratch_operands = 2 : i64, tpu.core_type = #tpu.core_type<tc>} {
    %c0 = arith.constant 0 : index
    %c0_0 = arith.constant 0 : index
    %0 = vector.load %arg1[%c0, %c0_0] : memref<1x36xf32, #tpu.memory_space<vmem>>, vector<1x36xf32>
    %c0_1 = arith.constant 0 : index
    %c0_2 = arith.constant 0 : index
    %1 = vector.load %arg15[%c0_1, %c0_2] : memref<16x128xf32, #tpu.memory_space<vmem>>, vector<16x128xf32>
    %c0_3 = arith.constant 0 : index
    %c0_4 = arith.constant 0 : index
    %2 = vector.load %arg17[%c0_3, %c0_4] : memref<1x128xf32, #tpu.memory_space<vmem>>, vector<1x128xf32>
    %cst = arith.constant 0.000000e+00 : f32
    %3 = vector.broadcast %cst : f32 to vector<16x38xf32>
    %c0_5 = arith.constant 0 : index
    %c0_6 = arith.constant 0 : index
    %4 = vector.load %arg23[%c0_5, %c0_6] : memref<16x38xf32, #tpu.memory_space<vmem>>, vector<16x38xf32>
    tpu.vector_store %arg23[%c0_5, %c0_6], %3 {strides = array<i32>} : memref<16x38xf32, #tpu.memory_space<vmem>>, vector<16x38xf32>,
    %c0_7 = arith.constant 0 : index
    %c0_8 = arith.constant 0 : index
    %c0_9 = arith.constant 0 : index
    %5 = vector.load %arg0[%c0_7, %c0_8, %c0_9] : memref<2x1x38xf32, #tpu.memory_space<vmem>>, vector<1x1x38xf32>
    %6 = vector.shape_cast %5 : vector<1x1x38xf32> to vector<1x38xf32>
    %cst_10 = arith.constant 0.000000e+00 : f32
    %7 = vector.broadcast %cst_10 : f32 to vector<8x36xf32>
    %c0_11 = arith.constant 0 : index
    %c0_12 = arith.constant 0 : index
    %c0_13 = arith.constant 0 : index
    %8 = vector.load %arg3[%c0_11, %c0_12, %c0_13] : memref<3x8x1xf32, #tpu.memory_space<vmem>>, vector<1x8x1xf32>
    %9 = vector.shape_cast %8 : vector<1x8x1xf32> to vector<8x1xf32>
    %10 = vector.extract_strided_slice %6 {offsets = [0, 0], sizes = [1, 36], strides = [1, 1]} : vector<1x38xf32> to vector<1x36xf32>
    %cst_14 = arith.constant dense<0.000000e+00> : vector<8x36xf32>
    %11 = tpu.matmul %9, %10, %cst_14 {dimension_numbers = #tpu.dot_dimension_numbers<[1], [0], [0], [1], [0, 0, 1, 1], [], []>} : vector<8x1xf32>, vector<1x36xf32>, vector<8x36xf32> -> vector<8x36xf32>
    %12 = arith.addf %7, %11 : vector<8x36xf32>
    %c1 = arith.constant 1 : index
    %c0_15 = arith.constant 0 : index
    %c0_16 = arith.constant 0 : index
    %13 = vector.load %arg3[%c1, %c0_15, %c0_16] : memref<3x8x1xf32, #tpu.memory_space<vmem>>, vector<1x8x1xf32>
    %14 = vector.shape_cast %13 : vector<1x8x1xf32> to vector<8x1xf32>
    %15 = vector.extract_strided_slice %6 {offsets = [0, 1], sizes = [1, 36], strides = [1, 1]} : vector<1x38xf32> to vector<1x36xf32>
    %cst_17 = arith.constant dense<0.000000e+00> : vector<8x36xf32>
    %16 = tpu.matmul %14, %15, %cst_17 {dimension_numbers = #tpu.dot_dimension_numbers<[1], [0], [0], [1], [0, 0, 1, 1], [], []>} : vector<8x1xf32>, vector<1x36xf32>, vector<8x36xf32> -> vector<8x36xf32>
    %17 = arith.addf %12, %16 : vector<8x36xf32>
    %c2 = arith.constant 2 : index
    %c0_18 = arith.constant 0 : index
    %c0_19 = arith.constant 0 : index
    %18 = vector.load %arg3[%c2, %c0_18, %c0_19] : memref<3x8x1xf32, #tpu.memory_space<vmem>>, vector<1x8x1xf32>
    %19 = vector.shape_cast %18 : vector<1x8x1xf32> to vector<8x1xf32>
    %20 = vector.extract_strided_slice %6 {offsets = [0, 2], sizes = [1, 36], strides = [1, 1]} : vector<1x38xf32> to vector<1x36xf32>
    %cst_20 = arith.constant dense<0.000000e+00> : vector<8x36xf32>
    %21 = tpu.matmul %19, %20, %cst_20 {dimension_numbers = #tpu.dot_dimension_numbers<[1], [0], [0], [1], [0, 0, 1, 1], [], []>} : vector<8x1xf32>, vector<1x36xf32>, vector<8x36xf32> -> vector<8x36xf32>
    %22 = arith.addf %17, %21 : vector<8x36xf32>
    %c0_21 = arith.constant 0 : index
    %c0_22 = arith.constant 0 : index
    %23 = vector.load %arg4[%c0_21, %c0_22] : memref<8x1xf32, #tpu.memory_space<vmem>>, vector<8x1xf32>
    %24 = vector.broadcast %23 : vector<8x1xf32> to vector<8x36xf32>
    %25 = arith.mulf %22, %24 : vector<8x36xf32>
    %c0_23 = arith.constant 0 : index
    %c0_24 = arith.constant 0 : index
    %26 = vector.load %arg5[%c0_23, %c0_24] : memref<8x1xf32, #tpu.memory_space<vmem>>, vector<8x1xf32>
    %27 = vector.broadcast %26 : vector<8x1xf32> to vector<8x36xf32>
    %28 = arith.addf %25, %27 : vector<8x36xf32>
    %cst_25 = arith.constant 0.000000e+00 : f32
    %29 = vector.broadcast %cst_25 : f32 to vector<8x36xf32>
    %30 = arith.maximumf %28, %29 : vector<8x36xf32>
    %31 = vector.broadcast %0 : vector<1x36xf32> to vector<8x36xf32>
    %32 = arith.mulf %30, %31 : vector<8x36xf32>
    %c0_26 = arith.constant 0 : index
    %c1_27 = arith.constant 1 : index
    %33 = vector.load %arg23[%c0_26, %c1_27] : memref<16x38xf32, #tpu.memory_space<vmem>>, vector<8x36xf32>
    tpu.vector_store %arg23[%c0_26, %c1_27], %32 {strides = array<i32>} : memref<16x38xf32, #tpu.memory_space<vmem>>, vector<8x36xf32>,
    %c0_28 = arith.constant 0 : index
    %c0_29 = arith.constant 0 : index
    %34 = vector.load %arg23[%c0_28, %c0_29] : memref<16x38xf32, #tpu.memory_space<vmem>>, vector<8x38xf32>
    %cst_30 = arith.constant 0.000000e+00 : f32
    %35 = vector.broadcast %cst_30 : f32 to vector<16x36xf32>
    %c0_31 = arith.constant 0 : index
    %c0_32 = arith.constant 0 : index
    %c0_33 = arith.constant 0 : index
    %36 = vector.load %arg6[%c0_31, %c0_32, %c0_33] : memref<3x16x8xf32, #tpu.memory_space<vmem>>, vector<1x16x8xf32>
    %37 = vector.shape_cast %36 : vector<1x16x8xf32> to vector<16x8xf32>
    %38 = vector.extract_strided_slice %34 {offsets = [0, 0], sizes = [8, 36], strides = [1, 1]} : vector<8x38xf32> to vector<8x36xf32>
    %cst_34 = arith.constant dense<0.000000e+00> : vector<16x36xf32>
    %39 = tpu.matmul %37, %38, %cst_34 {dimension_numbers = #tpu.dot_dimension_numbers<[1], [0], [0], [1], [0, 0, 1, 1], [], []>} : vector<16x8xf32>, vector<8x36xf32>, vector<16x36xf32> -> vector<16x36xf32>
    %40 = arith.addf %35, %39 : vector<16x36xf32>
    %c1_35 = arith.constant 1 : index
    %c0_36 = arith.constant 0 : index
    %c0_37 = arith.constant 0 : index
    %41 = vector.load %arg6[%c1_35, %c0_36, %c0_37] : memref<3x16x8xf32, #tpu.memory_space<vmem>>, vector<1x16x8xf32>
    %42 = vector.shape_cast %41 : vector<1x16x8xf32> to vector<16x8xf32>
    %43 = vector.extract_strided_slice %34 {offsets = [0, 1], sizes = [8, 36], strides = [1, 1]} : vector<8x38xf32> to vector<8x36xf32>
    %cst_38 = arith.constant dense<0.000000e+00> : vector<16x36xf32>
    %44 = tpu.matmul %42, %43, %cst_38 {dimension_numbers = #tpu.dot_dimension_numbers<[1], [0], [0], [1], [0, 0, 1, 1], [], []>} : vector<16x8xf32>, vector<8x36xf32>, vector<16x36xf32> -> vector<16x36xf32>
    %45 = arith.addf %40, %44 : vector<16x36xf32>
    %c2_39 = arith.constant 2 : index
    %c0_40 = arith.constant 0 : index
    %c0_41 = arith.constant 0 : index
    %46 = vector.load %arg6[%c2_39, %c0_40, %c0_41] : memref<3x16x8xf32, #tpu.memory_space<vmem>>, vector<1x16x8xf32>
    %47 = vector.shape_cast %46 : vector<1x16x8xf32> to vector<16x8xf32>
    %48 = vector.extract_strided_slice %34 {offsets = [0, 2], sizes = [8, 36], strides = [1, 1]} : vector<8x38xf32> to vector<8x36xf32>
    %cst_42 = arith.constant dense<0.000000e+00> : vector<16x36xf32>
    %49 = tpu.matmul %47, %48, %cst_42 {dimension_numbers = #tpu.dot_dimension_numbers<[1], [0], [0], [1], [0, 0, 1, 1], [], []>} : vector<16x8xf32>, vector<8x36xf32>, vector<16x36xf32> -> vector<16x36xf32>
    %50 = arith.addf %45, %49 : vector<16x36xf32>
    %c0_43 = arith.constant 0 : index
    %c0_44 = arith.constant 0 : index
    %51 = vector.load %arg7[%c0_43, %c0_44] : memref<16x1xf32, #tpu.memory_space<vmem>>, vector<16x1xf32>
    %52 = vector.broadcast %51 : vector<16x1xf32> to vector<16x36xf32>
    %53 = arith.mulf %50, %52 : vector<16x36xf32>
    %c0_45 = arith.constant 0 : index
    %c0_46 = arith.constant 0 : index
    %54 = vector.load %arg8[%c0_45, %c0_46] : memref<16x1xf32, #tpu.memory_space<vmem>>, vector<16x1xf32>
    %55 = vector.broadcast %54 : vector<16x1xf32> to vector<16x36xf32>
    %56 = arith.addf %53, %55 : vector<16x36xf32>
    %cst_47 = arith.constant 0.000000e+00 : f32
    %57 = vector.broadcast %cst_47 : f32 to vector<16x36xf32>
    %58 = arith.maximumf %56, %57 : vector<16x36xf32>
    %59 = vector.broadcast %0 : vector<1x36xf32> to vector<16x36xf32>
    %60 = arith.mulf %58, %59 : vector<16x36xf32>
    %c0_48 = arith.constant 0 : index
    %c1_49 = arith.constant 1 : index
    %61 = vector.load %arg23[%c0_48, %c1_49] : memref<16x38xf32, #tpu.memory_space<vmem>>, vector<16x36xf32>
    tpu.vector_store %arg23[%c0_48, %c1_49], %60 {strides = array<i32>} : memref<16x38xf32, #tpu.memory_space<vmem>>, vector<16x36xf32>,
    %c0_50 = arith.constant 0 : index
    %c0_51 = arith.constant 0 : index
    %62 = vector.load %arg23[%c0_50, %c0_51] : memref<16x38xf32, #tpu.memory_space<vmem>>, vector<16x38xf32>
    %cst_52 = arith.constant 0.000000e+00 : f32
    %63 = vector.broadcast %cst_52 : f32 to vector<16x36xf32>
    %c0_53 = arith.constant 0 : index
    %c0_54 = arith.constant 0 : index
    %c0_55 = arith.constant 0 : index
    %64 = vector.load %arg9[%c0_53, %c0_54, %c0_55] : memref<3x16x16xf32, #tpu.memory_space<vmem>>, vector<1x16x16xf32>
    %65 = vector.shape_cast %64 : vector<1x16x16xf32> to vector<16x16xf32>
    %66 = vector.extract_strided_slice %62 {offsets = [0, 0], sizes = [16, 36], strides = [1, 1]} : vector<16x38xf32> to vector<16x36xf32>
    %cst_56 = arith.constant dense<0.000000e+00> : vector<16x36xf32>
    %67 = tpu.matmul %65, %66, %cst_56 {dimension_numbers = #tpu.dot_dimension_numbers<[1], [0], [0], [1], [0, 0, 1, 1], [], []>} : vector<16x16xf32>, vector<16x36xf32>, vector<16x36xf32> -> vector<16x36xf32>
    %68 = arith.addf %63, %67 : vector<16x36xf32>
    %c1_57 = arith.constant 1 : index
    %c0_58 = arith.constant 0 : index
    %c0_59 = arith.constant 0 : index
    %69 = vector.load %arg9[%c1_57, %c0_58, %c0_59] : memref<3x16x16xf32, #tpu.memory_space<vmem>>, vector<1x16x16xf32>
    %70 = vector.shape_cast %69 : vector<1x16x16xf32> to vector<16x16xf32>
    %71 = vector.extract_strided_slice %62 {offsets = [0, 1], sizes = [16, 36], strides = [1, 1]} : vector<16x38xf32> to vector<16x36xf32>
    %cst_60 = arith.constant dense<0.000000e+00> : vector<16x36xf32>
    %72 = tpu.matmul %70, %71, %cst_60 {dimension_numbers = #tpu.dot_dimension_numbers<[1], [0], [0], [1], [0, 0, 1, 1], [], []>} : vector<16x16xf32>, vector<16x36xf32>, vector<16x36xf32> -> vector<16x36xf32>
    %73 = arith.addf %68, %72 : vector<16x36xf32>
    %c2_61 = arith.constant 2 : index
    %c0_62 = arith.constant 0 : index
    %c0_63 = arith.constant 0 : index
    %74 = vector.load %arg9[%c2_61, %c0_62, %c0_63] : memref<3x16x16xf32, #tpu.memory_space<vmem>>, vector<1x16x16xf32>
    %75 = vector.shape_cast %74 : vector<1x16x16xf32> to vector<16x16xf32>
    %76 = vector.extract_strided_slice %62 {offsets = [0, 2], sizes = [16, 36], strides = [1, 1]} : vector<16x38xf32> to vector<16x36xf32>
    %cst_64 = arith.constant dense<0.000000e+00> : vector<16x36xf32>
    %77 = tpu.matmul %75, %76, %cst_64 {dimension_numbers = #tpu.dot_dimension_numbers<[1], [0], [0], [1], [0, 0, 1, 1], [], []>} : vector<16x16xf32>, vector<16x36xf32>, vector<16x36xf32> -> vector<16x36xf32>
    %78 = arith.addf %73, %77 : vector<16x36xf32>
    %c0_65 = arith.constant 0 : index
    %c0_66 = arith.constant 0 : index
    %79 = vector.load %arg10[%c0_65, %c0_66] : memref<16x1xf32, #tpu.memory_space<vmem>>, vector<16x1xf32>
    %80 = vector.broadcast %79 : vector<16x1xf32> to vector<16x36xf32>
    %81 = arith.mulf %78, %80 : vector<16x36xf32>
    %c0_67 = arith.constant 0 : index
    %c0_68 = arith.constant 0 : index
    %82 = vector.load %arg11[%c0_67, %c0_68] : memref<16x1xf32, #tpu.memory_space<vmem>>, vector<16x1xf32>
    %83 = vector.broadcast %82 : vector<16x1xf32> to vector<16x36xf32>
    %84 = arith.addf %81, %83 : vector<16x36xf32>
    %cst_69 = arith.constant 0.000000e+00 : f32
    %85 = vector.broadcast %cst_69 : f32 to vector<16x36xf32>
    %86 = arith.maximumf %84, %85 : vector<16x36xf32>
    %87 = vector.broadcast %0 : vector<1x36xf32> to vector<16x36xf32>
    %88 = arith.mulf %86, %87 : vector<16x36xf32>
    %c0_70 = arith.constant 0 : index
    %c1_71 = arith.constant 1 : index
    %89 = vector.load %arg23[%c0_70, %c1_71] : memref<16x38xf32, #tpu.memory_space<vmem>>, vector<16x36xf32>
    tpu.vector_store %arg23[%c0_70, %c1_71], %88 {strides = array<i32>} : memref<16x38xf32, #tpu.memory_space<vmem>>, vector<16x36xf32>,
    %c0_72 = arith.constant 0 : index
    %c0_73 = arith.constant 0 : index
    %90 = vector.load %arg23[%c0_72, %c0_73] : memref<16x38xf32, #tpu.memory_space<vmem>>, vector<16x38xf32>
    %cst_74 = arith.constant 0.000000e+00 : f32
    %91 = vector.broadcast %cst_74 : f32 to vector<16x36xf32>
    %c0_75 = arith.constant 0 : index
    %c0_76 = arith.constant 0 : index
    %c0_77 = arith.constant 0 : index
    %92 = vector.load %arg12[%c0_75, %c0_76, %c0_77] : memref<3x16x16xf32, #tpu.memory_space<vmem>>, vector<1x16x16xf32>
    %93 = vector.shape_cast %92 : vector<1x16x16xf32> to vector<16x16xf32>
    %94 = vector.extract_strided_slice %90 {offsets = [0, 0], sizes = [16, 36], strides = [1, 1]} : vector<16x38xf32> to vector<16x36xf32>
    %cst_78 = arith.constant dense<0.000000e+00> : vector<16x36xf32>
    %95 = tpu.matmul %93, %94, %cst_78 {dimension_numbers = #tpu.dot_dimension_numbers<[1], [0], [0], [1], [0, 0, 1, 1], [], []>} : vector<16x16xf32>, vector<16x36xf32>, vector<16x36xf32> -> vector<16x36xf32>
    %96 = arith.addf %91, %95 : vector<16x36xf32>
    %c1_79 = arith.constant 1 : index
    %c0_80 = arith.constant 0 : index
    %c0_81 = arith.constant 0 : index
    %97 = vector.load %arg12[%c1_79, %c0_80, %c0_81] : memref<3x16x16xf32, #tpu.memory_space<vmem>>, vector<1x16x16xf32>
    %98 = vector.shape_cast %97 : vector<1x16x16xf32> to vector<16x16xf32>
    %99 = vector.extract_strided_slice %90 {offsets = [0, 1], sizes = [16, 36], strides = [1, 1]} : vector<16x38xf32> to vector<16x36xf32>
    %cst_82 = arith.constant dense<0.000000e+00> : vector<16x36xf32>
    %100 = tpu.matmul %98, %99, %cst_82 {dimension_numbers = #tpu.dot_dimension_numbers<[1], [0], [0], [1], [0, 0, 1, 1], [], []>} : vector<16x16xf32>, vector<16x36xf32>, vector<16x36xf32> -> vector<16x36xf32>
    %101 = arith.addf %96, %100 : vector<16x36xf32>
    %c2_83 = arith.constant 2 : index
    %c0_84 = arith.constant 0 : index
    %c0_85 = arith.constant 0 : index
    %102 = vector.load %arg12[%c2_83, %c0_84, %c0_85] : memref<3x16x16xf32, #tpu.memory_space<vmem>>, vector<1x16x16xf32>
    %103 = vector.shape_cast %102 : vector<1x16x16xf32> to vector<16x16xf32>
    %104 = vector.extract_strided_slice %90 {offsets = [0, 2], sizes = [16, 36], strides = [1, 1]} : vector<16x38xf32> to vector<16x36xf32>
    %cst_86 = arith.constant dense<0.000000e+00> : vector<16x36xf32>
    %105 = tpu.matmul %103, %104, %cst_86 {dimension_numbers = #tpu.dot_dimension_numbers<[1], [0], [0], [1], [0, 0, 1, 1], [], []>} : vector<16x16xf32>, vector<16x36xf32>, vector<16x36xf32> -> vector<16x36xf32>
    %106 = arith.addf %101, %105 : vector<16x36xf32>
    %c0_87 = arith.constant 0 : index
    %c0_88 = arith.constant 0 : index
    %107 = vector.load %arg13[%c0_87, %c0_88] : memref<16x1xf32, #tpu.memory_space<vmem>>, vector<16x1xf32>
    %108 = vector.broadcast %107 : vector<16x1xf32> to vector<16x36xf32>
    %109 = arith.mulf %106, %108 : vector<16x36xf32>
    %c0_89 = arith.constant 0 : index
    %c0_90 = arith.constant 0 : index
    %110 = vector.load %arg14[%c0_89, %c0_90] : memref<16x1xf32, #tpu.memory_space<vmem>>, vector<16x1xf32>
    %111 = vector.broadcast %110 : vector<16x1xf32> to vector<16x36xf32>
    %112 = arith.addf %109, %111 : vector<16x36xf32>
    %cst_91 = arith.constant 0.000000e+00 : f32
    %113 = vector.broadcast %cst_91 : f32 to vector<16x36xf32>
    %114 = arith.maximumf %112, %113 : vector<16x36xf32>
    %115 = vector.broadcast %0 : vector<1x36xf32> to vector<16x36xf32>
    %116 = arith.mulf %114, %115 : vector<16x36xf32>
    %117 = vector.extract_strided_slice %116 {offsets = [0, 1], sizes = [16, 16], strides = [1, 1]} : vector<16x36xf32> to vector<16x16xf32>
    %cst_92 = arith.constant dense<0.000000e+00> : vector<16x128xf32>
    %118 = tpu.matmul %117, %1, %cst_92 {dimension_numbers = #tpu.dot_dimension_numbers<[0], [0], [1], [1], [0, 1, 1, 1], [], []>} : vector<16x16xf32>, vector<16x128xf32>, vector<16x128xf32> -> vector<16x128xf32>
    %119 = vector.broadcast %2 : vector<1x128xf32> to vector<16x128xf32>
    %120 = arith.addf %118, %119 : vector<16x128xf32>
    %c0_93 = arith.constant 0 : index
    %c0_94 = arith.constant 0 : index
    %c0_95 = arith.constant 0 : index
    %121 = vector.load %arg24[%c0_93, %c0_94, %c0_95] : memref<32x2x128xf32, #tpu.memory_space<vmem>>, vector<16x1x128xf32>
    %122 = vector.shape_cast %121 : vector<16x1x128xf32> to vector<16x128xf32>
    %123 = vector.shape_cast %120 : vector<16x128xf32> to vector<16x1x128xf32>
    tpu.vector_store %arg24[%c0_93, %c0_94, %c0_95], %123 {strides = array<i32>} : memref<32x2x128xf32, #tpu.memory_space<vmem>>, vector<16x1x128xf32>,
    %124 = vector.extract_strided_slice %116 {offsets = [0, 19], sizes = [16, 16], strides = [1, 1]} : vector<16x36xf32> to vector<16x16xf32>
    %cst_96 = arith.constant dense<0.000000e+00> : vector<16x128xf32>
    %125 = tpu.matmul %124, %1, %cst_96 {dimension_numbers = #tpu.dot_dimension_numbers<[0], [0], [1], [1], [0, 1, 1, 1], [], []>} : vector<16x16xf32>, vector<16x128xf32>, vector<16x128xf32> -> vector<16x128xf32>
    %126 = vector.broadcast %2 : vector<1x128xf32> to vector<16x128xf32>
    %127 = arith.addf %125, %126 : vector<16x128xf32>
    %c0_97 = arith.constant 0 : index
    %c1_98 = arith.constant 1 : index
    %c0_99 = arith.constant 0 : index
    %128 = vector.load %arg24[%c0_97, %c1_98, %c0_99] : memref<32x2x128xf32, #tpu.memory_space<vmem>>, vector<16x1x128xf32>
    %129 = vector.shape_cast %128 : vector<16x1x128xf32> to vector<16x128xf32>
    %130 = vector.shape_cast %127 : vector<16x128xf32> to vector<16x1x128xf32>
    tpu.vector_store %arg24[%c0_97, %c1_98, %c0_99], %130 {strides = array<i32>} : memref<32x2x128xf32, #tpu.memory_space<vmem>>, vector<16x1x128xf32>,
    %c1_100 = arith.constant 1 : index
    %c0_101 = arith.constant 0 : index
    %c0_102 = arith.constant 0 : index
    %131 = vector.load %arg0[%c1_100, %c0_101, %c0_102] : memref<2x1x38xf32, #tpu.memory_space<vmem>>, vector<1x1x38xf32>
    %132 = vector.shape_cast %131 : vector<1x1x38xf32> to vector<1x38xf32>
    %cst_103 = arith.constant 0.000000e+00 : f32
    %133 = vector.broadcast %cst_103 : f32 to vector<8x36xf32>
    %c0_104 = arith.constant 0 : index
    %c0_105 = arith.constant 0 : index
    %c0_106 = arith.constant 0 : index
    %134 = vector.load %arg3[%c0_104, %c0_105, %c0_106] : memref<3x8x1xf32, #tpu.memory_space<vmem>>, vector<1x8x1xf32>
    %135 = vector.shape_cast %134 : vector<1x8x1xf32> to vector<8x1xf32>
    %136 = vector.extract_strided_slice %132 {offsets = [0, 0], sizes = [1, 36], strides = [1, 1]} : vector<1x38xf32> to vector<1x36xf32>
    %cst_107 = arith.constant dense<0.000000e+00> : vector<8x36xf32>
    %137 = tpu.matmul %135, %136, %cst_107 {dimension_numbers = #tpu.dot_dimension_numbers<[1], [0], [0], [1], [0, 0, 1, 1], [], []>} : vector<8x1xf32>, vector<1x36xf32>, vector<8x36xf32> -> vector<8x36xf32>
    %138 = arith.addf %133, %137 : vector<8x36xf32>
    %c1_108 = arith.constant 1 : index
    %c0_109 = arith.constant 0 : index
    %c0_110 = arith.constant 0 : index
    %139 = vector.load %arg3[%c1_108, %c0_109, %c0_110] : memref<3x8x1xf32, #tpu.memory_space<vmem>>, vector<1x8x1xf32>
    %140 = vector.shape_cast %139 : vector<1x8x1xf32> to vector<8x1xf32>
    %141 = vector.extract_strided_slice %132 {offsets = [0, 1], sizes = [1, 36], strides = [1, 1]} : vector<1x38xf32> to vector<1x36xf32>
    %cst_111 = arith.constant dense<0.000000e+00> : vector<8x36xf32>
    %142 = tpu.matmul %140, %141, %cst_111 {dimension_numbers = #tpu.dot_dimension_numbers<[1], [0], [0], [1], [0, 0, 1, 1], [], []>} : vector<8x1xf32>, vector<1x36xf32>, vector<8x36xf32> -> vector<8x36xf32>
    %143 = arith.addf %138, %142 : vector<8x36xf32>
    %c2_112 = arith.constant 2 : index
    %c0_113 = arith.constant 0 : index
    %c0_114 = arith.constant 0 : index
    %144 = vector.load %arg3[%c2_112, %c0_113, %c0_114] : memref<3x8x1xf32, #tpu.memory_space<vmem>>, vector<1x8x1xf32>
    %145 = vector.shape_cast %144 : vector<1x8x1xf32> to vector<8x1xf32>
    %146 = vector.extract_strided_slice %132 {offsets = [0, 2], sizes = [1, 36], strides = [1, 1]} : vector<1x38xf32> to vector<1x36xf32>
    %cst_115 = arith.constant dense<0.000000e+00> : vector<8x36xf32>
    %147 = tpu.matmul %145, %146, %cst_115 {dimension_numbers = #tpu.dot_dimension_numbers<[1], [0], [0], [1], [0, 0, 1, 1], [], []>} : vector<8x1xf32>, vector<1x36xf32>, vector<8x36xf32> -> vector<8x36xf32>
    %148 = arith.addf %143, %147 : vector<8x36xf32>
    %c0_116 = arith.constant 0 : index
    %c0_117 = arith.constant 0 : index
    %149 = vector.load %arg4[%c0_116, %c0_117] : memref<8x1xf32, #tpu.memory_space<vmem>>, vector<8x1xf32>
    %150 = vector.broadcast %149 : vector<8x1xf32> to vector<8x36xf32>
    %151 = arith.mulf %148, %150 : vector<8x36xf32>
    %c0_118 = arith.constant 0 : index
    %c0_119 = arith.constant 0 : index
    %152 = vector.load %arg5[%c0_118, %c0_119] : memref<8x1xf32, #tpu.memory_space<vmem>>, vector<8x1xf32>
    %153 = vector.broadcast %152 : vector<8x1xf32> to vector<8x36xf32>
    %154 = arith.addf %151, %153 : vector<8x36xf32>
    %cst_120 = arith.constant 0.000000e+00 : f32
    %155 = vector.broadcast %cst_120 : f32 to vector<8x36xf32>
    %156 = arith.maximumf %154, %155 : vector<8x36xf32>
    %157 = vector.broadcast %0 : vector<1x36xf32> to vector<8x36xf32>
    %158 = arith.mulf %156, %157 : vector<8x36xf32>
    %c0_121 = arith.constant 0 : index
    %c1_122 = arith.constant 1 : index
    %159 = vector.load %arg23[%c0_121, %c1_122] : memref<16x38xf32, #tpu.memory_space<vmem>>, vector<8x36xf32>
    tpu.vector_store %arg23[%c0_121, %c1_122], %158 {strides = array<i32>} : memref<16x38xf32, #tpu.memory_space<vmem>>, vector<8x36xf32>,
    %c0_123 = arith.constant 0 : index
    %c0_124 = arith.constant 0 : index
    %160 = vector.load %arg23[%c0_123, %c0_124] : memref<16x38xf32, #tpu.memory_space<vmem>>, vector<8x38xf32>
    %cst_125 = arith.constant 0.000000e+00 : f32
    %161 = vector.broadcast %cst_125 : f32 to vector<16x36xf32>
    %c0_126 = arith.constant 0 : index
    %c0_127 = arith.constant 0 : index
    %c0_128 = arith.constant 0 : index
    %162 = vector.load %arg6[%c0_126, %c0_127, %c0_128] : memref<3x16x8xf32, #tpu.memory_space<vmem>>, vector<1x16x8xf32>
    %163 = vector.shape_cast %162 : vector<1x16x8xf32> to vector<16x8xf32>
    %164 = vector.extract_strided_slice %160 {offsets = [0, 0], sizes = [8, 36], strides = [1, 1]} : vector<8x38xf32> to vector<8x36xf32>
    %cst_129 = arith.constant dense<0.000000e+00> : vector<16x36xf32>
    %165 = tpu.matmul %163, %164, %cst_129 {dimension_numbers = #tpu.dot_dimension_numbers<[1], [0], [0], [1], [0, 0, 1, 1], [], []>} : vector<16x8xf32>, vector<8x36xf32>, vector<16x36xf32> -> vector<16x36xf32>
    %166 = arith.addf %161, %165 : vector<16x36xf32>
    %c1_130 = arith.constant 1 : index
    %c0_131 = arith.constant 0 : index
    %c0_132 = arith.constant 0 : index
    %167 = vector.load %arg6[%c1_130, %c0_131, %c0_132] : memref<3x16x8xf32, #tpu.memory_space<vmem>>, vector<1x16x8xf32>
    %168 = vector.shape_cast %167 : vector<1x16x8xf32> to vector<16x8xf32>
    %169 = vector.extract_strided_slice %160 {offsets = [0, 1], sizes = [8, 36], strides = [1, 1]} : vector<8x38xf32> to vector<8x36xf32>
    %cst_133 = arith.constant dense<0.000000e+00> : vector<16x36xf32>
    %170 = tpu.matmul %168, %169, %cst_133 {dimension_numbers = #tpu.dot_dimension_numbers<[1], [0], [0], [1], [0, 0, 1, 1], [], []>} : vector<16x8xf32>, vector<8x36xf32>, vector<16x36xf32> -> vector<16x36xf32>
    %171 = arith.addf %166, %170 : vector<16x36xf32>
    %c2_134 = arith.constant 2 : index
    %c0_135 = arith.constant 0 : index
    %c0_136 = arith.constant 0 : index
    %172 = vector.load %arg6[%c2_134, %c0_135, %c0_136] : memref<3x16x8xf32, #tpu.memory_space<vmem>>, vector<1x16x8xf32>
    %173 = vector.shape_cast %172 : vector<1x16x8xf32> to vector<16x8xf32>
    %174 = vector.extract_strided_slice %160 {offsets = [0, 2], sizes = [8, 36], strides = [1, 1]} : vector<8x38xf32> to vector<8x36xf32>
    %cst_137 = arith.constant dense<0.000000e+00> : vector<16x36xf32>
    %175 = tpu.matmul %173, %174, %cst_137 {dimension_numbers = #tpu.dot_dimension_numbers<[1], [0], [0], [1], [0, 0, 1, 1], [], []>} : vector<16x8xf32>, vector<8x36xf32>, vector<16x36xf32> -> vector<16x36xf32>
    %176 = arith.addf %171, %175 : vector<16x36xf32>
    %c0_138 = arith.constant 0 : index
    %c0_139 = arith.constant 0 : index
    %177 = vector.load %arg7[%c0_138, %c0_139] : memref<16x1xf32, #tpu.memory_space<vmem>>, vector<16x1xf32>
    %178 = vector.broadcast %177 : vector<16x1xf32> to vector<16x36xf32>
    %179 = arith.mulf %176, %178 : vector<16x36xf32>
    %c0_140 = arith.constant 0 : index
    %c0_141 = arith.constant 0 : index
    %180 = vector.load %arg8[%c0_140, %c0_141] : memref<16x1xf32, #tpu.memory_space<vmem>>, vector<16x1xf32>
    %181 = vector.broadcast %180 : vector<16x1xf32> to vector<16x36xf32>
    %182 = arith.addf %179, %181 : vector<16x36xf32>
    %cst_142 = arith.constant 0.000000e+00 : f32
    %183 = vector.broadcast %cst_142 : f32 to vector<16x36xf32>
    %184 = arith.maximumf %182, %183 : vector<16x36xf32>
    %185 = vector.broadcast %0 : vector<1x36xf32> to vector<16x36xf32>
    %186 = arith.mulf %184, %185 : vector<16x36xf32>
    %c0_143 = arith.constant 0 : index
    %c1_144 = arith.constant 1 : index
    %187 = vector.load %arg23[%c0_143, %c1_144] : memref<16x38xf32, #tpu.memory_space<vmem>>, vector<16x36xf32>
    tpu.vector_store %arg23[%c0_143, %c1_144], %186 {strides = array<i32>} : memref<16x38xf32, #tpu.memory_space<vmem>>, vector<16x36xf32>,
    %c0_145 = arith.constant 0 : index
    %c0_146 = arith.constant 0 : index
    %188 = vector.load %arg23[%c0_145, %c0_146] : memref<16x38xf32, #tpu.memory_space<vmem>>, vector<16x38xf32>
    %cst_147 = arith.constant 0.000000e+00 : f32
    %189 = vector.broadcast %cst_147 : f32 to vector<16x36xf32>
    %c0_148 = arith.constant 0 : index
    %c0_149 = arith.constant 0 : index
    %c0_150 = arith.constant 0 : index
    %190 = vector.load %arg9[%c0_148, %c0_149, %c0_150] : memref<3x16x16xf32, #tpu.memory_space<vmem>>, vector<1x16x16xf32>
    %191 = vector.shape_cast %190 : vector<1x16x16xf32> to vector<16x16xf32>
    %192 = vector.extract_strided_slice %188 {offsets = [0, 0], sizes = [16, 36], strides = [1, 1]} : vector<16x38xf32> to vector<16x36xf32>
    %cst_151 = arith.constant dense<0.000000e+00> : vector<16x36xf32>
    %193 = tpu.matmul %191, %192, %cst_151 {dimension_numbers = #tpu.dot_dimension_numbers<[1], [0], [0], [1], [0, 0, 1, 1], [], []>} : vector<16x16xf32>, vector<16x36xf32>, vector<16x36xf32> -> vector<16x36xf32>
    %194 = arith.addf %189, %193 : vector<16x36xf32>
    %c1_152 = arith.constant 1 : index
    %c0_153 = arith.constant 0 : index
    %c0_154 = arith.constant 0 : index
    %195 = vector.load %arg9[%c1_152, %c0_153, %c0_154] : memref<3x16x16xf32, #tpu.memory_space<vmem>>, vector<1x16x16xf32>
    %196 = vector.shape_cast %195 : vector<1x16x16xf32> to vector<16x16xf32>
    %197 = vector.extract_strided_slice %188 {offsets = [0, 1], sizes = [16, 36], strides = [1, 1]} : vector<16x38xf32> to vector<16x36xf32>
    %cst_155 = arith.constant dense<0.000000e+00> : vector<16x36xf32>
    %198 = tpu.matmul %196, %197, %cst_155 {dimension_numbers = #tpu.dot_dimension_numbers<[1], [0], [0], [1], [0, 0, 1, 1], [], []>} : vector<16x16xf32>, vector<16x36xf32>, vector<16x36xf32> -> vector<16x36xf32>
    %199 = arith.addf %194, %198 : vector<16x36xf32>
    %c2_156 = arith.constant 2 : index
    %c0_157 = arith.constant 0 : index
    %c0_158 = arith.constant 0 : index
    %200 = vector.load %arg9[%c2_156, %c0_157, %c0_158] : memref<3x16x16xf32, #tpu.memory_space<vmem>>, vector<1x16x16xf32>
    %201 = vector.shape_cast %200 : vector<1x16x16xf32> to vector<16x16xf32>
    %202 = vector.extract_strided_slice %188 {offsets = [0, 2], sizes = [16, 36], strides = [1, 1]} : vector<16x38xf32> to vector<16x36xf32>
    %cst_159 = arith.constant dense<0.000000e+00> : vector<16x36xf32>
    %203 = tpu.matmul %201, %202, %cst_159 {dimension_numbers = #tpu.dot_dimension_numbers<[1], [0], [0], [1], [0, 0, 1, 1], [], []>} : vector<16x16xf32>, vector<16x36xf32>, vector<16x36xf32> -> vector<16x36xf32>
    %204 = arith.addf %199, %203 : vector<16x36xf32>
    %c0_160 = arith.constant 0 : index
    %c0_161 = arith.constant 0 : index
    %205 = vector.load %arg10[%c0_160, %c0_161] : memref<16x1xf32, #tpu.memory_space<vmem>>, vector<16x1xf32>
    %206 = vector.broadcast %205 : vector<16x1xf32> to vector<16x36xf32>
    %207 = arith.mulf %204, %206 : vector<16x36xf32>
    %c0_162 = arith.constant 0 : index
    %c0_163 = arith.constant 0 : index
    %208 = vector.load %arg11[%c0_162, %c0_163] : memref<16x1xf32, #tpu.memory_space<vmem>>, vector<16x1xf32>
    %209 = vector.broadcast %208 : vector<16x1xf32> to vector<16x36xf32>
    %210 = arith.addf %207, %209 : vector<16x36xf32>
    %cst_164 = arith.constant 0.000000e+00 : f32
    %211 = vector.broadcast %cst_164 : f32 to vector<16x36xf32>
    %212 = arith.maximumf %210, %211 : vector<16x36xf32>
    %213 = vector.broadcast %0 : vector<1x36xf32> to vector<16x36xf32>
    %214 = arith.mulf %212, %213 : vector<16x36xf32>
    %c0_165 = arith.constant 0 : index
    %c1_166 = arith.constant 1 : index
    %215 = vector.load %arg23[%c0_165, %c1_166] : memref<16x38xf32, #tpu.memory_space<vmem>>, vector<16x36xf32>
    tpu.vector_store %arg23[%c0_165, %c1_166], %214 {strides = array<i32>} : memref<16x38xf32, #tpu.memory_space<vmem>>, vector<16x36xf32>,
    %c0_167 = arith.constant 0 : index
    %c0_168 = arith.constant 0 : index
    %216 = vector.load %arg23[%c0_167, %c0_168] : memref<16x38xf32, #tpu.memory_space<vmem>>, vector<16x38xf32>
    %cst_169 = arith.constant 0.000000e+00 : f32
    %217 = vector.broadcast %cst_169 : f32 to vector<16x36xf32>
    %c0_170 = arith.constant 0 : index
    %c0_171 = arith.constant 0 : index
    %c0_172 = arith.constant 0 : index
    %218 = vector.load %arg12[%c0_170, %c0_171, %c0_172] : memref<3x16x16xf32, #tpu.memory_space<vmem>>, vector<1x16x16xf32>
    %219 = vector.shape_cast %218 : vector<1x16x16xf32> to vector<16x16xf32>
    %220 = vector.extract_strided_slice %216 {offsets = [0, 0], sizes = [16, 36], strides = [1, 1]} : vector<16x38xf32> to vector<16x36xf32>
    %cst_173 = arith.constant dense<0.000000e+00> : vector<16x36xf32>
    %221 = tpu.matmul %219, %220, %cst_173 {dimension_numbers = #tpu.dot_dimension_numbers<[1], [0], [0], [1], [0, 0, 1, 1], [], []>} : vector<16x16xf32>, vector<16x36xf32>, vector<16x36xf32> -> vector<16x36xf32>
    %222 = arith.addf %217, %221 : vector<16x36xf32>
    %c1_174 = arith.constant 1 : index
    %c0_175 = arith.constant 0 : index
    %c0_176 = arith.constant 0 : index
    %223 = vector.load %arg12[%c1_174, %c0_175, %c0_176] : memref<3x16x16xf32, #tpu.memory_space<vmem>>, vector<1x16x16xf32>
    %224 = vector.shape_cast %223 : vector<1x16x16xf32> to vector<16x16xf32>
    %225 = vector.extract_strided_slice %216 {offsets = [0, 1], sizes = [16, 36], strides = [1, 1]} : vector<16x38xf32> to vector<16x36xf32>
    %cst_177 = arith.constant dense<0.000000e+00> : vector<16x36xf32>
    %226 = tpu.matmul %224, %225, %cst_177 {dimension_numbers = #tpu.dot_dimension_numbers<[1], [0], [0], [1], [0, 0, 1, 1], [], []>} : vector<16x16xf32>, vector<16x36xf32>, vector<16x36xf32> -> vector<16x36xf32>
    %227 = arith.addf %222, %226 : vector<16x36xf32>
    %c2_178 = arith.constant 2 : index
    %c0_179 = arith.constant 0 : index
    %c0_180 = arith.constant 0 : index
    %228 = vector.load %arg12[%c2_178, %c0_179, %c0_180] : memref<3x16x16xf32, #tpu.memory_space<vmem>>, vector<1x16x16xf32>
    %229 = vector.shape_cast %228 : vector<1x16x16xf32> to vector<16x16xf32>
    %230 = vector.extract_strided_slice %216 {offsets = [0, 2], sizes = [16, 36], strides = [1, 1]} : vector<16x38xf32> to vector<16x36xf32>
    %cst_181 = arith.constant dense<0.000000e+00> : vector<16x36xf32>
    %231 = tpu.matmul %229, %230, %cst_181 {dimension_numbers = #tpu.dot_dimension_numbers<[1], [0], [0], [1], [0, 0, 1, 1], [], []>} : vector<16x16xf32>, vector<16x36xf32>, vector<16x36xf32> -> vector<16x36xf32>
    %232 = arith.addf %227, %231 : vector<16x36xf32>
    %c0_182 = arith.constant 0 : index
    %c0_183 = arith.constant 0 : index
    %233 = vector.load %arg13[%c0_182, %c0_183] : memref<16x1xf32, #tpu.memory_space<vmem>>, vector<16x1xf32>
    %234 = vector.broadcast %233 : vector<16x1xf32> to vector<16x36xf32>
    %235 = arith.mulf %232, %234 : vector<16x36xf32>
    %c0_184 = arith.constant 0 : index
    %c0_185 = arith.constant 0 : index
    %236 = vector.load %arg14[%c0_184, %c0_185] : memref<16x1xf32, #tpu.memory_space<vmem>>, vector<16x1xf32>
    %237 = vector.broadcast %236 : vector<16x1xf32> to vector<16x36xf32>
    %238 = arith.addf %235, %237 : vector<16x36xf32>
    %cst_186 = arith.constant 0.000000e+00 : f32
    %239 = vector.broadcast %cst_186 : f32 to vector<16x36xf32>
    %240 = arith.maximumf %238, %239 : vector<16x36xf32>
    %241 = vector.broadcast %0 : vector<1x36xf32> to vector<16x36xf32>
    %242 = arith.mulf %240, %241 : vector<16x36xf32>
    %243 = vector.extract_strided_slice %242 {offsets = [0, 1], sizes = [16, 16], strides = [1, 1]} : vector<16x36xf32> to vector<16x16xf32>
    %cst_187 = arith.constant dense<0.000000e+00> : vector<16x128xf32>
    %244 = tpu.matmul %243, %1, %cst_187 {dimension_numbers = #tpu.dot_dimension_numbers<[0], [0], [1], [1], [0, 1, 1, 1], [], []>} : vector<16x16xf32>, vector<16x128xf32>, vector<16x128xf32> -> vector<16x128xf32>
    %245 = vector.broadcast %2 : vector<1x128xf32> to vector<16x128xf32>
    %246 = arith.addf %244, %245 : vector<16x128xf32>
    %c16 = arith.constant 16 : index
    %c0_188 = arith.constant 0 : index
    %c0_189 = arith.constant 0 : index
    %247 = vector.load %arg24[%c16, %c0_188, %c0_189] : memref<32x2x128xf32, #tpu.memory_space<vmem>>, vector<16x1x128xf32>
    %248 = vector.shape_cast %247 : vector<16x1x128xf32> to vector<16x128xf32>
    %249 = vector.shape_cast %246 : vector<16x128xf32> to vector<16x1x128xf32>
    tpu.vector_store %arg24[%c16, %c0_188, %c0_189], %249 {strides = array<i32>} : memref<32x2x128xf32, #tpu.memory_space<vmem>>, vector<16x1x128xf32>,
    %250 = vector.extract_strided_slice %242 {offsets = [0, 19], sizes = [16, 16], strides = [1, 1]} : vector<16x36xf32> to vector<16x16xf32>
    %cst_190 = arith.constant dense<0.000000e+00> : vector<16x128xf32>
    %251 = tpu.matmul %250, %1, %cst_190 {dimension_numbers = #tpu.dot_dimension_numbers<[0], [0], [1], [1], [0, 1, 1, 1], [], []>} : vector<16x16xf32>, vector<16x128xf32>, vector<16x128xf32> -> vector<16x128xf32>
    %252 = vector.broadcast %2 : vector<1x128xf32> to vector<16x128xf32>
    %253 = arith.addf %251, %252 : vector<16x128xf32>
    %c16_191 = arith.constant 16 : index
    %c1_192 = arith.constant 1 : index
    %c0_193 = arith.constant 0 : index
    %254 = vector.load %arg24[%c16_191, %c1_192, %c0_193] : memref<32x2x128xf32, #tpu.memory_space<vmem>>, vector<16x1x128xf32>
    %255 = vector.shape_cast %254 : vector<16x1x128xf32> to vector<16x128xf32>
    %256 = vector.shape_cast %253 : vector<16x128xf32> to vector<16x1x128xf32>
    tpu.vector_store %arg24[%c16_191, %c1_192, %c0_193], %256 {strides = array<i32>} : memref<32x2x128xf32, #tpu.memory_space<vmem>>, vector<16x1x128xf32>,
    %c0_194 = arith.constant 0 : index
    %c0_195 = arith.constant 0 : index
    %257 = vector.load %arg2[%c0_194, %c0_195] : memref<1x128xf32, #tpu.memory_space<vmem>>, vector<1x128xf32>
    %cst_196 = arith.constant 1.000000e+00 : f32
    %258 = vector.broadcast %cst_196 : f32 to vector<1x128xf32>
    %259 = arith.subf %258, %257 : vector<1x128xf32>
    %c0_197 = arith.constant 0 : index
    %c0_198 = arith.constant 0 : index
    %260 = vector.load %arg16[%c0_197, %c0_198] : memref<32x128xf32, #tpu.memory_space<vmem>>, vector<32x128xf32>
    %cst_199 = arith.constant 0.000000e+00 : f32
    %261 = vector.broadcast %cst_199 : f32 to vector<2x32xf32>
    %cst_200 = arith.constant 0.000000e+00 : f32
    %262 = vector.broadcast %cst_200 : f32 to vector<2x32xf32>
    %c0_201 = arith.constant 0 : index
    %c0_202 = arith.constant 0 : index
    %c0_203 = arith.constant 0 : index
    %263 = vector.load %arg24[%c0_201, %c0_202, %c0_203] : memref<32x2x128xf32, #tpu.memory_space<vmem>>, vector<1x2x128xf32>
    %264 = vector.shape_cast %263 : vector<1x2x128xf32> to vector<2x128xf32>
    %265 = vector.broadcast %257 : vector<1x128xf32> to vector<2x128xf32>
    %266 = arith.mulf %264, %265 : vector<2x128xf32>
    %c31 = arith.constant 31 : index
    %c0_204 = arith.constant 0 : index
    %c0_205 = arith.constant 0 : index
    %267 = vector.load %arg24[%c31, %c0_204, %c0_205] : memref<32x2x128xf32, #tpu.memory_space<vmem>>, vector<1x2x128xf32>
    %268 = vector.shape_cast %267 : vector<1x2x128xf32> to vector<2x128xf32>
    %269 = vector.broadcast %259 : vector<1x128xf32> to vector<2x128xf32>
    %270 = arith.mulf %268, %269 : vector<2x128xf32>
    %271 = arith.addf %266, %270 : vector<2x128xf32>
    %cst_206 = arith.constant dense<0.000000e+00> : vector<2x128xf32>
    %272 = tpu.matmul %261, %260, %cst_206 {dimension_numbers = #tpu.dot_dimension_numbers<[1], [0], [0], [1], [0, 0, 1, 1], [], []>} : vector<2x32xf32>, vector<32x128xf32>, vector<2x128xf32> -> vector<2x128xf32>
    %273 = arith.addf %271, %272 : vector<2x128xf32>
    %274 = vector.extract_strided_slice %273 {offsets = [0, 0], sizes = [2, 32], strides = [1, 1]} : vector<2x128xf32> to vector<2x32xf32>
    %275 = arith.negf %274 : vector<2x32xf32>
    %276 = math.exp %275 : vector<2x32xf32>
    %cst_207 = arith.constant 1.000000e+00 : f32
    %277 = vector.broadcast %cst_207 : f32 to vector<2x32xf32>
    %278 = arith.addf %277, %276 : vector<2x32xf32>
    %279 = arith.divf %277, %278 : vector<2x32xf32>
    %280 = vector.extract_strided_slice %273 {offsets = [0, 32], sizes = [2, 32], strides = [1, 1]} : vector<2x128xf32> to vector<2x32xf32>
    %281 = arith.negf %280 : vector<2x32xf32>
    %282 = math.exp %281 : vector<2x32xf32>
    %cst_208 = arith.constant 1.000000e+00 : f32
    %283 = vector.broadcast %cst_208 : f32 to vector<2x32xf32>
    %284 = arith.addf %283, %282 : vector<2x32xf32>
    %285 = arith.divf %283, %284 : vector<2x32xf32>
    %286 = vector.extract_strided_slice %273 {offsets = [0, 64], sizes = [2, 32], strides = [1, 1]} : vector<2x128xf32> to vector<2x32xf32>
    %287 = math.tanh %286 : vector<2x32xf32>
    %288 = vector.extract_strided_slice %273 {offsets = [0, 96], sizes = [2, 32], strides = [1, 1]} : vector<2x128xf32> to vector<2x32xf32>
    %289 = arith.negf %288 : vector<2x32xf32>
    %290 = math.exp %289 : vector<2x32xf32>
    %cst_209 = arith.constant 1.000000e+00 : f32
    %291 = vector.broadcast %cst_209 : f32 to vector<2x32xf32>
    %292 = arith.addf %291, %290 : vector<2x32xf32>
    %293 = arith.divf %291, %292 : vector<2x32xf32>
    %294 = arith.mulf %285, %262 : vector<2x32xf32>
    %295 = arith.mulf %279, %287 : vector<2x32xf32>
    %296 = arith.addf %294, %295 : vector<2x32xf32>
    %297 = math.tanh %296 : vector<2x32xf32>
    %298 = arith.mulf %293, %297 : vector<2x32xf32>
    %c1_210 = arith.constant 1 : index
    %c0_211 = arith.constant 0 : index
    %c0_212 = arith.constant 0 : index
    %299 = vector.load %arg24[%c1_210, %c0_211, %c0_212] : memref<32x2x128xf32, #tpu.memory_space<vmem>>, vector<1x2x128xf32>
    %300 = vector.shape_cast %299 : vector<1x2x128xf32> to vector<2x128xf32>
    %301 = vector.broadcast %257 : vector<1x128xf32> to vector<2x128xf32>
    %302 = arith.mulf %300, %301 : vector<2x128xf32>
    %c30 = arith.constant 30 : index
    %c0_213 = arith.constant 0 : index
    %c0_214 = arith.constant 0 : index
    %303 = vector.load %arg24[%c30, %c0_213, %c0_214] : memref<32x2x128xf32, #tpu.memory_space<vmem>>, vector<1x2x128xf32>
    %304 = vector.shape_cast %303 : vector<1x2x128xf32> to vector<2x128xf32>
    %305 = vector.broadcast %259 : vector<1x128xf32> to vector<2x128xf32>
    %306 = arith.mulf %304, %305 : vector<2x128xf32>
    %307 = arith.addf %302, %306 : vector<2x128xf32>
    %cst_215 = arith.constant dense<0.000000e+00> : vector<2x128xf32>
    %308 = tpu.matmul %298, %260, %cst_215 {dimension_numbers = #tpu.dot_dimension_numbers<[1], [0], [0], [1], [0, 0, 1, 1], [], []>} : vector<2x32xf32>, vector<32x128xf32>, vector<2x128xf32> -> vector<2x128xf32>
    %309 = arith.addf %307, %308 : vector<2x128xf32>
    %310 = vector.extract_strided_slice %309 {offsets = [0, 0], sizes = [2, 32], strides = [1, 1]} : vector<2x128xf32> to vector<2x32xf32>
    %311 = arith.negf %310 : vector<2x32xf32>
    %312 = math.exp %311 : vector<2x32xf32>
    %cst_216 = arith.constant 1.000000e+00 : f32
    %313 = vector.broadcast %cst_216 : f32 to vector<2x32xf32>
    %314 = arith.addf %313, %312 : vector<2x32xf32>
    %315 = arith.divf %313, %314 : vector<2x32xf32>
    %316 = vector.extract_strided_slice %309 {offsets = [0, 32], sizes = [2, 32], strides = [1, 1]} : vector<2x128xf32> to vector<2x32xf32>
    %317 = arith.negf %316 : vector<2x32xf32>
    %318 = math.exp %317 : vector<2x32xf32>
    %cst_217 = arith.constant 1.000000e+00 : f32
    %319 = vector.broadcast %cst_217 : f32 to vector<2x32xf32>
    %320 = arith.addf %319, %318 : vector<2x32xf32>
    %321 = arith.divf %319, %320 : vector<2x32xf32>
    %322 = vector.extract_strided_slice %309 {offsets = [0, 64], sizes = [2, 32], strides = [1, 1]} : vector<2x128xf32> to vector<2x32xf32>
    %323 = math.tanh %322 : vector<2x32xf32>
    %324 = vector.extract_strided_slice %309 {offsets = [0, 96], sizes = [2, 32], strides = [1, 1]} : vector<2x128xf32> to vector<2x32xf32>
    %325 = arith.negf %324 : vector<2x32xf32>
    %326 = math.exp %325 : vector<2x32xf32>
    %cst_218 = arith.constant 1.000000e+00 : f32
    %327 = vector.broadcast %cst_218 : f32 to vector<2x32xf32>
    %328 = arith.addf %327, %326 : vector<2x32xf32>
    %329 = arith.divf %327, %328 : vector<2x32xf32>
    %330 = arith.mulf %321, %296 : vector<2x32xf32>
    %331 = arith.mulf %315, %323 : vector<2x32xf32>
    %332 = arith.addf %330, %331 : vector<2x32xf32>
    %333 = math.tanh %332 : vector<2x32xf32>
    %334 = arith.mulf %329, %333 : vector<2x32xf32>
    %c2_219 = arith.constant 2 : index
    %c0_220 = arith.constant 0 : index
    %c0_221 = arith.constant 0 : index
    %335 = vector.load %arg24[%c2_219, %c0_220, %c0_221] : memref<32x2x128xf32, #tpu.memory_space<vmem>>, vector<1x2x128xf32>
    %336 = vector.shape_cast %335 : vector<1x2x128xf32> to vector<2x128xf32>
    %337 = vector.broadcast %257 : vector<1x128xf32> to vector<2x128xf32>
    %338 = arith.mulf %336, %337 : vector<2x128xf32>
    %c29 = arith.constant 29 : index
    %c0_222 = arith.constant 0 : index
    %c0_223 = arith.constant 0 : index
    %339 = vector.load %arg24[%c29, %c0_222, %c0_223] : memref<32x2x128xf32, #tpu.memory_space<vmem>>, vector<1x2x128xf32>
    %340 = vector.shape_cast %339 : vector<1x2x128xf32> to vector<2x128xf32>
    %341 = vector.broadcast %259 : vector<1x128xf32> to vector<2x128xf32>
    %342 = arith.mulf %340, %341 : vector<2x128xf32>
    %343 = arith.addf %338, %342 : vector<2x128xf32>
    %cst_224 = arith.constant dense<0.000000e+00> : vector<2x128xf32>
    %344 = tpu.matmul %334, %260, %cst_224 {dimension_numbers = #tpu.dot_dimension_numbers<[1], [0], [0], [1], [0, 0, 1, 1], [], []>} : vector<2x32xf32>, vector<32x128xf32>, vector<2x128xf32> -> vector<2x128xf32>
    %345 = arith.addf %343, %344 : vector<2x128xf32>
    %346 = vector.extract_strided_slice %345 {offsets = [0, 0], sizes = [2, 32], strides = [1, 1]} : vector<2x128xf32> to vector<2x32xf32>
    %347 = arith.negf %346 : vector<2x32xf32>
    %348 = math.exp %347 : vector<2x32xf32>
    %cst_225 = arith.constant 1.000000e+00 : f32
    %349 = vector.broadcast %cst_225 : f32 to vector<2x32xf32>
    %350 = arith.addf %349, %348 : vector<2x32xf32>
    %351 = arith.divf %349, %350 : vector<2x32xf32>
    %352 = vector.extract_strided_slice %345 {offsets = [0, 32], sizes = [2, 32], strides = [1, 1]} : vector<2x128xf32> to vector<2x32xf32>
    %353 = arith.negf %352 : vector<2x32xf32>
    %354 = math.exp %353 : vector<2x32xf32>
    %cst_226 = arith.constant 1.000000e+00 : f32
    %355 = vector.broadcast %cst_226 : f32 to vector<2x32xf32>
    %356 = arith.addf %355, %354 : vector<2x32xf32>
    %357 = arith.divf %355, %356 : vector<2x32xf32>
    %358 = vector.extract_strided_slice %345 {offsets = [0, 64], sizes = [2, 32], strides = [1, 1]} : vector<2x128xf32> to vector<2x32xf32>
    %359 = math.tanh %358 : vector<2x32xf32>
    %360 = vector.extract_strided_slice %345 {offsets = [0, 96], sizes = [2, 32], strides = [1, 1]} : vector<2x128xf32> to vector<2x32xf32>
    %361 = arith.negf %360 : vector<2x32xf32>
    %362 = math.exp %361 : vector<2x32xf32>
    %cst_227 = arith.constant 1.000000e+00 : f32
    %363 = vector.broadcast %cst_227 : f32 to vector<2x32xf32>
    %364 = arith.addf %363, %362 : vector<2x32xf32>
    %365 = arith.divf %363, %364 : vector<2x32xf32>
    %366 = arith.mulf %357, %332 : vector<2x32xf32>
    %367 = arith.mulf %351, %359 : vector<2x32xf32>
    %368 = arith.addf %366, %367 : vector<2x32xf32>
    %369 = math.tanh %368 : vector<2x32xf32>
    %370 = arith.mulf %365, %369 : vector<2x32xf32>
    %c3 = arith.constant 3 : index
    %c0_228 = arith.constant 0 : index
    %c0_229 = arith.constant 0 : index
    %371 = vector.load %arg24[%c3, %c0_228, %c0_229] : memref<32x2x128xf32, #tpu.memory_space<vmem>>, vector<1x2x128xf32>
    %372 = vector.shape_cast %371 : vector<1x2x128xf32> to vector<2x128xf32>
    %373 = vector.broadcast %257 : vector<1x128xf32> to vector<2x128xf32>
    %374 = arith.mulf %372, %373 : vector<2x128xf32>
    %c28 = arith.constant 28 : index
    %c0_230 = arith.constant 0 : index
    %c0_231 = arith.constant 0 : index
    %375 = vector.load %arg24[%c28, %c0_230, %c0_231] : memref<32x2x128xf32, #tpu.memory_space<vmem>>, vector<1x2x128xf32>
    %376 = vector.shape_cast %375 : vector<1x2x128xf32> to vector<2x128xf32>
    %377 = vector.broadcast %259 : vector<1x128xf32> to vector<2x128xf32>
    %378 = arith.mulf %376, %377 : vector<2x128xf32>
    %379 = arith.addf %374, %378 : vector<2x128xf32>
    %cst_232 = arith.constant dense<0.000000e+00> : vector<2x128xf32>
    %380 = tpu.matmul %370, %260, %cst_232 {dimension_numbers = #tpu.dot_dimension_numbers<[1], [0], [0], [1], [0, 0, 1, 1], [], []>} : vector<2x32xf32>, vector<32x128xf32>, vector<2x128xf32> -> vector<2x128xf32>
    %381 = arith.addf %379, %380 : vector<2x128xf32>
    %382 = vector.extract_strided_slice %381 {offsets = [0, 0], sizes = [2, 32], strides = [1, 1]} : vector<2x128xf32> to vector<2x32xf32>
    %383 = arith.negf %382 : vector<2x32xf32>
    %384 = math.exp %383 : vector<2x32xf32>
    %cst_233 = arith.constant 1.000000e+00 : f32
    %385 = vector.broadcast %cst_233 : f32 to vector<2x32xf32>
    %386 = arith.addf %385, %384 : vector<2x32xf32>
    %387 = arith.divf %385, %386 : vector<2x32xf32>
    %388 = vector.extract_strided_slice %381 {offsets = [0, 32], sizes = [2, 32], strides = [1, 1]} : vector<2x128xf32> to vector<2x32xf32>
    %389 = arith.negf %388 : vector<2x32xf32>
    %390 = math.exp %389 : vector<2x32xf32>
    %cst_234 = arith.constant 1.000000e+00 : f32
    %391 = vector.broadcast %cst_234 : f32 to vector<2x32xf32>
    %392 = arith.addf %391, %390 : vector<2x32xf32>
    %393 = arith.divf %391, %392 : vector<2x32xf32>
    %394 = vector.extract_strided_slice %381 {offsets = [0, 64], sizes = [2, 32], strides = [1, 1]} : vector<2x128xf32> to vector<2x32xf32>
    %395 = math.tanh %394 : vector<2x32xf32>
    %396 = vector.extract_strided_slice %381 {offsets = [0, 96], sizes = [2, 32], strides = [1, 1]} : vector<2x128xf32> to vector<2x32xf32>
    %397 = arith.negf %396 : vector<2x32xf32>
    %398 = math.exp %397 : vector<2x32xf32>
    %cst_235 = arith.constant 1.000000e+00 : f32
    %399 = vector.broadcast %cst_235 : f32 to vector<2x32xf32>
    %400 = arith.addf %399, %398 : vector<2x32xf32>
    %401 = arith.divf %399, %400 : vector<2x32xf32>
    %402 = arith.mulf %393, %368 : vector<2x32xf32>
    %403 = arith.mulf %387, %395 : vector<2x32xf32>
    %404 = arith.addf %402, %403 : vector<2x32xf32>
    %405 = math.tanh %404 : vector<2x32xf32>
    %406 = arith.mulf %401, %405 : vector<2x32xf32>
    %c4 = arith.constant 4 : index
    %c0_236 = arith.constant 0 : index
    %c0_237 = arith.constant 0 : index
    %407 = vector.load %arg24[%c4, %c0_236, %c0_237] : memref<32x2x128xf32, #tpu.memory_space<vmem>>, vector<1x2x128xf32>
    %408 = vector.shape_cast %407 : vector<1x2x128xf32> to vector<2x128xf32>
    %409 = vector.broadcast %257 : vector<1x128xf32> to vector<2x128xf32>
    %410 = arith.mulf %408, %409 : vector<2x128xf32>
    %c27 = arith.constant 27 : index
    %c0_238 = arith.constant 0 : index
    %c0_239 = arith.constant 0 : index
    %411 = vector.load %arg24[%c27, %c0_238, %c0_239] : memref<32x2x128xf32, #tpu.memory_space<vmem>>, vector<1x2x128xf32>
    %412 = vector.shape_cast %411 : vector<1x2x128xf32> to vector<2x128xf32>
    %413 = vector.broadcast %259 : vector<1x128xf32> to vector<2x128xf32>
    %414 = arith.mulf %412, %413 : vector<2x128xf32>
    %415 = arith.addf %410, %414 : vector<2x128xf32>
    %cst_240 = arith.constant dense<0.000000e+00> : vector<2x128xf32>
    %416 = tpu.matmul %406, %260, %cst_240 {dimension_numbers = #tpu.dot_dimension_numbers<[1], [0], [0], [1], [0, 0, 1, 1], [], []>} : vector<2x32xf32>, vector<32x128xf32>, vector<2x128xf32> -> vector<2x128xf32>
    %417 = arith.addf %415, %416 : vector<2x128xf32>
    %418 = vector.extract_strided_slice %417 {offsets = [0, 0], sizes = [2, 32], strides = [1, 1]} : vector<2x128xf32> to vector<2x32xf32>
    %419 = arith.negf %418 : vector<2x32xf32>
    %420 = math.exp %419 : vector<2x32xf32>
    %cst_241 = arith.constant 1.000000e+00 : f32
    %421 = vector.broadcast %cst_241 : f32 to vector<2x32xf32>
    %422 = arith.addf %421, %420 : vector<2x32xf32>
    %423 = arith.divf %421, %422 : vector<2x32xf32>
    %424 = vector.extract_strided_slice %417 {offsets = [0, 32], sizes = [2, 32], strides = [1, 1]} : vector<2x128xf32> to vector<2x32xf32>
    %425 = arith.negf %424 : vector<2x32xf32>
    %426 = math.exp %425 : vector<2x32xf32>
    %cst_242 = arith.constant 1.000000e+00 : f32
    %427 = vector.broadcast %cst_242 : f32 to vector<2x32xf32>
    %428 = arith.addf %427, %426 : vector<2x32xf32>
    %429 = arith.divf %427, %428 : vector<2x32xf32>
    %430 = vector.extract_strided_slice %417 {offsets = [0, 64], sizes = [2, 32], strides = [1, 1]} : vector<2x128xf32> to vector<2x32xf32>
    %431 = math.tanh %430 : vector<2x32xf32>
    %432 = vector.extract_strided_slice %417 {offsets = [0, 96], sizes = [2, 32], strides = [1, 1]} : vector<2x128xf32> to vector<2x32xf32>
    %433 = arith.negf %432 : vector<2x32xf32>
    %434 = math.exp %433 : vector<2x32xf32>
    %cst_243 = arith.constant 1.000000e+00 : f32
    %435 = vector.broadcast %cst_243 : f32 to vector<2x32xf32>
    %436 = arith.addf %435, %434 : vector<2x32xf32>
    %437 = arith.divf %435, %436 : vector<2x32xf32>
    %438 = arith.mulf %429, %404 : vector<2x32xf32>
    %439 = arith.mulf %423, %431 : vector<2x32xf32>
    %440 = arith.addf %438, %439 : vector<2x32xf32>
    %441 = math.tanh %440 : vector<2x32xf32>
    %442 = arith.mulf %437, %441 : vector<2x32xf32>
    %c5 = arith.constant 5 : index
    %c0_244 = arith.constant 0 : index
    %c0_245 = arith.constant 0 : index
    %443 = vector.load %arg24[%c5, %c0_244, %c0_245] : memref<32x2x128xf32, #tpu.memory_space<vmem>>, vector<1x2x128xf32>
    %444 = vector.shape_cast %443 : vector<1x2x128xf32> to vector<2x128xf32>
    %445 = vector.broadcast %257 : vector<1x128xf32> to vector<2x128xf32>
    %446 = arith.mulf %444, %445 : vector<2x128xf32>
    %c26 = arith.constant 26 : index
    %c0_246 = arith.constant 0 : index
    %c0_247 = arith.constant 0 : index
    %447 = vector.load %arg24[%c26, %c0_246, %c0_247] : memref<32x2x128xf32, #tpu.memory_space<vmem>>, vector<1x2x128xf32>
    %448 = vector.shape_cast %447 : vector<1x2x128xf32> to vector<2x128xf32>
    %449 = vector.broadcast %259 : vector<1x128xf32> to vector<2x128xf32>
    %450 = arith.mulf %448, %449 : vector<2x128xf32>
    %451 = arith.addf %446, %450 : vector<2x128xf32>
    %cst_248 = arith.constant dense<0.000000e+00> : vector<2x128xf32>
    %452 = tpu.matmul %442, %260, %cst_248 {dimension_numbers = #tpu.dot_dimension_numbers<[1], [0], [0], [1], [0, 0, 1, 1], [], []>} : vector<2x32xf32>, vector<32x128xf32>, vector<2x128xf32> -> vector<2x128xf32>
    %453 = arith.addf %451, %452 : vector<2x128xf32>
    %454 = vector.extract_strided_slice %453 {offsets = [0, 0], sizes = [2, 32], strides = [1, 1]} : vector<2x128xf32> to vector<2x32xf32>
    %455 = arith.negf %454 : vector<2x32xf32>
    %456 = math.exp %455 : vector<2x32xf32>
    %cst_249 = arith.constant 1.000000e+00 : f32
    %457 = vector.broadcast %cst_249 : f32 to vector<2x32xf32>
    %458 = arith.addf %457, %456 : vector<2x32xf32>
    %459 = arith.divf %457, %458 : vector<2x32xf32>
    %460 = vector.extract_strided_slice %453 {offsets = [0, 32], sizes = [2, 32], strides = [1, 1]} : vector<2x128xf32> to vector<2x32xf32>
    %461 = arith.negf %460 : vector<2x32xf32>
    %462 = math.exp %461 : vector<2x32xf32>
    %cst_250 = arith.constant 1.000000e+00 : f32
    %463 = vector.broadcast %cst_250 : f32 to vector<2x32xf32>
    %464 = arith.addf %463, %462 : vector<2x32xf32>
    %465 = arith.divf %463, %464 : vector<2x32xf32>
    %466 = vector.extract_strided_slice %453 {offsets = [0, 64], sizes = [2, 32], strides = [1, 1]} : vector<2x128xf32> to vector<2x32xf32>
    %467 = math.tanh %466 : vector<2x32xf32>
    %468 = vector.extract_strided_slice %453 {offsets = [0, 96], sizes = [2, 32], strides = [1, 1]} : vector<2x128xf32> to vector<2x32xf32>
    %469 = arith.negf %468 : vector<2x32xf32>
    %470 = math.exp %469 : vector<2x32xf32>
    %cst_251 = arith.constant 1.000000e+00 : f32
    %471 = vector.broadcast %cst_251 : f32 to vector<2x32xf32>
    %472 = arith.addf %471, %470 : vector<2x32xf32>
    %473 = arith.divf %471, %472 : vector<2x32xf32>
    %474 = arith.mulf %465, %440 : vector<2x32xf32>
    %475 = arith.mulf %459, %467 : vector<2x32xf32>
    %476 = arith.addf %474, %475 : vector<2x32xf32>
    %477 = math.tanh %476 : vector<2x32xf32>
    %478 = arith.mulf %473, %477 : vector<2x32xf32>
    %c6 = arith.constant 6 : index
    %c0_252 = arith.constant 0 : index
    %c0_253 = arith.constant 0 : index
    %479 = vector.load %arg24[%c6, %c0_252, %c0_253] : memref<32x2x128xf32, #tpu.memory_space<vmem>>, vector<1x2x128xf32>
    %480 = vector.shape_cast %479 : vector<1x2x128xf32> to vector<2x128xf32>
    %481 = vector.broadcast %257 : vector<1x128xf32> to vector<2x128xf32>
    %482 = arith.mulf %480, %481 : vector<2x128xf32>
    %c25 = arith.constant 25 : index
    %c0_254 = arith.constant 0 : index
    %c0_255 = arith.constant 0 : index
    %483 = vector.load %arg24[%c25, %c0_254, %c0_255] : memref<32x2x128xf32, #tpu.memory_space<vmem>>, vector<1x2x128xf32>
    %484 = vector.shape_cast %483 : vector<1x2x128xf32> to vector<2x128xf32>
    %485 = vector.broadcast %259 : vector<1x128xf32> to vector<2x128xf32>
    %486 = arith.mulf %484, %485 : vector<2x128xf32>
    %487 = arith.addf %482, %486 : vector<2x128xf32>
    %cst_256 = arith.constant dense<0.000000e+00> : vector<2x128xf32>
    %488 = tpu.matmul %478, %260, %cst_256 {dimension_numbers = #tpu.dot_dimension_numbers<[1], [0], [0], [1], [0, 0, 1, 1], [], []>} : vector<2x32xf32>, vector<32x128xf32>, vector<2x128xf32> -> vector<2x128xf32>
    %489 = arith.addf %487, %488 : vector<2x128xf32>
    %490 = vector.extract_strided_slice %489 {offsets = [0, 0], sizes = [2, 32], strides = [1, 1]} : vector<2x128xf32> to vector<2x32xf32>
    %491 = arith.negf %490 : vector<2x32xf32>
    %492 = math.exp %491 : vector<2x32xf32>
    %cst_257 = arith.constant 1.000000e+00 : f32
    %493 = vector.broadcast %cst_257 : f32 to vector<2x32xf32>
    %494 = arith.addf %493, %492 : vector<2x32xf32>
    %495 = arith.divf %493, %494 : vector<2x32xf32>
    %496 = vector.extract_strided_slice %489 {offsets = [0, 32], sizes = [2, 32], strides = [1, 1]} : vector<2x128xf32> to vector<2x32xf32>
    %497 = arith.negf %496 : vector<2x32xf32>
    %498 = math.exp %497 : vector<2x32xf32>
    %cst_258 = arith.constant 1.000000e+00 : f32
    %499 = vector.broadcast %cst_258 : f32 to vector<2x32xf32>
    %500 = arith.addf %499, %498 : vector<2x32xf32>
    %501 = arith.divf %499, %500 : vector<2x32xf32>
    %502 = vector.extract_strided_slice %489 {offsets = [0, 64], sizes = [2, 32], strides = [1, 1]} : vector<2x128xf32> to vector<2x32xf32>
    %503 = math.tanh %502 : vector<2x32xf32>
    %504 = vector.extract_strided_slice %489 {offsets = [0, 96], sizes = [2, 32], strides = [1, 1]} : vector<2x128xf32> to vector<2x32xf32>
    %505 = arith.negf %504 : vector<2x32xf32>
    %506 = math.exp %505 : vector<2x32xf32>
    %cst_259 = arith.constant 1.000000e+00 : f32
    %507 = vector.broadcast %cst_259 : f32 to vector<2x32xf32>
    %508 = arith.addf %507, %506 : vector<2x32xf32>
    %509 = arith.divf %507, %508 : vector<2x32xf32>
    %510 = arith.mulf %501, %476 : vector<2x32xf32>
    %511 = arith.mulf %495, %503 : vector<2x32xf32>
    %512 = arith.addf %510, %511 : vector<2x32xf32>
    %513 = math.tanh %512 : vector<2x32xf32>
    %514 = arith.mulf %509, %513 : vector<2x32xf32>
    %c7 = arith.constant 7 : index
    %c0_260 = arith.constant 0 : index
    %c0_261 = arith.constant 0 : index
    %515 = vector.load %arg24[%c7, %c0_260, %c0_261] : memref<32x2x128xf32, #tpu.memory_space<vmem>>, vector<1x2x128xf32>
    %516 = vector.shape_cast %515 : vector<1x2x128xf32> to vector<2x128xf32>
    %517 = vector.broadcast %257 : vector<1x128xf32> to vector<2x128xf32>
    %518 = arith.mulf %516, %517 : vector<2x128xf32>
    %c24 = arith.constant 24 : index
    %c0_262 = arith.constant 0 : index
    %c0_263 = arith.constant 0 : index
    %519 = vector.load %arg24[%c24, %c0_262, %c0_263] : memref<32x2x128xf32, #tpu.memory_space<vmem>>, vector<1x2x128xf32>
    %520 = vector.shape_cast %519 : vector<1x2x128xf32> to vector<2x128xf32>
    %521 = vector.broadcast %259 : vector<1x128xf32> to vector<2x128xf32>
    %522 = arith.mulf %520, %521 : vector<2x128xf32>
    %523 = arith.addf %518, %522 : vector<2x128xf32>
    %cst_264 = arith.constant dense<0.000000e+00> : vector<2x128xf32>
    %524 = tpu.matmul %514, %260, %cst_264 {dimension_numbers = #tpu.dot_dimension_numbers<[1], [0], [0], [1], [0, 0, 1, 1], [], []>} : vector<2x32xf32>, vector<32x128xf32>, vector<2x128xf32> -> vector<2x128xf32>
    %525 = arith.addf %523, %524 : vector<2x128xf32>
    %526 = vector.extract_strided_slice %525 {offsets = [0, 0], sizes = [2, 32], strides = [1, 1]} : vector<2x128xf32> to vector<2x32xf32>
    %527 = arith.negf %526 : vector<2x32xf32>
    %528 = math.exp %527 : vector<2x32xf32>
    %cst_265 = arith.constant 1.000000e+00 : f32
    %529 = vector.broadcast %cst_265 : f32 to vector<2x32xf32>
    %530 = arith.addf %529, %528 : vector<2x32xf32>
    %531 = arith.divf %529, %530 : vector<2x32xf32>
    %532 = vector.extract_strided_slice %525 {offsets = [0, 32], sizes = [2, 32], strides = [1, 1]} : vector<2x128xf32> to vector<2x32xf32>
    %533 = arith.negf %532 : vector<2x32xf32>
    %534 = math.exp %533 : vector<2x32xf32>
    %cst_266 = arith.constant 1.000000e+00 : f32
    %535 = vector.broadcast %cst_266 : f32 to vector<2x32xf32>
    %536 = arith.addf %535, %534 : vector<2x32xf32>
    %537 = arith.divf %535, %536 : vector<2x32xf32>
    %538 = vector.extract_strided_slice %525 {offsets = [0, 64], sizes = [2, 32], strides = [1, 1]} : vector<2x128xf32> to vector<2x32xf32>
    %539 = math.tanh %538 : vector<2x32xf32>
    %540 = vector.extract_strided_slice %525 {offsets = [0, 96], sizes = [2, 32], strides = [1, 1]} : vector<2x128xf32> to vector<2x32xf32>
    %541 = arith.negf %540 : vector<2x32xf32>
    %542 = math.exp %541 : vector<2x32xf32>
    %cst_267 = arith.constant 1.000000e+00 : f32
    %543 = vector.broadcast %cst_267 : f32 to vector<2x32xf32>
    %544 = arith.addf %543, %542 : vector<2x32xf32>
    %545 = arith.divf %543, %544 : vector<2x32xf32>
    %546 = arith.mulf %537, %512 : vector<2x32xf32>
    %547 = arith.mulf %531, %539 : vector<2x32xf32>
    %548 = arith.addf %546, %547 : vector<2x32xf32>
    %549 = math.tanh %548 : vector<2x32xf32>
    %550 = arith.mulf %545, %549 : vector<2x32xf32>
    %c8 = arith.constant 8 : index
    %c0_268 = arith.constant 0 : index
    %c0_269 = arith.constant 0 : index
    %551 = vector.load %arg24[%c8, %c0_268, %c0_269] : memref<32x2x128xf32, #tpu.memory_space<vmem>>, vector<1x2x128xf32>
    %552 = vector.shape_cast %551 : vector<1x2x128xf32> to vector<2x128xf32>
    %553 = vector.broadcast %257 : vector<1x128xf32> to vector<2x128xf32>
    %554 = arith.mulf %552, %553 : vector<2x128xf32>
    %c23 = arith.constant 23 : index
    %c0_270 = arith.constant 0 : index
    %c0_271 = arith.constant 0 : index
    %555 = vector.load %arg24[%c23, %c0_270, %c0_271] : memref<32x2x128xf32, #tpu.memory_space<vmem>>, vector<1x2x128xf32>
    %556 = vector.shape_cast %555 : vector<1x2x128xf32> to vector<2x128xf32>
    %557 = vector.broadcast %259 : vector<1x128xf32> to vector<2x128xf32>
    %558 = arith.mulf %556, %557 : vector<2x128xf32>
    %559 = arith.addf %554, %558 : vector<2x128xf32>
    %cst_272 = arith.constant dense<0.000000e+00> : vector<2x128xf32>
    %560 = tpu.matmul %550, %260, %cst_272 {dimension_numbers = #tpu.dot_dimension_numbers<[1], [0], [0], [1], [0, 0, 1, 1], [], []>} : vector<2x32xf32>, vector<32x128xf32>, vector<2x128xf32> -> vector<2x128xf32>
    %561 = arith.addf %559, %560 : vector<2x128xf32>
    %562 = vector.extract_strided_slice %561 {offsets = [0, 0], sizes = [2, 32], strides = [1, 1]} : vector<2x128xf32> to vector<2x32xf32>
    %563 = arith.negf %562 : vector<2x32xf32>
    %564 = math.exp %563 : vector<2x32xf32>
    %cst_273 = arith.constant 1.000000e+00 : f32
    %565 = vector.broadcast %cst_273 : f32 to vector<2x32xf32>
    %566 = arith.addf %565, %564 : vector<2x32xf32>
    %567 = arith.divf %565, %566 : vector<2x32xf32>
    %568 = vector.extract_strided_slice %561 {offsets = [0, 32], sizes = [2, 32], strides = [1, 1]} : vector<2x128xf32> to vector<2x32xf32>
    %569 = arith.negf %568 : vector<2x32xf32>
    %570 = math.exp %569 : vector<2x32xf32>
    %cst_274 = arith.constant 1.000000e+00 : f32
    %571 = vector.broadcast %cst_274 : f32 to vector<2x32xf32>
    %572 = arith.addf %571, %570 : vector<2x32xf32>
    %573 = arith.divf %571, %572 : vector<2x32xf32>
    %574 = vector.extract_strided_slice %561 {offsets = [0, 64], sizes = [2, 32], strides = [1, 1]} : vector<2x128xf32> to vector<2x32xf32>
    %575 = math.tanh %574 : vector<2x32xf32>
    %576 = vector.extract_strided_slice %561 {offsets = [0, 96], sizes = [2, 32], strides = [1, 1]} : vector<2x128xf32> to vector<2x32xf32>
    %577 = arith.negf %576 : vector<2x32xf32>
    %578 = math.exp %577 : vector<2x32xf32>
    %cst_275 = arith.constant 1.000000e+00 : f32
    %579 = vector.broadcast %cst_275 : f32 to vector<2x32xf32>
    %580 = arith.addf %579, %578 : vector<2x32xf32>
    %581 = arith.divf %579, %580 : vector<2x32xf32>
    %582 = arith.mulf %573, %548 : vector<2x32xf32>
    %583 = arith.mulf %567, %575 : vector<2x32xf32>
    %584 = arith.addf %582, %583 : vector<2x32xf32>
    %585 = math.tanh %584 : vector<2x32xf32>
    %586 = arith.mulf %581, %585 : vector<2x32xf32>
    %c9 = arith.constant 9 : index
    %c0_276 = arith.constant 0 : index
    %c0_277 = arith.constant 0 : index
    %587 = vector.load %arg24[%c9, %c0_276, %c0_277] : memref<32x2x128xf32, #tpu.memory_space<vmem>>, vector<1x2x128xf32>
    %588 = vector.shape_cast %587 : vector<1x2x128xf32> to vector<2x128xf32>
    %589 = vector.broadcast %257 : vector<1x128xf32> to vector<2x128xf32>
    %590 = arith.mulf %588, %589 : vector<2x128xf32>
    %c22 = arith.constant 22 : index
    %c0_278 = arith.constant 0 : index
    %c0_279 = arith.constant 0 : index
    %591 = vector.load %arg24[%c22, %c0_278, %c0_279] : memref<32x2x128xf32, #tpu.memory_space<vmem>>, vector<1x2x128xf32>
    %592 = vector.shape_cast %591 : vector<1x2x128xf32> to vector<2x128xf32>
    %593 = vector.broadcast %259 : vector<1x128xf32> to vector<2x128xf32>
    %594 = arith.mulf %592, %593 : vector<2x128xf32>
    %595 = arith.addf %590, %594 : vector<2x128xf32>
    %cst_280 = arith.constant dense<0.000000e+00> : vector<2x128xf32>
    %596 = tpu.matmul %586, %260, %cst_280 {dimension_numbers = #tpu.dot_dimension_numbers<[1], [0], [0], [1], [0, 0, 1, 1], [], []>} : vector<2x32xf32>, vector<32x128xf32>, vector<2x128xf32> -> vector<2x128xf32>
    %597 = arith.addf %595, %596 : vector<2x128xf32>
    %598 = vector.extract_strided_slice %597 {offsets = [0, 0], sizes = [2, 32], strides = [1, 1]} : vector<2x128xf32> to vector<2x32xf32>
    %599 = arith.negf %598 : vector<2x32xf32>
    %600 = math.exp %599 : vector<2x32xf32>
    %cst_281 = arith.constant 1.000000e+00 : f32
    %601 = vector.broadcast %cst_281 : f32 to vector<2x32xf32>
    %602 = arith.addf %601, %600 : vector<2x32xf32>
    %603 = arith.divf %601, %602 : vector<2x32xf32>
    %604 = vector.extract_strided_slice %597 {offsets = [0, 32], sizes = [2, 32], strides = [1, 1]} : vector<2x128xf32> to vector<2x32xf32>
    %605 = arith.negf %604 : vector<2x32xf32>
    %606 = math.exp %605 : vector<2x32xf32>
    %cst_282 = arith.constant 1.000000e+00 : f32
    %607 = vector.broadcast %cst_282 : f32 to vector<2x32xf32>
    %608 = arith.addf %607, %606 : vector<2x32xf32>
    %609 = arith.divf %607, %608 : vector<2x32xf32>
    %610 = vector.extract_strided_slice %597 {offsets = [0, 64], sizes = [2, 32], strides = [1, 1]} : vector<2x128xf32> to vector<2x32xf32>
    %611 = math.tanh %610 : vector<2x32xf32>
    %612 = vector.extract_strided_slice %597 {offsets = [0, 96], sizes = [2, 32], strides = [1, 1]} : vector<2x128xf32> to vector<2x32xf32>
    %613 = arith.negf %612 : vector<2x32xf32>
    %614 = math.exp %613 : vector<2x32xf32>
    %cst_283 = arith.constant 1.000000e+00 : f32
    %615 = vector.broadcast %cst_283 : f32 to vector<2x32xf32>
    %616 = arith.addf %615, %614 : vector<2x32xf32>
    %617 = arith.divf %615, %616 : vector<2x32xf32>
    %618 = arith.mulf %609, %584 : vector<2x32xf32>
    %619 = arith.mulf %603, %611 : vector<2x32xf32>
    %620 = arith.addf %618, %619 : vector<2x32xf32>
    %621 = math.tanh %620 : vector<2x32xf32>
    %622 = arith.mulf %617, %621 : vector<2x32xf32>
    %c10 = arith.constant 10 : index
    %c0_284 = arith.constant 0 : index
    %c0_285 = arith.constant 0 : index
    %623 = vector.load %arg24[%c10, %c0_284, %c0_285] : memref<32x2x128xf32, #tpu.memory_space<vmem>>, vector<1x2x128xf32>
    %624 = vector.shape_cast %623 : vector<1x2x128xf32> to vector<2x128xf32>
    %625 = vector.broadcast %257 : vector<1x128xf32> to vector<2x128xf32>
    %626 = arith.mulf %624, %625 : vector<2x128xf32>
    %c21 = arith.constant 21 : index
    %c0_286 = arith.constant 0 : index
    %c0_287 = arith.constant 0 : index
    %627 = vector.load %arg24[%c21, %c0_286, %c0_287] : memref<32x2x128xf32, #tpu.memory_space<vmem>>, vector<1x2x128xf32>
    %628 = vector.shape_cast %627 : vector<1x2x128xf32> to vector<2x128xf32>
    %629 = vector.broadcast %259 : vector<1x128xf32> to vector<2x128xf32>
    %630 = arith.mulf %628, %629 : vector<2x128xf32>
    %631 = arith.addf %626, %630 : vector<2x128xf32>
    %cst_288 = arith.constant dense<0.000000e+00> : vector<2x128xf32>
    %632 = tpu.matmul %622, %260, %cst_288 {dimension_numbers = #tpu.dot_dimension_numbers<[1], [0], [0], [1], [0, 0, 1, 1], [], []>} : vector<2x32xf32>, vector<32x128xf32>, vector<2x128xf32> -> vector<2x128xf32>
    %633 = arith.addf %631, %632 : vector<2x128xf32>
    %634 = vector.extract_strided_slice %633 {offsets = [0, 0], sizes = [2, 32], strides = [1, 1]} : vector<2x128xf32> to vector<2x32xf32>
    %635 = arith.negf %634 : vector<2x32xf32>
    %636 = math.exp %635 : vector<2x32xf32>
    %cst_289 = arith.constant 1.000000e+00 : f32
    %637 = vector.broadcast %cst_289 : f32 to vector<2x32xf32>
    %638 = arith.addf %637, %636 : vector<2x32xf32>
    %639 = arith.divf %637, %638 : vector<2x32xf32>
    %640 = vector.extract_strided_slice %633 {offsets = [0, 32], sizes = [2, 32], strides = [1, 1]} : vector<2x128xf32> to vector<2x32xf32>
    %641 = arith.negf %640 : vector<2x32xf32>
    %642 = math.exp %641 : vector<2x32xf32>
    %cst_290 = arith.constant 1.000000e+00 : f32
    %643 = vector.broadcast %cst_290 : f32 to vector<2x32xf32>
    %644 = arith.addf %643, %642 : vector<2x32xf32>
    %645 = arith.divf %643, %644 : vector<2x32xf32>
    %646 = vector.extract_strided_slice %633 {offsets = [0, 64], sizes = [2, 32], strides = [1, 1]} : vector<2x128xf32> to vector<2x32xf32>
    %647 = math.tanh %646 : vector<2x32xf32>
    %648 = vector.extract_strided_slice %633 {offsets = [0, 96], sizes = [2, 32], strides = [1, 1]} : vector<2x128xf32> to vector<2x32xf32>
    %649 = arith.negf %648 : vector<2x32xf32>
    %650 = math.exp %649 : vector<2x32xf32>
    %cst_291 = arith.constant 1.000000e+00 : f32
    %651 = vector.broadcast %cst_291 : f32 to vector<2x32xf32>
    %652 = arith.addf %651, %650 : vector<2x32xf32>
    %653 = arith.divf %651, %652 : vector<2x32xf32>
    %654 = arith.mulf %645, %620 : vector<2x32xf32>
    %655 = arith.mulf %639, %647 : vector<2x32xf32>
    %656 = arith.addf %654, %655 : vector<2x32xf32>
    %657 = math.tanh %656 : vector<2x32xf32>
    %658 = arith.mulf %653, %657 : vector<2x32xf32>
    %c11 = arith.constant 11 : index
    %c0_292 = arith.constant 0 : index
    %c0_293 = arith.constant 0 : index
    %659 = vector.load %arg24[%c11, %c0_292, %c0_293] : memref<32x2x128xf32, #tpu.memory_space<vmem>>, vector<1x2x128xf32>
    %660 = vector.shape_cast %659 : vector<1x2x128xf32> to vector<2x128xf32>
    %661 = vector.broadcast %257 : vector<1x128xf32> to vector<2x128xf32>
    %662 = arith.mulf %660, %661 : vector<2x128xf32>
    %c20 = arith.constant 20 : index
    %c0_294 = arith.constant 0 : index
    %c0_295 = arith.constant 0 : index
    %663 = vector.load %arg24[%c20, %c0_294, %c0_295] : memref<32x2x128xf32, #tpu.memory_space<vmem>>, vector<1x2x128xf32>
    %664 = vector.shape_cast %663 : vector<1x2x128xf32> to vector<2x128xf32>
    %665 = vector.broadcast %259 : vector<1x128xf32> to vector<2x128xf32>
    %666 = arith.mulf %664, %665 : vector<2x128xf32>
    %667 = arith.addf %662, %666 : vector<2x128xf32>
    %cst_296 = arith.constant dense<0.000000e+00> : vector<2x128xf32>
    %668 = tpu.matmul %658, %260, %cst_296 {dimension_numbers = #tpu.dot_dimension_numbers<[1], [0], [0], [1], [0, 0, 1, 1], [], []>} : vector<2x32xf32>, vector<32x128xf32>, vector<2x128xf32> -> vector<2x128xf32>
    %669 = arith.addf %667, %668 : vector<2x128xf32>
    %670 = vector.extract_strided_slice %669 {offsets = [0, 0], sizes = [2, 32], strides = [1, 1]} : vector<2x128xf32> to vector<2x32xf32>
    %671 = arith.negf %670 : vector<2x32xf32>
    %672 = math.exp %671 : vector<2x32xf32>
    %cst_297 = arith.constant 1.000000e+00 : f32
    %673 = vector.broadcast %cst_297 : f32 to vector<2x32xf32>
    %674 = arith.addf %673, %672 : vector<2x32xf32>
    %675 = arith.divf %673, %674 : vector<2x32xf32>
    %676 = vector.extract_strided_slice %669 {offsets = [0, 32], sizes = [2, 32], strides = [1, 1]} : vector<2x128xf32> to vector<2x32xf32>
    %677 = arith.negf %676 : vector<2x32xf32>
    %678 = math.exp %677 : vector<2x32xf32>
    %cst_298 = arith.constant 1.000000e+00 : f32
    %679 = vector.broadcast %cst_298 : f32 to vector<2x32xf32>
    %680 = arith.addf %679, %678 : vector<2x32xf32>
    %681 = arith.divf %679, %680 : vector<2x32xf32>
    %682 = vector.extract_strided_slice %669 {offsets = [0, 64], sizes = [2, 32], strides = [1, 1]} : vector<2x128xf32> to vector<2x32xf32>
    %683 = math.tanh %682 : vector<2x32xf32>
    %684 = vector.extract_strided_slice %669 {offsets = [0, 96], sizes = [2, 32], strides = [1, 1]} : vector<2x128xf32> to vector<2x32xf32>
    %685 = arith.negf %684 : vector<2x32xf32>
    %686 = math.exp %685 : vector<2x32xf32>
    %cst_299 = arith.constant 1.000000e+00 : f32
    %687 = vector.broadcast %cst_299 : f32 to vector<2x32xf32>
    %688 = arith.addf %687, %686 : vector<2x32xf32>
    %689 = arith.divf %687, %688 : vector<2x32xf32>
    %690 = arith.mulf %681, %656 : vector<2x32xf32>
    %691 = arith.mulf %675, %683 : vector<2x32xf32>
    %692 = arith.addf %690, %691 : vector<2x32xf32>
    %693 = math.tanh %692 : vector<2x32xf32>
    %694 = arith.mulf %689, %693 : vector<2x32xf32>
    %c12 = arith.constant 12 : index
    %c0_300 = arith.constant 0 : index
    %c0_301 = arith.constant 0 : index
    %695 = vector.load %arg24[%c12, %c0_300, %c0_301] : memref<32x2x128xf32, #tpu.memory_space<vmem>>, vector<1x2x128xf32>
    %696 = vector.shape_cast %695 : vector<1x2x128xf32> to vector<2x128xf32>
    %697 = vector.broadcast %257 : vector<1x128xf32> to vector<2x128xf32>
    %698 = arith.mulf %696, %697 : vector<2x128xf32>
    %c19 = arith.constant 19 : index
    %c0_302 = arith.constant 0 : index
    %c0_303 = arith.constant 0 : index
    %699 = vector.load %arg24[%c19, %c0_302, %c0_303] : memref<32x2x128xf32, #tpu.memory_space<vmem>>, vector<1x2x128xf32>
    %700 = vector.shape_cast %699 : vector<1x2x128xf32> to vector<2x128xf32>
    %701 = vector.broadcast %259 : vector<1x128xf32> to vector<2x128xf32>
    %702 = arith.mulf %700, %701 : vector<2x128xf32>
    %703 = arith.addf %698, %702 : vector<2x128xf32>
    %cst_304 = arith.constant dense<0.000000e+00> : vector<2x128xf32>
    %704 = tpu.matmul %694, %260, %cst_304 {dimension_numbers = #tpu.dot_dimension_numbers<[1], [0], [0], [1], [0, 0, 1, 1], [], []>} : vector<2x32xf32>, vector<32x128xf32>, vector<2x128xf32> -> vector<2x128xf32>
    %705 = arith.addf %703, %704 : vector<2x128xf32>
    %706 = vector.extract_strided_slice %705 {offsets = [0, 0], sizes = [2, 32], strides = [1, 1]} : vector<2x128xf32> to vector<2x32xf32>
    %707 = arith.negf %706 : vector<2x32xf32>
    %708 = math.exp %707 : vector<2x32xf32>
    %cst_305 = arith.constant 1.000000e+00 : f32
    %709 = vector.broadcast %cst_305 : f32 to vector<2x32xf32>
    %710 = arith.addf %709, %708 : vector<2x32xf32>
    %711 = arith.divf %709, %710 : vector<2x32xf32>
    %712 = vector.extract_strided_slice %705 {offsets = [0, 32], sizes = [2, 32], strides = [1, 1]} : vector<2x128xf32> to vector<2x32xf32>
    %713 = arith.negf %712 : vector<2x32xf32>
    %714 = math.exp %713 : vector<2x32xf32>
    %cst_306 = arith.constant 1.000000e+00 : f32
    %715 = vector.broadcast %cst_306 : f32 to vector<2x32xf32>
    %716 = arith.addf %715, %714 : vector<2x32xf32>
    %717 = arith.divf %715, %716 : vector<2x32xf32>
    %718 = vector.extract_strided_slice %705 {offsets = [0, 64], sizes = [2, 32], strides = [1, 1]} : vector<2x128xf32> to vector<2x32xf32>
    %719 = math.tanh %718 : vector<2x32xf32>
    %720 = vector.extract_strided_slice %705 {offsets = [0, 96], sizes = [2, 32], strides = [1, 1]} : vector<2x128xf32> to vector<2x32xf32>
    %721 = arith.negf %720 : vector<2x32xf32>
    %722 = math.exp %721 : vector<2x32xf32>
    %cst_307 = arith.constant 1.000000e+00 : f32
    %723 = vector.broadcast %cst_307 : f32 to vector<2x32xf32>
    %724 = arith.addf %723, %722 : vector<2x32xf32>
    %725 = arith.divf %723, %724 : vector<2x32xf32>
    %726 = arith.mulf %717, %692 : vector<2x32xf32>
    %727 = arith.mulf %711, %719 : vector<2x32xf32>
    %728 = arith.addf %726, %727 : vector<2x32xf32>
    %729 = math.tanh %728 : vector<2x32xf32>
    %730 = arith.mulf %725, %729 : vector<2x32xf32>
    %c13 = arith.constant 13 : index
    %c0_308 = arith.constant 0 : index
    %c0_309 = arith.constant 0 : index
    %731 = vector.load %arg24[%c13, %c0_308, %c0_309] : memref<32x2x128xf32, #tpu.memory_space<vmem>>, vector<1x2x128xf32>
    %732 = vector.shape_cast %731 : vector<1x2x128xf32> to vector<2x128xf32>
    %733 = vector.broadcast %257 : vector<1x128xf32> to vector<2x128xf32>
    %734 = arith.mulf %732, %733 : vector<2x128xf32>
    %c18 = arith.constant 18 : index
    %c0_310 = arith.constant 0 : index
    %c0_311 = arith.constant 0 : index
    %735 = vector.load %arg24[%c18, %c0_310, %c0_311] : memref<32x2x128xf32, #tpu.memory_space<vmem>>, vector<1x2x128xf32>
    %736 = vector.shape_cast %735 : vector<1x2x128xf32> to vector<2x128xf32>
    %737 = vector.broadcast %259 : vector<1x128xf32> to vector<2x128xf32>
    %738 = arith.mulf %736, %737 : vector<2x128xf32>
    %739 = arith.addf %734, %738 : vector<2x128xf32>
    %cst_312 = arith.constant dense<0.000000e+00> : vector<2x128xf32>
    %740 = tpu.matmul %730, %260, %cst_312 {dimension_numbers = #tpu.dot_dimension_numbers<[1], [0], [0], [1], [0, 0, 1, 1], [], []>} : vector<2x32xf32>, vector<32x128xf32>, vector<2x128xf32> -> vector<2x128xf32>
    %741 = arith.addf %739, %740 : vector<2x128xf32>
    %742 = vector.extract_strided_slice %741 {offsets = [0, 0], sizes = [2, 32], strides = [1, 1]} : vector<2x128xf32> to vector<2x32xf32>
    %743 = arith.negf %742 : vector<2x32xf32>
    %744 = math.exp %743 : vector<2x32xf32>
    %cst_313 = arith.constant 1.000000e+00 : f32
    %745 = vector.broadcast %cst_313 : f32 to vector<2x32xf32>
    %746 = arith.addf %745, %744 : vector<2x32xf32>
    %747 = arith.divf %745, %746 : vector<2x32xf32>
    %748 = vector.extract_strided_slice %741 {offsets = [0, 32], sizes = [2, 32], strides = [1, 1]} : vector<2x128xf32> to vector<2x32xf32>
    %749 = arith.negf %748 : vector<2x32xf32>
    %750 = math.exp %749 : vector<2x32xf32>
    %cst_314 = arith.constant 1.000000e+00 : f32
    %751 = vector.broadcast %cst_314 : f32 to vector<2x32xf32>
    %752 = arith.addf %751, %750 : vector<2x32xf32>
    %753 = arith.divf %751, %752 : vector<2x32xf32>
    %754 = vector.extract_strided_slice %741 {offsets = [0, 64], sizes = [2, 32], strides = [1, 1]} : vector<2x128xf32> to vector<2x32xf32>
    %755 = math.tanh %754 : vector<2x32xf32>
    %756 = vector.extract_strided_slice %741 {offsets = [0, 96], sizes = [2, 32], strides = [1, 1]} : vector<2x128xf32> to vector<2x32xf32>
    %757 = arith.negf %756 : vector<2x32xf32>
    %758 = math.exp %757 : vector<2x32xf32>
    %cst_315 = arith.constant 1.000000e+00 : f32
    %759 = vector.broadcast %cst_315 : f32 to vector<2x32xf32>
    %760 = arith.addf %759, %758 : vector<2x32xf32>
    %761 = arith.divf %759, %760 : vector<2x32xf32>
    %762 = arith.mulf %753, %728 : vector<2x32xf32>
    %763 = arith.mulf %747, %755 : vector<2x32xf32>
    %764 = arith.addf %762, %763 : vector<2x32xf32>
    %765 = math.tanh %764 : vector<2x32xf32>
    %766 = arith.mulf %761, %765 : vector<2x32xf32>
    %c14 = arith.constant 14 : index
    %c0_316 = arith.constant 0 : index
    %c0_317 = arith.constant 0 : index
    %767 = vector.load %arg24[%c14, %c0_316, %c0_317] : memref<32x2x128xf32, #tpu.memory_space<vmem>>, vector<1x2x128xf32>
    %768 = vector.shape_cast %767 : vector<1x2x128xf32> to vector<2x128xf32>
    %769 = vector.broadcast %257 : vector<1x128xf32> to vector<2x128xf32>
    %770 = arith.mulf %768, %769 : vector<2x128xf32>
    %c17 = arith.constant 17 : index
    %c0_318 = arith.constant 0 : index
    %c0_319 = arith.constant 0 : index
    %771 = vector.load %arg24[%c17, %c0_318, %c0_319] : memref<32x2x128xf32, #tpu.memory_space<vmem>>, vector<1x2x128xf32>
    %772 = vector.shape_cast %771 : vector<1x2x128xf32> to vector<2x128xf32>
    %773 = vector.broadcast %259 : vector<1x128xf32> to vector<2x128xf32>
    %774 = arith.mulf %772, %773 : vector<2x128xf32>
    %775 = arith.addf %770, %774 : vector<2x128xf32>
    %cst_320 = arith.constant dense<0.000000e+00> : vector<2x128xf32>
    %776 = tpu.matmul %766, %260, %cst_320 {dimension_numbers = #tpu.dot_dimension_numbers<[1], [0], [0], [1], [0, 0, 1, 1], [], []>} : vector<2x32xf32>, vector<32x128xf32>, vector<2x128xf32> -> vector<2x128xf32>
    %777 = arith.addf %775, %776 : vector<2x128xf32>
    %778 = vector.extract_strided_slice %777 {offsets = [0, 0], sizes = [2, 32], strides = [1, 1]} : vector<2x128xf32> to vector<2x32xf32>
    %779 = arith.negf %778 : vector<2x32xf32>
    %780 = math.exp %779 : vector<2x32xf32>
    %cst_321 = arith.constant 1.000000e+00 : f32
    %781 = vector.broadcast %cst_321 : f32 to vector<2x32xf32>
    %782 = arith.addf %781, %780 : vector<2x32xf32>
    %783 = arith.divf %781, %782 : vector<2x32xf32>
    %784 = vector.extract_strided_slice %777 {offsets = [0, 32], sizes = [2, 32], strides = [1, 1]} : vector<2x128xf32> to vector<2x32xf32>
    %785 = arith.negf %784 : vector<2x32xf32>
    %786 = math.exp %785 : vector<2x32xf32>
    %cst_322 = arith.constant 1.000000e+00 : f32
    %787 = vector.broadcast %cst_322 : f32 to vector<2x32xf32>
    %788 = arith.addf %787, %786 : vector<2x32xf32>
    %789 = arith.divf %787, %788 : vector<2x32xf32>
    %790 = vector.extract_strided_slice %777 {offsets = [0, 64], sizes = [2, 32], strides = [1, 1]} : vector<2x128xf32> to vector<2x32xf32>
    %791 = math.tanh %790 : vector<2x32xf32>
    %792 = vector.extract_strided_slice %777 {offsets = [0, 96], sizes = [2, 32], strides = [1, 1]} : vector<2x128xf32> to vector<2x32xf32>
    %793 = arith.negf %792 : vector<2x32xf32>
    %794 = math.exp %793 : vector<2x32xf32>
    %cst_323 = arith.constant 1.000000e+00 : f32
    %795 = vector.broadcast %cst_323 : f32 to vector<2x32xf32>
    %796 = arith.addf %795, %794 : vector<2x32xf32>
    %797 = arith.divf %795, %796 : vector<2x32xf32>
    %798 = arith.mulf %789, %764 : vector<2x32xf32>
    %799 = arith.mulf %783, %791 : vector<2x32xf32>
    %800 = arith.addf %798, %799 : vector<2x32xf32>
    %801 = math.tanh %800 : vector<2x32xf32>
    %802 = arith.mulf %797, %801 : vector<2x32xf32>
    %c15 = arith.constant 15 : index
    %c0_324 = arith.constant 0 : index
    %c0_325 = arith.constant 0 : index
    %803 = vector.load %arg24[%c15, %c0_324, %c0_325] : memref<32x2x128xf32, #tpu.memory_space<vmem>>, vector<1x2x128xf32>
    %804 = vector.shape_cast %803 : vector<1x2x128xf32> to vector<2x128xf32>
    %805 = vector.broadcast %257 : vector<1x128xf32> to vector<2x128xf32>
    %806 = arith.mulf %804, %805 : vector<2x128xf32>
    %c16_326 = arith.constant 16 : index
    %c0_327 = arith.constant 0 : index
    %c0_328 = arith.constant 0 : index
    %807 = vector.load %arg24[%c16_326, %c0_327, %c0_328] : memref<32x2x128xf32, #tpu.memory_space<vmem>>, vector<1x2x128xf32>
    %808 = vector.shape_cast %807 : vector<1x2x128xf32> to vector<2x128xf32>
    %809 = vector.broadcast %259 : vector<1x128xf32> to vector<2x128xf32>
    %810 = arith.mulf %808, %809 : vector<2x128xf32>
    %811 = arith.addf %806, %810 : vector<2x128xf32>
    %cst_329 = arith.constant dense<0.000000e+00> : vector<2x128xf32>
    %812 = tpu.matmul %802, %260, %cst_329 {dimension_numbers = #tpu.dot_dimension_numbers<[1], [0], [0], [1], [0, 0, 1, 1], [], []>} : vector<2x32xf32>, vector<32x128xf32>, vector<2x128xf32> -> vector<2x128xf32>
    %813 = arith.addf %811, %812 : vector<2x128xf32>
    %814 = vector.extract_strided_slice %813 {offsets = [0, 0], sizes = [2, 32], strides = [1, 1]} : vector<2x128xf32> to vector<2x32xf32>
    %815 = arith.negf %814 : vector<2x32xf32>
    %816 = math.exp %815 : vector<2x32xf32>
    %cst_330 = arith.constant 1.000000e+00 : f32
    %817 = vector.broadcast %cst_330 : f32 to vector<2x32xf32>
    %818 = arith.addf %817, %816 : vector<2x32xf32>
    %819 = arith.divf %817, %818 : vector<2x32xf32>
    %820 = vector.extract_strided_slice %813 {offsets = [0, 32], sizes = [2, 32], strides = [1, 1]} : vector<2x128xf32> to vector<2x32xf32>
    %821 = arith.negf %820 : vector<2x32xf32>
    %822 = math.exp %821 : vector<2x32xf32>
    %cst_331 = arith.constant 1.000000e+00 : f32
    %823 = vector.broadcast %cst_331 : f32 to vector<2x32xf32>
    %824 = arith.addf %823, %822 : vector<2x32xf32>
    %825 = arith.divf %823, %824 : vector<2x32xf32>
    %826 = vector.extract_strided_slice %813 {offsets = [0, 64], sizes = [2, 32], strides = [1, 1]} : vector<2x128xf32> to vector<2x32xf32>
    %827 = math.tanh %826 : vector<2x32xf32>
    %828 = vector.extract_strided_slice %813 {offsets = [0, 96], sizes = [2, 32], strides = [1, 1]} : vector<2x128xf32> to vector<2x32xf32>
    %829 = arith.negf %828 : vector<2x32xf32>
    %830 = math.exp %829 : vector<2x32xf32>
    %cst_332 = arith.constant 1.000000e+00 : f32
    %831 = vector.broadcast %cst_332 : f32 to vector<2x32xf32>
    %832 = arith.addf %831, %830 : vector<2x32xf32>
    %833 = arith.divf %831, %832 : vector<2x32xf32>
    %834 = arith.mulf %825, %800 : vector<2x32xf32>
    %835 = arith.mulf %819, %827 : vector<2x32xf32>
    %836 = arith.addf %834, %835 : vector<2x32xf32>
    %837 = math.tanh %836 : vector<2x32xf32>
    %838 = arith.mulf %833, %837 : vector<2x32xf32>
    %c16_333 = arith.constant 16 : index
    %c0_334 = arith.constant 0 : index
    %c0_335 = arith.constant 0 : index
    %839 = vector.load %arg24[%c16_333, %c0_334, %c0_335] : memref<32x2x128xf32, #tpu.memory_space<vmem>>, vector<1x2x128xf32>
    %840 = vector.shape_cast %839 : vector<1x2x128xf32> to vector<2x128xf32>
    %841 = vector.broadcast %257 : vector<1x128xf32> to vector<2x128xf32>
    %842 = arith.mulf %840, %841 : vector<2x128xf32>
    %c15_336 = arith.constant 15 : index
    %c0_337 = arith.constant 0 : index
    %c0_338 = arith.constant 0 : index
    %843 = vector.load %arg24[%c15_336, %c0_337, %c0_338] : memref<32x2x128xf32, #tpu.memory_space<vmem>>, vector<1x2x128xf32>
    %844 = vector.shape_cast %843 : vector<1x2x128xf32> to vector<2x128xf32>
    %845 = vector.broadcast %259 : vector<1x128xf32> to vector<2x128xf32>
    %846 = arith.mulf %844, %845 : vector<2x128xf32>
    %847 = arith.addf %842, %846 : vector<2x128xf32>
    %cst_339 = arith.constant dense<0.000000e+00> : vector<2x128xf32>
    %848 = tpu.matmul %838, %260, %cst_339 {dimension_numbers = #tpu.dot_dimension_numbers<[1], [0], [0], [1], [0, 0, 1, 1], [], []>} : vector<2x32xf32>, vector<32x128xf32>, vector<2x128xf32> -> vector<2x128xf32>
    %849 = arith.addf %847, %848 : vector<2x128xf32>
    %850 = vector.extract_strided_slice %849 {offsets = [0, 0], sizes = [2, 32], strides = [1, 1]} : vector<2x128xf32> to vector<2x32xf32>
    %851 = arith.negf %850 : vector<2x32xf32>
    %852 = math.exp %851 : vector<2x32xf32>
    %cst_340 = arith.constant 1.000000e+00 : f32
    %853 = vector.broadcast %cst_340 : f32 to vector<2x32xf32>
    %854 = arith.addf %853, %852 : vector<2x32xf32>
    %855 = arith.divf %853, %854 : vector<2x32xf32>
    %856 = vector.extract_strided_slice %849 {offsets = [0, 32], sizes = [2, 32], strides = [1, 1]} : vector<2x128xf32> to vector<2x32xf32>
    %857 = arith.negf %856 : vector<2x32xf32>
    %858 = math.exp %857 : vector<2x32xf32>
    %cst_341 = arith.constant 1.000000e+00 : f32
    %859 = vector.broadcast %cst_341 : f32 to vector<2x32xf32>
    %860 = arith.addf %859, %858 : vector<2x32xf32>
    %861 = arith.divf %859, %860 : vector<2x32xf32>
    %862 = vector.extract_strided_slice %849 {offsets = [0, 64], sizes = [2, 32], strides = [1, 1]} : vector<2x128xf32> to vector<2x32xf32>
    %863 = math.tanh %862 : vector<2x32xf32>
    %864 = vector.extract_strided_slice %849 {offsets = [0, 96], sizes = [2, 32], strides = [1, 1]} : vector<2x128xf32> to vector<2x32xf32>
    %865 = arith.negf %864 : vector<2x32xf32>
    %866 = math.exp %865 : vector<2x32xf32>
    %cst_342 = arith.constant 1.000000e+00 : f32
    %867 = vector.broadcast %cst_342 : f32 to vector<2x32xf32>
    %868 = arith.addf %867, %866 : vector<2x32xf32>
    %869 = arith.divf %867, %868 : vector<2x32xf32>
    %870 = arith.mulf %861, %836 : vector<2x32xf32>
    %871 = arith.mulf %855, %863 : vector<2x32xf32>
    %872 = arith.addf %870, %871 : vector<2x32xf32>
    %873 = math.tanh %872 : vector<2x32xf32>
    %874 = arith.mulf %869, %873 : vector<2x32xf32>
    %c17_343 = arith.constant 17 : index
    %c0_344 = arith.constant 0 : index
    %c0_345 = arith.constant 0 : index
    %875 = vector.load %arg24[%c17_343, %c0_344, %c0_345] : memref<32x2x128xf32, #tpu.memory_space<vmem>>, vector<1x2x128xf32>
    %876 = vector.shape_cast %875 : vector<1x2x128xf32> to vector<2x128xf32>
    %877 = vector.broadcast %257 : vector<1x128xf32> to vector<2x128xf32>
    %878 = arith.mulf %876, %877 : vector<2x128xf32>
    %c14_346 = arith.constant 14 : index
    %c0_347 = arith.constant 0 : index
    %c0_348 = arith.constant 0 : index
    %879 = vector.load %arg24[%c14_346, %c0_347, %c0_348] : memref<32x2x128xf32, #tpu.memory_space<vmem>>, vector<1x2x128xf32>
    %880 = vector.shape_cast %879 : vector<1x2x128xf32> to vector<2x128xf32>
    %881 = vector.broadcast %259 : vector<1x128xf32> to vector<2x128xf32>
    %882 = arith.mulf %880, %881 : vector<2x128xf32>
    %883 = arith.addf %878, %882 : vector<2x128xf32>
    %cst_349 = arith.constant dense<0.000000e+00> : vector<2x128xf32>
    %884 = tpu.matmul %874, %260, %cst_349 {dimension_numbers = #tpu.dot_dimension_numbers<[1], [0], [0], [1], [0, 0, 1, 1], [], []>} : vector<2x32xf32>, vector<32x128xf32>, vector<2x128xf32> -> vector<2x128xf32>
    %885 = arith.addf %883, %884 : vector<2x128xf32>
    %886 = vector.extract_strided_slice %885 {offsets = [0, 0], sizes = [2, 32], strides = [1, 1]} : vector<2x128xf32> to vector<2x32xf32>
    %887 = arith.negf %886 : vector<2x32xf32>
    %888 = math.exp %887 : vector<2x32xf32>
    %cst_350 = arith.constant 1.000000e+00 : f32
    %889 = vector.broadcast %cst_350 : f32 to vector<2x32xf32>
    %890 = arith.addf %889, %888 : vector<2x32xf32>
    %891 = arith.divf %889, %890 : vector<2x32xf32>
    %892 = vector.extract_strided_slice %885 {offsets = [0, 32], sizes = [2, 32], strides = [1, 1]} : vector<2x128xf32> to vector<2x32xf32>
    %893 = arith.negf %892 : vector<2x32xf32>
    %894 = math.exp %893 : vector<2x32xf32>
    %cst_351 = arith.constant 1.000000e+00 : f32
    %895 = vector.broadcast %cst_351 : f32 to vector<2x32xf32>
    %896 = arith.addf %895, %894 : vector<2x32xf32>
    %897 = arith.divf %895, %896 : vector<2x32xf32>
    %898 = vector.extract_strided_slice %885 {offsets = [0, 64], sizes = [2, 32], strides = [1, 1]} : vector<2x128xf32> to vector<2x32xf32>
    %899 = math.tanh %898 : vector<2x32xf32>
    %900 = vector.extract_strided_slice %885 {offsets = [0, 96], sizes = [2, 32], strides = [1, 1]} : vector<2x128xf32> to vector<2x32xf32>
    %901 = arith.negf %900 : vector<2x32xf32>
    %902 = math.exp %901 : vector<2x32xf32>
    %cst_352 = arith.constant 1.000000e+00 : f32
    %903 = vector.broadcast %cst_352 : f32 to vector<2x32xf32>
    %904 = arith.addf %903, %902 : vector<2x32xf32>
    %905 = arith.divf %903, %904 : vector<2x32xf32>
    %906 = arith.mulf %897, %872 : vector<2x32xf32>
    %907 = arith.mulf %891, %899 : vector<2x32xf32>
    %908 = arith.addf %906, %907 : vector<2x32xf32>
    %909 = math.tanh %908 : vector<2x32xf32>
    %910 = arith.mulf %905, %909 : vector<2x32xf32>
    %c18_353 = arith.constant 18 : index
    %c0_354 = arith.constant 0 : index
    %c0_355 = arith.constant 0 : index
    %911 = vector.load %arg24[%c18_353, %c0_354, %c0_355] : memref<32x2x128xf32, #tpu.memory_space<vmem>>, vector<1x2x128xf32>
    %912 = vector.shape_cast %911 : vector<1x2x128xf32> to vector<2x128xf32>
    %913 = vector.broadcast %257 : vector<1x128xf32> to vector<2x128xf32>
    %914 = arith.mulf %912, %913 : vector<2x128xf32>
    %c13_356 = arith.constant 13 : index
    %c0_357 = arith.constant 0 : index
    %c0_358 = arith.constant 0 : index
    %915 = vector.load %arg24[%c13_356, %c0_357, %c0_358] : memref<32x2x128xf32, #tpu.memory_space<vmem>>, vector<1x2x128xf32>
    %916 = vector.shape_cast %915 : vector<1x2x128xf32> to vector<2x128xf32>
    %917 = vector.broadcast %259 : vector<1x128xf32> to vector<2x128xf32>
    %918 = arith.mulf %916, %917 : vector<2x128xf32>
    %919 = arith.addf %914, %918 : vector<2x128xf32>
    %cst_359 = arith.constant dense<0.000000e+00> : vector<2x128xf32>
    %920 = tpu.matmul %910, %260, %cst_359 {dimension_numbers = #tpu.dot_dimension_numbers<[1], [0], [0], [1], [0, 0, 1, 1], [], []>} : vector<2x32xf32>, vector<32x128xf32>, vector<2x128xf32> -> vector<2x128xf32>
    %921 = arith.addf %919, %920 : vector<2x128xf32>
    %922 = vector.extract_strided_slice %921 {offsets = [0, 0], sizes = [2, 32], strides = [1, 1]} : vector<2x128xf32> to vector<2x32xf32>
    %923 = arith.negf %922 : vector<2x32xf32>
    %924 = math.exp %923 : vector<2x32xf32>
    %cst_360 = arith.constant 1.000000e+00 : f32
    %925 = vector.broadcast %cst_360 : f32 to vector<2x32xf32>
    %926 = arith.addf %925, %924 : vector<2x32xf32>
    %927 = arith.divf %925, %926 : vector<2x32xf32>
    %928 = vector.extract_strided_slice %921 {offsets = [0, 32], sizes = [2, 32], strides = [1, 1]} : vector<2x128xf32> to vector<2x32xf32>
    %929 = arith.negf %928 : vector<2x32xf32>
    %930 = math.exp %929 : vector<2x32xf32>
    %cst_361 = arith.constant 1.000000e+00 : f32
    %931 = vector.broadcast %cst_361 : f32 to vector<2x32xf32>
    %932 = arith.addf %931, %930 : vector<2x32xf32>
    %933 = arith.divf %931, %932 : vector<2x32xf32>
    %934 = vector.extract_strided_slice %921 {offsets = [0, 64], sizes = [2, 32], strides = [1, 1]} : vector<2x128xf32> to vector<2x32xf32>
    %935 = math.tanh %934 : vector<2x32xf32>
    %936 = vector.extract_strided_slice %921 {offsets = [0, 96], sizes = [2, 32], strides = [1, 1]} : vector<2x128xf32> to vector<2x32xf32>
    %937 = arith.negf %936 : vector<2x32xf32>
    %938 = math.exp %937 : vector<2x32xf32>
    %cst_362 = arith.constant 1.000000e+00 : f32
    %939 = vector.broadcast %cst_362 : f32 to vector<2x32xf32>
    %940 = arith.addf %939, %938 : vector<2x32xf32>
    %941 = arith.divf %939, %940 : vector<2x32xf32>
    %942 = arith.mulf %933, %908 : vector<2x32xf32>
    %943 = arith.mulf %927, %935 : vector<2x32xf32>
    %944 = arith.addf %942, %943 : vector<2x32xf32>
    %945 = math.tanh %944 : vector<2x32xf32>
    %946 = arith.mulf %941, %945 : vector<2x32xf32>
    %c19_363 = arith.constant 19 : index
    %c0_364 = arith.constant 0 : index
    %c0_365 = arith.constant 0 : index
    %947 = vector.load %arg24[%c19_363, %c0_364, %c0_365] : memref<32x2x128xf32, #tpu.memory_space<vmem>>, vector<1x2x128xf32>
    %948 = vector.shape_cast %947 : vector<1x2x128xf32> to vector<2x128xf32>
    %949 = vector.broadcast %257 : vector<1x128xf32> to vector<2x128xf32>
    %950 = arith.mulf %948, %949 : vector<2x128xf32>
    %c12_366 = arith.constant 12 : index
    %c0_367 = arith.constant 0 : index
    %c0_368 = arith.constant 0 : index
    %951 = vector.load %arg24[%c12_366, %c0_367, %c0_368] : memref<32x2x128xf32, #tpu.memory_space<vmem>>, vector<1x2x128xf32>
    %952 = vector.shape_cast %951 : vector<1x2x128xf32> to vector<2x128xf32>
    %953 = vector.broadcast %259 : vector<1x128xf32> to vector<2x128xf32>
    %954 = arith.mulf %952, %953 : vector<2x128xf32>
    %955 = arith.addf %950, %954 : vector<2x128xf32>
    %cst_369 = arith.constant dense<0.000000e+00> : vector<2x128xf32>
    %956 = tpu.matmul %946, %260, %cst_369 {dimension_numbers = #tpu.dot_dimension_numbers<[1], [0], [0], [1], [0, 0, 1, 1], [], []>} : vector<2x32xf32>, vector<32x128xf32>, vector<2x128xf32> -> vector<2x128xf32>
    %957 = arith.addf %955, %956 : vector<2x128xf32>
    %958 = vector.extract_strided_slice %957 {offsets = [0, 0], sizes = [2, 32], strides = [1, 1]} : vector<2x128xf32> to vector<2x32xf32>
    %959 = arith.negf %958 : vector<2x32xf32>
    %960 = math.exp %959 : vector<2x32xf32>
    %cst_370 = arith.constant 1.000000e+00 : f32
    %961 = vector.broadcast %cst_370 : f32 to vector<2x32xf32>
    %962 = arith.addf %961, %960 : vector<2x32xf32>
    %963 = arith.divf %961, %962 : vector<2x32xf32>
    %964 = vector.extract_strided_slice %957 {offsets = [0, 32], sizes = [2, 32], strides = [1, 1]} : vector<2x128xf32> to vector<2x32xf32>
    %965 = arith.negf %964 : vector<2x32xf32>
    %966 = math.exp %965 : vector<2x32xf32>
    %cst_371 = arith.constant 1.000000e+00 : f32
    %967 = vector.broadcast %cst_371 : f32 to vector<2x32xf32>
    %968 = arith.addf %967, %966 : vector<2x32xf32>
    %969 = arith.divf %967, %968 : vector<2x32xf32>
    %970 = vector.extract_strided_slice %957 {offsets = [0, 64], sizes = [2, 32], strides = [1, 1]} : vector<2x128xf32> to vector<2x32xf32>
    %971 = math.tanh %970 : vector<2x32xf32>
    %972 = vector.extract_strided_slice %957 {offsets = [0, 96], sizes = [2, 32], strides = [1, 1]} : vector<2x128xf32> to vector<2x32xf32>
    %973 = arith.negf %972 : vector<2x32xf32>
    %974 = math.exp %973 : vector<2x32xf32>
    %cst_372 = arith.constant 1.000000e+00 : f32
    %975 = vector.broadcast %cst_372 : f32 to vector<2x32xf32>
    %976 = arith.addf %975, %974 : vector<2x32xf32>
    %977 = arith.divf %975, %976 : vector<2x32xf32>
    %978 = arith.mulf %969, %944 : vector<2x32xf32>
    %979 = arith.mulf %963, %971 : vector<2x32xf32>
    %980 = arith.addf %978, %979 : vector<2x32xf32>
    %981 = math.tanh %980 : vector<2x32xf32>
    %982 = arith.mulf %977, %981 : vector<2x32xf32>
    %c20_373 = arith.constant 20 : index
    %c0_374 = arith.constant 0 : index
    %c0_375 = arith.constant 0 : index
    %983 = vector.load %arg24[%c20_373, %c0_374, %c0_375] : memref<32x2x128xf32, #tpu.memory_space<vmem>>, vector<1x2x128xf32>
    %984 = vector.shape_cast %983 : vector<1x2x128xf32> to vector<2x128xf32>
    %985 = vector.broadcast %257 : vector<1x128xf32> to vector<2x128xf32>
    %986 = arith.mulf %984, %985 : vector<2x128xf32>
    %c11_376 = arith.constant 11 : index
    %c0_377 = arith.constant 0 : index
    %c0_378 = arith.constant 0 : index
    %987 = vector.load %arg24[%c11_376, %c0_377, %c0_378] : memref<32x2x128xf32, #tpu.memory_space<vmem>>, vector<1x2x128xf32>
    %988 = vector.shape_cast %987 : vector<1x2x128xf32> to vector<2x128xf32>
    %989 = vector.broadcast %259 : vector<1x128xf32> to vector<2x128xf32>
    %990 = arith.mulf %988, %989 : vector<2x128xf32>
    %991 = arith.addf %986, %990 : vector<2x128xf32>
    %cst_379 = arith.constant dense<0.000000e+00> : vector<2x128xf32>
    %992 = tpu.matmul %982, %260, %cst_379 {dimension_numbers = #tpu.dot_dimension_numbers<[1], [0], [0], [1], [0, 0, 1, 1], [], []>} : vector<2x32xf32>, vector<32x128xf32>, vector<2x128xf32> -> vector<2x128xf32>
    %993 = arith.addf %991, %992 : vector<2x128xf32>
    %994 = vector.extract_strided_slice %993 {offsets = [0, 0], sizes = [2, 32], strides = [1, 1]} : vector<2x128xf32> to vector<2x32xf32>
    %995 = arith.negf %994 : vector<2x32xf32>
    %996 = math.exp %995 : vector<2x32xf32>
    %cst_380 = arith.constant 1.000000e+00 : f32
    %997 = vector.broadcast %cst_380 : f32 to vector<2x32xf32>
    %998 = arith.addf %997, %996 : vector<2x32xf32>
    %999 = arith.divf %997, %998 : vector<2x32xf32>
    %1000 = vector.extract_strided_slice %993 {offsets = [0, 32], sizes = [2, 32], strides = [1, 1]} : vector<2x128xf32> to vector<2x32xf32>
    %1001 = arith.negf %1000 : vector<2x32xf32>
    %1002 = math.exp %1001 : vector<2x32xf32>
    %cst_381 = arith.constant 1.000000e+00 : f32
    %1003 = vector.broadcast %cst_381 : f32 to vector<2x32xf32>
    %1004 = arith.addf %1003, %1002 : vector<2x32xf32>
    %1005 = arith.divf %1003, %1004 : vector<2x32xf32>
    %1006 = vector.extract_strided_slice %993 {offsets = [0, 64], sizes = [2, 32], strides = [1, 1]} : vector<2x128xf32> to vector<2x32xf32>
    %1007 = math.tanh %1006 : vector<2x32xf32>
    %1008 = vector.extract_strided_slice %993 {offsets = [0, 96], sizes = [2, 32], strides = [1, 1]} : vector<2x128xf32> to vector<2x32xf32>
    %1009 = arith.negf %1008 : vector<2x32xf32>
    %1010 = math.exp %1009 : vector<2x32xf32>
    %cst_382 = arith.constant 1.000000e+00 : f32
    %1011 = vector.broadcast %cst_382 : f32 to vector<2x32xf32>
    %1012 = arith.addf %1011, %1010 : vector<2x32xf32>
    %1013 = arith.divf %1011, %1012 : vector<2x32xf32>
    %1014 = arith.mulf %1005, %980 : vector<2x32xf32>
    %1015 = arith.mulf %999, %1007 : vector<2x32xf32>
    %1016 = arith.addf %1014, %1015 : vector<2x32xf32>
    %1017 = math.tanh %1016 : vector<2x32xf32>
    %1018 = arith.mulf %1013, %1017 : vector<2x32xf32>
    %c21_383 = arith.constant 21 : index
    %c0_384 = arith.constant 0 : index
    %c0_385 = arith.constant 0 : index
    %1019 = vector.load %arg24[%c21_383, %c0_384, %c0_385] : memref<32x2x128xf32, #tpu.memory_space<vmem>>, vector<1x2x128xf32>
    %1020 = vector.shape_cast %1019 : vector<1x2x128xf32> to vector<2x128xf32>
    %1021 = vector.broadcast %257 : vector<1x128xf32> to vector<2x128xf32>
    %1022 = arith.mulf %1020, %1021 : vector<2x128xf32>
    %c10_386 = arith.constant 10 : index
    %c0_387 = arith.constant 0 : index
    %c0_388 = arith.constant 0 : index
    %1023 = vector.load %arg24[%c10_386, %c0_387, %c0_388] : memref<32x2x128xf32, #tpu.memory_space<vmem>>, vector<1x2x128xf32>
    %1024 = vector.shape_cast %1023 : vector<1x2x128xf32> to vector<2x128xf32>
    %1025 = vector.broadcast %259 : vector<1x128xf32> to vector<2x128xf32>
    %1026 = arith.mulf %1024, %1025 : vector<2x128xf32>
    %1027 = arith.addf %1022, %1026 : vector<2x128xf32>
    %cst_389 = arith.constant dense<0.000000e+00> : vector<2x128xf32>
    %1028 = tpu.matmul %1018, %260, %cst_389 {dimension_numbers = #tpu.dot_dimension_numbers<[1], [0], [0], [1], [0, 0, 1, 1], [], []>} : vector<2x32xf32>, vector<32x128xf32>, vector<2x128xf32> -> vector<2x128xf32>
    %1029 = arith.addf %1027, %1028 : vector<2x128xf32>
    %1030 = vector.extract_strided_slice %1029 {offsets = [0, 0], sizes = [2, 32], strides = [1, 1]} : vector<2x128xf32> to vector<2x32xf32>
    %1031 = arith.negf %1030 : vector<2x32xf32>
    %1032 = math.exp %1031 : vector<2x32xf32>
    %cst_390 = arith.constant 1.000000e+00 : f32
    %1033 = vector.broadcast %cst_390 : f32 to vector<2x32xf32>
    %1034 = arith.addf %1033, %1032 : vector<2x32xf32>
    %1035 = arith.divf %1033, %1034 : vector<2x32xf32>
    %1036 = vector.extract_strided_slice %1029 {offsets = [0, 32], sizes = [2, 32], strides = [1, 1]} : vector<2x128xf32> to vector<2x32xf32>
    %1037 = arith.negf %1036 : vector<2x32xf32>
    %1038 = math.exp %1037 : vector<2x32xf32>
    %cst_391 = arith.constant 1.000000e+00 : f32
    %1039 = vector.broadcast %cst_391 : f32 to vector<2x32xf32>
    %1040 = arith.addf %1039, %1038 : vector<2x32xf32>
    %1041 = arith.divf %1039, %1040 : vector<2x32xf32>
    %1042 = vector.extract_strided_slice %1029 {offsets = [0, 64], sizes = [2, 32], strides = [1, 1]} : vector<2x128xf32> to vector<2x32xf32>
    %1043 = math.tanh %1042 : vector<2x32xf32>
    %1044 = vector.extract_strided_slice %1029 {offsets = [0, 96], sizes = [2, 32], strides = [1, 1]} : vector<2x128xf32> to vector<2x32xf32>
    %1045 = arith.negf %1044 : vector<2x32xf32>
    %1046 = math.exp %1045 : vector<2x32xf32>
    %cst_392 = arith.constant 1.000000e+00 : f32
    %1047 = vector.broadcast %cst_392 : f32 to vector<2x32xf32>
    %1048 = arith.addf %1047, %1046 : vector<2x32xf32>
    %1049 = arith.divf %1047, %1048 : vector<2x32xf32>
    %1050 = arith.mulf %1041, %1016 : vector<2x32xf32>
    %1051 = arith.mulf %1035, %1043 : vector<2x32xf32>
    %1052 = arith.addf %1050, %1051 : vector<2x32xf32>
    %1053 = math.tanh %1052 : vector<2x32xf32>
    %1054 = arith.mulf %1049, %1053 : vector<2x32xf32>
    %c22_393 = arith.constant 22 : index
    %c0_394 = arith.constant 0 : index
    %c0_395 = arith.constant 0 : index
    %1055 = vector.load %arg24[%c22_393, %c0_394, %c0_395] : memref<32x2x128xf32, #tpu.memory_space<vmem>>, vector<1x2x128xf32>
    %1056 = vector.shape_cast %1055 : vector<1x2x128xf32> to vector<2x128xf32>
    %1057 = vector.broadcast %257 : vector<1x128xf32> to vector<2x128xf32>
    %1058 = arith.mulf %1056, %1057 : vector<2x128xf32>
    %c9_396 = arith.constant 9 : index
    %c0_397 = arith.constant 0 : index
    %c0_398 = arith.constant 0 : index
    %1059 = vector.load %arg24[%c9_396, %c0_397, %c0_398] : memref<32x2x128xf32, #tpu.memory_space<vmem>>, vector<1x2x128xf32>
    %1060 = vector.shape_cast %1059 : vector<1x2x128xf32> to vector<2x128xf32>
    %1061 = vector.broadcast %259 : vector<1x128xf32> to vector<2x128xf32>
    %1062 = arith.mulf %1060, %1061 : vector<2x128xf32>
    %1063 = arith.addf %1058, %1062 : vector<2x128xf32>
    %cst_399 = arith.constant dense<0.000000e+00> : vector<2x128xf32>
    %1064 = tpu.matmul %1054, %260, %cst_399 {dimension_numbers = #tpu.dot_dimension_numbers<[1], [0], [0], [1], [0, 0, 1, 1], [], []>} : vector<2x32xf32>, vector<32x128xf32>, vector<2x128xf32> -> vector<2x128xf32>
    %1065 = arith.addf %1063, %1064 : vector<2x128xf32>
    %1066 = vector.extract_strided_slice %1065 {offsets = [0, 0], sizes = [2, 32], strides = [1, 1]} : vector<2x128xf32> to vector<2x32xf32>
    %1067 = arith.negf %1066 : vector<2x32xf32>
    %1068 = math.exp %1067 : vector<2x32xf32>
    %cst_400 = arith.constant 1.000000e+00 : f32
    %1069 = vector.broadcast %cst_400 : f32 to vector<2x32xf32>
    %1070 = arith.addf %1069, %1068 : vector<2x32xf32>
    %1071 = arith.divf %1069, %1070 : vector<2x32xf32>
    %1072 = vector.extract_strided_slice %1065 {offsets = [0, 32], sizes = [2, 32], strides = [1, 1]} : vector<2x128xf32> to vector<2x32xf32>
    %1073 = arith.negf %1072 : vector<2x32xf32>
    %1074 = math.exp %1073 : vector<2x32xf32>
    %cst_401 = arith.constant 1.000000e+00 : f32
    %1075 = vector.broadcast %cst_401 : f32 to vector<2x32xf32>
    %1076 = arith.addf %1075, %1074 : vector<2x32xf32>
    %1077 = arith.divf %1075, %1076 : vector<2x32xf32>
    %1078 = vector.extract_strided_slice %1065 {offsets = [0, 64], sizes = [2, 32], strides = [1, 1]} : vector<2x128xf32> to vector<2x32xf32>
    %1079 = math.tanh %1078 : vector<2x32xf32>
    %1080 = vector.extract_strided_slice %1065 {offsets = [0, 96], sizes = [2, 32], strides = [1, 1]} : vector<2x128xf32> to vector<2x32xf32>
    %1081 = arith.negf %1080 : vector<2x32xf32>
    %1082 = math.exp %1081 : vector<2x32xf32>
    %cst_402 = arith.constant 1.000000e+00 : f32
    %1083 = vector.broadcast %cst_402 : f32 to vector<2x32xf32>
    %1084 = arith.addf %1083, %1082 : vector<2x32xf32>
    %1085 = arith.divf %1083, %1084 : vector<2x32xf32>
    %1086 = arith.mulf %1077, %1052 : vector<2x32xf32>
    %1087 = arith.mulf %1071, %1079 : vector<2x32xf32>
    %1088 = arith.addf %1086, %1087 : vector<2x32xf32>
    %1089 = math.tanh %1088 : vector<2x32xf32>
    %1090 = arith.mulf %1085, %1089 : vector<2x32xf32>
    %c23_403 = arith.constant 23 : index
    %c0_404 = arith.constant 0 : index
    %c0_405 = arith.constant 0 : index
    %1091 = vector.load %arg24[%c23_403, %c0_404, %c0_405] : memref<32x2x128xf32, #tpu.memory_space<vmem>>, vector<1x2x128xf32>
    %1092 = vector.shape_cast %1091 : vector<1x2x128xf32> to vector<2x128xf32>
    %1093 = vector.broadcast %257 : vector<1x128xf32> to vector<2x128xf32>
    %1094 = arith.mulf %1092, %1093 : vector<2x128xf32>
    %c8_406 = arith.constant 8 : index
    %c0_407 = arith.constant 0 : index
    %c0_408 = arith.constant 0 : index
    %1095 = vector.load %arg24[%c8_406, %c0_407, %c0_408] : memref<32x2x128xf32, #tpu.memory_space<vmem>>, vector<1x2x128xf32>
    %1096 = vector.shape_cast %1095 : vector<1x2x128xf32> to vector<2x128xf32>
    %1097 = vector.broadcast %259 : vector<1x128xf32> to vector<2x128xf32>
    %1098 = arith.mulf %1096, %1097 : vector<2x128xf32>
    %1099 = arith.addf %1094, %1098 : vector<2x128xf32>
    %cst_409 = arith.constant dense<0.000000e+00> : vector<2x128xf32>
    %1100 = tpu.matmul %1090, %260, %cst_409 {dimension_numbers = #tpu.dot_dimension_numbers<[1], [0], [0], [1], [0, 0, 1, 1], [], []>} : vector<2x32xf32>, vector<32x128xf32>, vector<2x128xf32> -> vector<2x128xf32>
    %1101 = arith.addf %1099, %1100 : vector<2x128xf32>
    %1102 = vector.extract_strided_slice %1101 {offsets = [0, 0], sizes = [2, 32], strides = [1, 1]} : vector<2x128xf32> to vector<2x32xf32>
    %1103 = arith.negf %1102 : vector<2x32xf32>
    %1104 = math.exp %1103 : vector<2x32xf32>
    %cst_410 = arith.constant 1.000000e+00 : f32
    %1105 = vector.broadcast %cst_410 : f32 to vector<2x32xf32>
    %1106 = arith.addf %1105, %1104 : vector<2x32xf32>
    %1107 = arith.divf %1105, %1106 : vector<2x32xf32>
    %1108 = vector.extract_strided_slice %1101 {offsets = [0, 32], sizes = [2, 32], strides = [1, 1]} : vector<2x128xf32> to vector<2x32xf32>
    %1109 = arith.negf %1108 : vector<2x32xf32>
    %1110 = math.exp %1109 : vector<2x32xf32>
    %cst_411 = arith.constant 1.000000e+00 : f32
    %1111 = vector.broadcast %cst_411 : f32 to vector<2x32xf32>
    %1112 = arith.addf %1111, %1110 : vector<2x32xf32>
    %1113 = arith.divf %1111, %1112 : vector<2x32xf32>
    %1114 = vector.extract_strided_slice %1101 {offsets = [0, 64], sizes = [2, 32], strides = [1, 1]} : vector<2x128xf32> to vector<2x32xf32>
    %1115 = math.tanh %1114 : vector<2x32xf32>
    %1116 = vector.extract_strided_slice %1101 {offsets = [0, 96], sizes = [2, 32], strides = [1, 1]} : vector<2x128xf32> to vector<2x32xf32>
    %1117 = arith.negf %1116 : vector<2x32xf32>
    %1118 = math.exp %1117 : vector<2x32xf32>
    %cst_412 = arith.constant 1.000000e+00 : f32
    %1119 = vector.broadcast %cst_412 : f32 to vector<2x32xf32>
    %1120 = arith.addf %1119, %1118 : vector<2x32xf32>
    %1121 = arith.divf %1119, %1120 : vector<2x32xf32>
    %1122 = arith.mulf %1113, %1088 : vector<2x32xf32>
    %1123 = arith.mulf %1107, %1115 : vector<2x32xf32>
    %1124 = arith.addf %1122, %1123 : vector<2x32xf32>
    %1125 = math.tanh %1124 : vector<2x32xf32>
    %1126 = arith.mulf %1121, %1125 : vector<2x32xf32>
    %c24_413 = arith.constant 24 : index
    %c0_414 = arith.constant 0 : index
    %c0_415 = arith.constant 0 : index
    %1127 = vector.load %arg24[%c24_413, %c0_414, %c0_415] : memref<32x2x128xf32, #tpu.memory_space<vmem>>, vector<1x2x128xf32>
    %1128 = vector.shape_cast %1127 : vector<1x2x128xf32> to vector<2x128xf32>
    %1129 = vector.broadcast %257 : vector<1x128xf32> to vector<2x128xf32>
    %1130 = arith.mulf %1128, %1129 : vector<2x128xf32>
    %c7_416 = arith.constant 7 : index
    %c0_417 = arith.constant 0 : index
    %c0_418 = arith.constant 0 : index
    %1131 = vector.load %arg24[%c7_416, %c0_417, %c0_418] : memref<32x2x128xf32, #tpu.memory_space<vmem>>, vector<1x2x128xf32>
    %1132 = vector.shape_cast %1131 : vector<1x2x128xf32> to vector<2x128xf32>
    %1133 = vector.broadcast %259 : vector<1x128xf32> to vector<2x128xf32>
    %1134 = arith.mulf %1132, %1133 : vector<2x128xf32>
    %1135 = arith.addf %1130, %1134 : vector<2x128xf32>
    %cst_419 = arith.constant dense<0.000000e+00> : vector<2x128xf32>
    %1136 = tpu.matmul %1126, %260, %cst_419 {dimension_numbers = #tpu.dot_dimension_numbers<[1], [0], [0], [1], [0, 0, 1, 1], [], []>} : vector<2x32xf32>, vector<32x128xf32>, vector<2x128xf32> -> vector<2x128xf32>
    %1137 = arith.addf %1135, %1136 : vector<2x128xf32>
    %1138 = vector.extract_strided_slice %1137 {offsets = [0, 0], sizes = [2, 32], strides = [1, 1]} : vector<2x128xf32> to vector<2x32xf32>
    %1139 = arith.negf %1138 : vector<2x32xf32>
    %1140 = math.exp %1139 : vector<2x32xf32>
    %cst_420 = arith.constant 1.000000e+00 : f32
    %1141 = vector.broadcast %cst_420 : f32 to vector<2x32xf32>
    %1142 = arith.addf %1141, %1140 : vector<2x32xf32>
    %1143 = arith.divf %1141, %1142 : vector<2x32xf32>
    %1144 = vector.extract_strided_slice %1137 {offsets = [0, 32], sizes = [2, 32], strides = [1, 1]} : vector<2x128xf32> to vector<2x32xf32>
    %1145 = arith.negf %1144 : vector<2x32xf32>
    %1146 = math.exp %1145 : vector<2x32xf32>
    %cst_421 = arith.constant 1.000000e+00 : f32
    %1147 = vector.broadcast %cst_421 : f32 to vector<2x32xf32>
    %1148 = arith.addf %1147, %1146 : vector<2x32xf32>
    %1149 = arith.divf %1147, %1148 : vector<2x32xf32>
    %1150 = vector.extract_strided_slice %1137 {offsets = [0, 64], sizes = [2, 32], strides = [1, 1]} : vector<2x128xf32> to vector<2x32xf32>
    %1151 = math.tanh %1150 : vector<2x32xf32>
    %1152 = vector.extract_strided_slice %1137 {offsets = [0, 96], sizes = [2, 32], strides = [1, 1]} : vector<2x128xf32> to vector<2x32xf32>
    %1153 = arith.negf %1152 : vector<2x32xf32>
    %1154 = math.exp %1153 : vector<2x32xf32>
    %cst_422 = arith.constant 1.000000e+00 : f32
    %1155 = vector.broadcast %cst_422 : f32 to vector<2x32xf32>
    %1156 = arith.addf %1155, %1154 : vector<2x32xf32>
    %1157 = arith.divf %1155, %1156 : vector<2x32xf32>
    %1158 = arith.mulf %1149, %1124 : vector<2x32xf32>
    %1159 = arith.mulf %1143, %1151 : vector<2x32xf32>
    %1160 = arith.addf %1158, %1159 : vector<2x32xf32>
    %1161 = math.tanh %1160 : vector<2x32xf32>
    %1162 = arith.mulf %1157, %1161 : vector<2x32xf32>
    %c25_423 = arith.constant 25 : index
    %c0_424 = arith.constant 0 : index
    %c0_425 = arith.constant 0 : index
    %1163 = vector.load %arg24[%c25_423, %c0_424, %c0_425] : memref<32x2x128xf32, #tpu.memory_space<vmem>>, vector<1x2x128xf32>
    %1164 = vector.shape_cast %1163 : vector<1x2x128xf32> to vector<2x128xf32>
    %1165 = vector.broadcast %257 : vector<1x128xf32> to vector<2x128xf32>
    %1166 = arith.mulf %1164, %1165 : vector<2x128xf32>
    %c6_426 = arith.constant 6 : index
    %c0_427 = arith.constant 0 : index
    %c0_428 = arith.constant 0 : index
    %1167 = vector.load %arg24[%c6_426, %c0_427, %c0_428] : memref<32x2x128xf32, #tpu.memory_space<vmem>>, vector<1x2x128xf32>
    %1168 = vector.shape_cast %1167 : vector<1x2x128xf32> to vector<2x128xf32>
    %1169 = vector.broadcast %259 : vector<1x128xf32> to vector<2x128xf32>
    %1170 = arith.mulf %1168, %1169 : vector<2x128xf32>
    %1171 = arith.addf %1166, %1170 : vector<2x128xf32>
    %cst_429 = arith.constant dense<0.000000e+00> : vector<2x128xf32>
    %1172 = tpu.matmul %1162, %260, %cst_429 {dimension_numbers = #tpu.dot_dimension_numbers<[1], [0], [0], [1], [0, 0, 1, 1], [], []>} : vector<2x32xf32>, vector<32x128xf32>, vector<2x128xf32> -> vector<2x128xf32>
    %1173 = arith.addf %1171, %1172 : vector<2x128xf32>
    %1174 = vector.extract_strided_slice %1173 {offsets = [0, 0], sizes = [2, 32], strides = [1, 1]} : vector<2x128xf32> to vector<2x32xf32>
    %1175 = arith.negf %1174 : vector<2x32xf32>
    %1176 = math.exp %1175 : vector<2x32xf32>
    %cst_430 = arith.constant 1.000000e+00 : f32
    %1177 = vector.broadcast %cst_430 : f32 to vector<2x32xf32>
    %1178 = arith.addf %1177, %1176 : vector<2x32xf32>
    %1179 = arith.divf %1177, %1178 : vector<2x32xf32>
    %1180 = vector.extract_strided_slice %1173 {offsets = [0, 32], sizes = [2, 32], strides = [1, 1]} : vector<2x128xf32> to vector<2x32xf32>
    %1181 = arith.negf %1180 : vector<2x32xf32>
    %1182 = math.exp %1181 : vector<2x32xf32>
    %cst_431 = arith.constant 1.000000e+00 : f32
    %1183 = vector.broadcast %cst_431 : f32 to vector<2x32xf32>
    %1184 = arith.addf %1183, %1182 : vector<2x32xf32>
    %1185 = arith.divf %1183, %1184 : vector<2x32xf32>
    %1186 = vector.extract_strided_slice %1173 {offsets = [0, 64], sizes = [2, 32], strides = [1, 1]} : vector<2x128xf32> to vector<2x32xf32>
    %1187 = math.tanh %1186 : vector<2x32xf32>
    %1188 = vector.extract_strided_slice %1173 {offsets = [0, 96], sizes = [2, 32], strides = [1, 1]} : vector<2x128xf32> to vector<2x32xf32>
    %1189 = arith.negf %1188 : vector<2x32xf32>
    %1190 = math.exp %1189 : vector<2x32xf32>
    %cst_432 = arith.constant 1.000000e+00 : f32
    %1191 = vector.broadcast %cst_432 : f32 to vector<2x32xf32>
    %1192 = arith.addf %1191, %1190 : vector<2x32xf32>
    %1193 = arith.divf %1191, %1192 : vector<2x32xf32>
    %1194 = arith.mulf %1185, %1160 : vector<2x32xf32>
    %1195 = arith.mulf %1179, %1187 : vector<2x32xf32>
    %1196 = arith.addf %1194, %1195 : vector<2x32xf32>
    %1197 = math.tanh %1196 : vector<2x32xf32>
    %1198 = arith.mulf %1193, %1197 : vector<2x32xf32>
    %c26_433 = arith.constant 26 : index
    %c0_434 = arith.constant 0 : index
    %c0_435 = arith.constant 0 : index
    %1199 = vector.load %arg24[%c26_433, %c0_434, %c0_435] : memref<32x2x128xf32, #tpu.memory_space<vmem>>, vector<1x2x128xf32>
    %1200 = vector.shape_cast %1199 : vector<1x2x128xf32> to vector<2x128xf32>
    %1201 = vector.broadcast %257 : vector<1x128xf32> to vector<2x128xf32>
    %1202 = arith.mulf %1200, %1201 : vector<2x128xf32>
    %c5_436 = arith.constant 5 : index
    %c0_437 = arith.constant 0 : index
    %c0_438 = arith.constant 0 : index
    %1203 = vector.load %arg24[%c5_436, %c0_437, %c0_438] : memref<32x2x128xf32, #tpu.memory_space<vmem>>, vector<1x2x128xf32>
    %1204 = vector.shape_cast %1203 : vector<1x2x128xf32> to vector<2x128xf32>
    %1205 = vector.broadcast %259 : vector<1x128xf32> to vector<2x128xf32>
    %1206 = arith.mulf %1204, %1205 : vector<2x128xf32>
    %1207 = arith.addf %1202, %1206 : vector<2x128xf32>
    %cst_439 = arith.constant dense<0.000000e+00> : vector<2x128xf32>
    %1208 = tpu.matmul %1198, %260, %cst_439 {dimension_numbers = #tpu.dot_dimension_numbers<[1], [0], [0], [1], [0, 0, 1, 1], [], []>} : vector<2x32xf32>, vector<32x128xf32>, vector<2x128xf32> -> vector<2x128xf32>
    %1209 = arith.addf %1207, %1208 : vector<2x128xf32>
    %1210 = vector.extract_strided_slice %1209 {offsets = [0, 0], sizes = [2, 32], strides = [1, 1]} : vector<2x128xf32> to vector<2x32xf32>
    %1211 = arith.negf %1210 : vector<2x32xf32>
    %1212 = math.exp %1211 : vector<2x32xf32>
    %cst_440 = arith.constant 1.000000e+00 : f32
    %1213 = vector.broadcast %cst_440 : f32 to vector<2x32xf32>
    %1214 = arith.addf %1213, %1212 : vector<2x32xf32>
    %1215 = arith.divf %1213, %1214 : vector<2x32xf32>
    %1216 = vector.extract_strided_slice %1209 {offsets = [0, 32], sizes = [2, 32], strides = [1, 1]} : vector<2x128xf32> to vector<2x32xf32>
    %1217 = arith.negf %1216 : vector<2x32xf32>
    %1218 = math.exp %1217 : vector<2x32xf32>
    %cst_441 = arith.constant 1.000000e+00 : f32
    %1219 = vector.broadcast %cst_441 : f32 to vector<2x32xf32>
    %1220 = arith.addf %1219, %1218 : vector<2x32xf32>
    %1221 = arith.divf %1219, %1220 : vector<2x32xf32>
    %1222 = vector.extract_strided_slice %1209 {offsets = [0, 64], sizes = [2, 32], strides = [1, 1]} : vector<2x128xf32> to vector<2x32xf32>
    %1223 = math.tanh %1222 : vector<2x32xf32>
    %1224 = vector.extract_strided_slice %1209 {offsets = [0, 96], sizes = [2, 32], strides = [1, 1]} : vector<2x128xf32> to vector<2x32xf32>
    %1225 = arith.negf %1224 : vector<2x32xf32>
    %1226 = math.exp %1225 : vector<2x32xf32>
    %cst_442 = arith.constant 1.000000e+00 : f32
    %1227 = vector.broadcast %cst_442 : f32 to vector<2x32xf32>
    %1228 = arith.addf %1227, %1226 : vector<2x32xf32>
    %1229 = arith.divf %1227, %1228 : vector<2x32xf32>
    %1230 = arith.mulf %1221, %1196 : vector<2x32xf32>
    %1231 = arith.mulf %1215, %1223 : vector<2x32xf32>
    %1232 = arith.addf %1230, %1231 : vector<2x32xf32>
    %1233 = math.tanh %1232 : vector<2x32xf32>
    %1234 = arith.mulf %1229, %1233 : vector<2x32xf32>
    %c27_443 = arith.constant 27 : index
    %c0_444 = arith.constant 0 : index
    %c0_445 = arith.constant 0 : index
    %1235 = vector.load %arg24[%c27_443, %c0_444, %c0_445] : memref<32x2x128xf32, #tpu.memory_space<vmem>>, vector<1x2x128xf32>
    %1236 = vector.shape_cast %1235 : vector<1x2x128xf32> to vector<2x128xf32>
    %1237 = vector.broadcast %257 : vector<1x128xf32> to vector<2x128xf32>
    %1238 = arith.mulf %1236, %1237 : vector<2x128xf32>
    %c4_446 = arith.constant 4 : index
    %c0_447 = arith.constant 0 : index
    %c0_448 = arith.constant 0 : index
    %1239 = vector.load %arg24[%c4_446, %c0_447, %c0_448] : memref<32x2x128xf32, #tpu.memory_space<vmem>>, vector<1x2x128xf32>
    %1240 = vector.shape_cast %1239 : vector<1x2x128xf32> to vector<2x128xf32>
    %1241 = vector.broadcast %259 : vector<1x128xf32> to vector<2x128xf32>
    %1242 = arith.mulf %1240, %1241 : vector<2x128xf32>
    %1243 = arith.addf %1238, %1242 : vector<2x128xf32>
    %cst_449 = arith.constant dense<0.000000e+00> : vector<2x128xf32>
    %1244 = tpu.matmul %1234, %260, %cst_449 {dimension_numbers = #tpu.dot_dimension_numbers<[1], [0], [0], [1], [0, 0, 1, 1], [], []>} : vector<2x32xf32>, vector<32x128xf32>, vector<2x128xf32> -> vector<2x128xf32>
    %1245 = arith.addf %1243, %1244 : vector<2x128xf32>
    %1246 = vector.extract_strided_slice %1245 {offsets = [0, 0], sizes = [2, 32], strides = [1, 1]} : vector<2x128xf32> to vector<2x32xf32>
    %1247 = arith.negf %1246 : vector<2x32xf32>
    %1248 = math.exp %1247 : vector<2x32xf32>
    %cst_450 = arith.constant 1.000000e+00 : f32
    %1249 = vector.broadcast %cst_450 : f32 to vector<2x32xf32>
    %1250 = arith.addf %1249, %1248 : vector<2x32xf32>
    %1251 = arith.divf %1249, %1250 : vector<2x32xf32>
    %1252 = vector.extract_strided_slice %1245 {offsets = [0, 32], sizes = [2, 32], strides = [1, 1]} : vector<2x128xf32> to vector<2x32xf32>
    %1253 = arith.negf %1252 : vector<2x32xf32>
    %1254 = math.exp %1253 : vector<2x32xf32>
    %cst_451 = arith.constant 1.000000e+00 : f32
    %1255 = vector.broadcast %cst_451 : f32 to vector<2x32xf32>
    %1256 = arith.addf %1255, %1254 : vector<2x32xf32>
    %1257 = arith.divf %1255, %1256 : vector<2x32xf32>
    %1258 = vector.extract_strided_slice %1245 {offsets = [0, 64], sizes = [2, 32], strides = [1, 1]} : vector<2x128xf32> to vector<2x32xf32>
    %1259 = math.tanh %1258 : vector<2x32xf32>
    %1260 = vector.extract_strided_slice %1245 {offsets = [0, 96], sizes = [2, 32], strides = [1, 1]} : vector<2x128xf32> to vector<2x32xf32>
    %1261 = arith.negf %1260 : vector<2x32xf32>
    %1262 = math.exp %1261 : vector<2x32xf32>
    %cst_452 = arith.constant 1.000000e+00 : f32
    %1263 = vector.broadcast %cst_452 : f32 to vector<2x32xf32>
    %1264 = arith.addf %1263, %1262 : vector<2x32xf32>
    %1265 = arith.divf %1263, %1264 : vector<2x32xf32>
    %1266 = arith.mulf %1257, %1232 : vector<2x32xf32>
    %1267 = arith.mulf %1251, %1259 : vector<2x32xf32>
    %1268 = arith.addf %1266, %1267 : vector<2x32xf32>
    %1269 = math.tanh %1268 : vector<2x32xf32>
    %1270 = arith.mulf %1265, %1269 : vector<2x32xf32>
    %c28_453 = arith.constant 28 : index
    %c0_454 = arith.constant 0 : index
    %c0_455 = arith.constant 0 : index
    %1271 = vector.load %arg24[%c28_453, %c0_454, %c0_455] : memref<32x2x128xf32, #tpu.memory_space<vmem>>, vector<1x2x128xf32>
    %1272 = vector.shape_cast %1271 : vector<1x2x128xf32> to vector<2x128xf32>
    %1273 = vector.broadcast %257 : vector<1x128xf32> to vector<2x128xf32>
    %1274 = arith.mulf %1272, %1273 : vector<2x128xf32>
    %c3_456 = arith.constant 3 : index
    %c0_457 = arith.constant 0 : index
    %c0_458 = arith.constant 0 : index
    %1275 = vector.load %arg24[%c3_456, %c0_457, %c0_458] : memref<32x2x128xf32, #tpu.memory_space<vmem>>, vector<1x2x128xf32>
    %1276 = vector.shape_cast %1275 : vector<1x2x128xf32> to vector<2x128xf32>
    %1277 = vector.broadcast %259 : vector<1x128xf32> to vector<2x128xf32>
    %1278 = arith.mulf %1276, %1277 : vector<2x128xf32>
    %1279 = arith.addf %1274, %1278 : vector<2x128xf32>
    %cst_459 = arith.constant dense<0.000000e+00> : vector<2x128xf32>
    %1280 = tpu.matmul %1270, %260, %cst_459 {dimension_numbers = #tpu.dot_dimension_numbers<[1], [0], [0], [1], [0, 0, 1, 1], [], []>} : vector<2x32xf32>, vector<32x128xf32>, vector<2x128xf32> -> vector<2x128xf32>
    %1281 = arith.addf %1279, %1280 : vector<2x128xf32>
    %1282 = vector.extract_strided_slice %1281 {offsets = [0, 0], sizes = [2, 32], strides = [1, 1]} : vector<2x128xf32> to vector<2x32xf32>
    %1283 = arith.negf %1282 : vector<2x32xf32>
    %1284 = math.exp %1283 : vector<2x32xf32>
    %cst_460 = arith.constant 1.000000e+00 : f32
    %1285 = vector.broadcast %cst_460 : f32 to vector<2x32xf32>
    %1286 = arith.addf %1285, %1284 : vector<2x32xf32>
    %1287 = arith.divf %1285, %1286 : vector<2x32xf32>
    %1288 = vector.extract_strided_slice %1281 {offsets = [0, 32], sizes = [2, 32], strides = [1, 1]} : vector<2x128xf32> to vector<2x32xf32>
    %1289 = arith.negf %1288 : vector<2x32xf32>
    %1290 = math.exp %1289 : vector<2x32xf32>
    %cst_461 = arith.constant 1.000000e+00 : f32
    %1291 = vector.broadcast %cst_461 : f32 to vector<2x32xf32>
    %1292 = arith.addf %1291, %1290 : vector<2x32xf32>
    %1293 = arith.divf %1291, %1292 : vector<2x32xf32>
    %1294 = vector.extract_strided_slice %1281 {offsets = [0, 64], sizes = [2, 32], strides = [1, 1]} : vector<2x128xf32> to vector<2x32xf32>
    %1295 = math.tanh %1294 : vector<2x32xf32>
    %1296 = vector.extract_strided_slice %1281 {offsets = [0, 96], sizes = [2, 32], strides = [1, 1]} : vector<2x128xf32> to vector<2x32xf32>
    %1297 = arith.negf %1296 : vector<2x32xf32>
    %1298 = math.exp %1297 : vector<2x32xf32>
    %cst_462 = arith.constant 1.000000e+00 : f32
    %1299 = vector.broadcast %cst_462 : f32 to vector<2x32xf32>
    %1300 = arith.addf %1299, %1298 : vector<2x32xf32>
    %1301 = arith.divf %1299, %1300 : vector<2x32xf32>
    %1302 = arith.mulf %1293, %1268 : vector<2x32xf32>
    %1303 = arith.mulf %1287, %1295 : vector<2x32xf32>
    %1304 = arith.addf %1302, %1303 : vector<2x32xf32>
    %1305 = math.tanh %1304 : vector<2x32xf32>
    %1306 = arith.mulf %1301, %1305 : vector<2x32xf32>
    %c29_463 = arith.constant 29 : index
    %c0_464 = arith.constant 0 : index
    %c0_465 = arith.constant 0 : index
    %1307 = vector.load %arg24[%c29_463, %c0_464, %c0_465] : memref<32x2x128xf32, #tpu.memory_space<vmem>>, vector<1x2x128xf32>
    %1308 = vector.shape_cast %1307 : vector<1x2x128xf32> to vector<2x128xf32>
    %1309 = vector.broadcast %257 : vector<1x128xf32> to vector<2x128xf32>
    %1310 = arith.mulf %1308, %1309 : vector<2x128xf32>
    %c2_466 = arith.constant 2 : index
    %c0_467 = arith.constant 0 : index
    %c0_468 = arith.constant 0 : index
    %1311 = vector.load %arg24[%c2_466, %c0_467, %c0_468] : memref<32x2x128xf32, #tpu.memory_space<vmem>>, vector<1x2x128xf32>
    %1312 = vector.shape_cast %1311 : vector<1x2x128xf32> to vector<2x128xf32>
    %1313 = vector.broadcast %259 : vector<1x128xf32> to vector<2x128xf32>
    %1314 = arith.mulf %1312, %1313 : vector<2x128xf32>
    %1315 = arith.addf %1310, %1314 : vector<2x128xf32>
    %cst_469 = arith.constant dense<0.000000e+00> : vector<2x128xf32>
    %1316 = tpu.matmul %1306, %260, %cst_469 {dimension_numbers = #tpu.dot_dimension_numbers<[1], [0], [0], [1], [0, 0, 1, 1], [], []>} : vector<2x32xf32>, vector<32x128xf32>, vector<2x128xf32> -> vector<2x128xf32>
    %1317 = arith.addf %1315, %1316 : vector<2x128xf32>
    %1318 = vector.extract_strided_slice %1317 {offsets = [0, 0], sizes = [2, 32], strides = [1, 1]} : vector<2x128xf32> to vector<2x32xf32>
    %1319 = arith.negf %1318 : vector<2x32xf32>
    %1320 = math.exp %1319 : vector<2x32xf32>
    %cst_470 = arith.constant 1.000000e+00 : f32
    %1321 = vector.broadcast %cst_470 : f32 to vector<2x32xf32>
    %1322 = arith.addf %1321, %1320 : vector<2x32xf32>
    %1323 = arith.divf %1321, %1322 : vector<2x32xf32>
    %1324 = vector.extract_strided_slice %1317 {offsets = [0, 32], sizes = [2, 32], strides = [1, 1]} : vector<2x128xf32> to vector<2x32xf32>
    %1325 = arith.negf %1324 : vector<2x32xf32>
    %1326 = math.exp %1325 : vector<2x32xf32>
    %cst_471 = arith.constant 1.000000e+00 : f32
    %1327 = vector.broadcast %cst_471 : f32 to vector<2x32xf32>
    %1328 = arith.addf %1327, %1326 : vector<2x32xf32>
    %1329 = arith.divf %1327, %1328 : vector<2x32xf32>
    %1330 = vector.extract_strided_slice %1317 {offsets = [0, 64], sizes = [2, 32], strides = [1, 1]} : vector<2x128xf32> to vector<2x32xf32>
    %1331 = math.tanh %1330 : vector<2x32xf32>
    %1332 = vector.extract_strided_slice %1317 {offsets = [0, 96], sizes = [2, 32], strides = [1, 1]} : vector<2x128xf32> to vector<2x32xf32>
    %1333 = arith.negf %1332 : vector<2x32xf32>
    %1334 = math.exp %1333 : vector<2x32xf32>
    %cst_472 = arith.constant 1.000000e+00 : f32
    %1335 = vector.broadcast %cst_472 : f32 to vector<2x32xf32>
    %1336 = arith.addf %1335, %1334 : vector<2x32xf32>
    %1337 = arith.divf %1335, %1336 : vector<2x32xf32>
    %1338 = arith.mulf %1329, %1304 : vector<2x32xf32>
    %1339 = arith.mulf %1323, %1331 : vector<2x32xf32>
    %1340 = arith.addf %1338, %1339 : vector<2x32xf32>
    %1341 = math.tanh %1340 : vector<2x32xf32>
    %1342 = arith.mulf %1337, %1341 : vector<2x32xf32>
    %c30_473 = arith.constant 30 : index
    %c0_474 = arith.constant 0 : index
    %c0_475 = arith.constant 0 : index
    %1343 = vector.load %arg24[%c30_473, %c0_474, %c0_475] : memref<32x2x128xf32, #tpu.memory_space<vmem>>, vector<1x2x128xf32>
    %1344 = vector.shape_cast %1343 : vector<1x2x128xf32> to vector<2x128xf32>
    %1345 = vector.broadcast %257 : vector<1x128xf32> to vector<2x128xf32>
    %1346 = arith.mulf %1344, %1345 : vector<2x128xf32>
    %c1_476 = arith.constant 1 : index
    %c0_477 = arith.constant 0 : index
    %c0_478 = arith.constant 0 : index
    %1347 = vector.load %arg24[%c1_476, %c0_477, %c0_478] : memref<32x2x128xf32, #tpu.memory_space<vmem>>, vector<1x2x128xf32>
    %1348 = vector.shape_cast %1347 : vector<1x2x128xf32> to vector<2x128xf32>
    %1349 = vector.broadcast %259 : vector<1x128xf32> to vector<2x128xf32>
    %1350 = arith.mulf %1348, %1349 : vector<2x128xf32>
    %1351 = arith.addf %1346, %1350 : vector<2x128xf32>
    %cst_479 = arith.constant dense<0.000000e+00> : vector<2x128xf32>
    %1352 = tpu.matmul %1342, %260, %cst_479 {dimension_numbers = #tpu.dot_dimension_numbers<[1], [0], [0], [1], [0, 0, 1, 1], [], []>} : vector<2x32xf32>, vector<32x128xf32>, vector<2x128xf32> -> vector<2x128xf32>
    %1353 = arith.addf %1351, %1352 : vector<2x128xf32>
    %1354 = vector.extract_strided_slice %1353 {offsets = [0, 0], sizes = [2, 32], strides = [1, 1]} : vector<2x128xf32> to vector<2x32xf32>
    %1355 = arith.negf %1354 : vector<2x32xf32>
    %1356 = math.exp %1355 : vector<2x32xf32>
    %cst_480 = arith.constant 1.000000e+00 : f32
    %1357 = vector.broadcast %cst_480 : f32 to vector<2x32xf32>
    %1358 = arith.addf %1357, %1356 : vector<2x32xf32>
    %1359 = arith.divf %1357, %1358 : vector<2x32xf32>
    %1360 = vector.extract_strided_slice %1353 {offsets = [0, 32], sizes = [2, 32], strides = [1, 1]} : vector<2x128xf32> to vector<2x32xf32>
    %1361 = arith.negf %1360 : vector<2x32xf32>
    %1362 = math.exp %1361 : vector<2x32xf32>
    %cst_481 = arith.constant 1.000000e+00 : f32
    %1363 = vector.broadcast %cst_481 : f32 to vector<2x32xf32>
    %1364 = arith.addf %1363, %1362 : vector<2x32xf32>
    %1365 = arith.divf %1363, %1364 : vector<2x32xf32>
    %1366 = vector.extract_strided_slice %1353 {offsets = [0, 64], sizes = [2, 32], strides = [1, 1]} : vector<2x128xf32> to vector<2x32xf32>
    %1367 = math.tanh %1366 : vector<2x32xf32>
    %1368 = vector.extract_strided_slice %1353 {offsets = [0, 96], sizes = [2, 32], strides = [1, 1]} : vector<2x128xf32> to vector<2x32xf32>
    %1369 = arith.negf %1368 : vector<2x32xf32>
    %1370 = math.exp %1369 : vector<2x32xf32>
    %cst_482 = arith.constant 1.000000e+00 : f32
    %1371 = vector.broadcast %cst_482 : f32 to vector<2x32xf32>
    %1372 = arith.addf %1371, %1370 : vector<2x32xf32>
    %1373 = arith.divf %1371, %1372 : vector<2x32xf32>
    %1374 = arith.mulf %1365, %1340 : vector<2x32xf32>
    %1375 = arith.mulf %1359, %1367 : vector<2x32xf32>
    %1376 = arith.addf %1374, %1375 : vector<2x32xf32>
    %1377 = math.tanh %1376 : vector<2x32xf32>
    %1378 = arith.mulf %1373, %1377 : vector<2x32xf32>
    %c31_483 = arith.constant 31 : index
    %c0_484 = arith.constant 0 : index
    %c0_485 = arith.constant 0 : index
    %1379 = vector.load %arg24[%c31_483, %c0_484, %c0_485] : memref<32x2x128xf32, #tpu.memory_space<vmem>>, vector<1x2x128xf32>
    %1380 = vector.shape_cast %1379 : vector<1x2x128xf32> to vector<2x128xf32>
    %1381 = vector.broadcast %257 : vector<1x128xf32> to vector<2x128xf32>
    %1382 = arith.mulf %1380, %1381 : vector<2x128xf32>
    %c0_486 = arith.constant 0 : index
    %c0_487 = arith.constant 0 : index
    %c0_488 = arith.constant 0 : index
    %1383 = vector.load %arg24[%c0_486, %c0_487, %c0_488] : memref<32x2x128xf32, #tpu.memory_space<vmem>>, vector<1x2x128xf32>
    %1384 = vector.shape_cast %1383 : vector<1x2x128xf32> to vector<2x128xf32>
    %1385 = vector.broadcast %259 : vector<1x128xf32> to vector<2x128xf32>
    %1386 = arith.mulf %1384, %1385 : vector<2x128xf32>
    %1387 = arith.addf %1382, %1386 : vector<2x128xf32>
    %cst_489 = arith.constant dense<0.000000e+00> : vector<2x128xf32>
    %1388 = tpu.matmul %1378, %260, %cst_489 {dimension_numbers = #tpu.dot_dimension_numbers<[1], [0], [0], [1], [0, 0, 1, 1], [], []>} : vector<2x32xf32>, vector<32x128xf32>, vector<2x128xf32> -> vector<2x128xf32>
    %1389 = arith.addf %1387, %1388 : vector<2x128xf32>
    %1390 = vector.extract_strided_slice %1389 {offsets = [0, 0], sizes = [2, 32], strides = [1, 1]} : vector<2x128xf32> to vector<2x32xf32>
    %1391 = arith.negf %1390 : vector<2x32xf32>
    %1392 = math.exp %1391 : vector<2x32xf32>
    %cst_490 = arith.constant 1.000000e+00 : f32
    %1393 = vector.broadcast %cst_490 : f32 to vector<2x32xf32>
    %1394 = arith.addf %1393, %1392 : vector<2x32xf32>
    %1395 = arith.divf %1393, %1394 : vector<2x32xf32>
    %1396 = vector.extract_strided_slice %1389 {offsets = [0, 32], sizes = [2, 32], strides = [1, 1]} : vector<2x128xf32> to vector<2x32xf32>
    %1397 = arith.negf %1396 : vector<2x32xf32>
    %1398 = math.exp %1397 : vector<2x32xf32>
    %cst_491 = arith.constant 1.000000e+00 : f32
    %1399 = vector.broadcast %cst_491 : f32 to vector<2x32xf32>
    %1400 = arith.addf %1399, %1398 : vector<2x32xf32>
    %1401 = arith.divf %1399, %1400 : vector<2x32xf32>
    %1402 = vector.extract_strided_slice %1389 {offsets = [0, 64], sizes = [2, 32], strides = [1, 1]} : vector<2x128xf32> to vector<2x32xf32>
    %1403 = math.tanh %1402 : vector<2x32xf32>
    %1404 = vector.extract_strided_slice %1389 {offsets = [0, 96], sizes = [2, 32], strides = [1, 1]} : vector<2x128xf32> to vector<2x32xf32>
    %1405 = arith.negf %1404 : vector<2x32xf32>
    %1406 = math.exp %1405 : vector<2x32xf32>
    %cst_492 = arith.constant 1.000000e+00 : f32
    %1407 = vector.broadcast %cst_492 : f32 to vector<2x32xf32>
    %1408 = arith.addf %1407, %1406 : vector<2x32xf32>
    %1409 = arith.divf %1407, %1408 : vector<2x32xf32>
    %1410 = arith.mulf %1401, %1376 : vector<2x32xf32>
    %1411 = arith.mulf %1395, %1403 : vector<2x32xf32>
    %1412 = arith.addf %1410, %1411 : vector<2x32xf32>
    %1413 = math.tanh %1412 : vector<2x32xf32>
    %1414 = arith.mulf %1409, %1413 : vector<2x32xf32>
    %c0_493 = arith.constant 0 : index
    %c0_494 = arith.constant 0 : index
    %1415 = vector.load %arg18[%c0_493, %c0_494] : memref<32x32xf32, #tpu.memory_space<vmem>>, vector<32x32xf32>
    %cst_495 = arith.constant dense<0.000000e+00> : vector<2x32xf32>
    %1416 = tpu.matmul %1414, %1415, %cst_495 {dimension_numbers = #tpu.dot_dimension_numbers<[1], [0], [0], [1], [0, 0, 1, 1], [], []>} : vector<2x32xf32>, vector<32x32xf32>, vector<2x32xf32> -> vector<2x32xf32>
    %c0_496 = arith.constant 0 : index
    %c0_497 = arith.constant 0 : index
    %1417 = vector.load %arg19[%c0_496, %c0_497] : memref<1x32xf32, #tpu.memory_space<vmem>>, vector<1x32xf32>
    %1418 = vector.broadcast %1417 : vector<1x32xf32> to vector<2x32xf32>
    %1419 = arith.addf %1416, %1418 : vector<2x32xf32>
    %cst_498 = arith.constant 0.000000e+00 : f32
    %1420 = vector.broadcast %cst_498 : f32 to vector<2x32xf32>
    %1421 = arith.maximumf %1419, %1420 : vector<2x32xf32>
    %c0_499 = arith.constant 0 : index
    %c0_500 = arith.constant 0 : index
    %1422 = vector.load %arg20[%c0_499, %c0_500] : memref<32x2xf32, #tpu.memory_space<vmem>>, vector<32x2xf32>
    %cst_501 = arith.constant dense<0.000000e+00> : vector<2x2xf32>
    %1423 = tpu.matmul %1421, %1422, %cst_501 {dimension_numbers = #tpu.dot_dimension_numbers<[1], [0], [0], [1], [0, 0, 1, 1], [], []>} : vector<2x32xf32>, vector<32x2xf32>, vector<2x2xf32> -> vector<2x2xf32>
    %c0_502 = arith.constant 0 : index
    %c0_503 = arith.constant 0 : index
    %1424 = vector.load %arg21[%c0_502, %c0_503] : memref<1x2xf32, #tpu.memory_space<vmem>>, vector<1x2xf32>
    %1425 = vector.broadcast %1424 : vector<1x2xf32> to vector<2x2xf32>
    %1426 = arith.addf %1423, %1425 : vector<2x2xf32>
    %c0_504 = arith.constant 0 : index
    %c0_505 = arith.constant 0 : index
    %1427 = vector.load %arg22[%c0_504, %c0_505] : memref<2x2xf32, #tpu.memory_space<vmem>>, vector<2x2xf32>
    tpu.vector_store %arg22[%c0_504, %c0_505], %1426 {strides = array<i32>} : memref<2x2xf32, #tpu.memory_space<vmem>>, vector<2x2xf32>,
    return
  }
}

</mosaic_0001>

<llo_original>
// kernel: _lambda_.1
$region0: #{_lambda_.1}
  #allocation0 [shape = 'u32[]', space=smem, size = 0x4, offset = 0x4, fixed_abs, tag = 'smem constant byte address 0x4 - core index']
  #allocation1 [shape = 'u32[72,128]{1,0:T(1,128)}', space=vmem, size = 0x9000, scoped, tag = 'internal scratch']
  #allocation2 [shape = 'f32[16,38]{1,0:T(8,128)}', space=vmem, size = 0x2000, scoped, tag = 'scratch operand']
  #allocation3 [shape = 'f32[32,2,128]{2,1,0:T(2,128)}', space=vmem, size = 0x8000, scoped, tag = 'scratch operand']
  %s0 = inlined_call_operand.vmem [shape: f32[2,1,38], index: 0, kind: input, shape index: {}]
  %s1 = inlined_call_operand.vmem [shape: f32[1,36], index: 1, kind: input, shape index: {}]
  %s2 = inlined_call_operand.vmem [shape: f32[1,128], index: 2, kind: input, shape index: {}]
  %s3 = inlined_call_operand.vmem [shape: f32[3,8,1], index: 3, kind: input, shape index: {}]
  %s4 = inlined_call_operand.vmem [shape: f32[8,1], index: 4, kind: input, shape index: {}]
  %s5 = inlined_call_operand.hbm [shape: f32[8,1], index: 5, kind: input, shape index: {}]
  %s6 = inlined_call_operand.hbm [shape: f32[3,16,8], index: 6, kind: input, shape index: {}]
  %s7 = inlined_call_operand.hbm [shape: f32[16,1], index: 7, kind: input, shape index: {}]
  %s8 = inlined_call_operand.hbm [shape: f32[16,1], index: 8, kind: input, shape index: {}]
  %s9 = inlined_call_operand.hbm [shape: f32[3,16,16], index: 9, kind: input, shape index: {}]
  %s10 = inlined_call_operand.hbm [shape: f32[16,1], index: 10, kind: input, shape index: {}]
  %s11 = inlined_call_operand.hbm [shape: f32[16,1], index: 11, kind: input, shape index: {}]
  %s12 = inlined_call_operand.hbm [shape: f32[3,16,16], index: 12, kind: input, shape index: {}]
  %s13 = inlined_call_operand.hbm [shape: f32[16,1], index: 13, kind: input, shape index: {}]
  %s14 = inlined_call_operand.hbm [shape: f32[16,1], index: 14, kind: input, shape index: {}]
  %s15 = inlined_call_operand.hbm [shape: f32[16,128], index: 15, kind: input, shape index: {}]
  %s16 = inlined_call_operand.vmem [shape: f32[32,128], index: 16, kind: input, shape index: {}]
  %s17 = inlined_call_operand.hbm [shape: f32[1,128], index: 17, kind: input, shape index: {}]
  %s18 = inlined_call_operand.hbm [shape: f32[32,32], index: 18, kind: input, shape index: {}]
  %s19 = inlined_call_operand.hbm [shape: f32[1,32], index: 19, kind: input, shape index: {}]
  %s20 = inlined_call_operand.hbm [shape: f32[32,2], index: 20, kind: input, shape index: {}]
  %s21 = inlined_call_operand.hbm [shape: f32[1,2], index: 21, kind: input, shape index: {}]
  %s22 = inlined_call_operand.hbm [shape: f32[2,2], index: 22, kind: output, shape index: {}]
  %s23 = sld [smem:[#allocation0]]
  $region162: #{_lambda_.1} parent=0
    _
  %s25 = ssub.s32 1, %s23
  %s26 = scalar_select 0, %s25, %s23
  $region1: #{_lambda_.1} parent=0
    #allocation4 [shape = 'u8[4096]{0}', space=vmem, size = 0x1000, scoped, tag = 'input window, operand 5, single buffered']
    #allocation5 [shape = 's32[1]{0}', space=sflag, size = 0x4, scoped, tag = 'scoped memory for _lambda_.1']
    #allocation6 [shape = 's32[1]{0}', space=sflag, size = 0x4, scoped, tag = 'scoped memory for _lambda_.1']
    #allocation7 [shape = 'u8[24576]{0}', space=vmem, size = 0x6000, scoped, tag = 'input window, operand 6, single buffered']
    #allocation8 [shape = 's32[1]{0}', space=sflag, size = 0x4, scoped, tag = 'scoped memory for _lambda_.1']
    #allocation9 [shape = 'u8[8192]{0}', space=vmem, size = 0x2000, scoped, tag = 'input window, operand 7, single buffered']
    #allocation10 [shape = 'u8[8192]{0}', space=vmem, size = 0x2000, scoped, tag = 'input window, operand 8, single buffered']
    #allocation11 [shape = 's32[1]{0}', space=sflag, size = 0x4, scoped, tag = 'scoped memory for _lambda_.1']
    #allocation12 [shape = 'u8[24576]{0}', space=vmem, size = 0x6000, scoped, tag = 'input window, operand 9, single buffered']
    #allocation13 [shape = 'u8[8192]{0}', space=vmem, size = 0x2000, scoped, tag = 'input window, operand 10, single buffered']
    #allocation14 [shape = 's32[1]{0}', space=sflag, size = 0x4, scoped, tag = 'scoped memory for _lambda_.1']
    #allocation15 [shape = 'u8[8192]{0}', space=vmem, size = 0x2000, scoped, tag = 'input window, operand 11, single buffered']
    #allocation16 [shape = 'u8[24576]{0}', space=vmem, size = 0x6000, scoped, tag = 'input window, operand 12, single buffered']
    #allocation17 [shape = 's32[1]{0}', space=sflag, size = 0x4, scoped, tag = 'scoped memory for _lambda_.1']
    #allocation18 [shape = 'u8[8192]{0}', space=vmem, size = 0x2000, scoped, tag = 'input window, operand 13, single buffered']
    #allocation19 [shape = 'u8[8192]{0}', space=vmem, size = 0x2000, scoped, tag = 'input window, operand 14, single buffered']
    #allocation20 [shape = 's32[1]{0}', space=sflag, size = 0x4, scoped, tag = 'scoped memory for _lambda_.1']
    #allocation21 [shape = 'u8[8192]{0}', space=vmem, size = 0x2000, scoped, tag = 'input window, operand 15, single buffered']
    #allocation22 [shape = 'u8[512]{0}', space=vmem, size = 0x400, scoped, tag = 'input window, operand 17, single buffered']
    #allocation23 [shape = 's32[1]{0}', space=sflag, size = 0x4, scoped, tag = 'scoped memory for _lambda_.1']
    #allocation24 [shape = 'u8[16384]{0}', space=vmem, size = 0x4000, scoped, tag = 'input window, operand 18, single buffered']
    #allocation25 [shape = 'u8[512]{0}', space=vmem, size = 0x400, scoped, tag = 'input window, operand 19, single buffered']
    #allocation26 [shape = 's32[1]{0}', space=sflag, size = 0x4, scoped, tag = 'scoped memory for _lambda_.1']
    #allocation27 [shape = 'u8[16384]{0}', space=vmem, size = 0x4000, scoped, tag = 'input window, operand 20, single buffered']
    #allocation28 [shape = 'u8[512]{0}', space=vmem, size = 0x400, scoped, tag = 'input window, operand 21, single buffered']
    #allocation29 [shape = 's32[1]{0}', space=sflag, size = 0x4, scoped, tag = 'scoped memory for _lambda_.1']
    #allocation30 [shape = 'u8[1024]{0}', space=vmem, size = 0x400, scoped, tag = 'output window, operand 0, single buffered']
    %27 = vsyncpa [#allocation5], 0
    %28 = vsyncpa [#allocation8], 0
    %29 = vsyncpa [#allocation11], 0
    %30 = vsyncpa [#allocation14], 0
    %31 = vsyncpa [#allocation17], 0
    %32 = vsyncpa [#allocation20], 0
    %33 = vsyncpa [#allocation23], 0
    %34 = vsyncpa [#allocation26], 0
    %35 = vsyncpa [#allocation29], 0
    %36 = vsyncpa [#allocation6], 0
    // Predicated region
    $region2: #{_lambda_.1} parent=1 // pred_check
      _
    $region3: #{_lambda_.1} parent=1 // pred_check_branch
      %38 = sbr.rel (0) target = $region5
    $region4: #{_lambda_.1} parent=1 // pred_region
      _
    $region5: #{_lambda_.1} parent=1 // pred_fallthru
      _
    // Predicated region
    $region6: #{_lambda_.1} parent=1 // pred_check
      _
    $region7: #{_lambda_.1} parent=1 // pred_check_branch
      %40 = sbr.rel (0) target = $region9
    $region8: #{_lambda_.1} parent=1 // pred_region
      _
    $region9: #{_lambda_.1} parent=1 // pred_fallthru
      _
    // Predicated region
    $region10: #{_lambda_.1} parent=1 // pred_check
      _
    $region11: #{_lambda_.1} parent=1 // pred_check_branch
      %42 = sbr.rel (0) target = $region13
    $region12: #{_lambda_.1} parent=1 // pred_region
      _
    $region13: #{_lambda_.1} parent=1 // pred_fallthru
      _
    // Predicated region
    $region14: #{_lambda_.1} parent=1 // pred_check
      _
    $region15: #{_lambda_.1} parent=1 // pred_check_branch
      %44 = sbr.rel (0) target = $region17
    $region16: #{_lambda_.1} parent=1 // pred_region
      _
    $region17: #{_lambda_.1} parent=1 // pred_fallthru
      _
    // Predicated region
    $region18: #{_lambda_.1} parent=1 // pred_check
      _
    $region19: #{_lambda_.1} parent=1 // pred_check_branch
      %46 = sbr.rel (0) target = $region21
    $region20: #{_lambda_.1} parent=1 // pred_region
      _
    $region21: #{_lambda_.1} parent=1 // pred_fallthru
      _
    // Predicated region
    $region22: #{_lambda_.1} parent=1 // pred_check
      _
    $region23: #{_lambda_.1} parent=1 // pred_check_branch
      %48 = sbr.rel (0) target = $region25
    $region24: #{_lambda_.1} parent=1 // pred_region
      %50 = vsyncadd [#allocation5], 0
      %s52 = sshll.u32 %s5, 4
      %s53 = int_to_ptr.hbm [resolvable:$true] %s52
      %s54 = sshll.u32 [#allocation4], 4
      %s55 = int_to_ptr.vmem [resolvable:$true] %s54
      %57 = dma.hbm_to_vmem [thread:$0]  %s53, 128, %s55, [#allocation5]
    $region25: #{_lambda_.1} parent=1 // pred_fallthru
      _
    // Predicated region
    $region26: #{_lambda_.1} parent=1 // pred_check
      _
    $region27: #{_lambda_.1} parent=1 // pred_check_branch
      %59 = sbr.rel (0) target = $region29
    $region28: #{_lambda_.1} parent=1 // pred_region
      %61 = vsyncadd [#allocation8], 0
      %s62 = sshll.u32 %s6, 4
      %s63 = int_to_ptr.hbm [resolvable:$true] %s62
      %s64 = sshll.u32 [#allocation7], 4
      %s65 = int_to_ptr.vmem [resolvable:$true] %s64
      %70 = dma.hbm_to_vmem [thread:$0]  %s63, 768, %s65, [#allocation8], 128, 128, 8
    $region29: #{_lambda_.1} parent=1 // pred_fallthru
      _
    // Predicated region
    $region30: #{_lambda_.1} parent=1 // pred_check
      _
    $region31: #{_lambda_.1} parent=1 // pred_check_branch
      %72 = sbr.rel (0) target = $region33
    $region32: #{_lambda_.1} parent=1 // pred_region
      %74 = vsyncadd [#allocation8], 0
      %s75 = sshll.u32 %s7, 4
      %s76 = int_to_ptr.hbm [resolvable:$true] %s75
      %s77 = sshll.u32 [#allocation9], 4
      %s78 = int_to_ptr.vmem [resolvable:$true] %s77
      %83 = dma.hbm_to_vmem [thread:$0]  %s76, 256, %s78, [#allocation8], 128, 128, 8
    $region33: #{_lambda_.1} parent=1 // pred_fallthru
      _
    // Predicated region
    $region34: #{_lambda_.1} parent=1 // pred_check
      _
    $region35: #{_lambda_.1} parent=1 // pred_check_branch
      %85 = sbr.rel (0) target = $region37
    $region36: #{_lambda_.1} parent=1 // pred_region
      %87 = vsyncadd [#allocation11], 0
      %s88 = sshll.u32 %s8, 4
      %s89 = int_to_ptr.hbm [resolvable:$true] %s88
      %s90 = sshll.u32 [#allocation10], 4
      %s91 = int_to_ptr.vmem [resolvable:$true] %s90
      %96 = dma.hbm_to_vmem [thread:$0]  %s89, 256, %s91, [#allocation11], 128, 128, 8
    $region37: #{_lambda_.1} parent=1 // pred_fallthru
      _
    // Predicated region
    $region38: #{_lambda_.1} parent=1 // pred_check
      _
    $region39: #{_lambda_.1} parent=1 // pred_check_branch
      %98 = sbr.rel (0) target = $region41
    $region40: #{_lambda_.1} parent=1 // pred_region
      %100 = vsyncadd [#allocation11], 0
      %s101 = sshll.u32 %s9, 4
      %s102 = int_to_ptr.hbm [resolvable:$true] %s101
      %s103 = sshll.u32 [#allocation12], 4
      %s104 = int_to_ptr.vmem [resolvable:$true] %s103
      %109 = dma.hbm_to_vmem [thread:$0]  %s102, 768, %s104, [#allocation11], 128, 128, 8
    $region41: #{_lambda_.1} parent=1 // pred_fallthru
      _
    // Predicated region
    $region42: #{_lambda_.1} parent=1 // pred_check
      _
    $region43: #{_lambda_.1} parent=1 // pred_check_branch
      %111 = sbr.rel (0) target = $region45
    $region44: #{_lambda_.1} parent=1 // pred_region
      %113 = vsyncadd [#allocation14], 0
      %s114 = sshll.u32 %s10, 4
      %s115 = int_to_ptr.hbm [resolvable:$true] %s114
      %s116 = sshll.u32 [#allocation13], 4
      %s117 = int_to_ptr.vmem [resolvable:$true] %s116
      %122 = dma.hbm_to_vmem [thread:$0]  %s115, 256, %s117, [#allocation14], 128, 128, 8
    $region45: #{_lambda_.1} parent=1 // pred_fallthru
      _
    // Predicated region
    $region46: #{_lambda_.1} parent=1 // pred_check
      _
    $region47: #{_lambda_.1} parent=1 // pred_check_branch
      %124 = sbr.rel (0) target = $region49
    $region48: #{_lambda_.1} parent=1 // pred_region
      %126 = vsyncadd [#allocation14], 0
      %s127 = sshll.u32 %s11, 4
      %s128 = int_to_ptr.hbm [resolvable:$true] %s127
      %s129 = sshll.u32 [#allocation15], 4
      %s130 = int_to_ptr.vmem [resolvable:$true] %s129
      %135 = dma.hbm_to_vmem [thread:$0]  %s128, 256, %s130, [#allocation14], 128, 128, 8
    $region49: #{_lambda_.1} parent=1 // pred_fallthru
      _
    // Predicated region
    $region50: #{_lambda_.1} parent=1 // pred_check
      _
    $region51: #{_lambda_.1} parent=1 // pred_check_branch
      %137 = sbr.rel (0) target = $region53
    $region52: #{_lambda_.1} parent=1 // pred_region
      %139 = vsyncadd [#allocation17], 0
      %s140 = sshll.u32 %s12, 4
      %s141 = int_to_ptr.hbm [resolvable:$true] %s140
      %s142 = sshll.u32 [#allocation16], 4
      %s143 = int_to_ptr.vmem [resolvable:$true] %s142
      %148 = dma.hbm_to_vmem [thread:$0]  %s141, 768, %s143, [#allocation17], 128, 128, 8
    $region53: #{_lambda_.1} parent=1 // pred_fallthru
      _
    // Predicated region
    $region54: #{_lambda_.1} parent=1 // pred_check
      _
    $region55: #{_lambda_.1} parent=1 // pred_check_branch
      %150 = sbr.rel (0) target = $region57
    $region56: #{_lambda_.1} parent=1 // pred_region
      %152 = vsyncadd [#allocation17], 0
      %s153 = sshll.u32 %s13, 4
      %s154 = int_to_ptr.hbm [resolvable:$true] %s153
      %s155 = sshll.u32 [#allocation18], 4
      %s156 = int_to_ptr.vmem [resolvable:$true] %s155
      %161 = dma.hbm_to_vmem [thread:$0]  %s154, 256, %s156, [#allocation17], 128, 128, 8
    $region57: #{_lambda_.1} parent=1 // pred_fallthru
      _
    // Predicated region
    $region58: #{_lambda_.1} parent=1 // pred_check
      _
    $region59: #{_lambda_.1} parent=1 // pred_check_branch
      %163 = sbr.rel (0) target = $region61
    $region60: #{_lambda_.1} parent=1 // pred_region
      %165 = vsyncadd [#allocation20], 0
      %s166 = sshll.u32 %s14, 4
      %s167 = int_to_ptr.hbm [resolvable:$true] %s166
      %s168 = sshll.u32 [#allocation19], 4
      %s169 = int_to_ptr.vmem [resolvable:$true] %s168
      %174 = dma.hbm_to_vmem [thread:$0]  %s167, 256, %s169, [#allocation20], 128, 128, 8
    $region61: #{_lambda_.1} parent=1 // pred_fallthru
      _
    // Predicated region
    $region62: #{_lambda_.1} parent=1 // pred_check
      _
    $region63: #{_lambda_.1} parent=1 // pred_check_branch
      %176 = sbr.rel (0) target = $region65
    $region64: #{_lambda_.1} parent=1 // pred_region
      %178 = vsyncadd [#allocation20], 0
      %s179 = sshll.u32 %s15, 4
      %s180 = int_to_ptr.hbm [resolvable:$true] %s179
      %s181 = sshll.u32 [#allocation21], 4
      %s182 = int_to_ptr.vmem [resolvable:$true] %s181
      %187 = dma.hbm_to_vmem [thread:$0]  %s180, 256, %s182, [#allocation20], 128, 128, 8
    $region65: #{_lambda_.1} parent=1 // pred_fallthru
      _
    // Predicated region
    $region66: #{_lambda_.1} parent=1 // pred_check
      _
    $region67: #{_lambda_.1} parent=1 // pred_check_branch
      %189 = sbr.rel (0) target = $region69
    $region68: #{_lambda_.1} parent=1 // pred_region
      _
    $region69: #{_lambda_.1} parent=1 // pred_fallthru
      _
    // Predicated region
    $region70: #{_lambda_.1} parent=1 // pred_check
      _
    $region71: #{_lambda_.1} parent=1 // pred_check_branch
      %191 = sbr.rel (0) target = $region73
    $region72: #{_lambda_.1} parent=1 // pred_region
      %193 = vsyncadd [#allocation23], 0
      %s195 = sshll.u32 %s17, 4
      %s196 = int_to_ptr.hbm [resolvable:$true] %s195
      %s197 = sshll.u32 [#allocation22], 4
      %s198 = int_to_ptr.vmem [resolvable:$true] %s197
      %200 = dma.hbm_to_vmem [thread:$0]  %s196, 16, %s198, [#allocation23]
    $region73: #{_lambda_.1} parent=1 // pred_fallthru
      _
    // Predicated region
    $region74: #{_lambda_.1} parent=1 // pred_check
      _
    $region75: #{_lambda_.1} parent=1 // pred_check_branch
      %202 = sbr.rel (0) target = $region77
    $region76: #{_lambda_.1} parent=1 // pred_region
      %204 = vsyncadd [#allocation23], 0
      %s205 = sshll.u32 %s18, 4
      %s206 = int_to_ptr.hbm [resolvable:$true] %s205
      %s207 = sshll.u32 [#allocation24], 4
      %s208 = int_to_ptr.vmem [resolvable:$true] %s207
      %213 = dma.hbm_to_vmem [thread:$0]  %s206, 512, %s208, [#allocation23], 128, 128, 8
    $region77: #{_lambda_.1} parent=1 // pred_fallthru
      _
    // Predicated region
    $region78: #{_lambda_.1} parent=1 // pred_check
      _
    $region79: #{_lambda_.1} parent=1 // pred_check_branch
      %215 = sbr.rel (0) target = $region81
    $region80: #{_lambda_.1} parent=1 // pred_region
      %217 = vsyncadd [#allocation26], 0
      %s219 = sshll.u32 %s19, 4
      %s220 = int_to_ptr.hbm [resolvable:$true] %s219
      %s221 = sshll.u32 [#allocation25], 4
      %s222 = int_to_ptr.vmem [resolvable:$true] %s221
      %224 = dma.hbm_to_vmem [thread:$0]  %s220, 16, %s222, [#allocation26]
    $region81: #{_lambda_.1} parent=1 // pred_fallthru
      _
    // Predicated region
    $region82: #{_lambda_.1} parent=1 // pred_check
      _
    $region83: #{_lambda_.1} parent=1 // pred_check_branch
      %226 = sbr.rel (0) target = $region85
    $region84: #{_lambda_.1} parent=1 // pred_region
      %228 = vsyncadd [#allocation26], 0
      %s229 = sshll.u32 %s20, 4
      %s230 = int_to_ptr.hbm [resolvable:$true] %s229
      %s231 = sshll.u32 [#allocation27], 4
      %s232 = int_to_ptr.vmem [resolvable:$true] %s231
      %237 = dma.hbm_to_vmem [thread:$0]  %s230, 512, %s232, [#allocation26], 128, 128, 8
    $region85: #{_lambda_.1} parent=1 // pred_fallthru
      _
    // Predicated region
    $region86: #{_lambda_.1} parent=1 // pred_check
      _
    $region87: #{_lambda_.1} parent=1 // pred_check_branch
      %239 = sbr.rel (0) target = $region89
    $region88: #{_lambda_.1} parent=1 // pred_region
      %241 = vsyncadd [#allocation29], 0
      %s243 = sshll.u32 %s21, 4
      %s244 = int_to_ptr.hbm [resolvable:$true] %s243
      %s245 = sshll.u32 [#allocation28], 4
      %s246 = int_to_ptr.vmem [resolvable:$true] %s245
      %248 = dma.hbm_to_vmem [thread:$0]  %s244, 16, %s246, [#allocation29]
    $region89: #{_lambda_.1} parent=1 // pred_fallthru
      _
    // Predicated region
    $region90: #{_lambda_.1} parent=1 // pred_check
      _
    $region91: #{_lambda_.1} parent=1 // pred_check_branch
      %250 = sbr.rel (0) target = $region93
    $region92: #{_lambda_.1} parent=1 // pred_region
      %252 = dma.done [#allocation5], 128
    $region93: #{_lambda_.1} parent=1 // pred_fallthru
      _
    // Predicated region
    $region94: #{_lambda_.1} parent=1 // pred_check
      _
    $region95: #{_lambda_.1} parent=1 // pred_check_branch
      %254 = sbr.rel (0) target = $region97
    $region96: #{_lambda_.1} parent=1 // pred_region
      %256 = dma.done [#allocation8], 768
    $region97: #{_lambda_.1} parent=1 // pred_fallthru
      _
    // Predicated region
    $region98: #{_lambda_.1} parent=1 // pred_check
      _
    $region99: #{_lambda_.1} parent=1 // pred_check_branch
      %258 = sbr.rel (0) target = $region101
    $region100: #{_lambda_.1} parent=1 // pred_region
      %260 = dma.done [#allocation8], 256
    $region101: #{_lambda_.1} parent=1 // pred_fallthru
      _
    // Predicated region
    $region102: #{_lambda_.1} parent=1 // pred_check
      _
    $region103: #{_lambda_.1} parent=1 // pred_check_branch
      %262 = sbr.rel (0) target = $region105
    $region104: #{_lambda_.1} parent=1 // pred_region
      %264 = dma.done [#allocation11], 256
    $region105: #{_lambda_.1} parent=1 // pred_fallthru
      _
    // Predicated region
    $region106: #{_lambda_.1} parent=1 // pred_check
      _
    $region107: #{_lambda_.1} parent=1 // pred_check_branch
      %266 = sbr.rel (0) target = $region109
    $region108: #{_lambda_.1} parent=1 // pred_region
      %268 = dma.done [#allocation11], 768
    $region109: #{_lambda_.1} parent=1 // pred_fallthru
      _
    // Predicated region
    $region110: #{_lambda_.1} parent=1 // pred_check
      _
    $region111: #{_lambda_.1} parent=1 // pred_check_branch
      %270 = sbr.rel (0) target = $region113
    $region112: #{_lambda_.1} parent=1 // pred_region
      %272 = dma.done [#allocation14], 256
    $region113: #{_lambda_.1} parent=1 // pred_fallthru
      _
    // Predicated region
    $region114: #{_lambda_.1} parent=1 // pred_check
      _
    $region115: #{_lambda_.1} parent=1 // pred_check_branch
      %274 = sbr.rel (0) target = $region117
    $region116: #{_lambda_.1} parent=1 // pred_region
      %276 = dma.done [#allocation14], 256
    $region117: #{_lambda_.1} parent=1 // pred_fallthru
      _
    // Predicated region
    $region118: #{_lambda_.1} parent=1 // pred_check
      _
    $region119: #{_lambda_.1} parent=1 // pred_check_branch
      %278 = sbr.rel (0) target = $region121
    $region120: #{_lambda_.1} parent=1 // pred_region
      %280 = dma.done [#allocation17], 768
    $region121: #{_lambda_.1} parent=1 // pred_fallthru
      _
    // Predicated region
    $region122: #{_lambda_.1} parent=1 // pred_check
      _
    $region123: #{_lambda_.1} parent=1 // pred_check_branch
      %282 = sbr.rel (0) target = $region125
    $region124: #{_lambda_.1} parent=1 // pred_region
      %284 = dma.done [#allocation17], 256
    $region125: #{_lambda_.1} parent=1 // pred_fallthru
      _
    // Predicated region
    $region126: #{_lambda_.1} parent=1 // pred_check
      _
    $region127: #{_lambda_.1} parent=1 // pred_check_branch
      %286 = sbr.rel (0) target = $region129
    $region128: #{_lambda_.1} parent=1 // pred_region
      %288 = dma.done [#allocation20], 256
    $region129: #{_lambda_.1} parent=1 // pred_fallthru
      _
    // Predicated region
    $region130: #{_lambda_.1} parent=1 // pred_check
      _
    $region131: #{_lambda_.1} parent=1 // pred_check_branch
      %290 = sbr.rel (0) target = $region133
    $region132: #{_lambda_.1} parent=1 // pred_region
      %292 = dma.done [#allocation20], 256
    $region133: #{_lambda_.1} parent=1 // pred_fallthru
      _
    // Predicated region
    $region134: #{_lambda_.1} parent=1 // pred_check
      _
    $region135: #{_lambda_.1} parent=1 // pred_check_branch
      %294 = sbr.rel (0) target = $region137
    $region136: #{_lambda_.1} parent=1 // pred_region
      %296 = dma.done [#allocation23], 16
    $region137: #{_lambda_.1} parent=1 // pred_fallthru
      _
    // Predicated region
    $region138: #{_lambda_.1} parent=1 // pred_check
      _
    $region139: #{_lambda_.1} parent=1 // pred_check_branch
      %298 = sbr.rel (0) target = $region141
    $region140: #{_lambda_.1} parent=1 // pred_region
      %300 = dma.done [#allocation23], 512
    $region141: #{_lambda_.1} parent=1 // pred_fallthru
      _
    // Predicated region
    $region142: #{_lambda_.1} parent=1 // pred_check
      _
    $region143: #{_lambda_.1} parent=1 // pred_check_branch
      %302 = sbr.rel (0) target = $region145
    $region144: #{_lambda_.1} parent=1 // pred_region
      %304 = dma.done [#allocation26], 16
    $region145: #{_lambda_.1} parent=1 // pred_fallthru
      _
    // Predicated region
    $region146: #{_lambda_.1} parent=1 // pred_check
      _
    $region147: #{_lambda_.1} parent=1 // pred_check_branch
      %306 = sbr.rel (0) target = $region149
    $region148: #{_lambda_.1} parent=1 // pred_region
      %308 = dma.done [#allocation26], 512
    $region149: #{_lambda_.1} parent=1 // pred_fallthru
      _
    // Predicated region
    $region150: #{_lambda_.1} parent=1 // pred_check
      _
    $region151: #{_lambda_.1} parent=1 // pred_check_branch
      %310 = sbr.rel (0) target = $region153
    $region152: #{_lambda_.1} parent=1 // pred_region
      %312 = dma.done [#allocation29], 16
    $region153: #{_lambda_.1} parent=1 // pred_fallthru
      _
    %v313 = vld [vmem:[%s1] sm:$0x1]
    %v314 = vld [vmem:[#allocation21] sm:$0xff]
    %v315 = vld [vmem:[#allocation21 + $0x8] sm:$0xff]
    %v316 = vld [vmem:[#allocation22] sm:$0x1]
    %vm317 = vcmask 310272
    %318 = vst.msk [vmem:[#allocation2] sm:$0xff] %vm317, 0.0
    %319 = vst.msk [vmem:[#allocation2 + $0x8] sm:$0xff] %vm317, 0.0
    %v320 = vld [vmem:[%s0] sm:$0x1]
    %v321 = vld [vmem:[%s3] sm:$0xff]
    %s322 = scalar_lea.vmem %s3, 8
    %v323 = vld [vmem:[%s322] sm:$0xff]
    %v325 = vperm.slane %v320, 0
    %326 = vrot.lane.b32.xlu0 %v325, 127
    %v327 = vpop.permute.xlu0 %326
    %vm328 = vcmask 7168
    %v330 = vsel %vm328, %v323, 0
    %vm332 = vcmask 1040384
    %v333 = vsel %vm332, %v327, 0
    %335 = vmatpush.msra.mxu0 0.0
    %336 = vmatpush.msra.mxu0 0.0
    %337 = vmatpush.msra.mxu0 0.0
    %338 = vmatpush.msra.mxu0 0.0
    %339 = vmatpush.msra.mxu0 0.0
    %340 = vmatpush.msra.mxu0 0.0
    %341 = vmatpush.msra.mxu0 0.0
    %342 = vmatpush.msra.mxu0 0.0
    %343 = vmatpush.msra.mxu0 0.0
    %344 = vmatpush.msra.mxu0 0.0
    %345 = vmatpush.msra.mxu0 0.0
    %346 = vmatpush.msra.mxu0 0.0
    %347 = vmatpush.msra.mxu0 0.0
    %348 = vmatpush.msra.mxu0 0.0
    %349 = vmatpush.msra.mxu0 0.0
    %350 = vmatpush.msra.mxu0 %v333
    %351 = vmatmul.f32.gmra.mxu0 %v330
    %v352 = vpop.f32.mrf.mxu0
    %v353 = vadd.f32 0.0, %v352
    %354 = vdwg.mxu0
    %v356 = vsel %vm328, %v321, 0
    %v358 = vsel %vm332, %v320, 0
    %360 = vmatpush.msra.mxu0 0.0
    %361 = vmatpush.msra.mxu0 0.0
    %362 = vmatpush.msra.mxu0 0.0
    %363 = vmatpush.msra.mxu0 0.0
    %364 = vmatpush.msra.mxu0 0.0
    %365 = vmatpush.msra.mxu0 0.0
    %366 = vmatpush.msra.mxu0 0.0
    %367 = vmatpush.msra.mxu0 0.0
    %368 = vmatpush.msra.mxu0 0.0
    %369 = vmatpush.msra.mxu0 0.0
    %370 = vmatpush.msra.mxu0 0.0
    %371 = vmatpush.msra.mxu0 0.0
    %372 = vmatpush.msra.mxu0 0.0
    %373 = vmatpush.msra.mxu0 0.0
    %374 = vmatpush.msra.mxu0 0.0
    %375 = vmatpush.msra.mxu0 %v358
    %376 = vmatmul.f32.gmra.mxu0 %v356
    %v377 = vpop.f32.mrf.mxu0
    %v378 = vadd.f32 %v353, %v377
    %379 = vdwg.mxu0
    %s380 = scalar_lea.vmem %s3, 16
    %v381 = vld [vmem:[%s380] sm:$0xff]
    %382 = vrot.lane.b32.xlu0 %v325, 126
    %v383 = vpop.permute.xlu0 %382
    %v385 = vsel %vm328, %v381, 0
    %v387 = vsel %vm332, %v383, 0
    %389 = vmatpush.msra.mxu0 0.0
    %390 = vmatpush.msra.mxu0 0.0
    %391 = vmatpush.msra.mxu0 0.0
    %392 = vmatpush.msra.mxu0 0.0
    %393 = vmatpush.msra.mxu0 0.0
    %394 = vmatpush.msra.mxu0 0.0
    %395 = vmatpush.msra.mxu0 0.0
    %396 = vmatpush.msra.mxu0 0.0
    %397 = vmatpush.msra.mxu0 0.0
    %398 = vmatpush.msra.mxu0 0.0
    %399 = vmatpush.msra.mxu0 0.0
    %400 = vmatpush.msra.mxu0 0.0
    %401 = vmatpush.msra.mxu0 0.0
    %402 = vmatpush.msra.mxu0 0.0
    %403 = vmatpush.msra.mxu0 0.0
    %404 = vmatpush.msra.mxu0 %v387
    %405 = vmatmul.f32.gmra.mxu0 %v385
    %v406 = vpop.f32.mrf.mxu0
    %v407 = vadd.f32 0.0, %v406
    %408 = vdwg.mxu0
    %v409 = vadd.f32 %v378, %v407
    %v410 = vld [vmem:[%s4] sm:$0xff]
    %412 = vset.pattern.permute.xlu0 0
    %413 = vperm.xlu0 %412, %v410
    %v414 = vpop.permute.xlu0 %413
    %v416 = vmul.f32 %v409, %v414
    %v417 = vld [vmem:[#allocation4] sm:$0xff]
    %419 = vset.pattern.permute.xlu0 0
    %420 = vperm.xlu0 %419, %v417
    %v421 = vpop.permute.xlu0 %420
    %v423 = vadd.f32 %v416, %v421
    %v424 = vmax.f32 %v423, 0.0
    %v426 = vperm.slane %v313, 0
    %v428 = vmul.f32 %v424, %v426
    %430 = vrot.lane.b32.xlu0 %v428, 1
    %v431 = vpop.permute.xlu0 %430
    %vm433 = vcmask 302088
    %434 = vst.msk [vmem:[#allocation2] sm:$0xff] %vm433, %v431
    %v435 = vld [vmem:[#allocation2] sm:$0xff]
    %v436 = vld [vmem:[#allocation7] sm:$0xff]
    %v437 = vld [vmem:[#allocation7 + $0x8] sm:$0xff]
    %s438 = scalar_lea.vmem [#allocation7], 16
    %v439 = vld [vmem:[%s438] sm:$0xff]
    %v440 = vld [vmem:[%s438 + $0x8] sm:$0xff]
    %442 = vrot.lane.b32.xlu0 %v435, 127
    %v443 = vpop.permute.xlu0 %442
    %vm445 = vcmask 64512
    %v447 = vsel %vm445, %v439, 0
    %v450 = vsel %vm445, %v440, 0
    %452 = vmatpush.msra.mxu0 0.0
    %453 = vmatpush.msra.mxu0 0.0
    %454 = vmatpush.msra.mxu0 0.0
    %455 = vmatpush.msra.mxu0 0.0
    %456 = vmatpush.msra.mxu0 0.0
    %457 = vmatpush.msra.mxu0 0.0
    %458 = vmatpush.msra.mxu0 0.0
    %459 = vmatpush.msra.mxu0 0.0
    %460 = vmatpush.msra.mxu0 0.0
    %461 = vmatpush.msra.mxu0 0.0
    %462 = vmatpush.msra.mxu0 0.0
    %463 = vmatpush.msra.mxu0 0.0
    %464 = vmatpush.msra.mxu0 0.0
    %465 = vmatpush.msra.mxu0 0.0
    %466 = vmatpush.msra.mxu0 0.0
    %467 = vmatpush.msra.mxu0 %v443
    %468 = vmatmul.f32.gmra.mxu0 %v447
    %v469 = vpop.f32.mrf.mxu0
    %v470 = vadd.f32 0.0, %v469
    %471 = vmatmul.f32.gmra.mxu0 %v450
    %v472 = vpop.f32.mrf.mxu0
    %v473 = vadd.f32 0.0, %v472
    %474 = vdwg.mxu0
    %v476 = vsel %vm445, %v436, 0
    %v479 = vsel %vm445, %v437, 0
    %481 = vmatpush.msra.mxu0 0.0
    %482 = vmatpush.msra.mxu0 0.0
    %483 = vmatpush.msra.mxu0 0.0
    %484 = vmatpush.msra.mxu0 0.0
    %485 = vmatpush.msra.mxu0 0.0
    %486 = vmatpush.msra.mxu0 0.0
    %487 = vmatpush.msra.mxu0 0.0
    %488 = vmatpush.msra.mxu0 0.0
    %489 = vmatpush.msra.mxu0 0.0
    %490 = vmatpush.msra.mxu0 0.0
    %491 = vmatpush.msra.mxu0 0.0
    %492 = vmatpush.msra.mxu0 0.0
    %493 = vmatpush.msra.mxu0 0.0
    %494 = vmatpush.msra.mxu0 0.0
    %495 = vmatpush.msra.mxu0 0.0
    %496 = vmatpush.msra.mxu0 %v435
    %497 = vmatmul.f32.gmra.mxu0 %v476
    %v498 = vpop.f32.mrf.mxu0
    %v499 = vadd.f32 %v470, %v498
    %500 = vmatmul.f32.gmra.mxu0 %v479
    %v501 = vpop.f32.mrf.mxu0
    %v502 = vadd.f32 %v473, %v501
    %503 = vdwg.mxu0
    %s504 = scalar_lea.vmem [#allocation7], 32
    %v505 = vld [vmem:[%s504] sm:$0xff]
    %v506 = vld [vmem:[%s504 + $0x8] sm:$0xff]
    %507 = vrot.lane.b32.xlu0 %v435, 126
    %v508 = vpop.permute.xlu0 %507
    %v511 = vsel %vm445, %v505, 0
    %v514 = vsel %vm445, %v506, 0
    %516 = vmatpush.msra.mxu0 0.0
    %517 = vmatpush.msra.mxu0 0.0
    %518 = vmatpush.msra.mxu0 0.0
    %519 = vmatpush.msra.mxu0 0.0
    %520 = vmatpush.msra.mxu0 0.0
    %521 = vmatpush.msra.mxu0 0.0
    %522 = vmatpush.msra.mxu0 0.0
    %523 = vmatpush.msra.mxu0 0.0
    %524 = vmatpush.msra.mxu0 0.0
    %525 = vmatpush.msra.mxu0 0.0
    %526 = vmatpush.msra.mxu0 0.0
    %527 = vmatpush.msra.mxu0 0.0
    %528 = vmatpush.msra.mxu0 0.0
    %529 = vmatpush.msra.mxu0 0.0
    %530 = vmatpush.msra.mxu0 0.0
    %531 = vmatpush.msra.mxu0 %v508
    %532 = vmatmul.f32.gmra.mxu0 %v511
    %v533 = vpop.f32.mrf.mxu0
    %v534 = vadd.f32 0.0, %v533
    %535 = vmatmul.f32.gmra.mxu0 %v514
    %v536 = vpop.f32.mrf.mxu0
    %v537 = vadd.f32 0.0, %v536
    %538 = vdwg.mxu0
    %v539 = vadd.f32 %v499, %v534
    %v540 = vadd.f32 %v502, %v537
    %v541 = vld [vmem:[#allocation9] sm:$0xff]
    %v542 = vld [vmem:[#allocation9 + $0x8] sm:$0xff]
    %544 = vset.pattern.permute.xlu0 0
    %545 = vperm.xlu0 %544, %v541
    %v546 = vpop.permute.xlu0 %545
    %549 = vset.pattern.permute.xlu0 0
    %550 = vperm.xlu0 %549, %v542
    %v551 = vpop.permute.xlu0 %550
    %v553 = vmul.f32 %v539, %v546
    %v554 = vmul.f32 %v540, %v551
    %v555 = vld [vmem:[#allocation10] sm:$0xff]
    %v556 = vld [vmem:[#allocation10 + $0x8] sm:$0xff]
    %558 = vset.pattern.permute.xlu0 0
    %559 = vperm.xlu0 %558, %v555
    %v560 = vpop.permute.xlu0 %559
    %563 = vset.pattern.permute.xlu0 0
    %564 = vperm.xlu0 %563, %v556
    %v565 = vpop.permute.xlu0 %564
    %v567 = vadd.f32 %v553, %v560
    %v568 = vadd.f32 %v554, %v565
    %v569 = vmax.f32 %v567, 0.0
    %v570 = vmax.f32 %v568, 0.0
    %v571 = vmul.f32 %v569, %v426
    %v572 = vmul.f32 %v570, %v426
    %575 = vrot.lane.b32.xlu0 %v571, 1
    %v576 = vpop.permute.xlu0 %575
    %577 = vrot.lane.b32.xlu0 %v572, 1
    %v578 = vpop.permute.xlu0 %577
    %581 = vst.msk [vmem:[#allocation2] sm:$0xff] %vm433, %v576
    %582 = vst.msk [vmem:[#allocation2 + $0x8] sm:$0xff] %vm433, %v578
    %v583 = vld [vmem:[#allocation2] sm:$0xff]
    %v584 = vld [vmem:[#allocation2 + $0x8] sm:$0xff]
    %v585 = vld [vmem:[#allocation12] sm:$0xff]
    %v586 = vld [vmem:[#allocation12 + $0x8] sm:$0xff]
    %s587 = scalar_lea.vmem [#allocation12], 16
    %v588 = vld [vmem:[%s587] sm:$0xff]
    %v589 = vld [vmem:[%s587 + $0x8] sm:$0xff]
    %592 = vrot.lane.b32.xlu0 %v583, 127
    %v593 = vpop.permute.xlu0 %592
    %594 = vrot.lane.b32.xlu0 %v584, 127
    %v595 = vpop.permute.xlu0 %594
    %vm598 = vcmask 130048
    %v600 = vsel %vm598, %v588, 0
    %v603 = vsel %vm598, %v589, 0
    %605 = vmatpush.msra.mxu0 0.0
    %606 = vmatpush.msra.mxu0 0.0
    %607 = vmatpush.msra.mxu0 0.0
    %608 = vmatpush.msra.mxu0 0.0
    %609 = vmatpush.msra.mxu0 0.0
    %610 = vmatpush.msra.mxu0 0.0
    %611 = vmatpush.msra.mxu0 0.0
    %612 = vmatpush.msra.mxu0 0.0
    %613 = vmatpush.msra.mxu0 0.0
    %614 = vmatpush.msra.mxu0 0.0
    %615 = vmatpush.msra.mxu0 0.0
    %616 = vmatpush.msra.mxu0 0.0
    %617 = vmatpush.msra.mxu0 0.0
    %618 = vmatpush.msra.mxu0 0.0
    %619 = vmatpush.msra.mxu0 %v595
    %620 = vmatpush.msra.mxu0 %v593
    %621 = vmatmul.f32.gmra.mxu0 %v600
    %v622 = vpop.f32.mrf.mxu0
    %v623 = vadd.f32 0.0, %v622
    %624 = vmatmul.f32.gmra.mxu0 %v603
    %v625 = vpop.f32.mrf.mxu0
    %v626 = vadd.f32 0.0, %v625
    %627 = vdwg.mxu0
    %v629 = vsel %vm598, %v585, 0
    %v632 = vsel %vm598, %v586, 0
    %634 = vmatpush.msra.mxu0 0.0
    %635 = vmatpush.msra.mxu0 0.0
    %636 = vmatpush.msra.mxu0 0.0
    %637 = vmatpush.msra.mxu0 0.0
    %638 = vmatpush.msra.mxu0 0.0
    %639 = vmatpush.msra.mxu0 0.0
    %640 = vmatpush.msra.mxu0 0.0
    %641 = vmatpush.msra.mxu0 0.0
    %642 = vmatpush.msra.mxu0 0.0
    %643 = vmatpush.msra.mxu0 0.0
    %644 = vmatpush.msra.mxu0 0.0
    %645 = vmatpush.msra.mxu0 0.0
    %646 = vmatpush.msra.mxu0 0.0
    %647 = vmatpush.msra.mxu0 0.0
    %648 = vmatpush.msra.mxu0 %v584
    %649 = vmatpush.msra.mxu0 %v583
    %650 = vmatmul.f32.gmra.mxu0 %v629
    %v651 = vpop.f32.mrf.mxu0
    %v652 = vadd.f32 %v623, %v651
    %653 = vmatmul.f32.gmra.mxu0 %v632
    %v654 = vpop.f32.mrf.mxu0
    %v655 = vadd.f32 %v626, %v654
    %656 = vdwg.mxu0
    %s657 = scalar_lea.vmem [#allocation12], 32
    %v658 = vld [vmem:[%s657] sm:$0xff]
    %v659 = vld [vmem:[%s657 + $0x8] sm:$0xff]
    %660 = vrot.lane.b32.xlu0 %v583, 126
    %v661 = vpop.permute.xlu0 %660
    %662 = vrot.lane.b32.xlu0 %v584, 126
    %v663 = vpop.permute.xlu0 %662
    %v667 = vsel %vm598, %v658, 0
    %v670 = vsel %vm598, %v659, 0
    %672 = vmatpush.msra.mxu0 0.0
    %673 = vmatpush.msra.mxu0 0.0
    %674 = vmatpush.msra.mxu0 0.0
    %675 = vmatpush.msra.mxu0 0.0
    %676 = vmatpush.msra.mxu0 0.0
    %677 = vmatpush.msra.mxu0 0.0
    %678 = vmatpush.msra.mxu0 0.0
    %679 = vmatpush.msra.mxu0 0.0
    %680 = vmatpush.msra.mxu0 0.0
    %681 = vmatpush.msra.mxu0 0.0
    %682 = vmatpush.msra.mxu0 0.0
    %683 = vmatpush.msra.mxu0 0.0
    %684 = vmatpush.msra.mxu0 0.0
    %685 = vmatpush.msra.mxu0 0.0
    %686 = vmatpush.msra.mxu0 %v663
    %687 = vmatpush.msra.mxu0 %v661
    %688 = vmatmul.f32.gmra.mxu0 %v667
    %v689 = vpop.f32.mrf.mxu0
    %v690 = vadd.f32 0.0, %v689
    %691 = vmatmul.f32.gmra.mxu0 %v670
    %v692 = vpop.f32.mrf.mxu0
    %v693 = vadd.f32 0.0, %v692
    %694 = vdwg.mxu0
    %v695 = vadd.f32 %v652, %v690
    %v696 = vadd.f32 %v655, %v693
    %v697 = vld [vmem:[#allocation13] sm:$0xff]
    %v698 = vld [vmem:[#allocation13 + $0x8] sm:$0xff]
    %700 = vset.pattern.permute.xlu0 0
    %701 = vperm.xlu0 %700, %v697
    %v702 = vpop.permute.xlu0 %701
    %705 = vset.pattern.permute.xlu0 0
    %706 = vperm.xlu0 %705, %v698
    %v707 = vpop.permute.xlu0 %706
    %v709 = vmul.f32 %v695, %v702
    %v710 = vmul.f32 %v696, %v707
    %v711 = vld [vmem:[#allocation15] sm:$0xff]
    %v712 = vld [vmem:[#allocation15 + $0x8] sm:$0xff]
    %714 = vset.pattern.permute.xlu0 0
    %715 = vperm.xlu0 %714, %v711
    %v716 = vpop.permute.xlu0 %715
    %719 = vset.pattern.permute.xlu0 0
    %720 = vperm.xlu0 %719, %v712
    %v721 = vpop.permute.xlu0 %720
    %v723 = vadd.f32 %v709, %v716
    %v724 = vadd.f32 %v710, %v721
    %v725 = vmax.f32 %v723, 0.0
    %v726 = vmax.f32 %v724, 0.0
    %v727 = vmul.f32 %v725, %v426
    %v728 = vmul.f32 %v726, %v426
    %731 = vrot.lane.b32.xlu0 %v727, 1
    %v732 = vpop.permute.xlu0 %731
    %733 = vrot.lane.b32.xlu0 %v728, 1
    %v734 = vpop.permute.xlu0 %733
    %737 = vst.msk [vmem:[#allocation2] sm:$0xff] %vm433, %v732
    %738 = vst.msk [vmem:[#allocation2 + $0x8] sm:$0xff] %vm433, %v734
    %v739 = vld [vmem:[#allocation2] sm:$0xff]
    %v740 = vld [vmem:[#allocation2 + $0x8] sm:$0xff]
    %v741 = vld [vmem:[#allocation16] sm:$0xff]
    %v742 = vld [vmem:[#allocation16 + $0x8] sm:$0xff]
    %s743 = scalar_lea.vmem [#allocation16], 16
    %v744 = vld [vmem:[%s743] sm:$0xff]
    %v745 = vld [vmem:[%s743 + $0x8] sm:$0xff]
    %748 = vrot.lane.b32.xlu0 %v739, 127
    %v749 = vpop.permute.xlu0 %748
    %750 = vrot.lane.b32.xlu0 %v740, 127
    %v751 = vpop.permute.xlu0 %750
    %v755 = vsel %vm598, %v744, 0
    %v758 = vsel %vm598, %v745, 0
    %760 = vmatpush.msra.mxu0 0.0
    %761 = vmatpush.msra.mxu0 0.0
    %762 = vmatpush.msra.mxu0 0.0
    %763 = vmatpush.msra.mxu0 0.0
    %764 = vmatpush.msra.mxu0 0.0
    %765 = vmatpush.msra.mxu0 0.0
    %766 = vmatpush.msra.mxu0 0.0
    %767 = vmatpush.msra.mxu0 0.0
    %768 = vmatpush.msra.mxu0 0.0
    %769 = vmatpush.msra.mxu0 0.0
    %770 = vmatpush.msra.mxu0 0.0
    %771 = vmatpush.msra.mxu0 0.0
    %772 = vmatpush.msra.mxu0 0.0
    %773 = vmatpush.msra.mxu0 0.0
    %774 = vmatpush.msra.mxu0 %v751
    %775 = vmatpush.msra.mxu0 %v749
    %776 = vmatmul.f32.gmra.mxu0 %v755
    %v777 = vpop.f32.mrf.mxu0
    %v778 = vadd.f32 0.0, %v777
    %779 = vmatmul.f32.gmra.mxu0 %v758
    %v780 = vpop.f32.mrf.mxu0
    %v781 = vadd.f32 0.0, %v780
    %782 = vdwg.mxu0
    %v784 = vsel %vm598, %v741, 0
    %v787 = vsel %vm598, %v742, 0
    %789 = vmatpush.msra.mxu0 0.0
    %790 = vmatpush.msra.mxu0 0.0
    %791 = vmatpush.msra.mxu0 0.0
    %792 = vmatpush.msra.mxu0 0.0
    %793 = vmatpush.msra.mxu0 0.0
    %794 = vmatpush.msra.mxu0 0.0
    %795 = vmatpush.msra.mxu0 0.0
    %796 = vmatpush.msra.mxu0 0.0
    %797 = vmatpush.msra.mxu0 0.0
    %798 = vmatpush.msra.mxu0 0.0
    %799 = vmatpush.msra.mxu0 0.0
    %800 = vmatpush.msra.mxu0 0.0
    %801 = vmatpush.msra.mxu0 0.0
    %802 = vmatpush.msra.mxu0 0.0
    %803 = vmatpush.msra.mxu0 %v740
    %804 = vmatpush.msra.mxu0 %v739
    %805 = vmatmul.f32.gmra.mxu0 %v784
    %v806 = vpop.f32.mrf.mxu0
    %v807 = vadd.f32 %v778, %v806
    %808 = vmatmul.f32.gmra.mxu0 %v787
    %v809 = vpop.f32.mrf.mxu0
    %v810 = vadd.f32 %v781, %v809
    %811 = vdwg.mxu0
    %s812 = scalar_lea.vmem [#allocation16], 32
    %v813 = vld [vmem:[%s812] sm:$0xff]
    %v814 = vld [vmem:[%s812 + $0x8] sm:$0xff]
    %815 = vrot.lane.b32.xlu0 %v739, 126
    %v816 = vpop.permute.xlu0 %815
    %817 = vrot.lane.b32.xlu0 %v740, 126
    %v818 = vpop.permute.xlu0 %817
    %v822 = vsel %vm598, %v813, 0
    %v825 = vsel %vm598, %v814, 0
    %827 = vmatpush.msra.mxu0 0.0
    %828 = vmatpush.msra.mxu0 0.0
    %829 = vmatpush.msra.mxu0 0.0
    %830 = vmatpush.msra.mxu0 0.0
    %831 = vmatpush.msra.mxu0 0.0
    %832 = vmatpush.msra.mxu0 0.0
    %833 = vmatpush.msra.mxu0 0.0
    %834 = vmatpush.msra.mxu0 0.0
    %835 = vmatpush.msra.mxu0 0.0
    %836 = vmatpush.msra.mxu0 0.0
    %837 = vmatpush.msra.mxu0 0.0
    %838 = vmatpush.msra.mxu0 0.0
    %839 = vmatpush.msra.mxu0 0.0
    %840 = vmatpush.msra.mxu0 0.0
    %841 = vmatpush.msra.mxu0 %v818
    %842 = vmatpush.msra.mxu0 %v816
    %843 = vmatmul.f32.gmra.mxu0 %v822
    %v844 = vpop.f32.mrf.mxu0
    %v845 = vadd.f32 0.0, %v844
    %846 = vmatmul.f32.gmra.mxu0 %v825
    %v847 = vpop.f32.mrf.mxu0
    %v848 = vadd.f32 0.0, %v847
    %849 = vdwg.mxu0
    %v850 = vadd.f32 %v807, %v845
    %v851 = vadd.f32 %v810, %v848
    %v852 = vld [vmem:[#allocation18] sm:$0xff]
    %v853 = vld [vmem:[#allocation18 + $0x8] sm:$0xff]
    %855 = vset.pattern.permute.xlu0 0
    %856 = vperm.xlu0 %855, %v852
    %v857 = vpop.permute.xlu0 %856
    %860 = vset.pattern.permute.xlu0 0
    %861 = vperm.xlu0 %860, %v853
    %v862 = vpop.permute.xlu0 %861
    %v864 = vmul.f32 %v850, %v857
    %v865 = vmul.f32 %v851, %v862
    %v866 = vld [vmem:[#allocation19] sm:$0xff]
    %v867 = vld [vmem:[#allocation19 + $0x8] sm:$0xff]
    %869 = vset.pattern.permute.xlu0 0
    %870 = vperm.xlu0 %869, %v866
    %v871 = vpop.permute.xlu0 %870
    %874 = vset.pattern.permute.xlu0 0
    %875 = vperm.xlu0 %874, %v867
    %v876 = vpop.permute.xlu0 %875
    %v878 = vadd.f32 %v864, %v871
    %v879 = vadd.f32 %v865, %v876
    %v880 = vmax.f32 %v878, 0.0
    %v881 = vmax.f32 %v879, 0.0
    %v882 = vmul.f32 %v880, %v426
    %v883 = vmul.f32 %v881, %v426
    %v885 = vperm.slane %v316, 0
    %889 = vrot.lane.b32.xlu0 %v882, 127
    %v890 = vpop.permute.xlu0 %889
    %891 = vrot.lane.b32.xlu0 %v883, 127
    %v892 = vpop.permute.xlu0 %891
    %895 = vxpose.xlu0.b32.start [1/16] %v890, 128
    %896 = vxpose.xlu0.b32.cont [2/16] %v892, 128
    %897 = vxpose.xlu0.b32.cont [3/16] 0.0, 128
    %898 = vxpose.xlu0.b32.cont [4/16] 0.0, 128
    %899 = vxpose.xlu0.b32.cont [5/16] 0.0, 128
    %900 = vxpose.xlu0.b32.cont [6/16] 0.0, 128
    %901 = vxpose.xlu0.b32.cont [7/16] 0.0, 128
    %902 = vxpose.xlu0.b32.cont [8/16] 0.0, 128
    %903 = vxpose.xlu0.b32.cont [9/16] 0.0, 128
    %904 = vxpose.xlu0.b32.cont [10/16] 0.0, 128
    %905 = vxpose.xlu0.b32.cont [11/16] 0.0, 128
    %906 = vxpose.xlu0.b32.cont [12/16] 0.0, 128
    %907 = vxpose.xlu0.b32.cont [13/16] 0.0, 128
    %908 = vxpose.xlu0.b32.cont [14/16] 0.0, 128
    %909 = vxpose.xlu0.b32.cont [15/16] 0.0, 128
    %910 = vxpose.xlu0.b32.end [16/16] 0.0, 128
    %v911 = vpop.trf.xlu0
    %v912 = vpop.trf.xlu0
    %v913 = vpop.trf.xlu0
    %v914 = vpop.trf.xlu0
    %v915 = vpop.trf.xlu0
    %v916 = vpop.trf.xlu0
    %v917 = vpop.trf.xlu0
    %v918 = vpop.trf.xlu0
    %v919 = vpop.trf.xlu0
    %v920 = vpop.trf.xlu0
    %v921 = vpop.trf.xlu0
    %v922 = vpop.trf.xlu0
    %v923 = vpop.trf.xlu0
    %v924 = vpop.trf.xlu0
    %v925 = vpop.trf.xlu0
    %v926 = vpop.trf.xlu0
    %v928 = vsel %vm598, %v911, 0
    %v931 = vsel %vm598, %v912, 0
    %933 = vmatpush.msra.mxu0 0.0
    %934 = vmatpush.msra.mxu0 0.0
    %935 = vmatpush.msra.mxu0 0.0
    %936 = vmatpush.msra.mxu0 0.0
    %937 = vmatpush.msra.mxu0 0.0
    %938 = vmatpush.msra.mxu0 0.0
    %939 = vmatpush.msra.mxu0 0.0
    %940 = vmatpush.msra.mxu0 0.0
    %941 = vmatpush.msra.mxu0 0.0
    %942 = vmatpush.msra.mxu0 0.0
    %943 = vmatpush.msra.mxu0 0.0
    %944 = vmatpush.msra.mxu0 0.0
    %945 = vmatpush.msra.mxu0 0.0
    %946 = vmatpush.msra.mxu0 0.0
    %947 = vmatpush.msra.mxu0 %v315
    %948 = vmatpush.msra.mxu0 %v314
    %949 = vmatmul.f32.gmra.mxu0 %v928
    %v950 = vpop.f32.mrf.mxu0
    %v951 = vadd.f32 %v885, %v950
    %952 = vmatmul.f32.gmra.mxu0 %v931
    %v953 = vpop.f32.mrf.mxu0
    %v954 = vadd.f32 %v885, %v953
    %955 = vdwg.mxu0
    %v958 = vrot.slane %v951, 1
    %v959 = vrot.slane %v951, 2
    %v960 = vrot.slane %v951, 3
    %v961 = vrot.slane %v951, 4
    %v962 = vrot.slane %v951, 5
    %v963 = vrot.slane %v951, 6
    %v964 = vrot.slane %v951, 7
    %v965 = vrot.slane %v954, 1
    %v966 = vrot.slane %v954, 2
    %v967 = vrot.slane %v954, 3
    %v968 = vrot.slane %v954, 4
    %v969 = vrot.slane %v954, 5
    %v970 = vrot.slane %v954, 6
    %v971 = vrot.slane %v954, 7
    %986 = vst [vmem:[#allocation3] sm:$0x1] %v951
    %987 = vst [vmem:[#allocation3 + $0x2] sm:$0x1] %v958
    %988 = vst [vmem:[#allocation3 + $0x4] sm:$0x1] %v959
    %989 = vst [vmem:[#allocation3 + $0x6] sm:$0x1] %v960
    %990 = vst [vmem:[#allocation3 + $0x8] sm:$0x1] %v961
    %991 = vst [vmem:[#allocation3 + $0xa] sm:$0x1] %v962
    %992 = vst [vmem:[#allocation3 + $0xc] sm:$0x1] %v963
    %993 = vst [vmem:[#allocation3 + $0xe] sm:$0x1] %v964
    %994 = vst [vmem:[#allocation3 + $0x10] sm:$0x1] %v954
    %995 = vst [vmem:[#allocation3 + $0x12] sm:$0x1] %v965
    %996 = vst [vmem:[#allocation3 + $0x14] sm:$0x1] %v966
    %997 = vst [vmem:[#allocation3 + $0x16] sm:$0x1] %v967
    %998 = vst [vmem:[#allocation3 + $0x18] sm:$0x1] %v968
    %999 = vst [vmem:[#allocation3 + $0x1a] sm:$0x1] %v969
    %1000 = vst [vmem:[#allocation3 + $0x1c] sm:$0x1] %v970
    %1001 = vst [vmem:[#allocation3 + $0x1e] sm:$0x1] %v971
    %1002 = vrot.lane.b32.xlu0 %v882, 109
    %v1003 = vpop.permute.xlu0 %1002
    %1004 = vrot.lane.b32.xlu0 %v883, 109
    %v1005 = vpop.permute.xlu0 %1004
    %1008 = vxpose.xlu0.b32.start [1/16] %v1003, 128
    %1009 = vxpose.xlu0.b32.cont [2/16] %v1005, 128
    %1010 = vxpose.xlu0.b32.cont [3/16] 0.0, 128
    %1011 = vxpose.xlu0.b32.cont [4/16] 0.0, 128
    %1012 = vxpose.xlu0.b32.cont [5/16] 0.0, 128
    %1013 = vxpose.xlu0.b32.cont [6/16] 0.0, 128
    %1014 = vxpose.xlu0.b32.cont [7/16] 0.0, 128
    %1015 = vxpose.xlu0.b32.cont [8/16] 0.0, 128
    %1016 = vxpose.xlu0.b32.cont [9/16] 0.0, 128
    %1017 = vxpose.xlu0.b32.cont [10/16] 0.0, 128
    %1018 = vxpose.xlu0.b32.cont [11/16] 0.0, 128
    %1019 = vxpose.xlu0.b32.cont [12/16] 0.0, 128
    %1020 = vxpose.xlu0.b32.cont [13/16] 0.0, 128
    %1021 = vxpose.xlu0.b32.cont [14/16] 0.0, 128
    %1022 = vxpose.xlu0.b32.cont [15/16] 0.0, 128
    %1023 = vxpose.xlu0.b32.end [16/16] 0.0, 128
    %v1024 = vpop.trf.xlu0
    %v1025 = vpop.trf.xlu0
    %v1026 = vpop.trf.xlu0
    %v1027 = vpop.trf.xlu0
    %v1028 = vpop.trf.xlu0
    %v1029 = vpop.trf.xlu0
    %v1030 = vpop.trf.xlu0
    %v1031 = vpop.trf.xlu0
    %v1032 = vpop.trf.xlu0
    %v1033 = vpop.trf.xlu0
    %v1034 = vpop.trf.xlu0
    %v1035 = vpop.trf.xlu0
    %v1036 = vpop.trf.xlu0
    %v1037 = vpop.trf.xlu0
    %v1038 = vpop.trf.xlu0
    %v1039 = vpop.trf.xlu0
    %v1041 = vsel %vm598, %v1024, 0
    %v1044 = vsel %vm598, %v1025, 0
    %1046 = vmatpush.msra.mxu0 0.0
    %1047 = vmatpush.msra.mxu0 0.0
    %1048 = vmatpush.msra.mxu0 0.0
    %1049 = vmatpush.msra.mxu0 0.0
    %1050 = vmatpush.msra.mxu0 0.0
    %1051 = vmatpush.msra.mxu0 0.0
    %1052 = vmatpush.msra.mxu0 0.0
    %1053 = vmatpush.msra.mxu0 0.0
    %1054 = vmatpush.msra.mxu0 0.0
    %1055 = vmatpush.msra.mxu0 0.0
    %1056 = vmatpush.msra.mxu0 0.0
    %1057 = vmatpush.msra.mxu0 0.0
    %1058 = vmatpush.msra.mxu0 0.0
    %1059 = vmatpush.msra.mxu0 0.0
    %1060 = vmatpush.msra.mxu0 %v315
    %1061 = vmatpush.msra.mxu0 %v314
    %1062 = vmatmul.f32.gmra.mxu0 %v1041
    %v1063 = vpop.f32.mrf.mxu0
    %v1064 = vadd.f32 %v885, %v1063
    %1065 = vmatmul.f32.gmra.mxu0 %v1044
    %v1066 = vpop.f32.mrf.mxu0
    %v1067 = vadd.f32 %v885, %v1066
    %1068 = vdwg.mxu0
    %v1071 = vrot.slane %v1064, 1
    %v1072 = vrot.slane %v1064, 2
    %v1073 = vrot.slane %v1064, 3
    %v1074 = vrot.slane %v1064, 4
    %v1075 = vrot.slane %v1064, 5
    %v1076 = vrot.slane %v1064, 6
    %v1077 = vrot.slane %v1064, 7
    %v1078 = vrot.slane %v1067, 1
    %v1079 = vrot.slane %v1067, 2
    %v1080 = vrot.slane %v1067, 3
    %v1081 = vrot.slane %v1067, 4
    %v1082 = vrot.slane %v1067, 5
    %v1083 = vrot.slane %v1067, 6
    %v1084 = vrot.slane %v1067, 7
    %1099 = vst [vmem:[#allocation3 + $0x1] sm:$0x1] %v1064
    %1100 = vst [vmem:[#allocation3 + $0x3] sm:$0x1] %v1071
    %1101 = vst [vmem:[#allocation3 + $0x5] sm:$0x1] %v1072
    %1102 = vst [vmem:[#allocation3 + $0x7] sm:$0x1] %v1073
    %1103 = vst [vmem:[#allocation3 + $0x9] sm:$0x1] %v1074
    %1104 = vst [vmem:[#allocation3 + $0xb] sm:$0x1] %v1075
    %1105 = vst [vmem:[#allocation3 + $0xd] sm:$0x1] %v1076
    %1106 = vst [vmem:[#allocation3 + $0xf] sm:$0x1] %v1077
    %1107 = vst [vmem:[#allocation3 + $0x11] sm:$0x1] %v1067
    %1108 = vst [vmem:[#allocation3 + $0x13] sm:$0x1] %v1078
    %1109 = vst [vmem:[#allocation3 + $0x15] sm:$0x1] %v1079
    %1110 = vst [vmem:[#allocation3 + $0x17] sm:$0x1] %v1080
    %1111 = vst [vmem:[#allocation3 + $0x19] sm:$0x1] %v1081
    %1112 = vst [vmem:[#allocation3 + $0x1b] sm:$0x1] %v1082
    %1113 = vst [vmem:[#allocation3 + $0x1d] sm:$0x1] %v1083
    %1114 = vst [vmem:[#allocation3 + $0x1f] sm:$0x1] %v1084
    %s1115 = scalar_lea.vmem %s0, 1
    %v1116 = vld [vmem:[%s1115] sm:$0x1]
    %v1117 = vld [vmem:[%s3] sm:$0xff]
    %v1118 = vld [vmem:[%s322] sm:$0xff]
    %v1120 = vperm.slane %v1116, 0
    %1121 = vrot.lane.b32.xlu0 %v1120, 127
    %v1122 = vpop.permute.xlu0 %1121
    %v1124 = vsel %vm328, %v1118, 0
    %v1126 = vsel %vm332, %v1122, 0
    %1128 = vmatpush.msra.mxu0 0.0
    %1129 = vmatpush.msra.mxu0 0.0
    %1130 = vmatpush.msra.mxu0 0.0
    %1131 = vmatpush.msra.mxu0 0.0
    %1132 = vmatpush.msra.mxu0 0.0
    %1133 = vmatpush.msra.mxu0 0.0
    %1134 = vmatpush.msra.mxu0 0.0
    %1135 = vmatpush.msra.mxu0 0.0
    %1136 = vmatpush.msra.mxu0 0.0
    %1137 = vmatpush.msra.mxu0 0.0
    %1138 = vmatpush.msra.mxu0 0.0
    %1139 = vmatpush.msra.mxu0 0.0
    %1140 = vmatpush.msra.mxu0 0.0
    %1141 = vmatpush.msra.mxu0 0.0
    %1142 = vmatpush.msra.mxu0 0.0
    %1143 = vmatpush.msra.mxu0 %v1126
    %1144 = vmatmul.f32.gmra.mxu0 %v1124
    %v1145 = vpop.f32.mrf.mxu0
    %v1146 = vadd.f32 0.0, %v1145
    %1147 = vdwg.mxu0
    %v1149 = vsel %vm328, %v1117, 0
    %v1151 = vsel %vm332, %v1116, 0
    %1153 = vmatpush.msra.mxu0 0.0
    %1154 = vmatpush.msra.mxu0 0.0
    %1155 = vmatpush.msra.mxu0 0.0
    %1156 = vmatpush.msra.mxu0 0.0
    %1157 = vmatpush.msra.mxu0 0.0
    %1158 = vmatpush.msra.mxu0 0.0
    %1159 = vmatpush.msra.mxu0 0.0
    %1160 = vmatpush.msra.mxu0 0.0
    %1161 = vmatpush.msra.mxu0 0.0
    %1162 = vmatpush.msra.mxu0 0.0
    %1163 = vmatpush.msra.mxu0 0.0
    %1164 = vmatpush.msra.mxu0 0.0
    %1165 = vmatpush.msra.mxu0 0.0
    %1166 = vmatpush.msra.mxu0 0.0
    %1167 = vmatpush.msra.mxu0 0.0
    %1168 = vmatpush.msra.mxu0 %v1151
    %1169 = vmatmul.f32.gmra.mxu0 %v1149
    %v1170 = vpop.f32.mrf.mxu0
    %v1171 = vadd.f32 %v1146, %v1170
    %1172 = vdwg.mxu0
    %v1173 = vld [vmem:[%s380] sm:$0xff]
    %1174 = vrot.lane.b32.xlu0 %v1120, 126
    %v1175 = vpop.permute.xlu0 %1174
    %v1177 = vsel %vm328, %v1173, 0
    %v1179 = vsel %vm332, %v1175, 0
    %1181 = vmatpush.msra.mxu0 0.0
    %1182 = vmatpush.msra.mxu0 0.0
    %1183 = vmatpush.msra.mxu0 0.0
    %1184 = vmatpush.msra.mxu0 0.0
    %1185 = vmatpush.msra.mxu0 0.0
    %1186 = vmatpush.msra.mxu0 0.0
    %1187 = vmatpush.msra.mxu0 0.0
    %1188 = vmatpush.msra.mxu0 0.0
    %1189 = vmatpush.msra.mxu0 0.0
    %1190 = vmatpush.msra.mxu0 0.0
    %1191 = vmatpush.msra.mxu0 0.0
    %1192 = vmatpush.msra.mxu0 0.0
    %1193 = vmatpush.msra.mxu0 0.0
    %1194 = vmatpush.msra.mxu0 0.0
    %1195 = vmatpush.msra.mxu0 0.0
    %1196 = vmatpush.msra.mxu0 %v1179
    %1197 = vmatmul.f32.gmra.mxu0 %v1177
    %v1198 = vpop.f32.mrf.mxu0
    %v1199 = vadd.f32 0.0, %v1198
    %1200 = vdwg.mxu0
    %v1201 = vadd.f32 %v1171, %v1199
    %v1202 = vld [vmem:[%s4] sm:$0xff]
    %1204 = vset.pattern.permute.xlu0 0
    %1205 = vperm.xlu0 %1204, %v1202
    %v1206 = vpop.permute.xlu0 %1205
    %v1208 = vmul.f32 %v1201, %v1206
    %v1209 = vld [vmem:[#allocation4] sm:$0xff]
    %1211 = vset.pattern.permute.xlu0 0
    %1212 = vperm.xlu0 %1211, %v1209
    %v1213 = vpop.permute.xlu0 %1212
    %v1215 = vadd.f32 %v1208, %v1213
    %v1216 = vmax.f32 %v1215, 0.0
    %v1217 = vmul.f32 %v1216, %v426
    %1219 = vrot.lane.b32.xlu0 %v1217, 1
    %v1220 = vpop.permute.xlu0 %1219
    %1222 = vst.msk [vmem:[#allocation2] sm:$0xff] %vm433, %v1220
    %v1223 = vld [vmem:[#allocation2] sm:$0xff]
    %v1224 = vld [vmem:[#allocation7] sm:$0xff]
    %v1225 = vld [vmem:[#allocation7 + $0x8] sm:$0xff]
    %v1226 = vld [vmem:[%s438] sm:$0xff]
    %v1227 = vld [vmem:[%s438 + $0x8] sm:$0xff]
    %1229 = vrot.lane.b32.xlu0 %v1223, 127
    %v1230 = vpop.permute.xlu0 %1229
    %v1233 = vsel %vm445, %v1226, 0
    %v1236 = vsel %vm445, %v1227, 0
    %1238 = vmatpush.msra.mxu0 0.0
    %1239 = vmatpush.msra.mxu0 0.0
    %1240 = vmatpush.msra.mxu0 0.0
    %1241 = vmatpush.msra.mxu0 0.0
    %1242 = vmatpush.msra.mxu0 0.0
    %1243 = vmatpush.msra.mxu0 0.0
    %1244 = vmatpush.msra.mxu0 0.0
    %1245 = vmatpush.msra.mxu0 0.0
    %1246 = vmatpush.msra.mxu0 0.0
    %1247 = vmatpush.msra.mxu0 0.0
    %1248 = vmatpush.msra.mxu0 0.0
    %1249 = vmatpush.msra.mxu0 0.0
    %1250 = vmatpush.msra.mxu0 0.0
    %1251 = vmatpush.msra.mxu0 0.0
    %1252 = vmatpush.msra.mxu0 0.0
    %1253 = vmatpush.msra.mxu0 %v1230
    %1254 = vmatmul.f32.gmra.mxu0 %v1233
    %v1255 = vpop.f32.mrf.mxu0
    %v1256 = vadd.f32 0.0, %v1255
    %1257 = vmatmul.f32.gmra.mxu0 %v1236
    %v1258 = vpop.f32.mrf.mxu0
    %v1259 = vadd.f32 0.0, %v1258
    %1260 = vdwg.mxu0
    %v1262 = vsel %vm445, %v1224, 0
    %v1265 = vsel %vm445, %v1225, 0
    %1267 = vmatpush.msra.mxu0 0.0
    %1268 = vmatpush.msra.mxu0 0.0
    %1269 = vmatpush.msra.mxu0 0.0
    %1270 = vmatpush.msra.mxu0 0.0
    %1271 = vmatpush.msra.mxu0 0.0
    %1272 = vmatpush.msra.mxu0 0.0
    %1273 = vmatpush.msra.mxu0 0.0
    %1274 = vmatpush.msra.mxu0 0.0
    %1275 = vmatpush.msra.mxu0 0.0
    %1276 = vmatpush.msra.mxu0 0.0
    %1277 = vmatpush.msra.mxu0 0.0
    %1278 = vmatpush.msra.mxu0 0.0
    %1279 = vmatpush.msra.mxu0 0.0
    %1280 = vmatpush.msra.mxu0 0.0
    %1281 = vmatpush.msra.mxu0 0.0
    %1282 = vmatpush.msra.mxu0 %v1223
    %1283 = vmatmul.f32.gmra.mxu0 %v1262
    %v1284 = vpop.f32.mrf.mxu0
    %v1285 = vadd.f32 %v1256, %v1284
    %1286 = vmatmul.f32.gmra.mxu0 %v1265
    %v1287 = vpop.f32.mrf.mxu0
    %v1288 = vadd.f32 %v1259, %v1287
    %1289 = vdwg.mxu0
    %v1290 = vld [vmem:[%s504] sm:$0xff]
    %v1291 = vld [vmem:[%s504 + $0x8] sm:$0xff]
    %1292 = vrot.lane.b32.xlu0 %v1223, 126
    %v1293 = vpop.permute.xlu0 %1292
    %v1296 = vsel %vm445, %v1290, 0
    %v1299 = vsel %vm445, %v1291, 0
    %1301 = vmatpush.msra.mxu0 0.0
    %1302 = vmatpush.msra.mxu0 0.0
    %1303 = vmatpush.msra.mxu0 0.0
    %1304 = vmatpush.msra.mxu0 0.0
    %1305 = vmatpush.msra.mxu0 0.0
    %1306 = vmatpush.msra.mxu0 0.0
    %1307 = vmatpush.msra.mxu0 0.0
    %1308 = vmatpush.msra.mxu0 0.0
    %1309 = vmatpush.msra.mxu0 0.0
    %1310 = vmatpush.msra.mxu0 0.0
    %1311 = vmatpush.msra.mxu0 0.0
    %1312 = vmatpush.msra.mxu0 0.0
    %1313 = vmatpush.msra.mxu0 0.0
    %1314 = vmatpush.msra.mxu0 0.0
    %1315 = vmatpush.msra.mxu0 0.0
    %1316 = vmatpush.msra.mxu0 %v1293
    %1317 = vmatmul.f32.gmra.mxu0 %v1296
    %v1318 = vpop.f32.mrf.mxu0
    %v1319 = vadd.f32 0.0, %v1318
    %1320 = vmatmul.f32.gmra.mxu0 %v1299
    %v1321 = vpop.f32.mrf.mxu0
    %v1322 = vadd.f32 0.0, %v1321
    %1323 = vdwg.mxu0
    %v1324 = vadd.f32 %v1285, %v1319
    %v1325 = vadd.f32 %v1288, %v1322
    %v1326 = vld [vmem:[#allocation9] sm:$0xff]
    %v1327 = vld [vmem:[#allocation9 + $0x8] sm:$0xff]
    %1329 = vset.pattern.permute.xlu0 0
    %1330 = vperm.xlu0 %1329, %v1326
    %v1331 = vpop.permute.xlu0 %1330
    %1334 = vset.pattern.permute.xlu0 0
    %1335 = vperm.xlu0 %1334, %v1327
    %v1336 = vpop.permute.xlu0 %1335
    %v1338 = vmul.f32 %v1324, %v1331
    %v1339 = vmul.f32 %v1325, %v1336
    %v1340 = vld [vmem:[#allocation10] sm:$0xff]
    %v1341 = vld [vmem:[#allocation10 + $0x8] sm:$0xff]
    %1343 = vset.pattern.permute.xlu0 0
    %1344 = vperm.xlu0 %1343, %v1340
    %v1345 = vpop.permute.xlu0 %1344
    %1348 = vset.pattern.permute.xlu0 0
    %1349 = vperm.xlu0 %1348, %v1341
    %v1350 = vpop.permute.xlu0 %1349
    %v1352 = vadd.f32 %v1338, %v1345
    %v1353 = vadd.f32 %v1339, %v1350
    %v1354 = vmax.f32 %v1352, 0.0
    %v1355 = vmax.f32 %v1353, 0.0
    %v1356 = vmul.f32 %v1354, %v426
    %v1357 = vmul.f32 %v1355, %v426
    %1360 = vrot.lane.b32.xlu0 %v1356, 1
    %v1361 = vpop.permute.xlu0 %1360
    %1362 = vrot.lane.b32.xlu0 %v1357, 1
    %v1363 = vpop.permute.xlu0 %1362
    %1366 = vst.msk [vmem:[#allocation2] sm:$0xff] %vm433, %v1361
    %1367 = vst.msk [vmem:[#allocation2 + $0x8] sm:$0xff] %vm433, %v1363
    %v1368 = vld [vmem:[#allocation2] sm:$0xff]
    %v1369 = vld [vmem:[#allocation2 + $0x8] sm:$0xff]
    %v1370 = vld [vmem:[#allocation12] sm:$0xff]
    %v1371 = vld [vmem:[#allocation12 + $0x8] sm:$0xff]
    %v1372 = vld [vmem:[%s587] sm:$0xff]
    %v1373 = vld [vmem:[%s587 + $0x8] sm:$0xff]
    %1376 = vrot.lane.b32.xlu0 %v1368, 127
    %v1377 = vpop.permute.xlu0 %1376
    %1378 = vrot.lane.b32.xlu0 %v1369, 127
    %v1379 = vpop.permute.xlu0 %1378
    %v1383 = vsel %vm598, %v1372, 0
    %v1386 = vsel %vm598, %v1373, 0
    %1388 = vmatpush.msra.mxu0 0.0
    %1389 = vmatpush.msra.mxu0 0.0
    %1390 = vmatpush.msra.mxu0 0.0
    %1391 = vmatpush.msra.mxu0 0.0
    %1392 = vmatpush.msra.mxu0 0.0
    %1393 = vmatpush.msra.mxu0 0.0
    %1394 = vmatpush.msra.mxu0 0.0
    %1395 = vmatpush.msra.mxu0 0.0
    %1396 = vmatpush.msra.mxu0 0.0
    %1397 = vmatpush.msra.mxu0 0.0
    %1398 = vmatpush.msra.mxu0 0.0
    %1399 = vmatpush.msra.mxu0 0.0
    %1400 = vmatpush.msra.mxu0 0.0
    %1401 = vmatpush.msra.mxu0 0.0
    %1402 = vmatpush.msra.mxu0 %v1379
    %1403 = vmatpush.msra.mxu0 %v1377
    %1404 = vmatmul.f32.gmra.mxu0 %v1383
    %v1405 = vpop.f32.mrf.mxu0
    %v1406 = vadd.f32 0.0, %v1405
    %1407 = vmatmul.f32.gmra.mxu0 %v1386
    %v1408 = vpop.f32.mrf.mxu0
    %v1409 = vadd.f32 0.0, %v1408
    %1410 = vdwg.mxu0
    %v1412 = vsel %vm598, %v1370, 0
    %v1415 = vsel %vm598, %v1371, 0
    %1417 = vmatpush.msra.mxu0 0.0
    %1418 = vmatpush.msra.mxu0 0.0
    %1419 = vmatpush.msra.mxu0 0.0
    %1420 = vmatpush.msra.mxu0 0.0
    %1421 = vmatpush.msra.mxu0 0.0
    %1422 = vmatpush.msra.mxu0 0.0
    %1423 = vmatpush.msra.mxu0 0.0
    %1424 = vmatpush.msra.mxu0 0.0
    %1425 = vmatpush.msra.mxu0 0.0
    %1426 = vmatpush.msra.mxu0 0.0
    %1427 = vmatpush.msra.mxu0 0.0
    %1428 = vmatpush.msra.mxu0 0.0
    %1429 = vmatpush.msra.mxu0 0.0
    %1430 = vmatpush.msra.mxu0 0.0
    %1431 = vmatpush.msra.mxu0 %v1369
    %1432 = vmatpush.msra.mxu0 %v1368
    %1433 = vmatmul.f32.gmra.mxu0 %v1412
    %v1434 = vpop.f32.mrf.mxu0
    %v1435 = vadd.f32 %v1406, %v1434
    %1436 = vmatmul.f32.gmra.mxu0 %v1415
    %v1437 = vpop.f32.mrf.mxu0
    %v1438 = vadd.f32 %v1409, %v1437
    %1439 = vdwg.mxu0
    %v1440 = vld [vmem:[%s657] sm:$0xff]
    %v1441 = vld [vmem:[%s657 + $0x8] sm:$0xff]
    %1442 = vrot.lane.b32.xlu0 %v1368, 126
    %v1443 = vpop.permute.xlu0 %1442
    %1444 = vrot.lane.b32.xlu0 %v1369, 126
    %v1445 = vpop.permute.xlu0 %1444
    %v1449 = vsel %vm598, %v1440, 0
    %v1452 = vsel %vm598, %v1441, 0
    %1454 = vmatpush.msra.mxu0 0.0
    %1455 = vmatpush.msra.mxu0 0.0
    %1456 = vmatpush.msra.mxu0 0.0
    %1457 = vmatpush.msra.mxu0 0.0
    %1458 = vmatpush.msra.mxu0 0.0
    %1459 = vmatpush.msra.mxu0 0.0
    %1460 = vmatpush.msra.mxu0 0.0
    %1461 = vmatpush.msra.mxu0 0.0
    %1462 = vmatpush.msra.mxu0 0.0
    %1463 = vmatpush.msra.mxu0 0.0
    %1464 = vmatpush.msra.mxu0 0.0
    %1465 = vmatpush.msra.mxu0 0.0
    %1466 = vmatpush.msra.mxu0 0.0
    %1467 = vmatpush.msra.mxu0 0.0
    %1468 = vmatpush.msra.mxu0 %v1445
    %1469 = vmatpush.msra.mxu0 %v1443
    %1470 = vmatmul.f32.gmra.mxu0 %v1449
    %v1471 = vpop.f32.mrf.mxu0
    %v1472 = vadd.f32 0.0, %v1471
    %1473 = vmatmul.f32.gmra.mxu0 %v1452
    %v1474 = vpop.f32.mrf.mxu0
    %v1475 = vadd.f32 0.0, %v1474
    %1476 = vdwg.mxu0
    %v1477 = vadd.f32 %v1435, %v1472
    %v1478 = vadd.f32 %v1438, %v1475
    %v1479 = vld [vmem:[#allocation13] sm:$0xff]
    %v1480 = vld [vmem:[#allocation13 + $0x8] sm:$0xff]
    %1482 = vset.pattern.permute.xlu0 0
    %1483 = vperm.xlu0 %1482, %v1479
    %v1484 = vpop.permute.xlu0 %1483
    %1487 = vset.pattern.permute.xlu0 0
    %1488 = vperm.xlu0 %1487, %v1480
    %v1489 = vpop.permute.xlu0 %1488
    %v1491 = vmul.f32 %v1477, %v1484
    %v1492 = vmul.f32 %v1478, %v1489
    %v1493 = vld [vmem:[#allocation15] sm:$0xff]
    %v1494 = vld [vmem:[#allocation15 + $0x8] sm:$0xff]
    %1496 = vset.pattern.permute.xlu0 0
    %1497 = vperm.xlu0 %1496, %v1493
    %v1498 = vpop.permute.xlu0 %1497
    %1501 = vset.pattern.permute.xlu0 0
    %1502 = vperm.xlu0 %1501, %v1494
    %v1503 = vpop.permute.xlu0 %1502
    %v1505 = vadd.f32 %v1491, %v1498
    %v1506 = vadd.f32 %v1492, %v1503
    %v1507 = vmax.f32 %v1505, 0.0
    %v1508 = vmax.f32 %v1506, 0.0
    %v1509 = vmul.f32 %v1507, %v426
    %v1510 = vmul.f32 %v1508, %v426
    %1513 = vrot.lane.b32.xlu0 %v1509, 1
    %v1514 = vpop.permute.xlu0 %1513
    %1515 = vrot.lane.b32.xlu0 %v1510, 1
    %v1516 = vpop.permute.xlu0 %1515
    %1519 = vst.msk [vmem:[#allocation2] sm:$0xff] %vm433, %v1514
    %1520 = vst.msk [vmem:[#allocation2 + $0x8] sm:$0xff] %vm433, %v1516
    %v1521 = vld [vmem:[#allocation2] sm:$0xff]
    %v1522 = vld [vmem:[#allocation2 + $0x8] sm:$0xff]
    %v1523 = vld [vmem:[#allocation16] sm:$0xff]
    %v1524 = vld [vmem:[#allocation16 + $0x8] sm:$0xff]
    %v1525 = vld [vmem:[%s743] sm:$0xff]
    %v1526 = vld [vmem:[%s743 + $0x8] sm:$0xff]
    %1529 = vrot.lane.b32.xlu0 %v1521, 127
    %v1530 = vpop.permute.xlu0 %1529
    %1531 = vrot.lane.b32.xlu0 %v1522, 127
    %v1532 = vpop.permute.xlu0 %1531
    %v1536 = vsel %vm598, %v1525, 0
    %v1539 = vsel %vm598, %v1526, 0
    %1541 = vmatpush.msra.mxu0 0.0
    %1542 = vmatpush.msra.mxu0 0.0
    %1543 = vmatpush.msra.mxu0 0.0
    %1544 = vmatpush.msra.mxu0 0.0
    %1545 = vmatpush.msra.mxu0 0.0
    %1546 = vmatpush.msra.mxu0 0.0
    %1547 = vmatpush.msra.mxu0 0.0
    %1548 = vmatpush.msra.mxu0 0.0
    %1549 = vmatpush.msra.mxu0 0.0
    %1550 = vmatpush.msra.mxu0 0.0
    %1551 = vmatpush.msra.mxu0 0.0
    %1552 = vmatpush.msra.mxu0 0.0
    %1553 = vmatpush.msra.mxu0 0.0
    %1554 = vmatpush.msra.mxu0 0.0
    %1555 = vmatpush.msra.mxu0 %v1532
    %1556 = vmatpush.msra.mxu0 %v1530
    %1557 = vmatmul.f32.gmra.mxu0 %v1536
    %v1558 = vpop.f32.mrf.mxu0
    %v1559 = vadd.f32 0.0, %v1558
    %1560 = vmatmul.f32.gmra.mxu0 %v1539
    %v1561 = vpop.f32.mrf.mxu0
    %v1562 = vadd.f32 0.0, %v1561
    %1563 = vdwg.mxu0
    %v1565 = vsel %vm598, %v1523, 0
    %v1568 = vsel %vm598, %v1524, 0
    %1570 = vmatpush.msra.mxu0 0.0
    %1571 = vmatpush.msra.mxu0 0.0
    %1572 = vmatpush.msra.mxu0 0.0
    %1573 = vmatpush.msra.mxu0 0.0
    %1574 = vmatpush.msra.mxu0 0.0
    %1575 = vmatpush.msra.mxu0 0.0
    %1576 = vmatpush.msra.mxu0 0.0
    %1577 = vmatpush.msra.mxu0 0.0
    %1578 = vmatpush.msra.mxu0 0.0
    %1579 = vmatpush.msra.mxu0 0.0
    %1580 = vmatpush.msra.mxu0 0.0
    %1581 = vmatpush.msra.mxu0 0.0
    %1582 = vmatpush.msra.mxu0 0.0
    %1583 = vmatpush.msra.mxu0 0.0
    %1584 = vmatpush.msra.mxu0 %v1522
    %1585 = vmatpush.msra.mxu0 %v1521
    %1586 = vmatmul.f32.gmra.mxu0 %v1565
    %v1587 = vpop.f32.mrf.mxu0
    %v1588 = vadd.f32 %v1559, %v1587
    %1589 = vmatmul.f32.gmra.mxu0 %v1568
    %v1590 = vpop.f32.mrf.mxu0
    %v1591 = vadd.f32 %v1562, %v1590
    %1592 = vdwg.mxu0
    %v1593 = vld [vmem:[%s812] sm:$0xff]
    %v1594 = vld [vmem:[%s812 + $0x8] sm:$0xff]
    %1595 = vrot.lane.b32.xlu0 %v1521, 126
    %v1596 = vpop.permute.xlu0 %1595
    %1597 = vrot.lane.b32.xlu0 %v1522, 126
    %v1598 = vpop.permute.xlu0 %1597
    %v1602 = vsel %vm598, %v1593, 0
    %v1605 = vsel %vm598, %v1594, 0
    %1607 = vmatpush.msra.mxu0 0.0
    %1608 = vmatpush.msra.mxu0 0.0
    %1609 = vmatpush.msra.mxu0 0.0
    %1610 = vmatpush.msra.mxu0 0.0
    %1611 = vmatpush.msra.mxu0 0.0
    %1612 = vmatpush.msra.mxu0 0.0
    %1613 = vmatpush.msra.mxu0 0.0
    %1614 = vmatpush.msra.mxu0 0.0
    %1615 = vmatpush.msra.mxu0 0.0
    %1616 = vmatpush.msra.mxu0 0.0
    %1617 = vmatpush.msra.mxu0 0.0
    %1618 = vmatpush.msra.mxu0 0.0
    %1619 = vmatpush.msra.mxu0 0.0
    %1620 = vmatpush.msra.mxu0 0.0
    %1621 = vmatpush.msra.mxu0 %v1598
    %1622 = vmatpush.msra.mxu0 %v1596
    %1623 = vmatmul.f32.gmra.mxu0 %v1602
    %v1624 = vpop.f32.mrf.mxu0
    %v1625 = vadd.f32 0.0, %v1624
    %1626 = vmatmul.f32.gmra.mxu0 %v1605
    %v1627 = vpop.f32.mrf.mxu0
    %v1628 = vadd.f32 0.0, %v1627
    %1629 = vdwg.mxu0
    %v1630 = vadd.f32 %v1588, %v1625
    %v1631 = vadd.f32 %v1591, %v1628
    %v1632 = vld [vmem:[#allocation18] sm:$0xff]
    %v1633 = vld [vmem:[#allocation18 + $0x8] sm:$0xff]
    %1635 = vset.pattern.permute.xlu0 0
    %1636 = vperm.xlu0 %1635, %v1632
    %v1637 = vpop.permute.xlu0 %1636
    %1640 = vset.pattern.permute.xlu0 0
    %1641 = vperm.xlu0 %1640, %v1633
    %v1642 = vpop.permute.xlu0 %1641
    %v1644 = vmul.f32 %v1630, %v1637
    %v1645 = vmul.f32 %v1631, %v1642
    %v1646 = vld [vmem:[#allocation19] sm:$0xff]
    %v1647 = vld [vmem:[#allocation19 + $0x8] sm:$0xff]
    %1649 = vset.pattern.permute.xlu0 0
    %1650 = vperm.xlu0 %1649, %v1646
    %v1651 = vpop.permute.xlu0 %1650
    %1654 = vset.pattern.permute.xlu0 0
    %1655 = vperm.xlu0 %1654, %v1647
    %v1656 = vpop.permute.xlu0 %1655
    %v1658 = vadd.f32 %v1644, %v1651
    %v1659 = vadd.f32 %v1645, %v1656
    %v1660 = vmax.f32 %v1658, 0.0
    %v1661 = vmax.f32 %v1659, 0.0
    %v1662 = vmul.f32 %v1660, %v426
    %v1663 = vmul.f32 %v1661, %v426
    %1666 = vrot.lane.b32.xlu0 %v1662, 127
    %v1667 = vpop.permute.xlu0 %1666
    %1668 = vrot.lane.b32.xlu0 %v1663, 127
    %v1669 = vpop.permute.xlu0 %1668
    %1672 = vxpose.xlu0.b32.start [1/16] %v1667, 128
    %1673 = vxpose.xlu0.b32.cont [2/16] %v1669, 128
    %1674 = vxpose.xlu0.b32.cont [3/16] 0.0, 128
    %1675 = vxpose.xlu0.b32.cont [4/16] 0.0, 128
    %1676 = vxpose.xlu0.b32.cont [5/16] 0.0, 128
    %1677 = vxpose.xlu0.b32.cont [6/16] 0.0, 128
    %1678 = vxpose.xlu0.b32.cont [7/16] 0.0, 128
    %1679 = vxpose.xlu0.b32.cont [8/16] 0.0, 128
    %1680 = vxpose.xlu0.b32.cont [9/16] 0.0, 128
    %1681 = vxpose.xlu0.b32.cont [10/16] 0.0, 128
    %1682 = vxpose.xlu0.b32.cont [11/16] 0.0, 128
    %1683 = vxpose.xlu0.b32.cont [12/16] 0.0, 128
    %1684 = vxpose.xlu0.b32.cont [13/16] 0.0, 128
    %1685 = vxpose.xlu0.b32.cont [14/16] 0.0, 128
    %1686 = vxpose.xlu0.b32.cont [15/16] 0.0, 128
    %1687 = vxpose.xlu0.b32.end [16/16] 0.0, 128
    %v1688 = vpop.trf.xlu0
    %v1689 = vpop.trf.xlu0
    %v1690 = vpop.trf.xlu0
    %v1691 = vpop.trf.xlu0
    %v1692 = vpop.trf.xlu0
    %v1693 = vpop.trf.xlu0
    %v1694 = vpop.trf.xlu0
    %v1695 = vpop.trf.xlu0
    %v1696 = vpop.trf.xlu0
    %v1697 = vpop.trf.xlu0
    %v1698 = vpop.trf.xlu0
    %v1699 = vpop.trf.xlu0
    %v1700 = vpop.trf.xlu0
    %v1701 = vpop.trf.xlu0
    %v1702 = vpop.trf.xlu0
    %v1703 = vpop.trf.xlu0
    %v1705 = vsel %vm598, %v1688, 0
    %v1708 = vsel %vm598, %v1689, 0
    %1710 = vmatpush.msra.mxu0 0.0
    %1711 = vmatpush.msra.mxu0 0.0
    %1712 = vmatpush.msra.mxu0 0.0
    %1713 = vmatpush.msra.mxu0 0.0
    %1714 = vmatpush.msra.mxu0 0.0
    %1715 = vmatpush.msra.mxu0 0.0
    %1716 = vmatpush.msra.mxu0 0.0
    %1717 = vmatpush.msra.mxu0 0.0
    %1718 = vmatpush.msra.mxu0 0.0
    %1719 = vmatpush.msra.mxu0 0.0
    %1720 = vmatpush.msra.mxu0 0.0
    %1721 = vmatpush.msra.mxu0 0.0
    %1722 = vmatpush.msra.mxu0 0.0
    %1723 = vmatpush.msra.mxu0 0.0
    %1724 = vmatpush.msra.mxu0 %v315
    %1725 = vmatpush.msra.mxu0 %v314
    %1726 = vmatmul.f32.gmra.mxu0 %v1705
    %v1727 = vpop.f32.mrf.mxu0
    %v1728 = vadd.f32 %v885, %v1727
    %1729 = vmatmul.f32.gmra.mxu0 %v1708
    %v1730 = vpop.f32.mrf.mxu0
    %v1731 = vadd.f32 %v885, %v1730
    %1732 = vdwg.mxu0
    %v1735 = vrot.slane %v1728, 1
    %v1736 = vrot.slane %v1728, 2
    %v1737 = vrot.slane %v1728, 3
    %v1738 = vrot.slane %v1728, 4
    %v1739 = vrot.slane %v1728, 5
    %v1740 = vrot.slane %v1728, 6
    %v1741 = vrot.slane %v1728, 7
    %v1742 = vrot.slane %v1731, 1
    %v1743 = vrot.slane %v1731, 2
    %v1744 = vrot.slane %v1731, 3
    %v1745 = vrot.slane %v1731, 4
    %v1746 = vrot.slane %v1731, 5
    %v1747 = vrot.slane %v1731, 6
    %v1748 = vrot.slane %v1731, 7
    %s1763 = scalar_lea.vmem [#allocation3], 32
    %1764 = vst [vmem:[%s1763] sm:$0x1] %v1728
    %1765 = vst [vmem:[%s1763 + $0x2] sm:$0x1] %v1735
    %1766 = vst [vmem:[%s1763 + $0x4] sm:$0x1] %v1736
    %1767 = vst [vmem:[%s1763 + $0x6] sm:$0x1] %v1737
    %1768 = vst [vmem:[%s1763 + $0x8] sm:$0x1] %v1738
    %1769 = vst [vmem:[%s1763 + $0xa] sm:$0x1] %v1739
    %1770 = vst [vmem:[%s1763 + $0xc] sm:$0x1] %v1740
    %1771 = vst [vmem:[%s1763 + $0xe] sm:$0x1] %v1741
    %1772 = vst [vmem:[%s1763 + $0x10] sm:$0x1] %v1731
    %1773 = vst [vmem:[%s1763 + $0x12] sm:$0x1] %v1742
    %1774 = vst [vmem:[%s1763 + $0x14] sm:$0x1] %v1743
    %1775 = vst [vmem:[%s1763 + $0x16] sm:$0x1] %v1744
    %1776 = vst [vmem:[%s1763 + $0x18] sm:$0x1] %v1745
    %1777 = vst [vmem:[%s1763 + $0x1a] sm:$0x1] %v1746
    %1778 = vst [vmem:[%s1763 + $0x1c] sm:$0x1] %v1747
    %1779 = vst [vmem:[%s1763 + $0x1e] sm:$0x1] %v1748
    %1780 = vrot.lane.b32.xlu0 %v1662, 109
    %v1781 = vpop.permute.xlu0 %1780
    %1782 = vrot.lane.b32.xlu0 %v1663, 109
    %v1783 = vpop.permute.xlu0 %1782
    %1786 = vxpose.xlu0.b32.start [1/16] %v1781, 128
    %1787 = vxpose.xlu0.b32.cont [2/16] %v1783, 128
    %1788 = vxpose.xlu0.b32.cont [3/16] 0.0, 128
    %1789 = vxpose.xlu0.b32.cont [4/16] 0.0, 128
    %1790 = vxpose.xlu0.b32.cont [5/16] 0.0, 128
    %1791 = vxpose.xlu0.b32.cont [6/16] 0.0, 128
    %1792 = vxpose.xlu0.b32.cont [7/16] 0.0, 128
    %1793 = vxpose.xlu0.b32.cont [8/16] 0.0, 128
    %1794 = vxpose.xlu0.b32.cont [9/16] 0.0, 128
    %1795 = vxpose.xlu0.b32.cont [10/16] 0.0, 128
    %1796 = vxpose.xlu0.b32.cont [11/16] 0.0, 128
    %1797 = vxpose.xlu0.b32.cont [12/16] 0.0, 128
    %1798 = vxpose.xlu0.b32.cont [13/16] 0.0, 128
    %1799 = vxpose.xlu0.b32.cont [14/16] 0.0, 128
    %1800 = vxpose.xlu0.b32.cont [15/16] 0.0, 128
    %1801 = vxpose.xlu0.b32.end [16/16] 0.0, 128
    %v1802 = vpop.trf.xlu0
    %v1803 = vpop.trf.xlu0
    %v1804 = vpop.trf.xlu0
    %v1805 = vpop.trf.xlu0
    %v1806 = vpop.trf.xlu0
    %v1807 = vpop.trf.xlu0
    %v1808 = vpop.trf.xlu0
    %v1809 = vpop.trf.xlu0
    %v1810 = vpop.trf.xlu0
    %v1811 = vpop.trf.xlu0
    %v1812 = vpop.trf.xlu0
    %v1813 = vpop.trf.xlu0
    %v1814 = vpop.trf.xlu0
    %v1815 = vpop.trf.xlu0
    %v1816 = vpop.trf.xlu0
    %v1817 = vpop.trf.xlu0
    %v1819 = vsel %vm598, %v1802, 0
    %v1822 = vsel %vm598, %v1803, 0
    %1824 = vmatpush.msra.mxu0 0.0
    %1825 = vmatpush.msra.mxu0 0.0
    %1826 = vmatpush.msra.mxu0 0.0
    %1827 = vmatpush.msra.mxu0 0.0
    %1828 = vmatpush.msra.mxu0 0.0
    %1829 = vmatpush.msra.mxu0 0.0
    %1830 = vmatpush.msra.mxu0 0.0
    %1831 = vmatpush.msra.mxu0 0.0
    %1832 = vmatpush.msra.mxu0 0.0
    %1833 = vmatpush.msra.mxu0 0.0
    %1834 = vmatpush.msra.mxu0 0.0
    %1835 = vmatpush.msra.mxu0 0.0
    %1836 = vmatpush.msra.mxu0 0.0
    %1837 = vmatpush.msra.mxu0 0.0
    %1838 = vmatpush.msra.mxu0 %v315
    %1839 = vmatpush.msra.mxu0 %v314
    %1840 = vmatmul.f32.gmra.mxu0 %v1819
    %v1841 = vpop.f32.mrf.mxu0
    %v1842 = vadd.f32 %v885, %v1841
    %1843 = vmatmul.f32.gmra.mxu0 %v1822
    %v1844 = vpop.f32.mrf.mxu0
    %v1845 = vadd.f32 %v885, %v1844
    %1846 = vdwg.mxu0
    %v1849 = vrot.slane %v1842, 1
    %v1850 = vrot.slane %v1842, 2
    %v1851 = vrot.slane %v1842, 3
    %v1852 = vrot.slane %v1842, 4
    %v1853 = vrot.slane %v1842, 5
    %v1854 = vrot.slane %v1842, 6
    %v1855 = vrot.slane %v1842, 7
    %v1856 = vrot.slane %v1845, 1
    %v1857 = vrot.slane %v1845, 2
    %v1858 = vrot.slane %v1845, 3
    %v1859 = vrot.slane %v1845, 4
    %v1860 = vrot.slane %v1845, 5
    %v1861 = vrot.slane %v1845, 6
    %v1862 = vrot.slane %v1845, 7
    %1877 = vst [vmem:[%s1763 + $0x1] sm:$0x1] %v1842
    %1878 = vst [vmem:[%s1763 + $0x3] sm:$0x1] %v1849
    %1879 = vst [vmem:[%s1763 + $0x5] sm:$0x1] %v1850
    %1880 = vst [vmem:[%s1763 + $0x7] sm:$0x1] %v1851
    %1881 = vst [vmem:[%s1763 + $0x9] sm:$0x1] %v1852
    %1882 = vst [vmem:[%s1763 + $0xb] sm:$0x1] %v1853
    %1883 = vst [vmem:[%s1763 + $0xd] sm:$0x1] %v1854
    %1884 = vst [vmem:[%s1763 + $0xf] sm:$0x1] %v1855
    %1885 = vst [vmem:[%s1763 + $0x11] sm:$0x1] %v1845
    %1886 = vst [vmem:[%s1763 + $0x13] sm:$0x1] %v1856
    %1887 = vst [vmem:[%s1763 + $0x15] sm:$0x1] %v1857
    %1888 = vst [vmem:[%s1763 + $0x17] sm:$0x1] %v1858
    %1889 = vst [vmem:[%s1763 + $0x19] sm:$0x1] %v1859
    %1890 = vst [vmem:[%s1763 + $0x1b] sm:$0x1] %v1860
    %1891 = vst [vmem:[%s1763 + $0x1d] sm:$0x1] %v1861
    %1892 = vst [vmem:[%s1763 + $0x1f] sm:$0x1] %v1862
    %v1893 = vld [vmem:[%s2] sm:$0x1]
    %v1894 = vsub.f32 1.0, %v1893
    %v1895 = vld [vmem:[%s16] sm:$0xff]
    %v1896 = vld [vmem:[%s16 + $0x8] sm:$0xff]
    %v1897 = vld [vmem:[%s16 + $0x10] sm:$0xff]
    %v1898 = vld [vmem:[%s16 + $0x18] sm:$0xff]
    %v1899 = vld [vmem:[#allocation3] sm:$0x3]
    %v1901 = vperm.slane %v1893, 0
    %v1903 = vmul.f32 %v1899, %v1901
    %s1904 = scalar_lea.vmem [#allocation3], 62
    %v1905 = vld [vmem:[%s1904] sm:$0x3]
    %v1907 = vperm.slane %v1894, 0
    %v1909 = vmul.f32 %v1905, %v1907
    %v1910 = vadd.f32 %v1903, %v1909
    %vm1911 = vcmask 261120
    %v1913 = vsel %vm1911, 0.0, 0
    %1915 = vmatpush.msra.mxu0 0.0
    %1916 = vmatpush.msra.mxu0 0.0
    %1917 = vmatpush.msra.mxu0 0.0
    %1918 = vmatpush.msra.mxu0 0.0
    %1919 = vmatpush.msra.mxu0 0.0
    %1920 = vmatpush.msra.mxu0 0.0
    %1921 = vmatpush.msra.mxu0 0.0
    %1922 = vmatpush.msra.mxu0 0.0
    %1923 = vmatpush.msra.mxu0 0.0
    %1924 = vmatpush.msra.mxu0 0.0
    %1925 = vmatpush.msra.mxu0 0.0
    %1926 = vmatpush.msra.mxu0 0.0
    %1927 = vmatpush.msra.mxu0 %v1898
    %1928 = vmatpush.msra.mxu0 %v1897
    %1929 = vmatpush.msra.mxu0 %v1896
    %1930 = vmatpush.msra.mxu0 %v1895
    %1931 = vmatmul.f32.gmra.mxu0 %v1913
    %v1932 = vpop.f32.mrf.mxu0
    %v1933 = vadd.f32 0.0, %v1932
    %1934 = vdwg.mxu0
    %v1935 = vadd.f32 %v1910, %v1933
    %v1936 = vxor.u32 %v1935, 2147483648
    %v1937 = vmul.f32 %v1936, 1.442695
    %v1938 = vpow.pop %v1937
    %v1939 = vadd.f32 %v1938, 1.0
    %v1940 = vrcp.pop %v1939
    %v1941 = vmul.f32 %v1939, %v1940
    %v1942 = vsub.f32 1.0, %v1941
    %v1943 = vmul.f32 %v1940, %v1942
    %v1944 = vadd.f32 %v1940, %v1943
    %vm1945 = vweird.f32 %v1939
    %vm1946 = vweird.f32 %v1940
    %vm1947 = vmor %vm1945, %vm1946
    %v1948 = vsel %vm1947, %v1940, %v1944
    %v1949 = vand.u32 2147483647, %v1939
    %vm1950 = vcmp.eq.f32.partialorder %v1949, 8.507059e+37
    %v1951 = vand.u32 %v1939, 2147483648
    %v1952 = vor.u32 1.1754944e-38, %v1951
    %v1953 = vsel %vm1950, %v1952, %v1948
    %v1954 = vmul.f32 1.0, %v1953
    %v1955 = vtanh.pop %v1935
    %v1956 = vmul.f32 %v1954, 0.0
    %1958 = vrot.lane.b32.xlu0 %v1955, 64
    %v1959 = vpop.permute.xlu0 %1958
    %v1961 = vmul.f32 %v1954, %v1959
    %1963 = vrot.lane.b32.xlu0 %v1961, 32
    %v1964 = vpop.permute.xlu0 %1963
    %v1966 = vadd.f32 %v1956, %v1964
    %v1967 = vtanh.pop %v1966
    %1969 = vrot.lane.b32.xlu0 %v1967, 64
    %v1970 = vpop.permute.xlu0 %1969
    %v1972 = vmul.f32 %v1954, %v1970
    %s1973 = scalar_lea.vmem [#allocation3], 2
    %v1974 = vld [vmem:[%s1973] sm:$0x3]
    %v1975 = vmul.f32 %v1974, %v1901
    %s1976 = scalar_lea.vmem [#allocation3], 60
    %v1977 = vld [vmem:[%s1976] sm:$0x3]
    %v1978 = vmul.f32 %v1977, %v1907
    %v1979 = vadd.f32 %v1975, %v1978
    %1981 = vrot.lane.b32.xlu0 %v1972, 32
    %v1982 = vpop.permute.xlu0 %1981
    %v1983 = vsel %vm1911, %v1982, 0
    %1985 = vmatpush.msra.mxu0 0.0
    %1986 = vmatpush.msra.mxu0 0.0
    %1987 = vmatpush.msra.mxu0 0.0
    %1988 = vmatpush.msra.mxu0 0.0
    %1989 = vmatpush.msra.mxu0 0.0
    %1990 = vmatpush.msra.mxu0 0.0
    %1991 = vmatpush.msra.mxu0 0.0
    %1992 = vmatpush.msra.mxu0 0.0
    %1993 = vmatpush.msra.mxu0 0.0
    %1994 = vmatpush.msra.mxu0 0.0
    %1995 = vmatpush.msra.mxu0 0.0
    %1996 = vmatpush.msra.mxu0 0.0
    %1997 = vmatpush.msra.mxu0 %v1898
    %1998 = vmatpush.msra.mxu0 %v1897
    %1999 = vmatpush.msra.mxu0 %v1896
    %2000 = vmatpush.msra.mxu0 %v1895
    %2001 = vmatmul.f32.gmra.mxu0 %v1983
    %v2002 = vpop.f32.mrf.mxu0
    %v2003 = vadd.f32 0.0, %v2002
    %2004 = vdwg.mxu0
    %v2005 = vadd.f32 %v1979, %v2003
    %v2006 = vxor.u32 %v2005, 2147483648
    %v2007 = vmul.f32 %v2006, 1.442695
    %v2008 = vpow.pop %v2007
    %v2009 = vadd.f32 %v2008, 1.0
    %v2010 = vrcp.pop %v2009
    %v2011 = vmul.f32 %v2009, %v2010
    %v2012 = vsub.f32 1.0, %v2011
    %v2013 = vmul.f32 %v2010, %v2012
    %v2014 = vadd.f32 %v2010, %v2013
    %vm2015 = vweird.f32 %v2009
    %vm2016 = vweird.f32 %v2010
    %vm2017 = vmor %vm2015, %vm2016
    %v2018 = vsel %vm2017, %v2010, %v2014
    %v2019 = vand.u32 2147483647, %v2009
    %vm2020 = vcmp.eq.f32.partialorder %v2019, 8.507059e+37
    %v2021 = vand.u32 %v2009, 2147483648
    %v2022 = vor.u32 1.1754944e-38, %v2021
    %v2023 = vsel %vm2020, %v2022, %v2018
    %v2024 = vmul.f32 1.0, %v2023
    %v2025 = vtanh.pop %v2005
    %v2026 = vmul.f32 %v2024, %v1966
    %2028 = vrot.lane.b32.xlu0 %v2025, 64
    %v2029 = vpop.permute.xlu0 %2028
    %v2031 = vmul.f32 %v2024, %v2029
    %2033 = vrot.lane.b32.xlu0 %v2031, 32
    %v2034 = vpop.permute.xlu0 %2033
    %v2036 = vadd.f32 %v2026, %v2034
    %v2037 = vtanh.pop %v2036
    %2039 = vrot.lane.b32.xlu0 %v2037, 64
    %v2040 = vpop.permute.xlu0 %2039
    %v2042 = vmul.f32 %v2024, %v2040
    %s2043 = scalar_lea.vmem [#allocation3], 4
    %v2044 = vld [vmem:[%s2043] sm:$0x3]
    %v2045 = vmul.f32 %v2044, %v1901
    %s2046 = scalar_lea.vmem [#allocation3], 58
    %v2047 = vld [vmem:[%s2046] sm:$0x3]
    %v2048 = vmul.f32 %v2047, %v1907
    %v2049 = vadd.f32 %v2045, %v2048
    %2051 = vrot.lane.b32.xlu0 %v2042, 32
    %v2052 = vpop.permute.xlu0 %2051
    %v2053 = vsel %vm1911, %v2052, 0
    %2055 = vmatpush.msra.mxu0 0.0
    %2056 = vmatpush.msra.mxu0 0.0
    %2057 = vmatpush.msra.mxu0 0.0
    %2058 = vmatpush.msra.mxu0 0.0
    %2059 = vmatpush.msra.mxu0 0.0
    %2060 = vmatpush.msra.mxu0 0.0
    %2061 = vmatpush.msra.mxu0 0.0
    %2062 = vmatpush.msra.mxu0 0.0
    %2063 = vmatpush.msra.mxu0 0.0
    %2064 = vmatpush.msra.mxu0 0.0
    %2065 = vmatpush.msra.mxu0 0.0
    %2066 = vmatpush.msra.mxu0 0.0
    %2067 = vmatpush.msra.mxu0 %v1898
    %2068 = vmatpush.msra.mxu0 %v1897
    %2069 = vmatpush.msra.mxu0 %v1896
    %2070 = vmatpush.msra.mxu0 %v1895
    %2071 = vmatmul.f32.gmra.mxu0 %v2053
    %v2072 = vpop.f32.mrf.mxu0
    %v2073 = vadd.f32 0.0, %v2072
    %2074 = vdwg.mxu0
    %v2075 = vadd.f32 %v2049, %v2073
    %v2076 = vxor.u32 %v2075, 2147483648
    %v2077 = vmul.f32 %v2076, 1.442695
    %v2078 = vpow.pop %v2077
    %v2079 = vadd.f32 %v2078, 1.0
    %v2080 = vrcp.pop %v2079
    %v2081 = vmul.f32 %v2079, %v2080
    %v2082 = vsub.f32 1.0, %v2081
    %v2083 = vmul.f32 %v2080, %v2082
    %v2084 = vadd.f32 %v2080, %v2083
    %vm2085 = vweird.f32 %v2079
    %vm2086 = vweird.f32 %v2080
    %vm2087 = vmor %vm2085, %vm2086
    %v2088 = vsel %vm2087, %v2080, %v2084
    %v2089 = vand.u32 2147483647, %v2079
    %vm2090 = vcmp.eq.f32.partialorder %v2089, 8.507059e+37
    %v2091 = vand.u32 %v2079, 2147483648
    %v2092 = vor.u32 1.1754944e-38, %v2091
    %v2093 = vsel %vm2090, %v2092, %v2088
    %v2094 = vmul.f32 1.0, %v2093
    %v2095 = vtanh.pop %v2075
    %v2096 = vmul.f32 %v2094, %v2036
    %2098 = vrot.lane.b32.xlu0 %v2095, 64
    %v2099 = vpop.permute.xlu0 %2098
    %v2101 = vmul.f32 %v2094, %v2099
    %2103 = vrot.lane.b32.xlu0 %v2101, 32
    %v2104 = vpop.permute.xlu0 %2103
    %v2106 = vadd.f32 %v2096, %v2104
    %v2107 = vtanh.pop %v2106
    %2109 = vrot.lane.b32.xlu0 %v2107, 64
    %v2110 = vpop.permute.xlu0 %2109
    %v2112 = vmul.f32 %v2094, %v2110
    %s2113 = scalar_lea.vmem [#allocation3], 6
    %v2114 = vld [vmem:[%s2113] sm:$0x3]
    %v2115 = vmul.f32 %v2114, %v1901
    %s2116 = scalar_lea.vmem [#allocation3], 56
    %v2117 = vld [vmem:[%s2116] sm:$0x3]
    %v2118 = vmul.f32 %v2117, %v1907
    %v2119 = vadd.f32 %v2115, %v2118
    %2121 = vrot.lane.b32.xlu0 %v2112, 32
    %v2122 = vpop.permute.xlu0 %2121
    %v2123 = vsel %vm1911, %v2122, 0
    %2125 = vmatpush.msra.mxu0 0.0
    %2126 = vmatpush.msra.mxu0 0.0
    %2127 = vmatpush.msra.mxu0 0.0
    %2128 = vmatpush.msra.mxu0 0.0
    %2129 = vmatpush.msra.mxu0 0.0
    %2130 = vmatpush.msra.mxu0 0.0
    %2131 = vmatpush.msra.mxu0 0.0
    %2132 = vmatpush.msra.mxu0 0.0
    %2133 = vmatpush.msra.mxu0 0.0
    %2134 = vmatpush.msra.mxu0 0.0
    %2135 = vmatpush.msra.mxu0 0.0
    %2136 = vmatpush.msra.mxu0 0.0
    %2137 = vmatpush.msra.mxu0 %v1898
    %2138 = vmatpush.msra.mxu0 %v1897
    %2139 = vmatpush.msra.mxu0 %v1896
    %2140 = vmatpush.msra.mxu0 %v1895
    %2141 = vmatmul.f32.gmra.mxu0 %v2123
    %v2142 = vpop.f32.mrf.mxu0
    %v2143 = vadd.f32 0.0, %v2142
    %2144 = vdwg.mxu0
    %v2145 = vadd.f32 %v2119, %v2143
    %v2146 = vxor.u32 %v2145, 2147483648
    %v2147 = vmul.f32 %v2146, 1.442695
    %v2148 = vpow.pop %v2147
    %v2149 = vadd.f32 %v2148, 1.0
    %v2150 = vrcp.pop %v2149
    %v2151 = vmul.f32 %v2149, %v2150
    %v2152 = vsub.f32 1.0, %v2151
    %v2153 = vmul.f32 %v2150, %v2152
    %v2154 = vadd.f32 %v2150, %v2153
    %vm2155 = vweird.f32 %v2149
    %vm2156 = vweird.f32 %v2150
    %vm2157 = vmor %vm2155, %vm2156
    %v2158 = vsel %vm2157, %v2150, %v2154
    %v2159 = vand.u32 2147483647, %v2149
    %vm2160 = vcmp.eq.f32.partialorder %v2159, 8.507059e+37
    %v2161 = vand.u32 %v2149, 2147483648
    %v2162 = vor.u32 1.1754944e-38, %v2161
    %v2163 = vsel %vm2160, %v2162, %v2158
    %v2164 = vmul.f32 1.0, %v2163
    %v2165 = vtanh.pop %v2145
    %v2166 = vmul.f32 %v2164, %v2106
    %2168 = vrot.lane.b32.xlu0 %v2165, 64
    %v2169 = vpop.permute.xlu0 %2168
    %v2171 = vmul.f32 %v2164, %v2169
    %2173 = vrot.lane.b32.xlu0 %v2171, 32
    %v2174 = vpop.permute.xlu0 %2173
    %v2176 = vadd.f32 %v2166, %v2174
    %v2177 = vtanh.pop %v2176
    %2179 = vrot.lane.b32.xlu0 %v2177, 64
    %v2180 = vpop.permute.xlu0 %2179
    %v2182 = vmul.f32 %v2164, %v2180
    %s2183 = scalar_lea.vmem [#allocation3], 8
    %v2184 = vld [vmem:[%s2183] sm:$0x3]
    %v2185 = vmul.f32 %v2184, %v1901
    %s2186 = scalar_lea.vmem [#allocation3], 54
    %v2187 = vld [vmem:[%s2186] sm:$0x3]
    %v2188 = vmul.f32 %v2187, %v1907
    %v2189 = vadd.f32 %v2185, %v2188
    %2191 = vrot.lane.b32.xlu0 %v2182, 32
    %v2192 = vpop.permute.xlu0 %2191
    %v2193 = vsel %vm1911, %v2192, 0
    %2195 = vmatpush.msra.mxu0 0.0
    %2196 = vmatpush.msra.mxu0 0.0
    %2197 = vmatpush.msra.mxu0 0.0
    %2198 = vmatpush.msra.mxu0 0.0
    %2199 = vmatpush.msra.mxu0 0.0
    %2200 = vmatpush.msra.mxu0 0.0
    %2201 = vmatpush.msra.mxu0 0.0
    %2202 = vmatpush.msra.mxu0 0.0
    %2203 = vmatpush.msra.mxu0 0.0
    %2204 = vmatpush.msra.mxu0 0.0
    %2205 = vmatpush.msra.mxu0 0.0
    %2206 = vmatpush.msra.mxu0 0.0
    %2207 = vmatpush.msra.mxu0 %v1898
    %2208 = vmatpush.msra.mxu0 %v1897
    %2209 = vmatpush.msra.mxu0 %v1896
    %2210 = vmatpush.msra.mxu0 %v1895
    %2211 = vmatmul.f32.gmra.mxu0 %v2193
    %v2212 = vpop.f32.mrf.mxu0
    %v2213 = vadd.f32 0.0, %v2212
    %2214 = vdwg.mxu0
    %v2215 = vadd.f32 %v2189, %v2213
    %v2216 = vxor.u32 %v2215, 2147483648
    %v2217 = vmul.f32 %v2216, 1.442695
    %v2218 = vpow.pop %v2217
    %v2219 = vadd.f32 %v2218, 1.0
    %v2220 = vrcp.pop %v2219
    %v2221 = vmul.f32 %v2219, %v2220
    %v2222 = vsub.f32 1.0, %v2221
    %v2223 = vmul.f32 %v2220, %v2222
    %v2224 = vadd.f32 %v2220, %v2223
    %vm2225 = vweird.f32 %v2219
    %vm2226 = vweird.f32 %v2220
    %vm2227 = vmor %vm2225, %vm2226
    %v2228 = vsel %vm2227, %v2220, %v2224
    %v2229 = vand.u32 2147483647, %v2219
    %vm2230 = vcmp.eq.f32.partialorder %v2229, 8.507059e+37
    %v2231 = vand.u32 %v2219, 2147483648
    %v2232 = vor.u32 1.1754944e-38, %v2231
    %v2233 = vsel %vm2230, %v2232, %v2228
    %v2234 = vmul.f32 1.0, %v2233
    %v2235 = vtanh.pop %v2215
    %v2236 = vmul.f32 %v2234, %v2176
    %2238 = vrot.lane.b32.xlu0 %v2235, 64
    %v2239 = vpop.permute.xlu0 %2238
    %v2241 = vmul.f32 %v2234, %v2239
    %2243 = vrot.lane.b32.xlu0 %v2241, 32
    %v2244 = vpop.permute.xlu0 %2243
    %v2246 = vadd.f32 %v2236, %v2244
    %v2247 = vtanh.pop %v2246
    %2249 = vrot.lane.b32.xlu0 %v2247, 64
    %v2250 = vpop.permute.xlu0 %2249
    %v2252 = vmul.f32 %v2234, %v2250
    %s2253 = scalar_lea.vmem [#allocation3], 10
    %v2254 = vld [vmem:[%s2253] sm:$0x3]
    %v2255 = vmul.f32 %v2254, %v1901
    %s2256 = scalar_lea.vmem [#allocation3], 52
    %v2257 = vld [vmem:[%s2256] sm:$0x3]
    %v2258 = vmul.f32 %v2257, %v1907
    %v2259 = vadd.f32 %v2255, %v2258
    %2261 = vrot.lane.b32.xlu0 %v2252, 32
    %v2262 = vpop.permute.xlu0 %2261
    %v2263 = vsel %vm1911, %v2262, 0
    %2265 = vmatpush.msra.mxu0 0.0
    %2266 = vmatpush.msra.mxu0 0.0
    %2267 = vmatpush.msra.mxu0 0.0
    %2268 = vmatpush.msra.mxu0 0.0
    %2269 = vmatpush.msra.mxu0 0.0
    %2270 = vmatpush.msra.mxu0 0.0
    %2271 = vmatpush.msra.mxu0 0.0
    %2272 = vmatpush.msra.mxu0 0.0
    %2273 = vmatpush.msra.mxu0 0.0
    %2274 = vmatpush.msra.mxu0 0.0
    %2275 = vmatpush.msra.mxu0 0.0
    %2276 = vmatpush.msra.mxu0 0.0
    %2277 = vmatpush.msra.mxu0 %v1898
    %2278 = vmatpush.msra.mxu0 %v1897
    %2279 = vmatpush.msra.mxu0 %v1896
    %2280 = vmatpush.msra.mxu0 %v1895
    %2281 = vmatmul.f32.gmra.mxu0 %v2263
    %v2282 = vpop.f32.mrf.mxu0
    %v2283 = vadd.f32 0.0, %v2282
    %2284 = vdwg.mxu0
    %v2285 = vadd.f32 %v2259, %v2283
    %v2286 = vxor.u32 %v2285, 2147483648
    %v2287 = vmul.f32 %v2286, 1.442695
    %v2288 = vpow.pop %v2287
    %v2289 = vadd.f32 %v2288, 1.0
    %v2290 = vrcp.pop %v2289
    %v2291 = vmul.f32 %v2289, %v2290
    %v2292 = vsub.f32 1.0, %v2291
    %v2293 = vmul.f32 %v2290, %v2292
    %v2294 = vadd.f32 %v2290, %v2293
    %vm2295 = vweird.f32 %v2289
    %vm2296 = vweird.f32 %v2290
    %vm2297 = vmor %vm2295, %vm2296
    %v2298 = vsel %vm2297, %v2290, %v2294
    %v2299 = vand.u32 2147483647, %v2289
    %vm2300 = vcmp.eq.f32.partialorder %v2299, 8.507059e+37
    %v2301 = vand.u32 %v2289, 2147483648
    %v2302 = vor.u32 1.1754944e-38, %v2301
    %v2303 = vsel %vm2300, %v2302, %v2298
    %v2304 = vmul.f32 1.0, %v2303
    %v2305 = vtanh.pop %v2285
    %v2306 = vmul.f32 %v2304, %v2246
    %2308 = vrot.lane.b32.xlu0 %v2305, 64
    %v2309 = vpop.permute.xlu0 %2308
    %v2311 = vmul.f32 %v2304, %v2309
    %2313 = vrot.lane.b32.xlu0 %v2311, 32
    %v2314 = vpop.permute.xlu0 %2313
    %v2316 = vadd.f32 %v2306, %v2314
    %v2317 = vtanh.pop %v2316
    %2319 = vrot.lane.b32.xlu0 %v2317, 64
    %v2320 = vpop.permute.xlu0 %2319
    %v2322 = vmul.f32 %v2304, %v2320
    %s2323 = scalar_lea.vmem [#allocation3], 12
    %v2324 = vld [vmem:[%s2323] sm:$0x3]
    %v2325 = vmul.f32 %v2324, %v1901
    %s2326 = scalar_lea.vmem [#allocation3], 50
    %v2327 = vld [vmem:[%s2326] sm:$0x3]
    %v2328 = vmul.f32 %v2327, %v1907
    %v2329 = vadd.f32 %v2325, %v2328
    %2331 = vrot.lane.b32.xlu0 %v2322, 32
    %v2332 = vpop.permute.xlu0 %2331
    %v2333 = vsel %vm1911, %v2332, 0
    %2335 = vmatpush.msra.mxu0 0.0
    %2336 = vmatpush.msra.mxu0 0.0
    %2337 = vmatpush.msra.mxu0 0.0
    %2338 = vmatpush.msra.mxu0 0.0
    %2339 = vmatpush.msra.mxu0 0.0
    %2340 = vmatpush.msra.mxu0 0.0
    %2341 = vmatpush.msra.mxu0 0.0
    %2342 = vmatpush.msra.mxu0 0.0
    %2343 = vmatpush.msra.mxu0 0.0
    %2344 = vmatpush.msra.mxu0 0.0
    %2345 = vmatpush.msra.mxu0 0.0
    %2346 = vmatpush.msra.mxu0 0.0
    %2347 = vmatpush.msra.mxu0 %v1898
    %2348 = vmatpush.msra.mxu0 %v1897
    %2349 = vmatpush.msra.mxu0 %v1896
    %2350 = vmatpush.msra.mxu0 %v1895
    %2351 = vmatmul.f32.gmra.mxu0 %v2333
    %v2352 = vpop.f32.mrf.mxu0
    %v2353 = vadd.f32 0.0, %v2352
    %2354 = vdwg.mxu0
    %v2355 = vadd.f32 %v2329, %v2353
    %v2356 = vxor.u32 %v2355, 2147483648
    %v2357 = vmul.f32 %v2356, 1.442695
    %v2358 = vpow.pop %v2357
    %v2359 = vadd.f32 %v2358, 1.0
    %v2360 = vrcp.pop %v2359
    %v2361 = vmul.f32 %v2359, %v2360
    %v2362 = vsub.f32 1.0, %v2361
    %v2363 = vmul.f32 %v2360, %v2362
    %v2364 = vadd.f32 %v2360, %v2363
    %vm2365 = vweird.f32 %v2359
    %vm2366 = vweird.f32 %v2360
    %vm2367 = vmor %vm2365, %vm2366
    %v2368 = vsel %vm2367, %v2360, %v2364
    %v2369 = vand.u32 2147483647, %v2359
    %vm2370 = vcmp.eq.f32.partialorder %v2369, 8.507059e+37
    %v2371 = vand.u32 %v2359, 2147483648
    %v2372 = vor.u32 1.1754944e-38, %v2371
    %v2373 = vsel %vm2370, %v2372, %v2368
    %v2374 = vmul.f32 1.0, %v2373
    %v2375 = vtanh.pop %v2355
    %v2376 = vmul.f32 %v2374, %v2316
    %2378 = vrot.lane.b32.xlu0 %v2375, 64
    %v2379 = vpop.permute.xlu0 %2378
    %v2381 = vmul.f32 %v2374, %v2379
    %2383 = vrot.lane.b32.xlu0 %v2381, 32
    %v2384 = vpop.permute.xlu0 %2383
    %v2386 = vadd.f32 %v2376, %v2384
    %v2387 = vtanh.pop %v2386
    %2389 = vrot.lane.b32.xlu0 %v2387, 64
    %v2390 = vpop.permute.xlu0 %2389
    %v2392 = vmul.f32 %v2374, %v2390
    %s2393 = scalar_lea.vmem [#allocation3], 14
    %v2394 = vld [vmem:[%s2393] sm:$0x3]
    %v2395 = vmul.f32 %v2394, %v1901
    %s2396 = scalar_lea.vmem [#allocation3], 48
    %v2397 = vld [vmem:[%s2396] sm:$0x3]
    %v2398 = vmul.f32 %v2397, %v1907
    %v2399 = vadd.f32 %v2395, %v2398
    %2401 = vrot.lane.b32.xlu0 %v2392, 32
    %v2402 = vpop.permute.xlu0 %2401
    %v2403 = vsel %vm1911, %v2402, 0
    %2405 = vmatpush.msra.mxu0 0.0
    %2406 = vmatpush.msra.mxu0 0.0
    %2407 = vmatpush.msra.mxu0 0.0
    %2408 = vmatpush.msra.mxu0 0.0
    %2409 = vmatpush.msra.mxu0 0.0
    %2410 = vmatpush.msra.mxu0 0.0
    %2411 = vmatpush.msra.mxu0 0.0
    %2412 = vmatpush.msra.mxu0 0.0
    %2413 = vmatpush.msra.mxu0 0.0
    %2414 = vmatpush.msra.mxu0 0.0
    %2415 = vmatpush.msra.mxu0 0.0
    %2416 = vmatpush.msra.mxu0 0.0
    %2417 = vmatpush.msra.mxu0 %v1898
    %2418 = vmatpush.msra.mxu0 %v1897
    %2419 = vmatpush.msra.mxu0 %v1896
    %2420 = vmatpush.msra.mxu0 %v1895
    %2421 = vmatmul.f32.gmra.mxu0 %v2403
    %v2422 = vpop.f32.mrf.mxu0
    %v2423 = vadd.f32 0.0, %v2422
    %2424 = vdwg.mxu0
    %v2425 = vadd.f32 %v2399, %v2423
    %v2426 = vxor.u32 %v2425, 2147483648
    %v2427 = vmul.f32 %v2426, 1.442695
    %v2428 = vpow.pop %v2427
    %v2429 = vadd.f32 %v2428, 1.0
    %v2430 = vrcp.pop %v2429
    %v2431 = vmul.f32 %v2429, %v2430
    %v2432 = vsub.f32 1.0, %v2431
    %v2433 = vmul.f32 %v2430, %v2432
    %v2434 = vadd.f32 %v2430, %v2433
    %vm2435 = vweird.f32 %v2429
    %vm2436 = vweird.f32 %v2430
    %vm2437 = vmor %vm2435, %vm2436
    %v2438 = vsel %vm2437, %v2430, %v2434
    %v2439 = vand.u32 2147483647, %v2429
    %vm2440 = vcmp.eq.f32.partialorder %v2439, 8.507059e+37
    %v2441 = vand.u32 %v2429, 2147483648
    %v2442 = vor.u32 1.1754944e-38, %v2441
    %v2443 = vsel %vm2440, %v2442, %v2438
    %v2444 = vmul.f32 1.0, %v2443
    %v2445 = vtanh.pop %v2425
    %v2446 = vmul.f32 %v2444, %v2386
    %2448 = vrot.lane.b32.xlu0 %v2445, 64
    %v2449 = vpop.permute.xlu0 %2448
    %v2451 = vmul.f32 %v2444, %v2449
    %2453 = vrot.lane.b32.xlu0 %v2451, 32
    %v2454 = vpop.permute.xlu0 %2453
    %v2456 = vadd.f32 %v2446, %v2454
    %v2457 = vtanh.pop %v2456
    %2459 = vrot.lane.b32.xlu0 %v2457, 64
    %v2460 = vpop.permute.xlu0 %2459
    %v2462 = vmul.f32 %v2444, %v2460
    %s2463 = scalar_lea.vmem [#allocation3], 16
    %v2464 = vld [vmem:[%s2463] sm:$0x3]
    %v2465 = vmul.f32 %v2464, %v1901
    %s2466 = scalar_lea.vmem [#allocation3], 46
    %v2467 = vld [vmem:[%s2466] sm:$0x3]
    %v2468 = vmul.f32 %v2467, %v1907
    %v2469 = vadd.f32 %v2465, %v2468
    %2471 = vrot.lane.b32.xlu0 %v2462, 32
    %v2472 = vpop.permute.xlu0 %2471
    %v2473 = vsel %vm1911, %v2472, 0
    %2475 = vmatpush.msra.mxu0 0.0
    %2476 = vmatpush.msra.mxu0 0.0
    %2477 = vmatpush.msra.mxu0 0.0
    %2478 = vmatpush.msra.mxu0 0.0
    %2479 = vmatpush.msra.mxu0 0.0
    %2480 = vmatpush.msra.mxu0 0.0
    %2481 = vmatpush.msra.mxu0 0.0
    %2482 = vmatpush.msra.mxu0 0.0
    %2483 = vmatpush.msra.mxu0 0.0
    %2484 = vmatpush.msra.mxu0 0.0
    %2485 = vmatpush.msra.mxu0 0.0
    %2486 = vmatpush.msra.mxu0 0.0
    %2487 = vmatpush.msra.mxu0 %v1898
    %2488 = vmatpush.msra.mxu0 %v1897
    %2489 = vmatpush.msra.mxu0 %v1896
    %2490 = vmatpush.msra.mxu0 %v1895
    %2491 = vmatmul.f32.gmra.mxu0 %v2473
    %v2492 = vpop.f32.mrf.mxu0
    %v2493 = vadd.f32 0.0, %v2492
    %2494 = vdwg.mxu0
    %v2495 = vadd.f32 %v2469, %v2493
    %v2496 = vxor.u32 %v2495, 2147483648
    %v2497 = vmul.f32 %v2496, 1.442695
    %v2498 = vpow.pop %v2497
    %v2499 = vadd.f32 %v2498, 1.0
    %v2500 = vrcp.pop %v2499
    %v2501 = vmul.f32 %v2499, %v2500
    %v2502 = vsub.f32 1.0, %v2501
    %v2503 = vmul.f32 %v2500, %v2502
    %v2504 = vadd.f32 %v2500, %v2503
    %vm2505 = vweird.f32 %v2499
    %vm2506 = vweird.f32 %v2500
    %vm2507 = vmor %vm2505, %vm2506
    %v2508 = vsel %vm2507, %v2500, %v2504
    %v2509 = vand.u32 2147483647, %v2499
    %vm2510 = vcmp.eq.f32.partialorder %v2509, 8.507059e+37
    %v2511 = vand.u32 %v2499, 2147483648
    %v2512 = vor.u32 1.1754944e-38, %v2511
    %v2513 = vsel %vm2510, %v2512, %v2508
    %v2514 = vmul.f32 1.0, %v2513
    %v2515 = vtanh.pop %v2495
    %v2516 = vmul.f32 %v2514, %v2456
    %2518 = vrot.lane.b32.xlu0 %v2515, 64
    %v2519 = vpop.permute.xlu0 %2518
    %v2521 = vmul.f32 %v2514, %v2519
    %2523 = vrot.lane.b32.xlu0 %v2521, 32
    %v2524 = vpop.permute.xlu0 %2523
    %v2526 = vadd.f32 %v2516, %v2524
    %v2527 = vtanh.pop %v2526
    %2529 = vrot.lane.b32.xlu0 %v2527, 64
    %v2530 = vpop.permute.xlu0 %2529
    %v2532 = vmul.f32 %v2514, %v2530
    %s2533 = scalar_lea.vmem [#allocation3], 18
    %v2534 = vld [vmem:[%s2533] sm:$0x3]
    %v2535 = vmul.f32 %v2534, %v1901
    %s2536 = scalar_lea.vmem [#allocation3], 44
    %v2537 = vld [vmem:[%s2536] sm:$0x3]
    %v2538 = vmul.f32 %v2537, %v1907
    %v2539 = vadd.f32 %v2535, %v2538
    %2541 = vrot.lane.b32.xlu0 %v2532, 32
    %v2542 = vpop.permute.xlu0 %2541
    %v2543 = vsel %vm1911, %v2542, 0
    %2545 = vmatpush.msra.mxu0 0.0
    %2546 = vmatpush.msra.mxu0 0.0
    %2547 = vmatpush.msra.mxu0 0.0
    %2548 = vmatpush.msra.mxu0 0.0
    %2549 = vmatpush.msra.mxu0 0.0
    %2550 = vmatpush.msra.mxu0 0.0
    %2551 = vmatpush.msra.mxu0 0.0
    %2552 = vmatpush.msra.mxu0 0.0
    %2553 = vmatpush.msra.mxu0 0.0
    %2554 = vmatpush.msra.mxu0 0.0
    %2555 = vmatpush.msra.mxu0 0.0
    %2556 = vmatpush.msra.mxu0 0.0
    %2557 = vmatpush.msra.mxu0 %v1898
    %2558 = vmatpush.msra.mxu0 %v1897
    %2559 = vmatpush.msra.mxu0 %v1896
    %2560 = vmatpush.msra.mxu0 %v1895
    %2561 = vmatmul.f32.gmra.mxu0 %v2543
    %v2562 = vpop.f32.mrf.mxu0
    %v2563 = vadd.f32 0.0, %v2562
    %2564 = vdwg.mxu0
    %v2565 = vadd.f32 %v2539, %v2563
    %v2566 = vxor.u32 %v2565, 2147483648
    %v2567 = vmul.f32 %v2566, 1.442695
    %v2568 = vpow.pop %v2567
    %v2569 = vadd.f32 %v2568, 1.0
    %v2570 = vrcp.pop %v2569
    %v2571 = vmul.f32 %v2569, %v2570
    %v2572 = vsub.f32 1.0, %v2571
    %v2573 = vmul.f32 %v2570, %v2572
    %v2574 = vadd.f32 %v2570, %v2573
    %vm2575 = vweird.f32 %v2569
    %vm2576 = vweird.f32 %v2570
    %vm2577 = vmor %vm2575, %vm2576
    %v2578 = vsel %vm2577, %v2570, %v2574
    %v2579 = vand.u32 2147483647, %v2569
    %vm2580 = vcmp.eq.f32.partialorder %v2579, 8.507059e+37
    %v2581 = vand.u32 %v2569, 2147483648
    %v2582 = vor.u32 1.1754944e-38, %v2581
    %v2583 = vsel %vm2580, %v2582, %v2578
    %v2584 = vmul.f32 1.0, %v2583
    %v2585 = vtanh.pop %v2565
    %v2586 = vmul.f32 %v2584, %v2526
    %2588 = vrot.lane.b32.xlu0 %v2585, 64
    %v2589 = vpop.permute.xlu0 %2588
    %v2591 = vmul.f32 %v2584, %v2589
    %2593 = vrot.lane.b32.xlu0 %v2591, 32
    %v2594 = vpop.permute.xlu0 %2593
    %v2596 = vadd.f32 %v2586, %v2594
    %v2597 = vtanh.pop %v2596
    %2599 = vrot.lane.b32.xlu0 %v2597, 64
    %v2600 = vpop.permute.xlu0 %2599
    %v2602 = vmul.f32 %v2584, %v2600
    %s2603 = scalar_lea.vmem [#allocation3], 20
    %v2604 = vld [vmem:[%s2603] sm:$0x3]
    %v2605 = vmul.f32 %v2604, %v1901
    %s2606 = scalar_lea.vmem [#allocation3], 42
    %v2607 = vld [vmem:[%s2606] sm:$0x3]
    %v2608 = vmul.f32 %v2607, %v1907
    %v2609 = vadd.f32 %v2605, %v2608
    %2611 = vrot.lane.b32.xlu0 %v2602, 32
    %v2612 = vpop.permute.xlu0 %2611
    %v2613 = vsel %vm1911, %v2612, 0
    %2615 = vmatpush.msra.mxu0 0.0
    %2616 = vmatpush.msra.mxu0 0.0
    %2617 = vmatpush.msra.mxu0 0.0
    %2618 = vmatpush.msra.mxu0 0.0
    %2619 = vmatpush.msra.mxu0 0.0
    %2620 = vmatpush.msra.mxu0 0.0
    %2621 = vmatpush.msra.mxu0 0.0
    %2622 = vmatpush.msra.mxu0 0.0
    %2623 = vmatpush.msra.mxu0 0.0
    %2624 = vmatpush.msra.mxu0 0.0
    %2625 = vmatpush.msra.mxu0 0.0
    %2626 = vmatpush.msra.mxu0 0.0
    %2627 = vmatpush.msra.mxu0 %v1898
    %2628 = vmatpush.msra.mxu0 %v1897
    %2629 = vmatpush.msra.mxu0 %v1896
    %2630 = vmatpush.msra.mxu0 %v1895
    %2631 = vmatmul.f32.gmra.mxu0 %v2613
    %v2632 = vpop.f32.mrf.mxu0
    %v2633 = vadd.f32 0.0, %v2632
    %2634 = vdwg.mxu0
    %v2635 = vadd.f32 %v2609, %v2633
    %v2636 = vxor.u32 %v2635, 2147483648
    %v2637 = vmul.f32 %v2636, 1.442695
    %v2638 = vpow.pop %v2637
    %v2639 = vadd.f32 %v2638, 1.0
    %v2640 = vrcp.pop %v2639
    %v2641 = vmul.f32 %v2639, %v2640
    %v2642 = vsub.f32 1.0, %v2641
    %v2643 = vmul.f32 %v2640, %v2642
    %v2644 = vadd.f32 %v2640, %v2643
    %vm2645 = vweird.f32 %v2639
    %vm2646 = vweird.f32 %v2640
    %vm2647 = vmor %vm2645, %vm2646
    %v2648 = vsel %vm2647, %v2640, %v2644
    %v2649 = vand.u32 2147483647, %v2639
    %vm2650 = vcmp.eq.f32.partialorder %v2649, 8.507059e+37
    %v2651 = vand.u32 %v2639, 2147483648
    %v2652 = vor.u32 1.1754944e-38, %v2651
    %v2653 = vsel %vm2650, %v2652, %v2648
    %v2654 = vmul.f32 1.0, %v2653
    %v2655 = vtanh.pop %v2635
    %v2656 = vmul.f32 %v2654, %v2596
    %2658 = vrot.lane.b32.xlu0 %v2655, 64
    %v2659 = vpop.permute.xlu0 %2658
    %v2661 = vmul.f32 %v2654, %v2659
    %2663 = vrot.lane.b32.xlu0 %v2661, 32
    %v2664 = vpop.permute.xlu0 %2663
    %v2666 = vadd.f32 %v2656, %v2664
    %v2667 = vtanh.pop %v2666
    %2669 = vrot.lane.b32.xlu0 %v2667, 64
    %v2670 = vpop.permute.xlu0 %2669
    %v2672 = vmul.f32 %v2654, %v2670
    %s2673 = scalar_lea.vmem [#allocation3], 22
    %v2674 = vld [vmem:[%s2673] sm:$0x3]
    %v2675 = vmul.f32 %v2674, %v1901
    %s2676 = scalar_lea.vmem [#allocation3], 40
    %v2677 = vld [vmem:[%s2676] sm:$0x3]
    %v2678 = vmul.f32 %v2677, %v1907
    %v2679 = vadd.f32 %v2675, %v2678
    %2681 = vrot.lane.b32.xlu0 %v2672, 32
    %v2682 = vpop.permute.xlu0 %2681
    %v2683 = vsel %vm1911, %v2682, 0
    %2685 = vmatpush.msra.mxu0 0.0
    %2686 = vmatpush.msra.mxu0 0.0
    %2687 = vmatpush.msra.mxu0 0.0
    %2688 = vmatpush.msra.mxu0 0.0
    %2689 = vmatpush.msra.mxu0 0.0
    %2690 = vmatpush.msra.mxu0 0.0
    %2691 = vmatpush.msra.mxu0 0.0
    %2692 = vmatpush.msra.mxu0 0.0
    %2693 = vmatpush.msra.mxu0 0.0
    %2694 = vmatpush.msra.mxu0 0.0
    %2695 = vmatpush.msra.mxu0 0.0
    %2696 = vmatpush.msra.mxu0 0.0
    %2697 = vmatpush.msra.mxu0 %v1898
    %2698 = vmatpush.msra.mxu0 %v1897
    %2699 = vmatpush.msra.mxu0 %v1896
    %2700 = vmatpush.msra.mxu0 %v1895
    %2701 = vmatmul.f32.gmra.mxu0 %v2683
    %v2702 = vpop.f32.mrf.mxu0
    %v2703 = vadd.f32 0.0, %v2702
    %2704 = vdwg.mxu0
    %v2705 = vadd.f32 %v2679, %v2703
    %v2706 = vxor.u32 %v2705, 2147483648
    %v2707 = vmul.f32 %v2706, 1.442695
    %v2708 = vpow.pop %v2707
    %v2709 = vadd.f32 %v2708, 1.0
    %v2710 = vrcp.pop %v2709
    %v2711 = vmul.f32 %v2709, %v2710
    %v2712 = vsub.f32 1.0, %v2711
    %v2713 = vmul.f32 %v2710, %v2712
    %v2714 = vadd.f32 %v2710, %v2713
    %vm2715 = vweird.f32 %v2709
    %vm2716 = vweird.f32 %v2710
    %vm2717 = vmor %vm2715, %vm2716
    %v2718 = vsel %vm2717, %v2710, %v2714
    %v2719 = vand.u32 2147483647, %v2709
    %vm2720 = vcmp.eq.f32.partialorder %v2719, 8.507059e+37
    %v2721 = vand.u32 %v2709, 2147483648
    %v2722 = vor.u32 1.1754944e-38, %v2721
    %v2723 = vsel %vm2720, %v2722, %v2718
    %v2724 = vmul.f32 1.0, %v2723
    %v2725 = vtanh.pop %v2705
    %v2726 = vmul.f32 %v2724, %v2666
    %2728 = vrot.lane.b32.xlu0 %v2725, 64
    %v2729 = vpop.permute.xlu0 %2728
    %v2731 = vmul.f32 %v2724, %v2729
    %2733 = vrot.lane.b32.xlu0 %v2731, 32
    %v2734 = vpop.permute.xlu0 %2733
    %v2736 = vadd.f32 %v2726, %v2734
    %v2737 = vtanh.pop %v2736
    %2739 = vrot.lane.b32.xlu0 %v2737, 64
    %v2740 = vpop.permute.xlu0 %2739
    %v2742 = vmul.f32 %v2724, %v2740
    %s2743 = scalar_lea.vmem [#allocation3], 24
    %v2744 = vld [vmem:[%s2743] sm:$0x3]
    %v2745 = vmul.f32 %v2744, %v1901
    %s2746 = scalar_lea.vmem [#allocation3], 38
    %v2747 = vld [vmem:[%s2746] sm:$0x3]
    %v2748 = vmul.f32 %v2747, %v1907
    %v2749 = vadd.f32 %v2745, %v2748
    %2751 = vrot.lane.b32.xlu0 %v2742, 32
    %v2752 = vpop.permute.xlu0 %2751
    %v2753 = vsel %vm1911, %v2752, 0
    %2755 = vmatpush.msra.mxu0 0.0
    %2756 = vmatpush.msra.mxu0 0.0
    %2757 = vmatpush.msra.mxu0 0.0
    %2758 = vmatpush.msra.mxu0 0.0
    %2759 = vmatpush.msra.mxu0 0.0
    %2760 = vmatpush.msra.mxu0 0.0
    %2761 = vmatpush.msra.mxu0 0.0
    %2762 = vmatpush.msra.mxu0 0.0
    %2763 = vmatpush.msra.mxu0 0.0
    %2764 = vmatpush.msra.mxu0 0.0
    %2765 = vmatpush.msra.mxu0 0.0
    %2766 = vmatpush.msra.mxu0 0.0
    %2767 = vmatpush.msra.mxu0 %v1898
    %2768 = vmatpush.msra.mxu0 %v1897
    %2769 = vmatpush.msra.mxu0 %v1896
    %2770 = vmatpush.msra.mxu0 %v1895
    %2771 = vmatmul.f32.gmra.mxu0 %v2753
    %v2772 = vpop.f32.mrf.mxu0
    %v2773 = vadd.f32 0.0, %v2772
    %2774 = vdwg.mxu0
    %v2775 = vadd.f32 %v2749, %v2773
    %v2776 = vxor.u32 %v2775, 2147483648
    %v2777 = vmul.f32 %v2776, 1.442695
    %v2778 = vpow.pop %v2777
    %v2779 = vadd.f32 %v2778, 1.0
    %v2780 = vrcp.pop %v2779
    %v2781 = vmul.f32 %v2779, %v2780
    %v2782 = vsub.f32 1.0, %v2781
    %v2783 = vmul.f32 %v2780, %v2782
    %v2784 = vadd.f32 %v2780, %v2783
    %vm2785 = vweird.f32 %v2779
    %vm2786 = vweird.f32 %v2780
    %vm2787 = vmor %vm2785, %vm2786
    %v2788 = vsel %vm2787, %v2780, %v2784
    %v2789 = vand.u32 2147483647, %v2779
    %vm2790 = vcmp.eq.f32.partialorder %v2789, 8.507059e+37
    %v2791 = vand.u32 %v2779, 2147483648
    %v2792 = vor.u32 1.1754944e-38, %v2791
    %v2793 = vsel %vm2790, %v2792, %v2788
    %v2794 = vmul.f32 1.0, %v2793
    %v2795 = vtanh.pop %v2775
    %v2796 = vmul.f32 %v2794, %v2736
    %2798 = vrot.lane.b32.xlu0 %v2795, 64
    %v2799 = vpop.permute.xlu0 %2798
    %v2801 = vmul.f32 %v2794, %v2799
    %2803 = vrot.lane.b32.xlu0 %v2801, 32
    %v2804 = vpop.permute.xlu0 %2803
    %v2806 = vadd.f32 %v2796, %v2804
    %v2807 = vtanh.pop %v2806
    %2809 = vrot.lane.b32.xlu0 %v2807, 64
    %v2810 = vpop.permute.xlu0 %2809
    %v2812 = vmul.f32 %v2794, %v2810
    %s2813 = scalar_lea.vmem [#allocation3], 26
    %v2814 = vld [vmem:[%s2813] sm:$0x3]
    %v2815 = vmul.f32 %v2814, %v1901
    %s2816 = scalar_lea.vmem [#allocation3], 36
    %v2817 = vld [vmem:[%s2816] sm:$0x3]
    %v2818 = vmul.f32 %v2817, %v1907
    %v2819 = vadd.f32 %v2815, %v2818
    %2821 = vrot.lane.b32.xlu0 %v2812, 32
    %v2822 = vpop.permute.xlu0 %2821
    %v2823 = vsel %vm1911, %v2822, 0
    %2825 = vmatpush.msra.mxu0 0.0
    %2826 = vmatpush.msra.mxu0 0.0
    %2827 = vmatpush.msra.mxu0 0.0
    %2828 = vmatpush.msra.mxu0 0.0
    %2829 = vmatpush.msra.mxu0 0.0
    %2830 = vmatpush.msra.mxu0 0.0
    %2831 = vmatpush.msra.mxu0 0.0
    %2832 = vmatpush.msra.mxu0 0.0
    %2833 = vmatpush.msra.mxu0 0.0
    %2834 = vmatpush.msra.mxu0 0.0
    %2835 = vmatpush.msra.mxu0 0.0
    %2836 = vmatpush.msra.mxu0 0.0
    %2837 = vmatpush.msra.mxu0 %v1898
    %2838 = vmatpush.msra.mxu0 %v1897
    %2839 = vmatpush.msra.mxu0 %v1896
    %2840 = vmatpush.msra.mxu0 %v1895
    %2841 = vmatmul.f32.gmra.mxu0 %v2823
    %v2842 = vpop.f32.mrf.mxu0
    %v2843 = vadd.f32 0.0, %v2842
    %2844 = vdwg.mxu0
    %v2845 = vadd.f32 %v2819, %v2843
    %v2846 = vxor.u32 %v2845, 2147483648
    %v2847 = vmul.f32 %v2846, 1.442695
    %v2848 = vpow.pop %v2847
    %v2849 = vadd.f32 %v2848, 1.0
    %v2850 = vrcp.pop %v2849
    %v2851 = vmul.f32 %v2849, %v2850
    %v2852 = vsub.f32 1.0, %v2851
    %v2853 = vmul.f32 %v2850, %v2852
    %v2854 = vadd.f32 %v2850, %v2853
    %vm2855 = vweird.f32 %v2849
    %vm2856 = vweird.f32 %v2850
    %vm2857 = vmor %vm2855, %vm2856
    %v2858 = vsel %vm2857, %v2850, %v2854
    %v2859 = vand.u32 2147483647, %v2849
    %vm2860 = vcmp.eq.f32.partialorder %v2859, 8.507059e+37
    %v2861 = vand.u32 %v2849, 2147483648
    %v2862 = vor.u32 1.1754944e-38, %v2861
    %v2863 = vsel %vm2860, %v2862, %v2858
    %v2864 = vmul.f32 1.0, %v2863
    %v2865 = vtanh.pop %v2845
    %v2866 = vmul.f32 %v2864, %v2806
    %2868 = vrot.lane.b32.xlu0 %v2865, 64
    %v2869 = vpop.permute.xlu0 %2868
    %v2871 = vmul.f32 %v2864, %v2869
    %2873 = vrot.lane.b32.xlu0 %v2871, 32
    %v2874 = vpop.permute.xlu0 %2873
    %v2876 = vadd.f32 %v2866, %v2874
    %v2877 = vtanh.pop %v2876
    %2879 = vrot.lane.b32.xlu0 %v2877, 64
    %v2880 = vpop.permute.xlu0 %2879
    %v2882 = vmul.f32 %v2864, %v2880
    %s2883 = scalar_lea.vmem [#allocation3], 28
    %v2884 = vld [vmem:[%s2883] sm:$0x3]
    %v2885 = vmul.f32 %v2884, %v1901
    %s2886 = scalar_lea.vmem [#allocation3], 34
    %v2887 = vld [vmem:[%s2886] sm:$0x3]
    %v2888 = vmul.f32 %v2887, %v1907
    %v2889 = vadd.f32 %v2885, %v2888
    %2891 = vrot.lane.b32.xlu0 %v2882, 32
    %v2892 = vpop.permute.xlu0 %2891
    %v2893 = vsel %vm1911, %v2892, 0
    %2895 = vmatpush.msra.mxu0 0.0
    %2896 = vmatpush.msra.mxu0 0.0
    %2897 = vmatpush.msra.mxu0 0.0
    %2898 = vmatpush.msra.mxu0 0.0
    %2899 = vmatpush.msra.mxu0 0.0
    %2900 = vmatpush.msra.mxu0 0.0
    %2901 = vmatpush.msra.mxu0 0.0
    %2902 = vmatpush.msra.mxu0 0.0
    %2903 = vmatpush.msra.mxu0 0.0
    %2904 = vmatpush.msra.mxu0 0.0
    %2905 = vmatpush.msra.mxu0 0.0
    %2906 = vmatpush.msra.mxu0 0.0
    %2907 = vmatpush.msra.mxu0 %v1898
    %2908 = vmatpush.msra.mxu0 %v1897
    %2909 = vmatpush.msra.mxu0 %v1896
    %2910 = vmatpush.msra.mxu0 %v1895
    %2911 = vmatmul.f32.gmra.mxu0 %v2893
    %v2912 = vpop.f32.mrf.mxu0
    %v2913 = vadd.f32 0.0, %v2912
    %2914 = vdwg.mxu0
    %v2915 = vadd.f32 %v2889, %v2913
    %v2916 = vxor.u32 %v2915, 2147483648
    %v2917 = vmul.f32 %v2916, 1.442695
    %v2918 = vpow.pop %v2917
    %v2919 = vadd.f32 %v2918, 1.0
    %v2920 = vrcp.pop %v2919
    %v2921 = vmul.f32 %v2919, %v2920
    %v2922 = vsub.f32 1.0, %v2921
    %v2923 = vmul.f32 %v2920, %v2922
    %v2924 = vadd.f32 %v2920, %v2923
    %vm2925 = vweird.f32 %v2919
    %vm2926 = vweird.f32 %v2920
    %vm2927 = vmor %vm2925, %vm2926
    %v2928 = vsel %vm2927, %v2920, %v2924
    %v2929 = vand.u32 2147483647, %v2919
    %vm2930 = vcmp.eq.f32.partialorder %v2929, 8.507059e+37
    %v2931 = vand.u32 %v2919, 2147483648
    %v2932 = vor.u32 1.1754944e-38, %v2931
    %v2933 = vsel %vm2930, %v2932, %v2928
    %v2934 = vmul.f32 1.0, %v2933
    %v2935 = vtanh.pop %v2915
    %v2936 = vmul.f32 %v2934, %v2876
    %2938 = vrot.lane.b32.xlu0 %v2935, 64
    %v2939 = vpop.permute.xlu0 %2938
    %v2941 = vmul.f32 %v2934, %v2939
    %2943 = vrot.lane.b32.xlu0 %v2941, 32
    %v2944 = vpop.permute.xlu0 %2943
    %v2946 = vadd.f32 %v2936, %v2944
    %v2947 = vtanh.pop %v2946
    %2949 = vrot.lane.b32.xlu0 %v2947, 64
    %v2950 = vpop.permute.xlu0 %2949
    %v2952 = vmul.f32 %v2934, %v2950
    %s2953 = scalar_lea.vmem [#allocation3], 30
    %v2954 = vld [vmem:[%s2953] sm:$0x3]
    %v2955 = vmul.f32 %v2954, %v1901
    %v2956 = vld [vmem:[%s1763] sm:$0x3]
    %v2957 = vmul.f32 %v2956, %v1907
    %v2958 = vadd.f32 %v2955, %v2957
    %2960 = vrot.lane.b32.xlu0 %v2952, 32
    %v2961 = vpop.permute.xlu0 %2960
    %v2962 = vsel %vm1911, %v2961, 0
    %2964 = vmatpush.msra.mxu0 0.0
    %2965 = vmatpush.msra.mxu0 0.0
    %2966 = vmatpush.msra.mxu0 0.0
    %2967 = vmatpush.msra.mxu0 0.0
    %2968 = vmatpush.msra.mxu0 0.0
    %2969 = vmatpush.msra.mxu0 0.0
    %2970 = vmatpush.msra.mxu0 0.0
    %2971 = vmatpush.msra.mxu0 0.0
    %2972 = vmatpush.msra.mxu0 0.0
    %2973 = vmatpush.msra.mxu0 0.0
    %2974 = vmatpush.msra.mxu0 0.0
    %2975 = vmatpush.msra.mxu0 0.0
    %2976 = vmatpush.msra.mxu0 %v1898
    %2977 = vmatpush.msra.mxu0 %v1897
    %2978 = vmatpush.msra.mxu0 %v1896
    %2979 = vmatpush.msra.mxu0 %v1895
    %2980 = vmatmul.f32.gmra.mxu0 %v2962
    %v2981 = vpop.f32.mrf.mxu0
    %v2982 = vadd.f32 0.0, %v2981
    %2983 = vdwg.mxu0
    %v2984 = vadd.f32 %v2958, %v2982
    %v2985 = vxor.u32 %v2984, 2147483648
    %v2986 = vmul.f32 %v2985, 1.442695
    %v2987 = vpow.pop %v2986
    %v2988 = vadd.f32 %v2987, 1.0
    %v2989 = vrcp.pop %v2988
    %v2990 = vmul.f32 %v2988, %v2989
    %v2991 = vsub.f32 1.0, %v2990
    %v2992 = vmul.f32 %v2989, %v2991
    %v2993 = vadd.f32 %v2989, %v2992
    %vm2994 = vweird.f32 %v2988
    %vm2995 = vweird.f32 %v2989
    %vm2996 = vmor %vm2994, %vm2995
    %v2997 = vsel %vm2996, %v2989, %v2993
    %v2998 = vand.u32 2147483647, %v2988
    %vm2999 = vcmp.eq.f32.partialorder %v2998, 8.507059e+37
    %v3000 = vand.u32 %v2988, 2147483648
    %v3001 = vor.u32 1.1754944e-38, %v3000
    %v3002 = vsel %vm2999, %v3001, %v2997
    %v3003 = vmul.f32 1.0, %v3002
    %v3004 = vtanh.pop %v2984
    %v3005 = vmul.f32 %v3003, %v2946
    %3007 = vrot.lane.b32.xlu0 %v3004, 64
    %v3008 = vpop.permute.xlu0 %3007
    %v3010 = vmul.f32 %v3003, %v3008
    %3012 = vrot.lane.b32.xlu0 %v3010, 32
    %v3013 = vpop.permute.xlu0 %3012
    %v3015 = vadd.f32 %v3005, %v3013
    %v3016 = vtanh.pop %v3015
    %3018 = vrot.lane.b32.xlu0 %v3016, 64
    %v3019 = vpop.permute.xlu0 %3018
    %v3021 = vmul.f32 %v3003, %v3019
    %v3022 = vmul.f32 %v2956, %v1901
    %v3023 = vmul.f32 %v2954, %v1907
    %v3024 = vadd.f32 %v3022, %v3023
    %3026 = vrot.lane.b32.xlu0 %v3021, 32
    %v3027 = vpop.permute.xlu0 %3026
    %v3028 = vsel %vm1911, %v3027, 0
    %3030 = vmatpush.msra.mxu0 0.0
    %3031 = vmatpush.msra.mxu0 0.0
    %3032 = vmatpush.msra.mxu0 0.0
    %3033 = vmatpush.msra.mxu0 0.0
    %3034 = vmatpush.msra.mxu0 0.0
    %3035 = vmatpush.msra.mxu0 0.0
    %3036 = vmatpush.msra.mxu0 0.0
    %3037 = vmatpush.msra.mxu0 0.0
    %3038 = vmatpush.msra.mxu0 0.0
    %3039 = vmatpush.msra.mxu0 0.0
    %3040 = vmatpush.msra.mxu0 0.0
    %3041 = vmatpush.msra.mxu0 0.0
    %3042 = vmatpush.msra.mxu0 %v1898
    %3043 = vmatpush.msra.mxu0 %v1897
    %3044 = vmatpush.msra.mxu0 %v1896
    %3045 = vmatpush.msra.mxu0 %v1895
    %3046 = vmatmul.f32.gmra.mxu0 %v3028
    %v3047 = vpop.f32.mrf.mxu0
    %v3048 = vadd.f32 0.0, %v3047
    %3049 = vdwg.mxu0
    %v3050 = vadd.f32 %v3024, %v3048
    %v3051 = vxor.u32 %v3050, 2147483648
    %v3052 = vmul.f32 %v3051, 1.442695
    %v3053 = vpow.pop %v3052
    %v3054 = vadd.f32 %v3053, 1.0
    %v3055 = vrcp.pop %v3054
    %v3056 = vmul.f32 %v3054, %v3055
    %v3057 = vsub.f32 1.0, %v3056
    %v3058 = vmul.f32 %v3055, %v3057
    %v3059 = vadd.f32 %v3055, %v3058
    %vm3060 = vweird.f32 %v3054
    %vm3061 = vweird.f32 %v3055
    %vm3062 = vmor %vm3060, %vm3061
    %v3063 = vsel %vm3062, %v3055, %v3059
    %v3064 = vand.u32 2147483647, %v3054
    %vm3065 = vcmp.eq.f32.partialorder %v3064, 8.507059e+37
    %v3066 = vand.u32 %v3054, 2147483648
    %v3067 = vor.u32 1.1754944e-38, %v3066
    %v3068 = vsel %vm3065, %v3067, %v3063
    %v3069 = vmul.f32 1.0, %v3068
    %v3070 = vtanh.pop %v3050
    %v3071 = vmul.f32 %v3069, %v3015
    %3073 = vrot.lane.b32.xlu0 %v3070, 64
    %v3074 = vpop.permute.xlu0 %3073
    %v3076 = vmul.f32 %v3069, %v3074
    %3078 = vrot.lane.b32.xlu0 %v3076, 32
    %v3079 = vpop.permute.xlu0 %3078
    %v3081 = vadd.f32 %v3071, %v3079
    %v3082 = vtanh.pop %v3081
    %3084 = vrot.lane.b32.xlu0 %v3082, 64
    %v3085 = vpop.permute.xlu0 %3084
    %v3087 = vmul.f32 %v3069, %v3085
    %v3088 = vmul.f32 %v2887, %v1901
    %v3089 = vmul.f32 %v2884, %v1907
    %v3090 = vadd.f32 %v3088, %v3089
    %3092 = vrot.lane.b32.xlu0 %v3087, 32
    %v3093 = vpop.permute.xlu0 %3092
    %v3094 = vsel %vm1911, %v3093, 0
    %3096 = vmatpush.msra.mxu0 0.0
    %3097 = vmatpush.msra.mxu0 0.0
    %3098 = vmatpush.msra.mxu0 0.0
    %3099 = vmatpush.msra.mxu0 0.0
    %3100 = vmatpush.msra.mxu0 0.0
    %3101 = vmatpush.msra.mxu0 0.0
    %3102 = vmatpush.msra.mxu0 0.0
    %3103 = vmatpush.msra.mxu0 0.0
    %3104 = vmatpush.msra.mxu0 0.0
    %3105 = vmatpush.msra.mxu0 0.0
    %3106 = vmatpush.msra.mxu0 0.0
    %3107 = vmatpush.msra.mxu0 0.0
    %3108 = vmatpush.msra.mxu0 %v1898
    %3109 = vmatpush.msra.mxu0 %v1897
    %3110 = vmatpush.msra.mxu0 %v1896
    %3111 = vmatpush.msra.mxu0 %v1895
    %3112 = vmatmul.f32.gmra.mxu0 %v3094
    %v3113 = vpop.f32.mrf.mxu0
    %v3114 = vadd.f32 0.0, %v3113
    %3115 = vdwg.mxu0
    %v3116 = vadd.f32 %v3090, %v3114
    %v3117 = vxor.u32 %v3116, 2147483648
    %v3118 = vmul.f32 %v3117, 1.442695
    %v3119 = vpow.pop %v3118
    %v3120 = vadd.f32 %v3119, 1.0
    %v3121 = vrcp.pop %v3120
    %v3122 = vmul.f32 %v3120, %v3121
    %v3123 = vsub.f32 1.0, %v3122
    %v3124 = vmul.f32 %v3121, %v3123
    %v3125 = vadd.f32 %v3121, %v3124
    %vm3126 = vweird.f32 %v3120
    %vm3127 = vweird.f32 %v3121
    %vm3128 = vmor %vm3126, %vm3127
    %v3129 = vsel %vm3128, %v3121, %v3125
    %v3130 = vand.u32 2147483647, %v3120
    %vm3131 = vcmp.eq.f32.partialorder %v3130, 8.507059e+37
    %v3132 = vand.u32 %v3120, 2147483648
    %v3133 = vor.u32 1.1754944e-38, %v3132
    %v3134 = vsel %vm3131, %v3133, %v3129
    %v3135 = vmul.f32 1.0, %v3134
    %v3136 = vtanh.pop %v3116
    %v3137 = vmul.f32 %v3135, %v3081
    %3139 = vrot.lane.b32.xlu0 %v3136, 64
    %v3140 = vpop.permute.xlu0 %3139
    %v3142 = vmul.f32 %v3135, %v3140
    %3144 = vrot.lane.b32.xlu0 %v3142, 32
    %v3145 = vpop.permute.xlu0 %3144
    %v3147 = vadd.f32 %v3137, %v3145
    %v3148 = vtanh.pop %v3147
    %3150 = vrot.lane.b32.xlu0 %v3148, 64
    %v3151 = vpop.permute.xlu0 %3150
    %v3153 = vmul.f32 %v3135, %v3151
    %v3154 = vmul.f32 %v2817, %v1901
    %v3155 = vmul.f32 %v2814, %v1907
    %v3156 = vadd.f32 %v3154, %v3155
    %3158 = vrot.lane.b32.xlu0 %v3153, 32
    %v3159 = vpop.permute.xlu0 %3158
    %v3160 = vsel %vm1911, %v3159, 0
    %3162 = vmatpush.msra.mxu0 0.0
    %3163 = vmatpush.msra.mxu0 0.0
    %3164 = vmatpush.msra.mxu0 0.0
    %3165 = vmatpush.msra.mxu0 0.0
    %3166 = vmatpush.msra.mxu0 0.0
    %3167 = vmatpush.msra.mxu0 0.0
    %3168 = vmatpush.msra.mxu0 0.0
    %3169 = vmatpush.msra.mxu0 0.0
    %3170 = vmatpush.msra.mxu0 0.0
    %3171 = vmatpush.msra.mxu0 0.0
    %3172 = vmatpush.msra.mxu0 0.0
    %3173 = vmatpush.msra.mxu0 0.0
    %3174 = vmatpush.msra.mxu0 %v1898
    %3175 = vmatpush.msra.mxu0 %v1897
    %3176 = vmatpush.msra.mxu0 %v1896
    %3177 = vmatpush.msra.mxu0 %v1895
    %3178 = vmatmul.f32.gmra.mxu0 %v3160
    %v3179 = vpop.f32.mrf.mxu0
    %v3180 = vadd.f32 0.0, %v3179
    %3181 = vdwg.mxu0
    %v3182 = vadd.f32 %v3156, %v3180
    %v3183 = vxor.u32 %v3182, 2147483648
    %v3184 = vmul.f32 %v3183, 1.442695
    %v3185 = vpow.pop %v3184
    %v3186 = vadd.f32 %v3185, 1.0
    %v3187 = vrcp.pop %v3186
    %v3188 = vmul.f32 %v3186, %v3187
    %v3189 = vsub.f32 1.0, %v3188
    %v3190 = vmul.f32 %v3187, %v3189
    %v3191 = vadd.f32 %v3187, %v3190
    %vm3192 = vweird.f32 %v3186
    %vm3193 = vweird.f32 %v3187
    %vm3194 = vmor %vm3192, %vm3193
    %v3195 = vsel %vm3194, %v3187, %v3191
    %v3196 = vand.u32 2147483647, %v3186
    %vm3197 = vcmp.eq.f32.partialorder %v3196, 8.507059e+37
    %v3198 = vand.u32 %v3186, 2147483648
    %v3199 = vor.u32 1.1754944e-38, %v3198
    %v3200 = vsel %vm3197, %v3199, %v3195
    %v3201 = vmul.f32 1.0, %v3200
    %v3202 = vtanh.pop %v3182
    %v3203 = vmul.f32 %v3201, %v3147
    %3205 = vrot.lane.b32.xlu0 %v3202, 64
    %v3206 = vpop.permute.xlu0 %3205
    %v3208 = vmul.f32 %v3201, %v3206
    %3210 = vrot.lane.b32.xlu0 %v3208, 32
    %v3211 = vpop.permute.xlu0 %3210
    %v3213 = vadd.f32 %v3203, %v3211
    %v3214 = vtanh.pop %v3213
    %3216 = vrot.lane.b32.xlu0 %v3214, 64
    %v3217 = vpop.permute.xlu0 %3216
    %v3219 = vmul.f32 %v3201, %v3217
    %v3220 = vmul.f32 %v2747, %v1901
    %v3221 = vmul.f32 %v2744, %v1907
    %v3222 = vadd.f32 %v3220, %v3221
    %3224 = vrot.lane.b32.xlu0 %v3219, 32
    %v3225 = vpop.permute.xlu0 %3224
    %v3226 = vsel %vm1911, %v3225, 0
    %3228 = vmatpush.msra.mxu0 0.0
    %3229 = vmatpush.msra.mxu0 0.0
    %3230 = vmatpush.msra.mxu0 0.0
    %3231 = vmatpush.msra.mxu0 0.0
    %3232 = vmatpush.msra.mxu0 0.0
    %3233 = vmatpush.msra.mxu0 0.0
    %3234 = vmatpush.msra.mxu0 0.0
    %3235 = vmatpush.msra.mxu0 0.0
    %3236 = vmatpush.msra.mxu0 0.0
    %3237 = vmatpush.msra.mxu0 0.0
    %3238 = vmatpush.msra.mxu0 0.0
    %3239 = vmatpush.msra.mxu0 0.0
    %3240 = vmatpush.msra.mxu0 %v1898
    %3241 = vmatpush.msra.mxu0 %v1897
    %3242 = vmatpush.msra.mxu0 %v1896
    %3243 = vmatpush.msra.mxu0 %v1895
    %3244 = vmatmul.f32.gmra.mxu0 %v3226
    %v3245 = vpop.f32.mrf.mxu0
    %v3246 = vadd.f32 0.0, %v3245
    %3247 = vdwg.mxu0
    %v3248 = vadd.f32 %v3222, %v3246
    %v3249 = vxor.u32 %v3248, 2147483648
    %v3250 = vmul.f32 %v3249, 1.442695
    %v3251 = vpow.pop %v3250
    %v3252 = vadd.f32 %v3251, 1.0
    %v3253 = vrcp.pop %v3252
    %v3254 = vmul.f32 %v3252, %v3253
    %v3255 = vsub.f32 1.0, %v3254
    %v3256 = vmul.f32 %v3253, %v3255
    %v3257 = vadd.f32 %v3253, %v3256
    %vm3258 = vweird.f32 %v3252
    %vm3259 = vweird.f32 %v3253
    %vm3260 = vmor %vm3258, %vm3259
    %v3261 = vsel %vm3260, %v3253, %v3257
    %v3262 = vand.u32 2147483647, %v3252
    %vm3263 = vcmp.eq.f32.partialorder %v3262, 8.507059e+37
    %v3264 = vand.u32 %v3252, 2147483648
    %v3265 = vor.u32 1.1754944e-38, %v3264
    %v3266 = vsel %vm3263, %v3265, %v3261
    %v3267 = vmul.f32 1.0, %v3266
    %v3268 = vtanh.pop %v3248
    %v3269 = vmul.f32 %v3267, %v3213
    %3271 = vrot.lane.b32.xlu0 %v3268, 64
    %v3272 = vpop.permute.xlu0 %3271
    %v3274 = vmul.f32 %v3267, %v3272
    %3276 = vrot.lane.b32.xlu0 %v3274, 32
    %v3277 = vpop.permute.xlu0 %3276
    %v3279 = vadd.f32 %v3269, %v3277
    %v3280 = vtanh.pop %v3279
    %3282 = vrot.lane.b32.xlu0 %v3280, 64
    %v3283 = vpop.permute.xlu0 %3282
    %v3285 = vmul.f32 %v3267, %v3283
    %v3286 = vmul.f32 %v2677, %v1901
    %v3287 = vmul.f32 %v2674, %v1907
    %v3288 = vadd.f32 %v3286, %v3287
    %3290 = vrot.lane.b32.xlu0 %v3285, 32
    %v3291 = vpop.permute.xlu0 %3290
    %v3292 = vsel %vm1911, %v3291, 0
    %3294 = vmatpush.msra.mxu0 0.0
    %3295 = vmatpush.msra.mxu0 0.0
    %3296 = vmatpush.msra.mxu0 0.0
    %3297 = vmatpush.msra.mxu0 0.0
    %3298 = vmatpush.msra.mxu0 0.0
    %3299 = vmatpush.msra.mxu0 0.0
    %3300 = vmatpush.msra.mxu0 0.0
    %3301 = vmatpush.msra.mxu0 0.0
    %3302 = vmatpush.msra.mxu0 0.0
    %3303 = vmatpush.msra.mxu0 0.0
    %3304 = vmatpush.msra.mxu0 0.0
    %3305 = vmatpush.msra.mxu0 0.0
    %3306 = vmatpush.msra.mxu0 %v1898
    %3307 = vmatpush.msra.mxu0 %v1897
    %3308 = vmatpush.msra.mxu0 %v1896
    %3309 = vmatpush.msra.mxu0 %v1895
    %3310 = vmatmul.f32.gmra.mxu0 %v3292
    %v3311 = vpop.f32.mrf.mxu0
    %v3312 = vadd.f32 0.0, %v3311
    %3313 = vdwg.mxu0
    %v3314 = vadd.f32 %v3288, %v3312
    %v3315 = vxor.u32 %v3314, 2147483648
    %v3316 = vmul.f32 %v3315, 1.442695
    %v3317 = vpow.pop %v3316
    %v3318 = vadd.f32 %v3317, 1.0
    %v3319 = vrcp.pop %v3318
    %v3320 = vmul.f32 %v3318, %v3319
    %v3321 = vsub.f32 1.0, %v3320
    %v3322 = vmul.f32 %v3319, %v3321
    %v3323 = vadd.f32 %v3319, %v3322
    %vm3324 = vweird.f32 %v3318
    %vm3325 = vweird.f32 %v3319
    %vm3326 = vmor %vm3324, %vm3325
    %v3327 = vsel %vm3326, %v3319, %v3323
    %v3328 = vand.u32 2147483647, %v3318
    %vm3329 = vcmp.eq.f32.partialorder %v3328, 8.507059e+37
    %v3330 = vand.u32 %v3318, 2147483648
    %v3331 = vor.u32 1.1754944e-38, %v3330
    %v3332 = vsel %vm3329, %v3331, %v3327
    %v3333 = vmul.f32 1.0, %v3332
    %v3334 = vtanh.pop %v3314
    %v3335 = vmul.f32 %v3333, %v3279
    %3337 = vrot.lane.b32.xlu0 %v3334, 64
    %v3338 = vpop.permute.xlu0 %3337
    %v3340 = vmul.f32 %v3333, %v3338
    %3342 = vrot.lane.b32.xlu0 %v3340, 32
    %v3343 = vpop.permute.xlu0 %3342
    %v3345 = vadd.f32 %v3335, %v3343
    %v3346 = vtanh.pop %v3345
    %3348 = vrot.lane.b32.xlu0 %v3346, 64
    %v3349 = vpop.permute.xlu0 %3348
    %v3351 = vmul.f32 %v3333, %v3349
    %v3352 = vmul.f32 %v2607, %v1901
    %v3353 = vmul.f32 %v2604, %v1907
    %v3354 = vadd.f32 %v3352, %v3353
    %3356 = vrot.lane.b32.xlu0 %v3351, 32
    %v3357 = vpop.permute.xlu0 %3356
    %v3358 = vsel %vm1911, %v3357, 0
    %3360 = vmatpush.msra.mxu0 0.0
    %3361 = vmatpush.msra.mxu0 0.0
    %3362 = vmatpush.msra.mxu0 0.0
    %3363 = vmatpush.msra.mxu0 0.0
    %3364 = vmatpush.msra.mxu0 0.0
    %3365 = vmatpush.msra.mxu0 0.0
    %3366 = vmatpush.msra.mxu0 0.0
    %3367 = vmatpush.msra.mxu0 0.0
    %3368 = vmatpush.msra.mxu0 0.0
    %3369 = vmatpush.msra.mxu0 0.0
    %3370 = vmatpush.msra.mxu0 0.0
    %3371 = vmatpush.msra.mxu0 0.0
    %3372 = vmatpush.msra.mxu0 %v1898
    %3373 = vmatpush.msra.mxu0 %v1897
    %3374 = vmatpush.msra.mxu0 %v1896
    %3375 = vmatpush.msra.mxu0 %v1895
    %3376 = vmatmul.f32.gmra.mxu0 %v3358
    %v3377 = vpop.f32.mrf.mxu0
    %v3378 = vadd.f32 0.0, %v3377
    %3379 = vdwg.mxu0
    %v3380 = vadd.f32 %v3354, %v3378
    %v3381 = vxor.u32 %v3380, 2147483648
    %v3382 = vmul.f32 %v3381, 1.442695
    %v3383 = vpow.pop %v3382
    %v3384 = vadd.f32 %v3383, 1.0
    %v3385 = vrcp.pop %v3384
    %v3386 = vmul.f32 %v3384, %v3385
    %v3387 = vsub.f32 1.0, %v3386
    %v3388 = vmul.f32 %v3385, %v3387
    %v3389 = vadd.f32 %v3385, %v3388
    %vm3390 = vweird.f32 %v3384
    %vm3391 = vweird.f32 %v3385
    %vm3392 = vmor %vm3390, %vm3391
    %v3393 = vsel %vm3392, %v3385, %v3389
    %v3394 = vand.u32 2147483647, %v3384
    %vm3395 = vcmp.eq.f32.partialorder %v3394, 8.507059e+37
    %v3396 = vand.u32 %v3384, 2147483648
    %v3397 = vor.u32 1.1754944e-38, %v3396
    %v3398 = vsel %vm3395, %v3397, %v3393
    %v3399 = vmul.f32 1.0, %v3398
    %v3400 = vtanh.pop %v3380
    %v3401 = vmul.f32 %v3399, %v3345
    %3403 = vrot.lane.b32.xlu0 %v3400, 64
    %v3404 = vpop.permute.xlu0 %3403
    %v3406 = vmul.f32 %v3399, %v3404
    %3408 = vrot.lane.b32.xlu0 %v3406, 32
    %v3409 = vpop.permute.xlu0 %3408
    %v3411 = vadd.f32 %v3401, %v3409
    %v3412 = vtanh.pop %v3411
    %3414 = vrot.lane.b32.xlu0 %v3412, 64
    %v3415 = vpop.permute.xlu0 %3414
    %v3417 = vmul.f32 %v3399, %v3415
    %v3418 = vmul.f32 %v2537, %v1901
    %v3419 = vmul.f32 %v2534, %v1907
    %v3420 = vadd.f32 %v3418, %v3419
    %3422 = vrot.lane.b32.xlu0 %v3417, 32
    %v3423 = vpop.permute.xlu0 %3422
    %v3424 = vsel %vm1911, %v3423, 0
    %3426 = vmatpush.msra.mxu0 0.0
    %3427 = vmatpush.msra.mxu0 0.0
    %3428 = vmatpush.msra.mxu0 0.0
    %3429 = vmatpush.msra.mxu0 0.0
    %3430 = vmatpush.msra.mxu0 0.0
    %3431 = vmatpush.msra.mxu0 0.0
    %3432 = vmatpush.msra.mxu0 0.0
    %3433 = vmatpush.msra.mxu0 0.0
    %3434 = vmatpush.msra.mxu0 0.0
    %3435 = vmatpush.msra.mxu0 0.0
    %3436 = vmatpush.msra.mxu0 0.0
    %3437 = vmatpush.msra.mxu0 0.0
    %3438 = vmatpush.msra.mxu0 %v1898
    %3439 = vmatpush.msra.mxu0 %v1897
    %3440 = vmatpush.msra.mxu0 %v1896
    %3441 = vmatpush.msra.mxu0 %v1895
    %3442 = vmatmul.f32.gmra.mxu0 %v3424
    %v3443 = vpop.f32.mrf.mxu0
    %v3444 = vadd.f32 0.0, %v3443
    %3445 = vdwg.mxu0
    %v3446 = vadd.f32 %v3420, %v3444
    %v3447 = vxor.u32 %v3446, 2147483648
    %v3448 = vmul.f32 %v3447, 1.442695
    %v3449 = vpow.pop %v3448
    %v3450 = vadd.f32 %v3449, 1.0
    %v3451 = vrcp.pop %v3450
    %v3452 = vmul.f32 %v3450, %v3451
    %v3453 = vsub.f32 1.0, %v3452
    %v3454 = vmul.f32 %v3451, %v3453
    %v3455 = vadd.f32 %v3451, %v3454
    %vm3456 = vweird.f32 %v3450
    %vm3457 = vweird.f32 %v3451
    %vm3458 = vmor %vm3456, %vm3457
    %v3459 = vsel %vm3458, %v3451, %v3455
    %v3460 = vand.u32 2147483647, %v3450
    %vm3461 = vcmp.eq.f32.partialorder %v3460, 8.507059e+37
    %v3462 = vand.u32 %v3450, 2147483648
    %v3463 = vor.u32 1.1754944e-38, %v3462
    %v3464 = vsel %vm3461, %v3463, %v3459
    %v3465 = vmul.f32 1.0, %v3464
    %v3466 = vtanh.pop %v3446
    %v3467 = vmul.f32 %v3465, %v3411
    %3469 = vrot.lane.b32.xlu0 %v3466, 64
    %v3470 = vpop.permute.xlu0 %3469
    %v3472 = vmul.f32 %v3465, %v3470
    %3474 = vrot.lane.b32.xlu0 %v3472, 32
    %v3475 = vpop.permute.xlu0 %3474
    %v3477 = vadd.f32 %v3467, %v3475
    %v3478 = vtanh.pop %v3477
    %3480 = vrot.lane.b32.xlu0 %v3478, 64
    %v3481 = vpop.permute.xlu0 %3480
    %v3483 = vmul.f32 %v3465, %v3481
    %v3484 = vmul.f32 %v2467, %v1901
    %v3485 = vmul.f32 %v2464, %v1907
    %v3486 = vadd.f32 %v3484, %v3485
    %3488 = vrot.lane.b32.xlu0 %v3483, 32
    %v3489 = vpop.permute.xlu0 %3488
    %v3490 = vsel %vm1911, %v3489, 0
    %3492 = vmatpush.msra.mxu0 0.0
    %3493 = vmatpush.msra.mxu0 0.0
    %3494 = vmatpush.msra.mxu0 0.0
    %3495 = vmatpush.msra.mxu0 0.0
    %3496 = vmatpush.msra.mxu0 0.0
    %3497 = vmatpush.msra.mxu0 0.0
    %3498 = vmatpush.msra.mxu0 0.0
    %3499 = vmatpush.msra.mxu0 0.0
    %3500 = vmatpush.msra.mxu0 0.0
    %3501 = vmatpush.msra.mxu0 0.0
    %3502 = vmatpush.msra.mxu0 0.0
    %3503 = vmatpush.msra.mxu0 0.0
    %3504 = vmatpush.msra.mxu0 %v1898
    %3505 = vmatpush.msra.mxu0 %v1897
    %3506 = vmatpush.msra.mxu0 %v1896
    %3507 = vmatpush.msra.mxu0 %v1895
    %3508 = vmatmul.f32.gmra.mxu0 %v3490
    %v3509 = vpop.f32.mrf.mxu0
    %v3510 = vadd.f32 0.0, %v3509
    %3511 = vdwg.mxu0
    %v3512 = vadd.f32 %v3486, %v3510
    %v3513 = vxor.u32 %v3512, 2147483648
    %v3514 = vmul.f32 %v3513, 1.442695
    %v3515 = vpow.pop %v3514
    %v3516 = vadd.f32 %v3515, 1.0
    %v3517 = vrcp.pop %v3516
    %v3518 = vmul.f32 %v3516, %v3517
    %v3519 = vsub.f32 1.0, %v3518
    %v3520 = vmul.f32 %v3517, %v3519
    %v3521 = vadd.f32 %v3517, %v3520
    %vm3522 = vweird.f32 %v3516
    %vm3523 = vweird.f32 %v3517
    %vm3524 = vmor %vm3522, %vm3523
    %v3525 = vsel %vm3524, %v3517, %v3521
    %v3526 = vand.u32 2147483647, %v3516
    %vm3527 = vcmp.eq.f32.partialorder %v3526, 8.507059e+37
    %v3528 = vand.u32 %v3516, 2147483648
    %v3529 = vor.u32 1.1754944e-38, %v3528
    %v3530 = vsel %vm3527, %v3529, %v3525
    %v3531 = vmul.f32 1.0, %v3530
    %v3532 = vtanh.pop %v3512
    %v3533 = vmul.f32 %v3531, %v3477
    %3535 = vrot.lane.b32.xlu0 %v3532, 64
    %v3536 = vpop.permute.xlu0 %3535
    %v3538 = vmul.f32 %v3531, %v3536
    %3540 = vrot.lane.b32.xlu0 %v3538, 32
    %v3541 = vpop.permute.xlu0 %3540
    %v3543 = vadd.f32 %v3533, %v3541
    %v3544 = vtanh.pop %v3543
    %3546 = vrot.lane.b32.xlu0 %v3544, 64
    %v3547 = vpop.permute.xlu0 %3546
    %v3549 = vmul.f32 %v3531, %v3547
    %v3550 = vmul.f32 %v2397, %v1901
    %v3551 = vmul.f32 %v2394, %v1907
    %v3552 = vadd.f32 %v3550, %v3551
    %3554 = vrot.lane.b32.xlu0 %v3549, 32
    %v3555 = vpop.permute.xlu0 %3554
    %v3556 = vsel %vm1911, %v3555, 0
    %3558 = vmatpush.msra.mxu0 0.0
    %3559 = vmatpush.msra.mxu0 0.0
    %3560 = vmatpush.msra.mxu0 0.0
    %3561 = vmatpush.msra.mxu0 0.0
    %3562 = vmatpush.msra.mxu0 0.0
    %3563 = vmatpush.msra.mxu0 0.0
    %3564 = vmatpush.msra.mxu0 0.0
    %3565 = vmatpush.msra.mxu0 0.0
    %3566 = vmatpush.msra.mxu0 0.0
    %3567 = vmatpush.msra.mxu0 0.0
    %3568 = vmatpush.msra.mxu0 0.0
    %3569 = vmatpush.msra.mxu0 0.0
    %3570 = vmatpush.msra.mxu0 %v1898
    %3571 = vmatpush.msra.mxu0 %v1897
    %3572 = vmatpush.msra.mxu0 %v1896
    %3573 = vmatpush.msra.mxu0 %v1895
    %3574 = vmatmul.f32.gmra.mxu0 %v3556
    %v3575 = vpop.f32.mrf.mxu0
    %v3576 = vadd.f32 0.0, %v3575
    %3577 = vdwg.mxu0
    %v3578 = vadd.f32 %v3552, %v3576
    %v3579 = vxor.u32 %v3578, 2147483648
    %v3580 = vmul.f32 %v3579, 1.442695
    %v3581 = vpow.pop %v3580
    %v3582 = vadd.f32 %v3581, 1.0
    %v3583 = vrcp.pop %v3582
    %v3584 = vmul.f32 %v3582, %v3583
    %v3585 = vsub.f32 1.0, %v3584
    %v3586 = vmul.f32 %v3583, %v3585
    %v3587 = vadd.f32 %v3583, %v3586
    %vm3588 = vweird.f32 %v3582
    %vm3589 = vweird.f32 %v3583
    %vm3590 = vmor %vm3588, %vm3589
    %v3591 = vsel %vm3590, %v3583, %v3587
    %v3592 = vand.u32 2147483647, %v3582
    %vm3593 = vcmp.eq.f32.partialorder %v3592, 8.507059e+37
    %v3594 = vand.u32 %v3582, 2147483648
    %v3595 = vor.u32 1.1754944e-38, %v3594
    %v3596 = vsel %vm3593, %v3595, %v3591
    %v3597 = vmul.f32 1.0, %v3596
    %v3598 = vtanh.pop %v3578
    %v3599 = vmul.f32 %v3597, %v3543
    %3601 = vrot.lane.b32.xlu0 %v3598, 64
    %v3602 = vpop.permute.xlu0 %3601
    %v3604 = vmul.f32 %v3597, %v3602
    %3606 = vrot.lane.b32.xlu0 %v3604, 32
    %v3607 = vpop.permute.xlu0 %3606
    %v3609 = vadd.f32 %v3599, %v3607
    %v3610 = vtanh.pop %v3609
    %3612 = vrot.lane.b32.xlu0 %v3610, 64
    %v3613 = vpop.permute.xlu0 %3612
    %v3615 = vmul.f32 %v3597, %v3613
    %v3616 = vmul.f32 %v2327, %v1901
    %v3617 = vmul.f32 %v2324, %v1907
    %v3618 = vadd.f32 %v3616, %v3617
    %3620 = vrot.lane.b32.xlu0 %v3615, 32
    %v3621 = vpop.permute.xlu0 %3620
    %v3622 = vsel %vm1911, %v3621, 0
    %3624 = vmatpush.msra.mxu0 0.0
    %3625 = vmatpush.msra.mxu0 0.0
    %3626 = vmatpush.msra.mxu0 0.0
    %3627 = vmatpush.msra.mxu0 0.0
    %3628 = vmatpush.msra.mxu0 0.0
    %3629 = vmatpush.msra.mxu0 0.0
    %3630 = vmatpush.msra.mxu0 0.0
    %3631 = vmatpush.msra.mxu0 0.0
    %3632 = vmatpush.msra.mxu0 0.0
    %3633 = vmatpush.msra.mxu0 0.0
    %3634 = vmatpush.msra.mxu0 0.0
    %3635 = vmatpush.msra.mxu0 0.0
    %3636 = vmatpush.msra.mxu0 %v1898
    %3637 = vmatpush.msra.mxu0 %v1897
    %3638 = vmatpush.msra.mxu0 %v1896
    %3639 = vmatpush.msra.mxu0 %v1895
    %3640 = vmatmul.f32.gmra.mxu0 %v3622
    %v3641 = vpop.f32.mrf.mxu0
    %v3642 = vadd.f32 0.0, %v3641
    %3643 = vdwg.mxu0
    %v3644 = vadd.f32 %v3618, %v3642
    %v3645 = vxor.u32 %v3644, 2147483648
    %v3646 = vmul.f32 %v3645, 1.442695
    %v3647 = vpow.pop %v3646
    %v3648 = vadd.f32 %v3647, 1.0
    %v3649 = vrcp.pop %v3648
    %v3650 = vmul.f32 %v3648, %v3649
    %v3651 = vsub.f32 1.0, %v3650
    %v3652 = vmul.f32 %v3649, %v3651
    %v3653 = vadd.f32 %v3649, %v3652
    %vm3654 = vweird.f32 %v3648
    %vm3655 = vweird.f32 %v3649
    %vm3656 = vmor %vm3654, %vm3655
    %v3657 = vsel %vm3656, %v3649, %v3653
    %v3658 = vand.u32 2147483647, %v3648
    %vm3659 = vcmp.eq.f32.partialorder %v3658, 8.507059e+37
    %v3660 = vand.u32 %v3648, 2147483648
    %v3661 = vor.u32 1.1754944e-38, %v3660
    %v3662 = vsel %vm3659, %v3661, %v3657
    %v3663 = vmul.f32 1.0, %v3662
    %v3664 = vtanh.pop %v3644
    %v3665 = vmul.f32 %v3663, %v3609
    %3667 = vrot.lane.b32.xlu0 %v3664, 64
    %v3668 = vpop.permute.xlu0 %3667
    %v3670 = vmul.f32 %v3663, %v3668
    %3672 = vrot.lane.b32.xlu0 %v3670, 32
    %v3673 = vpop.permute.xlu0 %3672
    %v3675 = vadd.f32 %v3665, %v3673
    %v3676 = vtanh.pop %v3675
    %3678 = vrot.lane.b32.xlu0 %v3676, 64
    %v3679 = vpop.permute.xlu0 %3678
    %v3681 = vmul.f32 %v3663, %v3679
    %v3682 = vmul.f32 %v2257, %v1901
    %v3683 = vmul.f32 %v2254, %v1907
    %v3684 = vadd.f32 %v3682, %v3683
    %3686 = vrot.lane.b32.xlu0 %v3681, 32
    %v3687 = vpop.permute.xlu0 %3686
    %v3688 = vsel %vm1911, %v3687, 0
    %3690 = vmatpush.msra.mxu0 0.0
    %3691 = vmatpush.msra.mxu0 0.0
    %3692 = vmatpush.msra.mxu0 0.0
    %3693 = vmatpush.msra.mxu0 0.0
    %3694 = vmatpush.msra.mxu0 0.0
    %3695 = vmatpush.msra.mxu0 0.0
    %3696 = vmatpush.msra.mxu0 0.0
    %3697 = vmatpush.msra.mxu0 0.0
    %3698 = vmatpush.msra.mxu0 0.0
    %3699 = vmatpush.msra.mxu0 0.0
    %3700 = vmatpush.msra.mxu0 0.0
    %3701 = vmatpush.msra.mxu0 0.0
    %3702 = vmatpush.msra.mxu0 %v1898
    %3703 = vmatpush.msra.mxu0 %v1897
    %3704 = vmatpush.msra.mxu0 %v1896
    %3705 = vmatpush.msra.mxu0 %v1895
    %3706 = vmatmul.f32.gmra.mxu0 %v3688
    %v3707 = vpop.f32.mrf.mxu0
    %v3708 = vadd.f32 0.0, %v3707
    %3709 = vdwg.mxu0
    %v3710 = vadd.f32 %v3684, %v3708
    %v3711 = vxor.u32 %v3710, 2147483648
    %v3712 = vmul.f32 %v3711, 1.442695
    %v3713 = vpow.pop %v3712
    %v3714 = vadd.f32 %v3713, 1.0
    %v3715 = vrcp.pop %v3714
    %v3716 = vmul.f32 %v3714, %v3715
    %v3717 = vsub.f32 1.0, %v3716
    %v3718 = vmul.f32 %v3715, %v3717
    %v3719 = vadd.f32 %v3715, %v3718
    %vm3720 = vweird.f32 %v3714
    %vm3721 = vweird.f32 %v3715
    %vm3722 = vmor %vm3720, %vm3721
    %v3723 = vsel %vm3722, %v3715, %v3719
    %v3724 = vand.u32 2147483647, %v3714
    %vm3725 = vcmp.eq.f32.partialorder %v3724, 8.507059e+37
    %v3726 = vand.u32 %v3714, 2147483648
    %v3727 = vor.u32 1.1754944e-38, %v3726
    %v3728 = vsel %vm3725, %v3727, %v3723
    %v3729 = vmul.f32 1.0, %v3728
    %v3730 = vtanh.pop %v3710
    %v3731 = vmul.f32 %v3729, %v3675
    %3733 = vrot.lane.b32.xlu0 %v3730, 64
    %v3734 = vpop.permute.xlu0 %3733
    %v3736 = vmul.f32 %v3729, %v3734
    %3738 = vrot.lane.b32.xlu0 %v3736, 32
    %v3739 = vpop.permute.xlu0 %3738
    %v3741 = vadd.f32 %v3731, %v3739
    %v3742 = vtanh.pop %v3741
    %3744 = vrot.lane.b32.xlu0 %v3742, 64
    %v3745 = vpop.permute.xlu0 %3744
    %v3747 = vmul.f32 %v3729, %v3745
    %v3748 = vmul.f32 %v2187, %v1901
    %v3749 = vmul.f32 %v2184, %v1907
    %v3750 = vadd.f32 %v3748, %v3749
    %3752 = vrot.lane.b32.xlu0 %v3747, 32
    %v3753 = vpop.permute.xlu0 %3752
    %v3754 = vsel %vm1911, %v3753, 0
    %3756 = vmatpush.msra.mxu0 0.0
    %3757 = vmatpush.msra.mxu0 0.0
    %3758 = vmatpush.msra.mxu0 0.0
    %3759 = vmatpush.msra.mxu0 0.0
    %3760 = vmatpush.msra.mxu0 0.0
    %3761 = vmatpush.msra.mxu0 0.0
    %3762 = vmatpush.msra.mxu0 0.0
    %3763 = vmatpush.msra.mxu0 0.0
    %3764 = vmatpush.msra.mxu0 0.0
    %3765 = vmatpush.msra.mxu0 0.0
    %3766 = vmatpush.msra.mxu0 0.0
    %3767 = vmatpush.msra.mxu0 0.0
    %3768 = vmatpush.msra.mxu0 %v1898
    %3769 = vmatpush.msra.mxu0 %v1897
    %3770 = vmatpush.msra.mxu0 %v1896
    %3771 = vmatpush.msra.mxu0 %v1895
    %3772 = vmatmul.f32.gmra.mxu0 %v3754
    %v3773 = vpop.f32.mrf.mxu0
    %v3774 = vadd.f32 0.0, %v3773
    %3775 = vdwg.mxu0
    %v3776 = vadd.f32 %v3750, %v3774
    %v3777 = vxor.u32 %v3776, 2147483648
    %v3778 = vmul.f32 %v3777, 1.442695
    %v3779 = vpow.pop %v3778
    %v3780 = vadd.f32 %v3779, 1.0
    %v3781 = vrcp.pop %v3780
    %v3782 = vmul.f32 %v3780, %v3781
    %v3783 = vsub.f32 1.0, %v3782
    %v3784 = vmul.f32 %v3781, %v3783
    %v3785 = vadd.f32 %v3781, %v3784
    %vm3786 = vweird.f32 %v3780
    %vm3787 = vweird.f32 %v3781
    %vm3788 = vmor %vm3786, %vm3787
    %v3789 = vsel %vm3788, %v3781, %v3785
    %v3790 = vand.u32 2147483647, %v3780
    %vm3791 = vcmp.eq.f32.partialorder %v3790, 8.507059e+37
    %v3792 = vand.u32 %v3780, 2147483648
    %v3793 = vor.u32 1.1754944e-38, %v3792
    %v3794 = vsel %vm3791, %v3793, %v3789
    %v3795 = vmul.f32 1.0, %v3794
    %v3796 = vtanh.pop %v3776
    %v3797 = vmul.f32 %v3795, %v3741
    %3799 = vrot.lane.b32.xlu0 %v3796, 64
    %v3800 = vpop.permute.xlu0 %3799
    %v3802 = vmul.f32 %v3795, %v3800
    %3804 = vrot.lane.b32.xlu0 %v3802, 32
    %v3805 = vpop.permute.xlu0 %3804
    %v3807 = vadd.f32 %v3797, %v3805
    %v3808 = vtanh.pop %v3807
    %3810 = vrot.lane.b32.xlu0 %v3808, 64
    %v3811 = vpop.permute.xlu0 %3810
    %v3813 = vmul.f32 %v3795, %v3811
    %v3814 = vmul.f32 %v2117, %v1901
    %v3815 = vmul.f32 %v2114, %v1907
    %v3816 = vadd.f32 %v3814, %v3815
    %3818 = vrot.lane.b32.xlu0 %v3813, 32
    %v3819 = vpop.permute.xlu0 %3818
    %v3820 = vsel %vm1911, %v3819, 0
    %3822 = vmatpush.msra.mxu0 0.0
    %3823 = vmatpush.msra.mxu0 0.0
    %3824 = vmatpush.msra.mxu0 0.0
    %3825 = vmatpush.msra.mxu0 0.0
    %3826 = vmatpush.msra.mxu0 0.0
    %3827 = vmatpush.msra.mxu0 0.0
    %3828 = vmatpush.msra.mxu0 0.0
    %3829 = vmatpush.msra.mxu0 0.0
    %3830 = vmatpush.msra.mxu0 0.0
    %3831 = vmatpush.msra.mxu0 0.0
    %3832 = vmatpush.msra.mxu0 0.0
    %3833 = vmatpush.msra.mxu0 0.0
    %3834 = vmatpush.msra.mxu0 %v1898
    %3835 = vmatpush.msra.mxu0 %v1897
    %3836 = vmatpush.msra.mxu0 %v1896
    %3837 = vmatpush.msra.mxu0 %v1895
    %3838 = vmatmul.f32.gmra.mxu0 %v3820
    %v3839 = vpop.f32.mrf.mxu0
    %v3840 = vadd.f32 0.0, %v3839
    %3841 = vdwg.mxu0
    %v3842 = vadd.f32 %v3816, %v3840
    %v3843 = vxor.u32 %v3842, 2147483648
    %v3844 = vmul.f32 %v3843, 1.442695
    %v3845 = vpow.pop %v3844
    %v3846 = vadd.f32 %v3845, 1.0
    %v3847 = vrcp.pop %v3846
    %v3848 = vmul.f32 %v3846, %v3847
    %v3849 = vsub.f32 1.0, %v3848
    %v3850 = vmul.f32 %v3847, %v3849
    %v3851 = vadd.f32 %v3847, %v3850
    %vm3852 = vweird.f32 %v3846
    %vm3853 = vweird.f32 %v3847
    %vm3854 = vmor %vm3852, %vm3853
    %v3855 = vsel %vm3854, %v3847, %v3851
    %v3856 = vand.u32 2147483647, %v3846
    %vm3857 = vcmp.eq.f32.partialorder %v3856, 8.507059e+37
    %v3858 = vand.u32 %v3846, 2147483648
    %v3859 = vor.u32 1.1754944e-38, %v3858
    %v3860 = vsel %vm3857, %v3859, %v3855
    %v3861 = vmul.f32 1.0, %v3860
    %v3862 = vtanh.pop %v3842
    %v3863 = vmul.f32 %v3861, %v3807
    %3865 = vrot.lane.b32.xlu0 %v3862, 64
    %v3866 = vpop.permute.xlu0 %3865
    %v3868 = vmul.f32 %v3861, %v3866
    %3870 = vrot.lane.b32.xlu0 %v3868, 32
    %v3871 = vpop.permute.xlu0 %3870
    %v3873 = vadd.f32 %v3863, %v3871
    %v3874 = vtanh.pop %v3873
    %3876 = vrot.lane.b32.xlu0 %v3874, 64
    %v3877 = vpop.permute.xlu0 %3876
    %v3879 = vmul.f32 %v3861, %v3877
    %v3880 = vmul.f32 %v2047, %v1901
    %v3881 = vmul.f32 %v2044, %v1907
    %v3882 = vadd.f32 %v3880, %v3881
    %3884 = vrot.lane.b32.xlu0 %v3879, 32
    %v3885 = vpop.permute.xlu0 %3884
    %v3886 = vsel %vm1911, %v3885, 0
    %3888 = vmatpush.msra.mxu0 0.0
    %3889 = vmatpush.msra.mxu0 0.0
    %3890 = vmatpush.msra.mxu0 0.0
    %3891 = vmatpush.msra.mxu0 0.0
    %3892 = vmatpush.msra.mxu0 0.0
    %3893 = vmatpush.msra.mxu0 0.0
    %3894 = vmatpush.msra.mxu0 0.0
    %3895 = vmatpush.msra.mxu0 0.0
    %3896 = vmatpush.msra.mxu0 0.0
    %3897 = vmatpush.msra.mxu0 0.0
    %3898 = vmatpush.msra.mxu0 0.0
    %3899 = vmatpush.msra.mxu0 0.0
    %3900 = vmatpush.msra.mxu0 %v1898
    %3901 = vmatpush.msra.mxu0 %v1897
    %3902 = vmatpush.msra.mxu0 %v1896
    %3903 = vmatpush.msra.mxu0 %v1895
    %3904 = vmatmul.f32.gmra.mxu0 %v3886
    %v3905 = vpop.f32.mrf.mxu0
    %v3906 = vadd.f32 0.0, %v3905
    %3907 = vdwg.mxu0
    %v3908 = vadd.f32 %v3882, %v3906
    %v3909 = vxor.u32 %v3908, 2147483648
    %v3910 = vmul.f32 %v3909, 1.442695
    %v3911 = vpow.pop %v3910
    %v3912 = vadd.f32 %v3911, 1.0
    %v3913 = vrcp.pop %v3912
    %v3914 = vmul.f32 %v3912, %v3913
    %v3915 = vsub.f32 1.0, %v3914
    %v3916 = vmul.f32 %v3913, %v3915
    %v3917 = vadd.f32 %v3913, %v3916
    %vm3918 = vweird.f32 %v3912
    %vm3919 = vweird.f32 %v3913
    %vm3920 = vmor %vm3918, %vm3919
    %v3921 = vsel %vm3920, %v3913, %v3917
    %v3922 = vand.u32 2147483647, %v3912
    %vm3923 = vcmp.eq.f32.partialorder %v3922, 8.507059e+37
    %v3924 = vand.u32 %v3912, 2147483648
    %v3925 = vor.u32 1.1754944e-38, %v3924
    %v3926 = vsel %vm3923, %v3925, %v3921
    %v3927 = vmul.f32 1.0, %v3926
    %v3928 = vtanh.pop %v3908
    %v3929 = vmul.f32 %v3927, %v3873
    %3931 = vrot.lane.b32.xlu0 %v3928, 64
    %v3932 = vpop.permute.xlu0 %3931
    %v3934 = vmul.f32 %v3927, %v3932
    %3936 = vrot.lane.b32.xlu0 %v3934, 32
    %v3937 = vpop.permute.xlu0 %3936
    %v3939 = vadd.f32 %v3929, %v3937
    %v3940 = vtanh.pop %v3939
    %3942 = vrot.lane.b32.xlu0 %v3940, 64
    %v3943 = vpop.permute.xlu0 %3942
    %v3945 = vmul.f32 %v3927, %v3943
    %v3946 = vmul.f32 %v1977, %v1901
    %v3947 = vmul.f32 %v1974, %v1907
    %v3948 = vadd.f32 %v3946, %v3947
    %3950 = vrot.lane.b32.xlu0 %v3945, 32
    %v3951 = vpop.permute.xlu0 %3950
    %v3952 = vsel %vm1911, %v3951, 0
    %3954 = vmatpush.msra.mxu0 0.0
    %3955 = vmatpush.msra.mxu0 0.0
    %3956 = vmatpush.msra.mxu0 0.0
    %3957 = vmatpush.msra.mxu0 0.0
    %3958 = vmatpush.msra.mxu0 0.0
    %3959 = vmatpush.msra.mxu0 0.0
    %3960 = vmatpush.msra.mxu0 0.0
    %3961 = vmatpush.msra.mxu0 0.0
    %3962 = vmatpush.msra.mxu0 0.0
    %3963 = vmatpush.msra.mxu0 0.0
    %3964 = vmatpush.msra.mxu0 0.0
    %3965 = vmatpush.msra.mxu0 0.0
    %3966 = vmatpush.msra.mxu0 %v1898
    %3967 = vmatpush.msra.mxu0 %v1897
    %3968 = vmatpush.msra.mxu0 %v1896
    %3969 = vmatpush.msra.mxu0 %v1895
    %3970 = vmatmul.f32.gmra.mxu0 %v3952
    %v3971 = vpop.f32.mrf.mxu0
    %v3972 = vadd.f32 0.0, %v3971
    %3973 = vdwg.mxu0
    %v3974 = vadd.f32 %v3948, %v3972
    %v3975 = vxor.u32 %v3974, 2147483648
    %v3976 = vmul.f32 %v3975, 1.442695
    %v3977 = vpow.pop %v3976
    %v3978 = vadd.f32 %v3977, 1.0
    %v3979 = vrcp.pop %v3978
    %v3980 = vmul.f32 %v3978, %v3979
    %v3981 = vsub.f32 1.0, %v3980
    %v3982 = vmul.f32 %v3979, %v3981
    %v3983 = vadd.f32 %v3979, %v3982
    %vm3984 = vweird.f32 %v3978
    %vm3985 = vweird.f32 %v3979
    %vm3986 = vmor %vm3984, %vm3985
    %v3987 = vsel %vm3986, %v3979, %v3983
    %v3988 = vand.u32 2147483647, %v3978
    %vm3989 = vcmp.eq.f32.partialorder %v3988, 8.507059e+37
    %v3990 = vand.u32 %v3978, 2147483648
    %v3991 = vor.u32 1.1754944e-38, %v3990
    %v3992 = vsel %vm3989, %v3991, %v3987
    %v3993 = vmul.f32 1.0, %v3992
    %v3994 = vtanh.pop %v3974
    %v3995 = vmul.f32 %v3993, %v3939
    %3997 = vrot.lane.b32.xlu0 %v3994, 64
    %v3998 = vpop.permute.xlu0 %3997
    %v4000 = vmul.f32 %v3993, %v3998
    %4002 = vrot.lane.b32.xlu0 %v4000, 32
    %v4003 = vpop.permute.xlu0 %4002
    %v4005 = vadd.f32 %v3995, %v4003
    %v4006 = vtanh.pop %v4005
    %4008 = vrot.lane.b32.xlu0 %v4006, 64
    %v4009 = vpop.permute.xlu0 %4008
    %v4011 = vmul.f32 %v3993, %v4009
    %v4012 = vmul.f32 %v1905, %v1901
    %v4013 = vmul.f32 %v1899, %v1907
    %v4014 = vadd.f32 %v4012, %v4013
    %4016 = vrot.lane.b32.xlu0 %v4011, 32
    %v4017 = vpop.permute.xlu0 %4016
    %v4018 = vsel %vm1911, %v4017, 0
    %4020 = vmatpush.msra.mxu0 0.0
    %4021 = vmatpush.msra.mxu0 0.0
    %4022 = vmatpush.msra.mxu0 0.0
    %4023 = vmatpush.msra.mxu0 0.0
    %4024 = vmatpush.msra.mxu0 0.0
    %4025 = vmatpush.msra.mxu0 0.0
    %4026 = vmatpush.msra.mxu0 0.0
    %4027 = vmatpush.msra.mxu0 0.0
    %4028 = vmatpush.msra.mxu0 0.0
    %4029 = vmatpush.msra.mxu0 0.0
    %4030 = vmatpush.msra.mxu0 0.0
    %4031 = vmatpush.msra.mxu0 0.0
    %4032 = vmatpush.msra.mxu0 %v1898
    %4033 = vmatpush.msra.mxu0 %v1897
    %4034 = vmatpush.msra.mxu0 %v1896
    %4035 = vmatpush.msra.mxu0 %v1895
    %4036 = vmatmul.f32.gmra.mxu0 %v4018
    %v4037 = vpop.f32.mrf.mxu0
    %v4038 = vadd.f32 0.0, %v4037
    %4039 = vdwg.mxu0
    %v4040 = vadd.f32 %v4014, %v4038
    %v4041 = vxor.u32 %v4040, 2147483648
    %v4042 = vmul.f32 %v4041, 1.442695
    %v4043 = vpow.pop %v4042
    %v4044 = vadd.f32 %v4043, 1.0
    %v4045 = vrcp.pop %v4044
    %v4046 = vmul.f32 %v4044, %v4045
    %v4047 = vsub.f32 1.0, %v4046
    %v4048 = vmul.f32 %v4045, %v4047
    %v4049 = vadd.f32 %v4045, %v4048
    %vm4050 = vweird.f32 %v4044
    %vm4051 = vweird.f32 %v4045
    %vm4052 = vmor %vm4050, %vm4051
    %v4053 = vsel %vm4052, %v4045, %v4049
    %v4054 = vand.u32 2147483647, %v4044
    %vm4055 = vcmp.eq.f32.partialorder %v4054, 8.507059e+37
    %v4056 = vand.u32 %v4044, 2147483648
    %v4057 = vor.u32 1.1754944e-38, %v4056
    %v4058 = vsel %vm4055, %v4057, %v4053
    %v4059 = vmul.f32 1.0, %v4058
    %v4060 = vtanh.pop %v4040
    %v4061 = vmul.f32 %v4059, %v4005
    %4063 = vrot.lane.b32.xlu0 %v4060, 64
    %v4064 = vpop.permute.xlu0 %4063
    %v4066 = vmul.f32 %v4059, %v4064
    %4068 = vrot.lane.b32.xlu0 %v4066, 32
    %v4069 = vpop.permute.xlu0 %4068
    %v4071 = vadd.f32 %v4061, %v4069
    %v4072 = vtanh.pop %v4071
    %4074 = vrot.lane.b32.xlu0 %v4072, 64
    %v4075 = vpop.permute.xlu0 %4074
    %v4077 = vmul.f32 %v4059, %v4075
    %v4078 = vld [vmem:[#allocation24] sm:$0xff]
    %v4079 = vld [vmem:[#allocation24 + $0x8] sm:$0xff]
    %v4080 = vld [vmem:[#allocation24 + $0x10] sm:$0xff]
    %v4081 = vld [vmem:[#allocation24 + $0x18] sm:$0xff]
    %v4082 = vld [vmem:[#allocation25] sm:$0x1]
    %v4084 = vperm.slane %v4082, 0
    %4087 = vrot.lane.b32.xlu0 %v4077, 32
    %v4088 = vpop.permute.xlu0 %4087
    %v4089 = vsel %vm1911, %v4088, 0
    %4091 = vmatpush.msra.mxu0 0.0
    %4092 = vmatpush.msra.mxu0 0.0
    %4093 = vmatpush.msra.mxu0 0.0
    %4094 = vmatpush.msra.mxu0 0.0
    %4095 = vmatpush.msra.mxu0 0.0
    %4096 = vmatpush.msra.mxu0 0.0
    %4097 = vmatpush.msra.mxu0 0.0
    %4098 = vmatpush.msra.mxu0 0.0
    %4099 = vmatpush.msra.mxu0 0.0
    %4100 = vmatpush.msra.mxu0 0.0
    %4101 = vmatpush.msra.mxu0 0.0
    %4102 = vmatpush.msra.mxu0 0.0
    %4103 = vmatpush.msra.mxu0 %v4081
    %4104 = vmatpush.msra.mxu0 %v4080
    %4105 = vmatpush.msra.mxu0 %v4079
    %4106 = vmatpush.msra.mxu0 %v4078
    %4107 = vmatmul.f32.gmra.mxu0 %v4089
    %v4108 = vpop.f32.mrf.mxu0
    %v4109 = vadd.f32 %v4084, %v4108
    %4110 = vdwg.mxu0
    %v4111 = vmax.f32 %v4109, 0.0
    %v4112 = vld [vmem:[#allocation27] sm:$0xff]
    %v4113 = vld [vmem:[#allocation27 + $0x8] sm:$0xff]
    %v4114 = vld [vmem:[#allocation27 + $0x10] sm:$0xff]
    %v4115 = vld [vmem:[#allocation27 + $0x18] sm:$0xff]
    %v4116 = vld [vmem:[#allocation28] sm:$0x1]
    %v4118 = vperm.slane %v4116, 0
    %v4121 = vsel %vm1911, %v4111, 0
    %4123 = vmatpush.msra.mxu0 0.0
    %4124 = vmatpush.msra.mxu0 0.0
    %4125 = vmatpush.msra.mxu0 0.0
    %4126 = vmatpush.msra.mxu0 0.0
    %4127 = vmatpush.msra.mxu0 0.0
    %4128 = vmatpush.msra.mxu0 0.0
    %4129 = vmatpush.msra.mxu0 0.0
    %4130 = vmatpush.msra.mxu0 0.0
    %4131 = vmatpush.msra.mxu0 0.0
    %4132 = vmatpush.msra.mxu0 0.0
    %4133 = vmatpush.msra.mxu0 0.0
    %4134 = vmatpush.msra.mxu0 0.0
    %4135 = vmatpush.msra.mxu0 %v4115
    %4136 = vmatpush.msra.mxu0 %v4114
    %4137 = vmatpush.msra.mxu0 %v4113
    %4138 = vmatpush.msra.mxu0 %v4112
    %4139 = vmatmul.f32.gmra.mxu0 %v4121
    %v4140 = vpop.f32.mrf.mxu0
    %v4141 = vadd.f32 %v4118, %v4140
    %4142 = vdwg.mxu0
    %vm4143 = vcmask 9216
    %4144 = vst.msk [vmem:[#allocation30] sm:$0x3] %vm4143, %v4141
    // Predicated region
    $region154: #{_lambda_.1} parent=1 // pred_check
      _
    $region155: #{_lambda_.1} parent=1 // pred_check_branch
      %4146 = sbr.rel (0) target = $region157
    $region156: #{_lambda_.1} parent=1 // pred_region
      %4148 = vsyncadd [#allocation6], 0
      %s4150 = sshll.u32 [#allocation30], 4
      %s4151 = int_to_ptr.vmem [resolvable:$true] %s4150
      %s4152 = sshll.u32 %s22, 4
      %s4153 = int_to_ptr.hbm [resolvable:$true] %s4152
      %4155 = dma.vmem_to_hbm [thread:$0]  %s4151, 32, %s4153, [#allocation6]
    $region157: #{_lambda_.1} parent=1 // pred_fallthru
      _
    // Predicated region
    $region158: #{_lambda_.1} parent=1 // pred_check
      _
    $region159: #{_lambda_.1} parent=1 // pred_check_branch
      %4157 = sbr.rel (0) target = $region161
    $region160: #{_lambda_.1} parent=1 // pred_region
      %4159 = dma.done [#allocation6], 32
    $region161: #{_lambda_.1} parent=1 // pred_fallthru
      _
    %4160 = vsyncpa [#allocation5], 1
    %4161 = vsyncpa [#allocation8], 1
    %4162 = vsyncpa [#allocation11], 1
    %4163 = vsyncpa [#allocation14], 1
    %4164 = vsyncpa [#allocation17], 1
    %4165 = vsyncpa [#allocation20], 1
    %4166 = vsyncpa [#allocation23], 1
    %4167 = vsyncpa [#allocation26], 1
    %4168 = vsyncpa [#allocation29], 1
    %4169 = vsyncpa [#allocation6], 1

</llo_original>
